<compile_context>
chip_gen: v6e
topology: v6e:2x2x1
jax: 0.10.0
libtpu: 0.0.40
codegen_flags: <defaults>
</compile_context>

<pallas_src>
import functools

import jax
import jax.numpy as jnp
from jax import lax
from jax.experimental import pallas as pl
from jax.experimental.pallas import tpu as pltpu

BN_EPS = 1e-5


def _pick_depth_chunk(D, H, W, max_rows=2048):
    """Largest divisor DC of D with DC*H*W <= max_rows (fills the MXU M dim)."""
    best = 1
    for dc in range(1, D + 1):
        if D % dc == 0 and dc * H * W <= max_rows:
            best = dc
    return best


def _vmem_limit_bytes(need_bytes):
    # 2x headroom over the static per-call estimate, clamped to [16, 96] MiB.
    return int(min(96 * 2 ** 20, max(16 * 2 ** 20, 2 * need_bytes)))


def _conv3_bn_kernel(x_ref, w_ref, scale_ref, bias_ref, o_ref, acc_ref,
                     *, DC, H, W, relu):
    """3x3x3 conv (stride 1, pre-padded input) + BN affine (+ ReLU).

    x_ref:     (D+2, H+2, W+2, Cin)  bf16, resident for the whole batch element
    w_ref:     (3, 3, 3*Cin, Cout)   bf16, (kw, cin) folded into K
    scale_ref: (1, Cout) f32         bias_ref: (1, Cout) f32
    o_ref:     (DC*H*W, Cout)        output slab for grid point (n, depth-chunk)
    acc_ref:   (DC*H*W, Cout) f32    VMEM scratch accumulator
    """
    cin = x_ref.shape[-1]
    M = DC * H * W
    d0 = pl.program_id(1) * DC

    # Load the depth-halo window once per grid step; upcast to f32 so the
    # window slicing / lane-concat / flatten below stay in the native (8,128)
    # f32 layout (see TODO about bf16 MXU operands).
    xs = x_ref[pl.ds(d0, DC + 2)].astype(jnp.float32)      # (DC+2, H+2, W+2, Cin)

    # Fold the 3 kw taps into the channel (lane) dim once per grid step; every
    # (kd, kh) tap afterwards is a leading-dim slice (no data movement).
    xs_w = jnp.concatenate([xs[:, :, kw:kw + W, :] for kw in range(3)],
                           axis=-1)                        # (DC+2, H+2, W, 3*Cin)

    wf = w_ref[...].astype(jnp.float32)                    # (3, 3, 3*Cin, Cout)

    acc_ref[...] = jnp.zeros_like(acc_ref)
    for kd in range(3):
        for kh in range(3):
            lhs = xs_w[kd:kd + DC, kh:kh + H].reshape(M, 3 * cin)
            acc_ref[...] += jnp.dot(lhs, wf[kd, kh],
                                    preferred_element_type=jnp.float32)

    out = acc_ref[...] * scale_ref[...] + bias_ref[...]
    if relu:
        out = jnp.maximum(out, 0.0)
    o_ref[...] = out.astype(o_ref.dtype)


def _conv3_bn_res_kernel(x_ref, w_ref, scale_ref, bias_ref, res_ref, wres_ref,
                         o_ref, acc_ref, *, DC, H, W):
    """conv2 (3x3x3) + bn2 affine + residual 1x1x1 conv + final ReLU, fused."""
    cin = x_ref.shape[-1]
    M = DC * H * W
    d0 = pl.program_id(1) * DC

    xs = x_ref[pl.ds(d0, DC + 2)].astype(jnp.float32)
    xs_w = jnp.concatenate([xs[:, :, kw:kw + W, :] for kw in range(3)], axis=-1)
    wf = w_ref[...].astype(jnp.float32)

    acc_ref[...] = jnp.zeros_like(acc_ref)
    for kd in range(3):
        for kh in range(3):
            lhs = xs_w[kd:kd + DC, kh:kh + H].reshape(M, 3 * cin)
            acc_ref[...] += jnp.dot(lhs, wf[kd, kh],
                                    preferred_element_type=jnp.float32)

    out = acc_ref[...] * scale_ref[...] + bias_ref[...]
    # residual 1x1x1 conv == per-voxel channel matmul (bf16 operands, f32 acc)
    res = jnp.dot(res_ref[...], wres_ref[...], preferred_element_type=jnp.float32)
    o_ref[...] = jnp.maximum(out + res, 0.0).astype(o_ref.dtype)


def _conv3_bn_relu(x, w, scale, bias):
    """x: (N,D,H,W,Cin) bf16 (unpadded); w: (3,3,3*Cin,Cout) bf16 -> bf16 out."""
    N, D, H, W, Cin = x.shape
    Cout = w.shape[-1]
    DC = _pick_depth_chunk(D, H, W)
    M = DC * H * W

    xp = jnp.pad(x, ((0, 0), (1, 1), (1, 1), (1, 1), (0, 0)))

    need = (2 * (D + 2) * (H + 2) * (W + 2) * Cin * 2   # padded input block x2 bufs (bf16)
            + 2 * 27 * Cin * Cout * 2                   # folded weights x2 bufs
            + 4 * Cout * 4                              # scale + bias x2 bufs
            + 2 * M * Cout * 2                          # output block x2 bufs (bf16)
            + M * Cout * 4)                             # f32 accumulator scratch

    kern = functools.partial(_conv3_bn_kernel, DC=DC, H=H, W=W, relu=True)
    out = pl.pallas_call(
        kern,
        out_shape=jax.ShapeDtypeStruct((N, D // DC, M, Cout), jnp.bfloat16),
        grid=(N, D // DC),
        in_specs=[
            pl.BlockSpec((None, D + 2, H + 2, W + 2, Cin),
                         lambda n, d: (n, 0, 0, 0, 0)),
            pl.BlockSpec((3, 3, 3 * Cin, Cout), lambda n, d: (0, 0, 0, 0)),
            pl.BlockSpec((1, Cout), lambda n, d: (0, 0)),
            pl.BlockSpec((1, Cout), lambda n, d: (0, 0)),
        ],
        out_specs=pl.BlockSpec((None, None, M, Cout), lambda n, d: (n, d, 0, 0)),
        scratch_shapes=[pltpu.VMEM((M, Cout), jnp.float32)],
        compiler_params=pltpu.CompilerParams(
            dimension_semantics=("parallel", "parallel"),
            vmem_limit_bytes=_vmem_limit_bytes(need)),
    )(xp, w, scale.reshape(1, Cout), bias.reshape(1, Cout))
    return out.reshape(N, D, H, W, Cout)


def _conv3_bn_add_res_relu(x, w, scale, bias, res, wres):
    """x: (N,D,H,W,Cin) bf16; res: (N,D,H,W,Cres) bf16; wres: (Cres,Cout) bf16."""
    N, D, H, W, Cin = x.shape
    Cout = w.shape[-1]
    Cres = res.shape[-1]
    DC = _pick_depth_chunk(D, H, W)
    M = DC * H * W

    xp = jnp.pad(x, ((0, 0), (1, 1), (1, 1), (1, 1), (0, 0)))
    res_flat = res.reshape(N, D // DC, M, Cres)

    need = (2 * (D + 2) * (H + 2) * (W + 2) * Cin * 2
            + 2 * 27 * Cin * Cout * 2
            + 4 * Cout * 4
            + 2 * M * Cres * 2
            + 2 * Cres * Cout * 2
            + 2 * M * Cout * 4
            + M * Cout * 4)

    kern = functools.partial(_conv3_bn_res_kernel, DC=DC, H=H, W=W)
    out = pl.pallas_call(
        kern,
        out_shape=jax.ShapeDtypeStruct((N, D // DC, M, Cout), jnp.float32),
        grid=(N, D // DC),
        in_specs=[
            pl.BlockSpec((None, D + 2, H + 2, W + 2, Cin),
                         lambda n, d: (n, 0, 0, 0, 0)),
            pl.BlockSpec((3, 3, 3 * Cin, Cout), lambda n, d: (0, 0, 0, 0)),
            pl.BlockSpec((1, Cout), lambda n, d: (0, 0)),
            pl.BlockSpec((1, Cout), lambda n, d: (0, 0)),
            pl.BlockSpec((None, None, M, Cres), lambda n, d: (n, d, 0, 0)),
            pl.BlockSpec((Cres, Cout), lambda n, d: (0, 0)),
        ],
        out_specs=pl.BlockSpec((None, None, M, Cout), lambda n, d: (n, d, 0, 0)),
        scratch_shapes=[pltpu.VMEM((M, Cout), jnp.float32)],
        compiler_params=pltpu.CompilerParams(
            dimension_semantics=("parallel", "parallel"),
            vmem_limit_bytes=_vmem_limit_bytes(need)),
    )(xp, w, scale.reshape(1, Cout), bias.reshape(1, Cout), res_flat, wres)
    return out.reshape(N, D, H, W, Cout)


def basic_block_forward(x_ncdhw, params):
    """BasicBlock forward (stride=1, downsample=None).  BatchNorm3d runs in
    eval/inference mode (running statistics folded into per-channel scale/bias).
    # TODO(synk): training-mode BN batch statistics, stride>1 and the external
    # `downsample` module are not implemented.
    """
    x = jnp.transpose(x_ncdhw, (0, 2, 3, 4, 1))          # NCDHW -> NDHWC
    x = x.astype(jnp.bfloat16)                           # bf16 activations in HBM/VMEM
    Cin = x.shape[-1]

    w1 = params["w1"]                                    # (3,3,3,Cin,P)
    w2 = params["w2"]                                    # (3,3,3,P,P)
    P = w1.shape[-1]
    # fold the kw tap into the contraction dim: (kd, kh, kw*Cin, Cout)
    w1f = w1.reshape(3, 3, 3 * Cin, P).astype(jnp.bfloat16)
    w2f = w2.reshape(3, 3, 3 * P, P).astype(jnp.bfloat16)

    scale1 = (params["gamma1"] / jnp.sqrt(params["var1"] + BN_EPS)).astype(jnp.float32)
    bias1 = (params["beta1"] - params["mean1"] * scale1).astype(jnp.float32)
    scale2 = (params["gamma2"] / jnp.sqrt(params["var2"] + BN_EPS)).astype(jnp.float32)
    bias2 = (params["beta2"] - params["mean2"] * scale2).astype(jnp.float32)

    y1 = _conv3_bn_relu(x, w1f, scale1, bias1)           # (N,D,H,W,P) bf16

    wres = params["wres"]
    if wres is None:  # identity residual: only valid when inplanes == planes
        if Cin != P:
            raise ValueError("identity residual requires inplanes == planes "
                             f"(got {Cin} != {P}); supply a 1x1x1 res_conv weight")
        wres = jnp.eye(Cin, dtype=jnp.float32)
    wres = wres.astype(jnp.bfloat16)                     # (Cin, P)

    out = _conv3_bn_add_res_relu(y1, w2f, scale2, bias2, x, wres)
    return jnp.transpose(out, (0, 4, 1, 2, 3))           # NDHWC -> NCDHW


def _ref_forward(x, w1, g1, b1, m1, v1, w2, g2, b2, m2, v2, wres):
    """Pure-JAX reference (PyTorch NCDHW / OIDHW layouts), eval-mode BN.
    Activations / weights are rounded to bf16 (matching the kernel's storage
    precision); all conv math and the BN affine run in f32."""
    dn = ("NCDHW", "OIDHW", "NCDHW")
    q = lambda a: a.astype(jnp.bfloat16).astype(jnp.float32)

    def bn(y, g, b, m, v):
        inv = g / jnp.sqrt(v + BN_EPS)
        return (y * inv[None, :, None, None, None]
                + (b - m * inv)[None, :, None, None, None])

    xq = q(x)
    out = jax.nn.relu(bn(lax.conv_general_dilated(
        xq, q(w1), (1, 1, 1), [(1, 1)] * 3, dimension_numbers=dn),
        g1, b1, m1, v1))
    out = bn(lax.conv_general_dilated(
        q(out), q(w2), (1, 1, 1), [(1, 1)] * 3, dimension_numbers=dn),
        g2, b2, m2, v2)
    res = lax.conv_general_dilated(
        xq, q(wres), (1, 1, 1), [(0, 0)] * 3, dimension_numbers=dn)
    return jax.nn.relu(out + res)


if __name__ == "__main__":
    N, Cin, P, D, H, W = 2, 4, 8, 8, 8, 8   # inplanes=4, planes=8 -> res_conv used

    key = jax.random.PRNGKey(0)
    ks = jax.random.split(key, 12)
    x = jax.random.normal(ks[0], (N, Cin, D, H, W), jnp.float32)

    # Deterministic synthetic parameters (PyTorch Conv3d weight layout OIDHW).
    w1 = jax.random.normal(ks[1], (P, Cin, 3, 3, 3), jnp.float32) / jnp.sqrt(27.0 * Cin)
    w2 = jax.random.normal(ks[2], (P, P, 3, 3, 3), jnp.float32) / jnp.sqrt(27.0 * P)
    wres = jax.random.normal(ks[3], (P, Cin, 1, 1, 1), jnp.float32) / jnp.sqrt(1.0 * Cin)
    g1 = jax.random.uniform(ks[4], (P,), jnp.float32, 0.5, 1.5)
    b1 = 0.1 * jax.random.normal(ks[5], (P,), jnp.float32)
    m1 = 0.1 * jax.random.normal(ks[6], (P,), jnp.float32)
    v1 = jax.random.uniform(ks[7], (P,), jnp.float32, 0.5, 1.5)
    g2 = jax.random.uniform(ks[8], (P,), jnp.float32, 0.5, 1.5)
    b2 = 0.1 * jax.random.normal(ks[9], (P,), jnp.float32)
    m2 = 0.1 * jax.random.normal(ks[10], (P,), jnp.float32)
    v2 = jax.random.uniform(ks[11], (P,), jnp.float32, 0.5, 1.5)

    params = dict(
        w1=jnp.transpose(w1, (2, 3, 4, 1, 0)),      # (3,3,3,Cin,Cout) for the kernel
        w2=jnp.transpose(w2, (2, 3, 4, 1, 0)),
        wres=wres[:, :, 0, 0, 0].T,                 # (Cin, Cout)
        gamma1=g1, beta1=b1, mean1=m1, var1=v1,
        gamma2=g2, beta2=b2, mean2=m2, var2=v2,
    )

    out = jax.block_until_ready(basic_block_forward(x, params))
    ref = jax.block_until_ready(
        _ref_forward(x, w1, g1, b1, m1, v1, w2, g2, b2, m2, v2, wres))

    assert out.shape == (N, P, D, H, W), out.shape
    err = float(jnp.max(jnp.abs(out - ref)))
    assert jnp.allclose(out, ref, rtol=5e-3, atol=5e-3), f"max abs err = {err}"
    print("KERNEL_OK")
</pallas_src>

<mosaic_0001>
module attributes {stable_mosaic.version = 11 : i64} {
  func.func @_conv3_bn_kernel(%arg0: i32, %arg1: i32, %arg2: memref<1x10x10x10x4xbf16, #tpu.memory_space<vmem>>, %arg3: memref<3x3x12x8xbf16, #tpu.memory_space<vmem>>, %arg4: memref<1x8xf32, #tpu.memory_space<vmem>>, %arg5: memref<1x8xf32, #tpu.memory_space<vmem>>, %arg6: memref<1x1x512x8xbf16, #tpu.memory_space<vmem>>, %arg7: memref<512x8xf32, #tpu.memory_space<vmem>>) attributes {dimension_semantics = [#tpu.dimension_semantics<parallel>, #tpu.dimension_semantics<parallel>], iteration_bounds = array<i64: 2, 1>, scalar_prefetch = 0 : i64, scratch_operands = 1 : i64, tpu.core_type = #tpu.core_type<tc>, window_params = [{transform_indices = @transform_0, window_bounds = array<i64: 1, 10, 10, 10, 4>}, {pipeline_mode = #tpu.pipeline_mode<synchronous>, transform_indices = @transform_1, window_bounds = array<i64: 3, 3, 12, 8>}, {pipeline_mode = #tpu.pipeline_mode<synchronous>, transform_indices = @transform_2, window_bounds = array<i64: 1, 8>}, {pipeline_mode = #tpu.pipeline_mode<synchronous>, transform_indices = @transform_3, window_bounds = array<i64: 1, 8>}, {transform_indices = @transform_4, window_bounds = array<i64: 1, 1, 512, 8>}]} {
    %c8_i32 = arith.constant 8 : i32
    %0 = arith.muli %arg1, %c8_i32 : i32
    %c0 = arith.constant 0 : index
    %1 = arith.index_cast %0 : i32 to index
    %c0_0 = arith.constant 0 : index
    %c0_1 = arith.constant 0 : index
    %c0_2 = arith.constant 0 : index
    %2 = vector.load %arg2[%c0, %1, %c0_0, %c0_1, %c0_2] : memref<1x10x10x10x4xbf16, #tpu.memory_space<vmem>>, vector<1x10x10x10x4xbf16>
    %3 = vector.shape_cast %2 : vector<1x10x10x10x4xbf16> to vector<10x10x10x4xbf16>
    %4 = arith.extf %3 : vector<10x10x10x4xbf16> to vector<10x10x10x4xf32>
    %5 = vector.extract_strided_slice %4 {offsets = [0, 0, 0, 0], sizes = [10, 10, 8, 4], strides = [1, 1, 1, 1]} : vector<10x10x10x4xf32> to vector<10x10x8x4xf32>
    %6 = vector.extract_strided_slice %4 {offsets = [0, 0, 1, 0], sizes = [10, 10, 8, 4], strides = [1, 1, 1, 1]} : vector<10x10x10x4xf32> to vector<10x10x8x4xf32>
    %7 = vector.extract_strided_slice %4 {offsets = [0, 0, 2, 0], sizes = [10, 10, 8, 4], strides = [1, 1, 1, 1]} : vector<10x10x10x4xf32> to vector<10x10x8x4xf32>
    %8 = tpu.concatenate %5, %6, %7 in 3 : vector<10x10x8x4xf32>, vector<10x10x8x4xf32>, vector<10x10x8x4xf32> -> vector<10x10x8x12xf32>
    %c0_3 = arith.constant 0 : index
    %c0_4 = arith.constant 0 : index
    %c0_5 = arith.constant 0 : index
    %c0_6 = arith.constant 0 : index
    %9 = vector.load %arg3[%c0_3, %c0_4, %c0_5, %c0_6] : memref<3x3x12x8xbf16, #tpu.memory_space<vmem>>, vector<3x3x12x8xbf16>
    %10 = arith.extf %9 : vector<3x3x12x8xbf16> to vector<3x3x12x8xf32>
    %cst = arith.constant 0.000000e+00 : f32
    %11 = vector.broadcast %cst : f32 to vector<512x8xf32>
    %c0_7 = arith.constant 0 : index
    %c0_8 = arith.constant 0 : index
    %12 = vector.load %arg7[%c0_7, %c0_8] : memref<512x8xf32, #tpu.memory_space<vmem>>, vector<512x8xf32>
    tpu.vector_store %arg7[%c0_7, %c0_8], %11 {strides = array<i32>} : memref<512x8xf32, #tpu.memory_space<vmem>>, vector<512x8xf32>,
    %13 = vector.extract_strided_slice %8 {offsets = [0, 0, 0, 0], sizes = [8, 8, 8, 12], strides = [1, 1, 1, 1]} : vector<10x10x8x12xf32> to vector<8x8x8x12xf32>
    %14 = vector.shape_cast %13 : vector<8x8x8x12xf32> to vector<512x12xf32>
    %c0_9 = arith.constant 0 : index
    %c0_10 = arith.constant 0 : index
    %15 = vector.load %arg7[%c0_9, %c0_10] : memref<512x8xf32, #tpu.memory_space<vmem>>, vector<512x8xf32>
    %16 = vector.extract_strided_slice %10 {offsets = [0, 0, 0, 0], sizes = [1, 1, 12, 8], strides = [1, 1, 1, 1]} : vector<3x3x12x8xf32> to vector<1x1x12x8xf32>
    %17 = vector.shape_cast %16 : vector<1x1x12x8xf32> to vector<12x8xf32>
    %cst_11 = arith.constant dense<0.000000e+00> : vector<512x8xf32>
    %18 = tpu.matmul %14, %17, %cst_11 {dimension_numbers = #tpu.dot_dimension_numbers<[1], [0], [0], [1], [0, 0, 1, 1], [], []>} : vector<512x12xf32>, vector<12x8xf32>, vector<512x8xf32> -> vector<512x8xf32>
    %19 = arith.addf %15, %18 : vector<512x8xf32>
    %c0_12 = arith.constant 0 : index
    %c0_13 = arith.constant 0 : index
    %20 = vector.load %arg7[%c0_12, %c0_13] : memref<512x8xf32, #tpu.memory_space<vmem>>, vector<512x8xf32>
    tpu.vector_store %arg7[%c0_12, %c0_13], %19 {strides = array<i32>} : memref<512x8xf32, #tpu.memory_space<vmem>>, vector<512x8xf32>,
    %21 = vector.extract_strided_slice %8 {offsets = [0, 1, 0, 0], sizes = [8, 8, 8, 12], strides = [1, 1, 1, 1]} : vector<10x10x8x12xf32> to vector<8x8x8x12xf32>
    %22 = vector.shape_cast %21 : vector<8x8x8x12xf32> to vector<512x12xf32>
    %c0_14 = arith.constant 0 : index
    %c0_15 = arith.constant 0 : index
    %23 = vector.load %arg7[%c0_14, %c0_15] : memref<512x8xf32, #tpu.memory_space<vmem>>, vector<512x8xf32>
    %24 = vector.extract_strided_slice %10 {offsets = [0, 1, 0, 0], sizes = [1, 1, 12, 8], strides = [1, 1, 1, 1]} : vector<3x3x12x8xf32> to vector<1x1x12x8xf32>
    %25 = vector.shape_cast %24 : vector<1x1x12x8xf32> to vector<12x8xf32>
    %cst_16 = arith.constant dense<0.000000e+00> : vector<512x8xf32>
    %26 = tpu.matmul %22, %25, %cst_16 {dimension_numbers = #tpu.dot_dimension_numbers<[1], [0], [0], [1], [0, 0, 1, 1], [], []>} : vector<512x12xf32>, vector<12x8xf32>, vector<512x8xf32> -> vector<512x8xf32>
    %27 = arith.addf %23, %26 : vector<512x8xf32>
    %c0_17 = arith.constant 0 : index
    %c0_18 = arith.constant 0 : index
    %28 = vector.load %arg7[%c0_17, %c0_18] : memref<512x8xf32, #tpu.memory_space<vmem>>, vector<512x8xf32>
    tpu.vector_store %arg7[%c0_17, %c0_18], %27 {strides = array<i32>} : memref<512x8xf32, #tpu.memory_space<vmem>>, vector<512x8xf32>,
    %29 = vector.extract_strided_slice %8 {offsets = [0, 2, 0, 0], sizes = [8, 8, 8, 12], strides = [1, 1, 1, 1]} : vector<10x10x8x12xf32> to vector<8x8x8x12xf32>
    %30 = vector.shape_cast %29 : vector<8x8x8x12xf32> to vector<512x12xf32>
    %c0_19 = arith.constant 0 : index
    %c0_20 = arith.constant 0 : index
    %31 = vector.load %arg7[%c0_19, %c0_20] : memref<512x8xf32, #tpu.memory_space<vmem>>, vector<512x8xf32>
    %32 = vector.extract_strided_slice %10 {offsets = [0, 2, 0, 0], sizes = [1, 1, 12, 8], strides = [1, 1, 1, 1]} : vector<3x3x12x8xf32> to vector<1x1x12x8xf32>
    %33 = vector.shape_cast %32 : vector<1x1x12x8xf32> to vector<12x8xf32>
    %cst_21 = arith.constant dense<0.000000e+00> : vector<512x8xf32>
    %34 = tpu.matmul %30, %33, %cst_21 {dimension_numbers = #tpu.dot_dimension_numbers<[1], [0], [0], [1], [0, 0, 1, 1], [], []>} : vector<512x12xf32>, vector<12x8xf32>, vector<512x8xf32> -> vector<512x8xf32>
    %35 = arith.addf %31, %34 : vector<512x8xf32>
    %c0_22 = arith.constant 0 : index
    %c0_23 = arith.constant 0 : index
    %36 = vector.load %arg7[%c0_22, %c0_23] : memref<512x8xf32, #tpu.memory_space<vmem>>, vector<512x8xf32>
    tpu.vector_store %arg7[%c0_22, %c0_23], %35 {strides = array<i32>} : memref<512x8xf32, #tpu.memory_space<vmem>>, vector<512x8xf32>,
    %37 = vector.extract_strided_slice %8 {offsets = [1, 0, 0, 0], sizes = [8, 8, 8, 12], strides = [1, 1, 1, 1]} : vector<10x10x8x12xf32> to vector<8x8x8x12xf32>
    %38 = vector.shape_cast %37 : vector<8x8x8x12xf32> to vector<512x12xf32>
    %c0_24 = arith.constant 0 : index
    %c0_25 = arith.constant 0 : index
    %39 = vector.load %arg7[%c0_24, %c0_25] : memref<512x8xf32, #tpu.memory_space<vmem>>, vector<512x8xf32>
    %40 = vector.extract_strided_slice %10 {offsets = [1, 0, 0, 0], sizes = [1, 1, 12, 8], strides = [1, 1, 1, 1]} : vector<3x3x12x8xf32> to vector<1x1x12x8xf32>
    %41 = vector.shape_cast %40 : vector<1x1x12x8xf32> to vector<12x8xf32>
    %cst_26 = arith.constant dense<0.000000e+00> : vector<512x8xf32>
    %42 = tpu.matmul %38, %41, %cst_26 {dimension_numbers = #tpu.dot_dimension_numbers<[1], [0], [0], [1], [0, 0, 1, 1], [], []>} : vector<512x12xf32>, vector<12x8xf32>, vector<512x8xf32> -> vector<512x8xf32>
    %43 = arith.addf %39, %42 : vector<512x8xf32>
    %c0_27 = arith.constant 0 : index
    %c0_28 = arith.constant 0 : index
    %44 = vector.load %arg7[%c0_27, %c0_28] : memref<512x8xf32, #tpu.memory_space<vmem>>, vector<512x8xf32>
    tpu.vector_store %arg7[%c0_27, %c0_28], %43 {strides = array<i32>} : memref<512x8xf32, #tpu.memory_space<vmem>>, vector<512x8xf32>,
    %45 = vector.extract_strided_slice %8 {offsets = [1, 1, 0, 0], sizes = [8, 8, 8, 12], strides = [1, 1, 1, 1]} : vector<10x10x8x12xf32> to vector<8x8x8x12xf32>
    %46 = vector.shape_cast %45 : vector<8x8x8x12xf32> to vector<512x12xf32>
    %c0_29 = arith.constant 0 : index
    %c0_30 = arith.constant 0 : index
    %47 = vector.load %arg7[%c0_29, %c0_30] : memref<512x8xf32, #tpu.memory_space<vmem>>, vector<512x8xf32>
    %48 = vector.extract_strided_slice %10 {offsets = [1, 1, 0, 0], sizes = [1, 1, 12, 8], strides = [1, 1, 1, 1]} : vector<3x3x12x8xf32> to vector<1x1x12x8xf32>
    %49 = vector.shape_cast %48 : vector<1x1x12x8xf32> to vector<12x8xf32>
    %cst_31 = arith.constant dense<0.000000e+00> : vector<512x8xf32>
    %50 = tpu.matmul %46, %49, %cst_31 {dimension_numbers = #tpu.dot_dimension_numbers<[1], [0], [0], [1], [0, 0, 1, 1], [], []>} : vector<512x12xf32>, vector<12x8xf32>, vector<512x8xf32> -> vector<512x8xf32>
    %51 = arith.addf %47, %50 : vector<512x8xf32>
    %c0_32 = arith.constant 0 : index
    %c0_33 = arith.constant 0 : index
    %52 = vector.load %arg7[%c0_32, %c0_33] : memref<512x8xf32, #tpu.memory_space<vmem>>, vector<512x8xf32>
    tpu.vector_store %arg7[%c0_32, %c0_33], %51 {strides = array<i32>} : memref<512x8xf32, #tpu.memory_space<vmem>>, vector<512x8xf32>,
    %53 = vector.extract_strided_slice %8 {offsets = [1, 2, 0, 0], sizes = [8, 8, 8, 12], strides = [1, 1, 1, 1]} : vector<10x10x8x12xf32> to vector<8x8x8x12xf32>
    %54 = vector.shape_cast %53 : vector<8x8x8x12xf32> to vector<512x12xf32>
    %c0_34 = arith.constant 0 : index
    %c0_35 = arith.constant 0 : index
    %55 = vector.load %arg7[%c0_34, %c0_35] : memref<512x8xf32, #tpu.memory_space<vmem>>, vector<512x8xf32>
    %56 = vector.extract_strided_slice %10 {offsets = [1, 2, 0, 0], sizes = [1, 1, 12, 8], strides = [1, 1, 1, 1]} : vector<3x3x12x8xf32> to vector<1x1x12x8xf32>
    %57 = vector.shape_cast %56 : vector<1x1x12x8xf32> to vector<12x8xf32>
    %cst_36 = arith.constant dense<0.000000e+00> : vector<512x8xf32>
    %58 = tpu.matmul %54, %57, %cst_36 {dimension_numbers = #tpu.dot_dimension_numbers<[1], [0], [0], [1], [0, 0, 1, 1], [], []>} : vector<512x12xf32>, vector<12x8xf32>, vector<512x8xf32> -> vector<512x8xf32>
    %59 = arith.addf %55, %58 : vector<512x8xf32>
    %c0_37 = arith.constant 0 : index
    %c0_38 = arith.constant 0 : index
    %60 = vector.load %arg7[%c0_37, %c0_38] : memref<512x8xf32, #tpu.memory_space<vmem>>, vector<512x8xf32>
    tpu.vector_store %arg7[%c0_37, %c0_38], %59 {strides = array<i32>} : memref<512x8xf32, #tpu.memory_space<vmem>>, vector<512x8xf32>,
    %61 = vector.extract_strided_slice %8 {offsets = [2, 0, 0, 0], sizes = [8, 8, 8, 12], strides = [1, 1, 1, 1]} : vector<10x10x8x12xf32> to vector<8x8x8x12xf32>
    %62 = vector.shape_cast %61 : vector<8x8x8x12xf32> to vector<512x12xf32>
    %c0_39 = arith.constant 0 : index
    %c0_40 = arith.constant 0 : index
    %63 = vector.load %arg7[%c0_39, %c0_40] : memref<512x8xf32, #tpu.memory_space<vmem>>, vector<512x8xf32>
    %64 = vector.extract_strided_slice %10 {offsets = [2, 0, 0, 0], sizes = [1, 1, 12, 8], strides = [1, 1, 1, 1]} : vector<3x3x12x8xf32> to vector<1x1x12x8xf32>
    %65 = vector.shape_cast %64 : vector<1x1x12x8xf32> to vector<12x8xf32>
    %cst_41 = arith.constant dense<0.000000e+00> : vector<512x8xf32>
    %66 = tpu.matmul %62, %65, %cst_41 {dimension_numbers = #tpu.dot_dimension_numbers<[1], [0], [0], [1], [0, 0, 1, 1], [], []>} : vector<512x12xf32>, vector<12x8xf32>, vector<512x8xf32> -> vector<512x8xf32>
    %67 = arith.addf %63, %66 : vector<512x8xf32>
    %c0_42 = arith.constant 0 : index
    %c0_43 = arith.constant 0 : index
    %68 = vector.load %arg7[%c0_42, %c0_43] : memref<512x8xf32, #tpu.memory_space<vmem>>, vector<512x8xf32>
    tpu.vector_store %arg7[%c0_42, %c0_43], %67 {strides = array<i32>} : memref<512x8xf32, #tpu.memory_space<vmem>>, vector<512x8xf32>,
    %69 = vector.extract_strided_slice %8 {offsets = [2, 1, 0, 0], sizes = [8, 8, 8, 12], strides = [1, 1, 1, 1]} : vector<10x10x8x12xf32> to vector<8x8x8x12xf32>
    %70 = vector.shape_cast %69 : vector<8x8x8x12xf32> to vector<512x12xf32>
    %c0_44 = arith.constant 0 : index
    %c0_45 = arith.constant 0 : index
    %71 = vector.load %arg7[%c0_44, %c0_45] : memref<512x8xf32, #tpu.memory_space<vmem>>, vector<512x8xf32>
    %72 = vector.extract_strided_slice %10 {offsets = [2, 1, 0, 0], sizes = [1, 1, 12, 8], strides = [1, 1, 1, 1]} : vector<3x3x12x8xf32> to vector<1x1x12x8xf32>
    %73 = vector.shape_cast %72 : vector<1x1x12x8xf32> to vector<12x8xf32>
    %cst_46 = arith.constant dense<0.000000e+00> : vector<512x8xf32>
    %74 = tpu.matmul %70, %73, %cst_46 {dimension_numbers = #tpu.dot_dimension_numbers<[1], [0], [0], [1], [0, 0, 1, 1], [], []>} : vector<512x12xf32>, vector<12x8xf32>, vector<512x8xf32> -> vector<512x8xf32>
    %75 = arith.addf %71, %74 : vector<512x8xf32>
    %c0_47 = arith.constant 0 : index
    %c0_48 = arith.constant 0 : index
    %76 = vector.load %arg7[%c0_47, %c0_48] : memref<512x8xf32, #tpu.memory_space<vmem>>, vector<512x8xf32>
    tpu.vector_store %arg7[%c0_47, %c0_48], %75 {strides = array<i32>} : memref<512x8xf32, #tpu.memory_space<vmem>>, vector<512x8xf32>,
    %77 = vector.extract_strided_slice %8 {offsets = [2, 2, 0, 0], sizes = [8, 8, 8, 12], strides = [1, 1, 1, 1]} : vector<10x10x8x12xf32> to vector<8x8x8x12xf32>
    %78 = vector.shape_cast %77 : vector<8x8x8x12xf32> to vector<512x12xf32>
    %c0_49 = arith.constant 0 : index
    %c0_50 = arith.constant 0 : index
    %79 = vector.load %arg7[%c0_49, %c0_50] : memref<512x8xf32, #tpu.memory_space<vmem>>, vector<512x8xf32>
    %80 = vector.extract_strided_slice %10 {offsets = [2, 2, 0, 0], sizes = [1, 1, 12, 8], strides = [1, 1, 1, 1]} : vector<3x3x12x8xf32> to vector<1x1x12x8xf32>
    %81 = vector.shape_cast %80 : vector<1x1x12x8xf32> to vector<12x8xf32>
    %cst_51 = arith.constant dense<0.000000e+00> : vector<512x8xf32>
    %82 = tpu.matmul %78, %81, %cst_51 {dimension_numbers = #tpu.dot_dimension_numbers<[1], [0], [0], [1], [0, 0, 1, 1], [], []>} : vector<512x12xf32>, vector<12x8xf32>, vector<512x8xf32> -> vector<512x8xf32>
    %83 = arith.addf %79, %82 : vector<512x8xf32>
    %c0_52 = arith.constant 0 : index
    %c0_53 = arith.constant 0 : index
    %84 = vector.load %arg7[%c0_52, %c0_53] : memref<512x8xf32, #tpu.memory_space<vmem>>, vector<512x8xf32>
    tpu.vector_store %arg7[%c0_52, %c0_53], %83 {strides = array<i32>} : memref<512x8xf32, #tpu.memory_space<vmem>>, vector<512x8xf32>,
    %c0_54 = arith.constant 0 : index
    %c0_55 = arith.constant 0 : index
    %85 = vector.load %arg7[%c0_54, %c0_55] : memref<512x8xf32, #tpu.memory_space<vmem>>, vector<512x8xf32>
    %c0_56 = arith.constant 0 : index
    %c0_57 = arith.constant 0 : index
    %86 = vector.load %arg4[%c0_56, %c0_57] : memref<1x8xf32, #tpu.memory_space<vmem>>, vector<1x8xf32>
    %87 = vector.broadcast %86 : vector<1x8xf32> to vector<512x8xf32>
    %88 = arith.mulf %85, %87 : vector<512x8xf32>
    %c0_58 = arith.constant 0 : index
    %c0_59 = arith.constant 0 : index
    %89 = vector.load %arg5[%c0_58, %c0_59] : memref<1x8xf32, #tpu.memory_space<vmem>>, vector<1x8xf32>
    %90 = vector.broadcast %89 : vector<1x8xf32> to vector<512x8xf32>
    %91 = arith.addf %88, %90 : vector<512x8xf32>
    %cst_60 = arith.constant 0.000000e+00 : f32
    %92 = vector.broadcast %cst_60 : f32 to vector<512x8xf32>
    %93 = arith.maximumf %91, %92 : vector<512x8xf32>
    %94 = arith.truncf %93 : vector<512x8xf32> to vector<512x8xbf16>
    %c0_61 = arith.constant 0 : index
    %c0_62 = arith.constant 0 : index
    %c0_63 = arith.constant 0 : index
    %c0_64 = arith.constant 0 : index
    %95 = vector.load %arg6[%c0_61, %c0_62, %c0_63, %c0_64] : memref<1x1x512x8xbf16, #tpu.memory_space<vmem>>, vector<1x1x512x8xbf16>
    %96 = vector.shape_cast %95 : vector<1x1x512x8xbf16> to vector<512x8xbf16>
    %97 = vector.shape_cast %94 : vector<512x8xbf16> to vector<1x1x512x8xbf16>
    tpu.vector_store %arg6[%c0_61, %c0_62, %c0_63, %c0_64], %97 {strides = array<i32>} : memref<1x1x512x8xbf16, #tpu.memory_space<vmem>>, vector<1x1x512x8xbf16>,
    return
  }
  func.func @transform_0(%arg0: i32, %arg1: i32) -> (i32, i32, i32, i32, i32) {
    %c0_i32 = arith.constant 0 : i32
    %c0_i32_0 = arith.constant 0 : i32
    %c0_i32_1 = arith.constant 0 : i32
    %c0_i32_2 = arith.constant 0 : i32
    %c0_i32_3 = arith.constant 0 : i32
    return %arg0, %c0_i32, %c0_i32_0, %c0_i32_1, %c0_i32_2 : i32, i32, i32, i32, i32
  }
  func.func @transform_1(%arg0: i32, %arg1: i32) -> (i32, i32, i32, i32) {
    %c0_i32 = arith.constant 0 : i32
    %c0_i32_0 = arith.constant 0 : i32
    %c0_i32_1 = arith.constant 0 : i32
    %c0_i32_2 = arith.constant 0 : i32
    %c0_i32_3 = arith.constant 0 : i32
    return %c0_i32, %c0_i32_0, %c0_i32_1, %c0_i32_2 : i32, i32, i32, i32
  }
  func.func @transform_2(%arg0: i32, %arg1: i32) -> (i32, i32) {
    %c0_i32 = arith.constant 0 : i32
    %c0_i32_0 = arith.constant 0 : i32
    %c0_i32_1 = arith.constant 0 : i32
    return %c0_i32, %c0_i32_0 : i32, i32
  }
  func.func @transform_3(%arg0: i32, %arg1: i32) -> (i32, i32) {
    %c0_i32 = arith.constant 0 : i32
    %c0_i32_0 = arith.constant 0 : i32
    %c0_i32_1 = arith.constant 0 : i32
    return %c0_i32, %c0_i32_0 : i32, i32
  }
  func.func @transform_4(%arg0: i32, %arg1: i32) -> (i32, i32, i32, i32) {
    %c0_i32 = arith.constant 0 : i32
    %c0_i32_0 = arith.constant 0 : i32
    %c0_i32_1 = arith.constant 0 : i32
    return %arg0, %arg1, %c0_i32, %c0_i32_0 : i32, i32, i32, i32
  }
}

</mosaic_0001>

<llo_original>
// kernel: tpu_custom_call.1
$region0: #{tpu_custom_call.1}
  #allocation0 [shape = 'u32[]', space=smem, size = 0x4, offset = 0x4, fixed_abs, tag = 'smem constant byte address 0x4 - core index']
  #allocation1 [shape = 'u32[144,128]{1,0:T(1,128)}', space=vmem, size = 0x12000, scoped, tag = 'internal scratch']
  #allocation2 [shape = 'f32[512,8]{1,0:T(8,128)}', space=vmem, size = 0x40000, scoped, tag = 'scratch operand']
  %s0 = inlined_call_operand.vmem [shape: bf16[2,10,10,10,4], index: 0, kind: input, shape index: {}]
  %s1 = inlined_call_operand.vmem [shape: bf16[3,3,12,8], index: 1, kind: input, shape index: {}]
  %s2 = inlined_call_operand.vmem [shape: f32[1,8], index: 2, kind: input, shape index: {}]
  %s3 = inlined_call_operand.vmem [shape: f32[1,8], index: 3, kind: input, shape index: {}]
  %s4 = inlined_call_operand.vmem [shape: bf16[2,1,512,8], index: 4, kind: output, shape index: {}]
  %s5 = sld [smem:[#allocation0]]
  $region49: #{tpu_custom_call.1} parent=0
    _
  %s7 = ssub.s32 1, %s5
  %s8 = scalar_select 0, %s7, %s5
  loop: start=0, step=1, limit=4
  $region2: #{tpu_custom_call.1} parent=0 // loop_pre_header
    _
  $region3: #{tpu_custom_call.1} parent=0 // loop_header
    %s10 = sphi 0, %s14
    %p11 = scmp.ge.s32.totalorder %s10, 4
    %s17 = sphi 0, %s29
    %s18 = sphi 0, %s25
    %s19 = sphi 0, %s17
    %s20 = sphi 0, %s18
    %s21 = sphi 0, %s19
    %s22 = sphi 0, %s20
    %s32 = sphi 0, %s34
    %s35 = sphi 0, %s32
    %s36 = sphi 0, %s35
    %s52 = sphi 0, %s36
    %s56 = sphi 0, %s56
    %s58 = sphi 0, %s56
    %s59 = sphi 0, %s58
    %s73 = sphi 0, %s59
    %s77 = sphi 0, %s77
    %s79 = sphi 0, %s77
    %s80 = sphi 0, %s79
    %s94 = sphi 0, %s80
    %s98 = sphi 0, %s98
    %s100 = sphi 0, %s98
    %s101 = sphi 0, %s100
    %s115 = sphi 0, %s101
    %s123 = sphi 0, %s125
    %s126 = sphi 0, %s123
    %s127 = sphi 0, %s126
    %s143 = sphi 0, %s127
  $region4: #{tpu_custom_call.1} parent=0 // loop_header_branch
    %13 = sbr.rel (%p11) target = $region8
  $region5: #{tpu_custom_call.1} parent=0 // loop_body
    %s15 = ssub.s32 %s10, 1
    %s16 = ssub.s32 %s10, 2
    %s23 = sadd.s32 1, %s18
    %p24 = scmp.ge.s32.totalorder %s23, 1
    %s25 = scalar_select %p24, 0, %s23
    %s26 = sadd.s32 1, %s17
    %s27 = scalar_select %p24, %s26, %s17
    %p28 = scmp.ge.s32.totalorder %s27, 2
    %s29 = scalar_select %p28, 0, %s27
    %s30 = ssub.s32 %s17, %s29
    %p31 = scmp.eq.s32.totalorder %s30, 0
    %s33 = sadd.s32 %s32, 1
    %s34 = scalar_select %p31, %s32, %s33
    %p37 = pneg %p31
    %p38 = scmp.eq.s32.totalorder %s10, 1
    %p39 = por %p37, %p38
    %p40 = scmp.ne.s32.totalorder %s32, %s35
    %p41 = scmp.eq.s32.totalorder %s10, 0
    %p42 = por %p40, %p41
    %p43 = scmp.ne.s32.totalorder %s32, %s35
    %p44 = scmp.eq.s32.totalorder %s15, 1
    %p45 = por %p43, %p44
    %p46 = scmp.ne.s32.totalorder %s35, %s36
    %p47 = scmp.eq.s32.totalorder %s15, 0
    %p48 = por %p46, %p47
    %p49 = scmp.ne.s32.totalorder %s35, %s36
    %p50 = scmp.eq.s32.totalorder %s16, 1
    %p51 = por %p49, %p50
    %p53 = scmp.ne.s32.totalorder %s36, %s52
    %p54 = scmp.eq.s32.totalorder %s16, 0
    %p55 = por %p53, %p54
    %s57 = sadd.s32 %s56, 1
    %p60 = scmp.eq.s32.totalorder %s10, 1
    %p61 = scmp.ne.s32.totalorder %s56, %s58
    %p62 = scmp.eq.s32.totalorder %s10, 0
    %p63 = por %p61, %p62
    %p64 = scmp.ne.s32.totalorder %s56, %s58
    %p65 = scmp.eq.s32.totalorder %s15, 1
    %p66 = por %p64, %p65
    %p67 = scmp.ne.s32.totalorder %s58, %s59
    %p68 = scmp.eq.s32.totalorder %s15, 0
    %p69 = por %p67, %p68
    %p70 = scmp.ne.s32.totalorder %s58, %s59
    %p71 = scmp.eq.s32.totalorder %s16, 1
    %p72 = por %p70, %p71
    %p74 = scmp.ne.s32.totalorder %s59, %s73
    %p75 = scmp.eq.s32.totalorder %s16, 0
    %p76 = por %p74, %p75
    %s78 = sadd.s32 %s77, 1
    %p81 = scmp.eq.s32.totalorder %s10, 1
    %p82 = scmp.ne.s32.totalorder %s77, %s79
    %p83 = scmp.eq.s32.totalorder %s10, 0
    %p84 = por %p82, %p83
    %p85 = scmp.ne.s32.totalorder %s77, %s79
    %p86 = scmp.eq.s32.totalorder %s15, 1
    %p87 = por %p85, %p86
    %p88 = scmp.ne.s32.totalorder %s79, %s80
    %p89 = scmp.eq.s32.totalorder %s15, 0
    %p90 = por %p88, %p89
    %p91 = scmp.ne.s32.totalorder %s79, %s80
    %p92 = scmp.eq.s32.totalorder %s16, 1
    %p93 = por %p91, %p92
    %p95 = scmp.ne.s32.totalorder %s80, %s94
    %p96 = scmp.eq.s32.totalorder %s16, 0
    %p97 = por %p95, %p96
    %s99 = sadd.s32 %s98, 1
    %p102 = scmp.eq.s32.totalorder %s10, 1
    %p103 = scmp.ne.s32.totalorder %s98, %s100
    %p104 = scmp.eq.s32.totalorder %s10, 0
    %p105 = por %p103, %p104
    %p106 = scmp.ne.s32.totalorder %s98, %s100
    %p107 = scmp.eq.s32.totalorder %s15, 1
    %p108 = por %p106, %p107
    %p109 = scmp.ne.s32.totalorder %s100, %s101
    %p110 = scmp.eq.s32.totalorder %s15, 0
    %p111 = por %p109, %p110
    %p112 = scmp.ne.s32.totalorder %s100, %s101
    %p113 = scmp.eq.s32.totalorder %s16, 1
    %p114 = por %p112, %p113
    %p116 = scmp.ne.s32.totalorder %s101, %s115
    %p117 = scmp.eq.s32.totalorder %s16, 0
    %p118 = por %p116, %p117
    %s119 = ssub.s32 %s17, %s29
    %s120 = ssub.s32 %s18, %s25
    %s121 = sor.u32 %s119, %s120
    %p122 = scmp.eq.s32.totalorder %s121, 0
    %s124 = sadd.s32 %s123, 1
    %s125 = scalar_select %p122, %s123, %s124
    %p128 = pneg %p122
    %p129 = scmp.eq.s32.totalorder %s10, 1
    %p130 = por %p128, %p129
    %p131 = scmp.ne.s32.totalorder %s123, %s126
    %p132 = scmp.eq.s32.totalorder %s10, 0
    %p133 = por %p131, %p132
    %p134 = scmp.ne.s32.totalorder %s123, %s126
    %p135 = scmp.eq.s32.totalorder %s15, 1
    %p136 = por %p134, %p135
    %p137 = scmp.ne.s32.totalorder %s126, %s127
    %p138 = scmp.eq.s32.totalorder %s15, 0
    %p139 = por %p137, %p138
    %p140 = scmp.ne.s32.totalorder %s126, %s127
    %p141 = scmp.eq.s32.totalorder %s16, 1
    %p142 = por %p140, %p141
    %p144 = scmp.ne.s32.totalorder %s127, %s143
    %p145 = scmp.eq.s32.totalorder %s16, 0
    %p146 = por %p144, %p145
    %p147 = scmp.le.s32.totalorder 1, %s10
    %p148 = scmp.lt.s32.totalorder %s10, 3
    %p149 = pnand %p147, %p148
    %p150 = pneg %p149
    // Predicated region
    $region9: #{tpu_custom_call.1} parent=5 // pred_check
      _
    $region10: #{tpu_custom_call.1} parent=5 // pred_check_branch
      %152 = sbr.rel (%p149) target = $region12
    $region11: #{tpu_custom_call.1} parent=5 // pred_region
      %s153 = ssub.s32 %s10, 1
      // Predicated region
      $region13: #{tpu_custom_call.1} parent=11 // pred_check
        %p154 = pneg %p69
      $region14: #{tpu_custom_call.1} parent=11 // pred_check_branch
        %156 = sbr.rel (%p154) target = $region16
      $region15: #{tpu_custom_call.1} parent=11 // pred_region
        _
      $region16: #{tpu_custom_call.1} parent=11 // pred_fallthru
        _
      // Predicated region
      $region17: #{tpu_custom_call.1} parent=11 // pred_check
        %p157 = pneg %p90
      $region18: #{tpu_custom_call.1} parent=11 // pred_check_branch
        %159 = sbr.rel (%p157) target = $region20
      $region19: #{tpu_custom_call.1} parent=11 // pred_region
        _
      $region20: #{tpu_custom_call.1} parent=11 // pred_fallthru
        _
      // Predicated region
      $region21: #{tpu_custom_call.1} parent=11 // pred_check
        %p160 = pneg %p111
      $region22: #{tpu_custom_call.1} parent=11 // pred_check_branch
        %162 = sbr.rel (%p160) target = $region24
      $region23: #{tpu_custom_call.1} parent=11 // pred_region
        _
      $region24: #{tpu_custom_call.1} parent=11 // pred_fallthru
        _
    $region12: #{tpu_custom_call.1} parent=5 // pred_fallthru
      _
    %p163 = scmp.lt.s32.totalorder %s10, 2
    // Predicated region
    $region25: #{tpu_custom_call.1} parent=5 // pred_check
      %p164 = pneg %p163
    $region26: #{tpu_custom_call.1} parent=5 // pred_check_branch
      %166 = sbr.rel (%p164) target = $region28
    $region27: #{tpu_custom_call.1} parent=5 // pred_region
      // Predicated region
      $region29: #{tpu_custom_call.1} parent=27 // pred_check
        %p167 = pneg %p42
      $region30: #{tpu_custom_call.1} parent=27 // pred_check_branch
        %169 = sbr.rel (%p167) target = $region32
      $region31: #{tpu_custom_call.1} parent=27 // pred_region
        %p170 = scmp.lt.s32.totalorder %s17, 1
        %s171 = scalar_select %p170, %s17, 1
        %s172 = smul.addr %s171, 200
        %s173 = smul.addr %s172, 4
        %s174 = scalar_lea.vmem %s0, %s173
      $region32: #{tpu_custom_call.1} parent=27 // pred_fallthru
        _
    $region28: #{tpu_custom_call.1} parent=5 // pred_fallthru
      _
    %p175 = scmp.le.s32.totalorder 1, %s10
    %p176 = scmp.lt.s32.totalorder %s10, 3
    %p177 = pnand %p175, %p176
    %p178 = pneg %p177
    // Predicated region
    $region33: #{tpu_custom_call.1} parent=5 // pred_check
      _
    $region34: #{tpu_custom_call.1} parent=5 // pred_check_branch
      %180 = sbr.rel (%p177) target = $region36
    $region35: #{tpu_custom_call.1} parent=5 // pred_region
      %s181 = ssub.s32 %s10, 1
      %p182 = scmp.lt.s32.totalorder %s19, 1
      %s183 = scalar_select %p182, %s19, 1
      %s184 = smul.addr %s183, 200
      %s185 = smul.addr %s184, 4
      %s186 = scalar_lea.vmem %s0, %s185
      %p187 = pneg %p48
      %p188 = pneg %p45
      %p189 = pneg %p69
      %p190 = pneg %p66
      %p191 = pneg %p90
      %p192 = pneg %p87
      %p193 = pneg %p111
      %p194 = pneg %p108
      %p195 = pneg %p139
      %p196 = pneg %p136
      %p197 = scmp.lt.s32.totalorder %s19, 1
      %s198 = scalar_select %p197, %s19, 1
      %p199 = scmp.lt.s32.totalorder %s20, 0
      %s200 = scalar_select %p199, %s20, 0
      %s201 = smul.addr %s200, 64
      %s202 = smul.addr %s198, 64
      %s203 = sadd.s32 %s201, %s202
      %s204 = smul.addr %s203, 4
      %s205 = scalar_lea.vmem %s4, %s204
      %p206 = scmp.lt.s32.totalorder %s19, 1
      %s207 = scalar_select %p206, %s19, 1
      %s208 = smul.addr %s207, 200
      %s209 = smul.addr %s208, 4
      %s210 = scalar_lea.vmem %s0, %s209
      %p211 = scmp.lt.s32.totalorder %s19, 1
      %s212 = scalar_select %p211, %s19, 1
      %p213 = scmp.lt.s32.totalorder %s20, 0
      %s214 = scalar_select %p213, %s20, 0
      %s215 = smul.addr %s214, 64
      %s216 = smul.addr %s212, 64
      %s217 = sadd.s32 %s215, %s216
      %s218 = smul.addr %s217, 4
      %s219 = scalar_lea.vmem %s4, %s218
      %s220 = smul.u32 %s20, 8
      %s221 = smul.u32 %s220, 20
      %s222 = smul.addr %s221, 4
      %s223 = scalar_lea.vmem %s210, %s222
      %v224 = vld [vmem:[%s223] sm:$0xf]
      %v225 = vld [vmem:[%s223 + $0x4] sm:$0x1]
      %v226 = vld [vmem:[%s223 + $0x8] sm:$0xf]
      %v227 = vld [vmem:[%s223 + $0xc] sm:$0x1]
      %v228 = vld [vmem:[%s223 + $0x10] sm:$0xf]
      %v229 = vld [vmem:[%s223 + $0x14] sm:$0x1]
      %v230 = vld [vmem:[%s223 + $0x18] sm:$0xf]
      %v231 = vld [vmem:[%s223 + $0x1c] sm:$0x1]
      %v232 = vld [vmem:[%s223 + $0x20] sm:$0xf]
      %v233 = vld [vmem:[%s223 + $0x24] sm:$0x1]
      %v234 = vld [vmem:[%s223 + $0x28] sm:$0xf]
      %v235 = vld [vmem:[%s223 + $0x2c] sm:$0x1]
      %v236 = vld [vmem:[%s223 + $0x30] sm:$0xf]
      %v237 = vld [vmem:[%s223 + $0x34] sm:$0x1]
      %v238 = vld [vmem:[%s223 + $0x38] sm:$0xf]
      %v239 = vld [vmem:[%s223 + $0x3c] sm:$0x1]
      %v240 = vld [vmem:[%s223 + $0x40] sm:$0xf]
      %v241 = vld [vmem:[%s223 + $0x44] sm:$0x1]
      %v242 = vld [vmem:[%s223 + $0x48] sm:$0xf]
      %v243 = vld [vmem:[%s223 + $0x4c] sm:$0x1]
      %v244 = vld [vmem:[%s223 + $0x50] sm:$0xf]
      %v245 = vld [vmem:[%s223 + $0x54] sm:$0x1]
      %v246 = vld [vmem:[%s223 + $0x58] sm:$0xf]
      %v247 = vld [vmem:[%s223 + $0x5c] sm:$0x1]
      %v248 = vld [vmem:[%s223 + $0x60] sm:$0xf]
      %v249 = vld [vmem:[%s223 + $0x64] sm:$0x1]
      %v250 = vld [vmem:[%s223 + $0x68] sm:$0xf]
      %v251 = vld [vmem:[%s223 + $0x6c] sm:$0x1]
      %v252 = vld [vmem:[%s223 + $0x70] sm:$0xf]
      %v253 = vld [vmem:[%s223 + $0x74] sm:$0x1]
      %v254 = vld [vmem:[%s223 + $0x78] sm:$0xf]
      %v255 = vld [vmem:[%s223 + $0x7c] sm:$0x1]
      %v256 = vld [vmem:[%s223 + $0x80] sm:$0xf]
      %v257 = vld [vmem:[%s223 + $0x84] sm:$0x1]
      %v258 = vld [vmem:[%s223 + $0x88] sm:$0xf]
      %v259 = vld [vmem:[%s223 + $0x8c] sm:$0x1]
      %v260 = vld [vmem:[%s223 + $0x90] sm:$0xf]
      %v261 = vld [vmem:[%s223 + $0x94] sm:$0x1]
      %v262 = vld [vmem:[%s223 + $0x98] sm:$0xf]
      %v263 = vld [vmem:[%s223 + $0x9c] sm:$0x1]
      %v264 = vld [vmem:[%s223 + $0xa0] sm:$0xf]
      %v265 = vld [vmem:[%s223 + $0xa4] sm:$0x1]
      %v266 = vld [vmem:[%s223 + $0xa8] sm:$0xf]
      %v267 = vld [vmem:[%s223 + $0xac] sm:$0x1]
      %v268 = vld [vmem:[%s223 + $0xb0] sm:$0xf]
      %v269 = vld [vmem:[%s223 + $0xb4] sm:$0x1]
      %v270 = vld [vmem:[%s223 + $0xb8] sm:$0xf]
      %v271 = vld [vmem:[%s223 + $0xbc] sm:$0x1]
      %v272 = vld [vmem:[%s223 + $0xc0] sm:$0xf]
      %v273 = vld [vmem:[%s223 + $0xc4] sm:$0x1]
      %v274 = vld [vmem:[%s223 + $0xc8] sm:$0xf]
      %v275 = vld [vmem:[%s223 + $0xcc] sm:$0x1]
      %v276 = vld [vmem:[%s223 + $0xd0] sm:$0xf]
      %v277 = vld [vmem:[%s223 + $0xd4] sm:$0x1]
      %v278 = vld [vmem:[%s223 + $0xd8] sm:$0xf]
      %v279 = vld [vmem:[%s223 + $0xdc] sm:$0x1]
      %v280 = vld [vmem:[%s223 + $0xe0] sm:$0xf]
      %v281 = vld [vmem:[%s223 + $0xe4] sm:$0x1]
      %v282 = vld [vmem:[%s223 + $0xe8] sm:$0xf]
      %v283 = vld [vmem:[%s223 + $0xec] sm:$0x1]
      %v284 = vld [vmem:[%s223 + $0xf0] sm:$0xf]
      %v285 = vld [vmem:[%s223 + $0xf4] sm:$0x1]
      %v286 = vld [vmem:[%s223 + $0xf8] sm:$0xf]
      %v287 = vld [vmem:[%s223 + $0xfc] sm:$0x1]
      %v288 = vld [vmem:[%s223 + $0x100] sm:$0xf]
      %v289 = vld [vmem:[%s223 + $0x104] sm:$0x1]
      %v290 = vld [vmem:[%s223 + $0x108] sm:$0xf]
      %v291 = vld [vmem:[%s223 + $0x10c] sm:$0x1]
      %v292 = vld [vmem:[%s223 + $0x110] sm:$0xf]
      %v293 = vld [vmem:[%s223 + $0x114] sm:$0x1]
      %v294 = vld [vmem:[%s223 + $0x118] sm:$0xf]
      %v295 = vld [vmem:[%s223 + $0x11c] sm:$0x1]
      %v296 = vld [vmem:[%s223 + $0x120] sm:$0xf]
      %v297 = vld [vmem:[%s223 + $0x124] sm:$0x1]
      %v298 = vld [vmem:[%s223 + $0x128] sm:$0xf]
      %v299 = vld [vmem:[%s223 + $0x12c] sm:$0x1]
      %v300 = vld [vmem:[%s223 + $0x130] sm:$0xf]
      %v301 = vld [vmem:[%s223 + $0x134] sm:$0x1]
      %v302 = vld [vmem:[%s223 + $0x138] sm:$0xf]
      %v303 = vld [vmem:[%s223 + $0x13c] sm:$0x1]
      %v304 = vld [vmem:[%s223 + $0x140] sm:$0xf]
      %v305 = vld [vmem:[%s223 + $0x144] sm:$0x1]
      %v306 = vld [vmem:[%s223 + $0x148] sm:$0xf]
      %v307 = vld [vmem:[%s223 + $0x14c] sm:$0x1]
      %v308 = vld [vmem:[%s223 + $0x150] sm:$0xf]
      %v309 = vld [vmem:[%s223 + $0x154] sm:$0x1]
      %v310 = vld [vmem:[%s223 + $0x158] sm:$0xf]
      %v311 = vld [vmem:[%s223 + $0x15c] sm:$0x1]
      %v312 = vld [vmem:[%s223 + $0x160] sm:$0xf]
      %v313 = vld [vmem:[%s223 + $0x164] sm:$0x1]
      %v314 = vld [vmem:[%s223 + $0x168] sm:$0xf]
      %v315 = vld [vmem:[%s223 + $0x16c] sm:$0x1]
      %v316 = vld [vmem:[%s223 + $0x170] sm:$0xf]
      %v317 = vld [vmem:[%s223 + $0x174] sm:$0x1]
      %v318 = vld [vmem:[%s223 + $0x178] sm:$0xf]
      %v319 = vld [vmem:[%s223 + $0x17c] sm:$0x1]
      %v320 = vld [vmem:[%s223 + $0x180] sm:$0xf]
      %v321 = vld [vmem:[%s223 + $0x184] sm:$0x1]
      %v322 = vld [vmem:[%s223 + $0x188] sm:$0xf]
      %v323 = vld [vmem:[%s223 + $0x18c] sm:$0x1]
      %v324 = vld [vmem:[%s223 + $0x190] sm:$0xf]
      %v325 = vld [vmem:[%s223 + $0x194] sm:$0x1]
      %v326 = vld [vmem:[%s223 + $0x198] sm:$0xf]
      %v327 = vld [vmem:[%s223 + $0x19c] sm:$0x1]
      %v328 = vld [vmem:[%s223 + $0x1a0] sm:$0xf]
      %v329 = vld [vmem:[%s223 + $0x1a4] sm:$0x1]
      %v330 = vld [vmem:[%s223 + $0x1a8] sm:$0xf]
      %v331 = vld [vmem:[%s223 + $0x1ac] sm:$0x1]
      %v332 = vld [vmem:[%s223 + $0x1b0] sm:$0xf]
      %v333 = vld [vmem:[%s223 + $0x1b4] sm:$0x1]
      %v334 = vld [vmem:[%s223 + $0x1b8] sm:$0xf]
      %v335 = vld [vmem:[%s223 + $0x1bc] sm:$0x1]
      %v336 = vld [vmem:[%s223 + $0x1c0] sm:$0xf]
      %v337 = vld [vmem:[%s223 + $0x1c4] sm:$0x1]
      %v338 = vld [vmem:[%s223 + $0x1c8] sm:$0xf]
      %v339 = vld [vmem:[%s223 + $0x1cc] sm:$0x1]
      %v340 = vld [vmem:[%s223 + $0x1d0] sm:$0xf]
      %v341 = vld [vmem:[%s223 + $0x1d4] sm:$0x1]
      %v342 = vld [vmem:[%s223 + $0x1d8] sm:$0xf]
      %v343 = vld [vmem:[%s223 + $0x1dc] sm:$0x1]
      %v344 = vld [vmem:[%s223 + $0x1e0] sm:$0xf]
      %v345 = vld [vmem:[%s223 + $0x1e4] sm:$0x1]
      %v346 = vld [vmem:[%s223 + $0x1e8] sm:$0xf]
      %v347 = vld [vmem:[%s223 + $0x1ec] sm:$0x1]
      %v348 = vld [vmem:[%s223 + $0x1f0] sm:$0xf]
      %v349 = vld [vmem:[%s223 + $0x1f4] sm:$0x1]
      %v350 = vld [vmem:[%s223 + $0x1f8] sm:$0xf]
      %v351 = vld [vmem:[%s223 + $0x1fc] sm:$0x1]
      %v352 = vld [vmem:[%s223 + $0x200] sm:$0xf]
      %v353 = vld [vmem:[%s223 + $0x204] sm:$0x1]
      %v354 = vld [vmem:[%s223 + $0x208] sm:$0xf]
      %v355 = vld [vmem:[%s223 + $0x20c] sm:$0x1]
      %v356 = vld [vmem:[%s223 + $0x210] sm:$0xf]
      %v357 = vld [vmem:[%s223 + $0x214] sm:$0x1]
      %v358 = vld [vmem:[%s223 + $0x218] sm:$0xf]
      %v359 = vld [vmem:[%s223 + $0x21c] sm:$0x1]
      %v360 = vld [vmem:[%s223 + $0x220] sm:$0xf]
      %v361 = vld [vmem:[%s223 + $0x224] sm:$0x1]
      %v362 = vld [vmem:[%s223 + $0x228] sm:$0xf]
      %v363 = vld [vmem:[%s223 + $0x22c] sm:$0x1]
      %v364 = vld [vmem:[%s223 + $0x230] sm:$0xf]
      %v365 = vld [vmem:[%s223 + $0x234] sm:$0x1]
      %v366 = vld [vmem:[%s223 + $0x238] sm:$0xf]
      %v367 = vld [vmem:[%s223 + $0x23c] sm:$0x1]
      %v368 = vld [vmem:[%s223 + $0x240] sm:$0xf]
      %v369 = vld [vmem:[%s223 + $0x244] sm:$0x1]
      %v370 = vld [vmem:[%s223 + $0x248] sm:$0xf]
      %v371 = vld [vmem:[%s223 + $0x24c] sm:$0x1]
      %v372 = vld [vmem:[%s223 + $0x250] sm:$0xf]
      %v373 = vld [vmem:[%s223 + $0x254] sm:$0x1]
      %v374 = vld [vmem:[%s223 + $0x258] sm:$0xf]
      %v375 = vld [vmem:[%s223 + $0x25c] sm:$0x1]
      %v376 = vld [vmem:[%s223 + $0x260] sm:$0xf]
      %v377 = vld [vmem:[%s223 + $0x264] sm:$0x1]
      %v378 = vld [vmem:[%s223 + $0x268] sm:$0xf]
      %v379 = vld [vmem:[%s223 + $0x26c] sm:$0x1]
      %v380 = vld [vmem:[%s223 + $0x270] sm:$0xf]
      %v381 = vld [vmem:[%s223 + $0x274] sm:$0x1]
      %v382 = vld [vmem:[%s223 + $0x278] sm:$0xf]
      %v383 = vld [vmem:[%s223 + $0x27c] sm:$0x1]
      %v384 = vld [vmem:[%s223 + $0x280] sm:$0xf]
      %v385 = vld [vmem:[%s223 + $0x284] sm:$0x1]
      %v386 = vld [vmem:[%s223 + $0x288] sm:$0xf]
      %v387 = vld [vmem:[%s223 + $0x28c] sm:$0x1]
      %v388 = vld [vmem:[%s223 + $0x290] sm:$0xf]
      %v389 = vld [vmem:[%s223 + $0x294] sm:$0x1]
      %v390 = vld [vmem:[%s223 + $0x298] sm:$0xf]
      %v391 = vld [vmem:[%s223 + $0x29c] sm:$0x1]
      %v392 = vld [vmem:[%s223 + $0x2a0] sm:$0xf]
      %v393 = vld [vmem:[%s223 + $0x2a4] sm:$0x1]
      %v394 = vld [vmem:[%s223 + $0x2a8] sm:$0xf]
      %v395 = vld [vmem:[%s223 + $0x2ac] sm:$0x1]
      %v396 = vld [vmem:[%s223 + $0x2b0] sm:$0xf]
      %v397 = vld [vmem:[%s223 + $0x2b4] sm:$0x1]
      %v398 = vld [vmem:[%s223 + $0x2b8] sm:$0xf]
      %v399 = vld [vmem:[%s223 + $0x2bc] sm:$0x1]
      %v400 = vld [vmem:[%s223 + $0x2c0] sm:$0xf]
      %v401 = vld [vmem:[%s223 + $0x2c4] sm:$0x1]
      %v402 = vld [vmem:[%s223 + $0x2c8] sm:$0xf]
      %v403 = vld [vmem:[%s223 + $0x2cc] sm:$0x1]
      %v404 = vld [vmem:[%s223 + $0x2d0] sm:$0xf]
      %v405 = vld [vmem:[%s223 + $0x2d4] sm:$0x1]
      %v406 = vld [vmem:[%s223 + $0x2d8] sm:$0xf]
      %v407 = vld [vmem:[%s223 + $0x2dc] sm:$0x1]
      %v408 = vld [vmem:[%s223 + $0x2e0] sm:$0xf]
      %v409 = vld [vmem:[%s223 + $0x2e4] sm:$0x1]
      %v410 = vld [vmem:[%s223 + $0x2e8] sm:$0xf]
      %v411 = vld [vmem:[%s223 + $0x2ec] sm:$0x1]
      %v412 = vld [vmem:[%s223 + $0x2f0] sm:$0xf]
      %v413 = vld [vmem:[%s223 + $0x2f4] sm:$0x1]
      %v414 = vld [vmem:[%s223 + $0x2f8] sm:$0xf]
      %v415 = vld [vmem:[%s223 + $0x2fc] sm:$0x1]
      %v416 = vld [vmem:[%s223 + $0x300] sm:$0xf]
      %v417 = vld [vmem:[%s223 + $0x304] sm:$0x1]
      %v418 = vld [vmem:[%s223 + $0x308] sm:$0xf]
      %v419 = vld [vmem:[%s223 + $0x30c] sm:$0x1]
      %v420 = vld [vmem:[%s223 + $0x310] sm:$0xf]
      %v421 = vld [vmem:[%s223 + $0x314] sm:$0x1]
      %v422 = vld [vmem:[%s223 + $0x318] sm:$0xf]
      %v423 = vld [vmem:[%s223 + $0x31c] sm:$0x1]
      %v424 = vunpack.c.l.bf16 %v224
      %v425 = vunpack.c.l.bf16 %v225
      %v426 = vunpack.c.l.bf16 %v226
      %v427 = vunpack.c.l.bf16 %v227
      %v428 = vunpack.c.l.bf16 %v228
      %v429 = vunpack.c.l.bf16 %v229
      %v430 = vunpack.c.l.bf16 %v230
      %v431 = vunpack.c.l.bf16 %v231
      %v432 = vunpack.c.l.bf16 %v232
      %v433 = vunpack.c.l.bf16 %v233
      %v434 = vunpack.c.l.bf16 %v234
      %v435 = vunpack.c.l.bf16 %v235
      %v436 = vunpack.c.l.bf16 %v236
      %v437 = vunpack.c.l.bf16 %v237
      %v438 = vunpack.c.l.bf16 %v238
      %v439 = vunpack.c.l.bf16 %v239
      %v440 = vunpack.c.l.bf16 %v240
      %v441 = vunpack.c.l.bf16 %v241
      %v442 = vunpack.c.l.bf16 %v242
      %v443 = vunpack.c.l.bf16 %v243
      %v444 = vunpack.c.l.bf16 %v244
      %v445 = vunpack.c.l.bf16 %v245
      %v446 = vunpack.c.l.bf16 %v246
      %v447 = vunpack.c.l.bf16 %v247
      %v448 = vunpack.c.l.bf16 %v248
      %v449 = vunpack.c.l.bf16 %v249
      %v450 = vunpack.c.l.bf16 %v250
      %v451 = vunpack.c.l.bf16 %v251
      %v452 = vunpack.c.l.bf16 %v252
      %v453 = vunpack.c.l.bf16 %v253
      %v454 = vunpack.c.l.bf16 %v254
      %v455 = vunpack.c.l.bf16 %v255
      %v456 = vunpack.c.l.bf16 %v256
      %v457 = vunpack.c.l.bf16 %v257
      %v458 = vunpack.c.l.bf16 %v258
      %v459 = vunpack.c.l.bf16 %v259
      %v460 = vunpack.c.l.bf16 %v260
      %v461 = vunpack.c.l.bf16 %v261
      %v462 = vunpack.c.l.bf16 %v262
      %v463 = vunpack.c.l.bf16 %v263
      %v464 = vunpack.c.l.bf16 %v264
      %v465 = vunpack.c.l.bf16 %v265
      %v466 = vunpack.c.l.bf16 %v266
      %v467 = vunpack.c.l.bf16 %v267
      %v468 = vunpack.c.l.bf16 %v268
      %v469 = vunpack.c.l.bf16 %v269
      %v470 = vunpack.c.l.bf16 %v270
      %v471 = vunpack.c.l.bf16 %v271
      %v472 = vunpack.c.l.bf16 %v272
      %v473 = vunpack.c.l.bf16 %v273
      %v474 = vunpack.c.l.bf16 %v274
      %v475 = vunpack.c.l.bf16 %v275
      %v476 = vunpack.c.l.bf16 %v276
      %v477 = vunpack.c.l.bf16 %v277
      %v478 = vunpack.c.l.bf16 %v278
      %v479 = vunpack.c.l.bf16 %v279
      %v480 = vunpack.c.l.bf16 %v280
      %v481 = vunpack.c.l.bf16 %v281
      %v482 = vunpack.c.l.bf16 %v282
      %v483 = vunpack.c.l.bf16 %v283
      %v484 = vunpack.c.l.bf16 %v284
      %v485 = vunpack.c.l.bf16 %v285
      %v486 = vunpack.c.l.bf16 %v286
      %v487 = vunpack.c.l.bf16 %v287
      %v488 = vunpack.c.l.bf16 %v288
      %v489 = vunpack.c.l.bf16 %v289
      %v490 = vunpack.c.l.bf16 %v290
      %v491 = vunpack.c.l.bf16 %v291
      %v492 = vunpack.c.l.bf16 %v292
      %v493 = vunpack.c.l.bf16 %v293
      %v494 = vunpack.c.l.bf16 %v294
      %v495 = vunpack.c.l.bf16 %v295
      %v496 = vunpack.c.l.bf16 %v296
      %v497 = vunpack.c.l.bf16 %v297
      %v498 = vunpack.c.l.bf16 %v298
      %v499 = vunpack.c.l.bf16 %v299
      %v500 = vunpack.c.l.bf16 %v300
      %v501 = vunpack.c.l.bf16 %v301
      %v502 = vunpack.c.l.bf16 %v302
      %v503 = vunpack.c.l.bf16 %v303
      %v504 = vunpack.c.l.bf16 %v304
      %v505 = vunpack.c.l.bf16 %v305
      %v506 = vunpack.c.l.bf16 %v306
      %v507 = vunpack.c.l.bf16 %v307
      %v508 = vunpack.c.l.bf16 %v308
      %v509 = vunpack.c.l.bf16 %v309
      %v510 = vunpack.c.l.bf16 %v310
      %v511 = vunpack.c.l.bf16 %v311
      %v512 = vunpack.c.l.bf16 %v312
      %v513 = vunpack.c.l.bf16 %v313
      %v514 = vunpack.c.l.bf16 %v314
      %v515 = vunpack.c.l.bf16 %v315
      %v516 = vunpack.c.l.bf16 %v316
      %v517 = vunpack.c.l.bf16 %v317
      %v518 = vunpack.c.l.bf16 %v318
      %v519 = vunpack.c.l.bf16 %v319
      %v520 = vunpack.c.l.bf16 %v320
      %v521 = vunpack.c.l.bf16 %v321
      %v522 = vunpack.c.l.bf16 %v322
      %v523 = vunpack.c.l.bf16 %v323
      %v524 = vunpack.c.l.bf16 %v324
      %v525 = vunpack.c.l.bf16 %v325
      %v526 = vunpack.c.l.bf16 %v326
      %v527 = vunpack.c.l.bf16 %v327
      %v528 = vunpack.c.l.bf16 %v328
      %v529 = vunpack.c.l.bf16 %v329
      %v530 = vunpack.c.l.bf16 %v330
      %v531 = vunpack.c.l.bf16 %v331
      %v532 = vunpack.c.l.bf16 %v332
      %v533 = vunpack.c.l.bf16 %v333
      %v534 = vunpack.c.l.bf16 %v334
      %v535 = vunpack.c.l.bf16 %v335
      %v536 = vunpack.c.l.bf16 %v336
      %v537 = vunpack.c.l.bf16 %v337
      %v538 = vunpack.c.l.bf16 %v338
      %v539 = vunpack.c.l.bf16 %v339
      %v540 = vunpack.c.l.bf16 %v340
      %v541 = vunpack.c.l.bf16 %v341
      %v542 = vunpack.c.l.bf16 %v342
      %v543 = vunpack.c.l.bf16 %v343
      %v544 = vunpack.c.l.bf16 %v344
      %v545 = vunpack.c.l.bf16 %v345
      %v546 = vunpack.c.l.bf16 %v346
      %v547 = vunpack.c.l.bf16 %v347
      %v548 = vunpack.c.l.bf16 %v348
      %v549 = vunpack.c.l.bf16 %v349
      %v550 = vunpack.c.l.bf16 %v350
      %v551 = vunpack.c.l.bf16 %v351
      %v552 = vunpack.c.l.bf16 %v352
      %v553 = vunpack.c.l.bf16 %v353
      %v554 = vunpack.c.l.bf16 %v354
      %v555 = vunpack.c.l.bf16 %v355
      %v556 = vunpack.c.l.bf16 %v356
      %v557 = vunpack.c.l.bf16 %v357
      %v558 = vunpack.c.l.bf16 %v358
      %v559 = vunpack.c.l.bf16 %v359
      %v560 = vunpack.c.l.bf16 %v360
      %v561 = vunpack.c.l.bf16 %v361
      %v562 = vunpack.c.l.bf16 %v362
      %v563 = vunpack.c.l.bf16 %v363
      %v564 = vunpack.c.l.bf16 %v364
      %v565 = vunpack.c.l.bf16 %v365
      %v566 = vunpack.c.l.bf16 %v366
      %v567 = vunpack.c.l.bf16 %v367
      %v568 = vunpack.c.l.bf16 %v368
      %v569 = vunpack.c.l.bf16 %v369
      %v570 = vunpack.c.l.bf16 %v370
      %v571 = vunpack.c.l.bf16 %v371
      %v572 = vunpack.c.l.bf16 %v372
      %v573 = vunpack.c.l.bf16 %v373
      %v574 = vunpack.c.l.bf16 %v374
      %v575 = vunpack.c.l.bf16 %v375
      %v576 = vunpack.c.l.bf16 %v376
      %v577 = vunpack.c.l.bf16 %v377
      %v578 = vunpack.c.l.bf16 %v378
      %v579 = vunpack.c.l.bf16 %v379
      %v580 = vunpack.c.l.bf16 %v380
      %v581 = vunpack.c.l.bf16 %v381
      %v582 = vunpack.c.l.bf16 %v382
      %v583 = vunpack.c.l.bf16 %v383
      %v584 = vunpack.c.l.bf16 %v384
      %v585 = vunpack.c.l.bf16 %v385
      %v586 = vunpack.c.l.bf16 %v386
      %v587 = vunpack.c.l.bf16 %v387
      %v588 = vunpack.c.l.bf16 %v388
      %v589 = vunpack.c.l.bf16 %v389
      %v590 = vunpack.c.l.bf16 %v390
      %v591 = vunpack.c.l.bf16 %v391
      %v592 = vunpack.c.l.bf16 %v392
      %v593 = vunpack.c.l.bf16 %v393
      %v594 = vunpack.c.l.bf16 %v394
      %v595 = vunpack.c.l.bf16 %v395
      %v596 = vunpack.c.l.bf16 %v396
      %v597 = vunpack.c.l.bf16 %v397
      %v598 = vunpack.c.l.bf16 %v398
      %v599 = vunpack.c.l.bf16 %v399
      %v600 = vunpack.c.l.bf16 %v400
      %v601 = vunpack.c.l.bf16 %v401
      %v602 = vunpack.c.l.bf16 %v402
      %v603 = vunpack.c.l.bf16 %v403
      %v604 = vunpack.c.l.bf16 %v404
      %v605 = vunpack.c.l.bf16 %v405
      %v606 = vunpack.c.l.bf16 %v406
      %v607 = vunpack.c.l.bf16 %v407
      %v608 = vunpack.c.l.bf16 %v408
      %v609 = vunpack.c.l.bf16 %v409
      %v610 = vunpack.c.l.bf16 %v410
      %v611 = vunpack.c.l.bf16 %v411
      %v612 = vunpack.c.l.bf16 %v412
      %v613 = vunpack.c.l.bf16 %v413
      %v614 = vunpack.c.l.bf16 %v414
      %v615 = vunpack.c.l.bf16 %v415
      %v616 = vunpack.c.l.bf16 %v416
      %v617 = vunpack.c.l.bf16 %v417
      %v618 = vunpack.c.l.bf16 %v418
      %v619 = vunpack.c.l.bf16 %v419
      %v620 = vunpack.c.l.bf16 %v420
      %v621 = vunpack.c.l.bf16 %v421
      %v622 = vunpack.c.l.bf16 %v422
      %v623 = vunpack.c.l.bf16 %v423
      %vm824 = vcmask 1046528
      %v825 = vrot.slane %v424, 1
      %v826 = vrot.slane %v425, 1
      %v827 = vsel %vm824, %v825, %v826
      %v828 = vrot.slane %v426, 1
      %v829 = vrot.slane %v427, 1
      %v830 = vsel %vm824, %v828, %v829
      %v831 = vrot.slane %v428, 1
      %v832 = vrot.slane %v429, 1
      %v833 = vsel %vm824, %v831, %v832
      %v834 = vrot.slane %v430, 1
      %v835 = vrot.slane %v431, 1
      %v836 = vsel %vm824, %v834, %v835
      %v837 = vrot.slane %v432, 1
      %v838 = vrot.slane %v433, 1
      %v839 = vsel %vm824, %v837, %v838
      %v840 = vrot.slane %v434, 1
      %v841 = vrot.slane %v435, 1
      %v842 = vsel %vm824, %v840, %v841
      %v843 = vrot.slane %v436, 1
      %v844 = vrot.slane %v437, 1
      %v845 = vsel %vm824, %v843, %v844
      %v846 = vrot.slane %v438, 1
      %v847 = vrot.slane %v439, 1
      %v848 = vsel %vm824, %v846, %v847
      %v849 = vrot.slane %v440, 1
      %v850 = vrot.slane %v441, 1
      %v851 = vsel %vm824, %v849, %v850
      %v852 = vrot.slane %v442, 1
      %v853 = vrot.slane %v443, 1
      %v854 = vsel %vm824, %v852, %v853
      %v855 = vrot.slane %v444, 1
      %v856 = vrot.slane %v445, 1
      %v857 = vsel %vm824, %v855, %v856
      %v858 = vrot.slane %v446, 1
      %v859 = vrot.slane %v447, 1
      %v860 = vsel %vm824, %v858, %v859
      %v861 = vrot.slane %v448, 1
      %v862 = vrot.slane %v449, 1
      %v863 = vsel %vm824, %v861, %v862
      %v864 = vrot.slane %v450, 1
      %v865 = vrot.slane %v451, 1
      %v866 = vsel %vm824, %v864, %v865
      %v867 = vrot.slane %v452, 1
      %v868 = vrot.slane %v453, 1
      %v869 = vsel %vm824, %v867, %v868
      %v870 = vrot.slane %v454, 1
      %v871 = vrot.slane %v455, 1
      %v872 = vsel %vm824, %v870, %v871
      %v873 = vrot.slane %v456, 1
      %v874 = vrot.slane %v457, 1
      %v875 = vsel %vm824, %v873, %v874
      %v876 = vrot.slane %v458, 1
      %v877 = vrot.slane %v459, 1
      %v878 = vsel %vm824, %v876, %v877
      %v879 = vrot.slane %v460, 1
      %v880 = vrot.slane %v461, 1
      %v881 = vsel %vm824, %v879, %v880
      %v882 = vrot.slane %v462, 1
      %v883 = vrot.slane %v463, 1
      %v884 = vsel %vm824, %v882, %v883
      %v885 = vrot.slane %v464, 1
      %v886 = vrot.slane %v465, 1
      %v887 = vsel %vm824, %v885, %v886
      %v888 = vrot.slane %v466, 1
      %v889 = vrot.slane %v467, 1
      %v890 = vsel %vm824, %v888, %v889
      %v891 = vrot.slane %v468, 1
      %v892 = vrot.slane %v469, 1
      %v893 = vsel %vm824, %v891, %v892
      %v894 = vrot.slane %v470, 1
      %v895 = vrot.slane %v471, 1
      %v896 = vsel %vm824, %v894, %v895
      %v897 = vrot.slane %v472, 1
      %v898 = vrot.slane %v473, 1
      %v899 = vsel %vm824, %v897, %v898
      %v900 = vrot.slane %v474, 1
      %v901 = vrot.slane %v475, 1
      %v902 = vsel %vm824, %v900, %v901
      %v903 = vrot.slane %v476, 1
      %v904 = vrot.slane %v477, 1
      %v905 = vsel %vm824, %v903, %v904
      %v906 = vrot.slane %v478, 1
      %v907 = vrot.slane %v479, 1
      %v908 = vsel %vm824, %v906, %v907
      %v909 = vrot.slane %v480, 1
      %v910 = vrot.slane %v481, 1
      %v911 = vsel %vm824, %v909, %v910
      %v912 = vrot.slane %v482, 1
      %v913 = vrot.slane %v483, 1
      %v914 = vsel %vm824, %v912, %v913
      %v915 = vrot.slane %v484, 1
      %v916 = vrot.slane %v485, 1
      %v917 = vsel %vm824, %v915, %v916
      %v918 = vrot.slane %v486, 1
      %v919 = vrot.slane %v487, 1
      %v920 = vsel %vm824, %v918, %v919
      %v921 = vrot.slane %v488, 1
      %v922 = vrot.slane %v489, 1
      %v923 = vsel %vm824, %v921, %v922
      %v924 = vrot.slane %v490, 1
      %v925 = vrot.slane %v491, 1
      %v926 = vsel %vm824, %v924, %v925
      %v927 = vrot.slane %v492, 1
      %v928 = vrot.slane %v493, 1
      %v929 = vsel %vm824, %v927, %v928
      %v930 = vrot.slane %v494, 1
      %v931 = vrot.slane %v495, 1
      %v932 = vsel %vm824, %v930, %v931
      %v933 = vrot.slane %v496, 1
      %v934 = vrot.slane %v497, 1
      %v935 = vsel %vm824, %v933, %v934
      %v936 = vrot.slane %v498, 1
      %v937 = vrot.slane %v499, 1
      %v938 = vsel %vm824, %v936, %v937
      %v939 = vrot.slane %v500, 1
      %v940 = vrot.slane %v501, 1
      %v941 = vsel %vm824, %v939, %v940
      %v942 = vrot.slane %v502, 1
      %v943 = vrot.slane %v503, 1
      %v944 = vsel %vm824, %v942, %v943
      %v945 = vrot.slane %v504, 1
      %v946 = vrot.slane %v505, 1
      %v947 = vsel %vm824, %v945, %v946
      %v948 = vrot.slane %v506, 1
      %v949 = vrot.slane %v507, 1
      %v950 = vsel %vm824, %v948, %v949
      %v951 = vrot.slane %v508, 1
      %v952 = vrot.slane %v509, 1
      %v953 = vsel %vm824, %v951, %v952
      %v954 = vrot.slane %v510, 1
      %v955 = vrot.slane %v511, 1
      %v956 = vsel %vm824, %v954, %v955
      %v957 = vrot.slane %v512, 1
      %v958 = vrot.slane %v513, 1
      %v959 = vsel %vm824, %v957, %v958
      %v960 = vrot.slane %v514, 1
      %v961 = vrot.slane %v515, 1
      %v962 = vsel %vm824, %v960, %v961
      %v963 = vrot.slane %v516, 1
      %v964 = vrot.slane %v517, 1
      %v965 = vsel %vm824, %v963, %v964
      %v966 = vrot.slane %v518, 1
      %v967 = vrot.slane %v519, 1
      %v968 = vsel %vm824, %v966, %v967
      %v969 = vrot.slane %v520, 1
      %v970 = vrot.slane %v521, 1
      %v971 = vsel %vm824, %v969, %v970
      %v972 = vrot.slane %v522, 1
      %v973 = vrot.slane %v523, 1
      %v974 = vsel %vm824, %v972, %v973
      %v975 = vrot.slane %v524, 1
      %v976 = vrot.slane %v525, 1
      %v977 = vsel %vm824, %v975, %v976
      %v978 = vrot.slane %v526, 1
      %v979 = vrot.slane %v527, 1
      %v980 = vsel %vm824, %v978, %v979
      %v981 = vrot.slane %v528, 1
      %v982 = vrot.slane %v529, 1
      %v983 = vsel %vm824, %v981, %v982
      %v984 = vrot.slane %v530, 1
      %v985 = vrot.slane %v531, 1
      %v986 = vsel %vm824, %v984, %v985
      %v987 = vrot.slane %v532, 1
      %v988 = vrot.slane %v533, 1
      %v989 = vsel %vm824, %v987, %v988
      %v990 = vrot.slane %v534, 1
      %v991 = vrot.slane %v535, 1
      %v992 = vsel %vm824, %v990, %v991
      %v993 = vrot.slane %v536, 1
      %v994 = vrot.slane %v537, 1
      %v995 = vsel %vm824, %v993, %v994
      %v996 = vrot.slane %v538, 1
      %v997 = vrot.slane %v539, 1
      %v998 = vsel %vm824, %v996, %v997
      %v999 = vrot.slane %v540, 1
      %v1000 = vrot.slane %v541, 1
      %v1001 = vsel %vm824, %v999, %v1000
      %v1002 = vrot.slane %v542, 1
      %v1003 = vrot.slane %v543, 1
      %v1004 = vsel %vm824, %v1002, %v1003
      %v1005 = vrot.slane %v544, 1
      %v1006 = vrot.slane %v545, 1
      %v1007 = vsel %vm824, %v1005, %v1006
      %v1008 = vrot.slane %v546, 1
      %v1009 = vrot.slane %v547, 1
      %v1010 = vsel %vm824, %v1008, %v1009
      %v1011 = vrot.slane %v548, 1
      %v1012 = vrot.slane %v549, 1
      %v1013 = vsel %vm824, %v1011, %v1012
      %v1014 = vrot.slane %v550, 1
      %v1015 = vrot.slane %v551, 1
      %v1016 = vsel %vm824, %v1014, %v1015
      %v1017 = vrot.slane %v552, 1
      %v1018 = vrot.slane %v553, 1
      %v1019 = vsel %vm824, %v1017, %v1018
      %v1020 = vrot.slane %v554, 1
      %v1021 = vrot.slane %v555, 1
      %v1022 = vsel %vm824, %v1020, %v1021
      %v1023 = vrot.slane %v556, 1
      %v1024 = vrot.slane %v557, 1
      %v1025 = vsel %vm824, %v1023, %v1024
      %v1026 = vrot.slane %v558, 1
      %v1027 = vrot.slane %v559, 1
      %v1028 = vsel %vm824, %v1026, %v1027
      %v1029 = vrot.slane %v560, 1
      %v1030 = vrot.slane %v561, 1
      %v1031 = vsel %vm824, %v1029, %v1030
      %v1032 = vrot.slane %v562, 1
      %v1033 = vrot.slane %v563, 1
      %v1034 = vsel %vm824, %v1032, %v1033
      %v1035 = vrot.slane %v564, 1
      %v1036 = vrot.slane %v565, 1
      %v1037 = vsel %vm824, %v1035, %v1036
      %v1038 = vrot.slane %v566, 1
      %v1039 = vrot.slane %v567, 1
      %v1040 = vsel %vm824, %v1038, %v1039
      %v1041 = vrot.slane %v568, 1
      %v1042 = vrot.slane %v569, 1
      %v1043 = vsel %vm824, %v1041, %v1042
      %v1044 = vrot.slane %v570, 1
      %v1045 = vrot.slane %v571, 1
      %v1046 = vsel %vm824, %v1044, %v1045
      %v1047 = vrot.slane %v572, 1
      %v1048 = vrot.slane %v573, 1
      %v1049 = vsel %vm824, %v1047, %v1048
      %v1050 = vrot.slane %v574, 1
      %v1051 = vrot.slane %v575, 1
      %v1052 = vsel %vm824, %v1050, %v1051
      %v1053 = vrot.slane %v576, 1
      %v1054 = vrot.slane %v577, 1
      %v1055 = vsel %vm824, %v1053, %v1054
      %v1056 = vrot.slane %v578, 1
      %v1057 = vrot.slane %v579, 1
      %v1058 = vsel %vm824, %v1056, %v1057
      %v1059 = vrot.slane %v580, 1
      %v1060 = vrot.slane %v581, 1
      %v1061 = vsel %vm824, %v1059, %v1060
      %v1062 = vrot.slane %v582, 1
      %v1063 = vrot.slane %v583, 1
      %v1064 = vsel %vm824, %v1062, %v1063
      %v1065 = vrot.slane %v584, 1
      %v1066 = vrot.slane %v585, 1
      %v1067 = vsel %vm824, %v1065, %v1066
      %v1068 = vrot.slane %v586, 1
      %v1069 = vrot.slane %v587, 1
      %v1070 = vsel %vm824, %v1068, %v1069
      %v1071 = vrot.slane %v588, 1
      %v1072 = vrot.slane %v589, 1
      %v1073 = vsel %vm824, %v1071, %v1072
      %v1074 = vrot.slane %v590, 1
      %v1075 = vrot.slane %v591, 1
      %v1076 = vsel %vm824, %v1074, %v1075
      %v1077 = vrot.slane %v592, 1
      %v1078 = vrot.slane %v593, 1
      %v1079 = vsel %vm824, %v1077, %v1078
      %v1080 = vrot.slane %v594, 1
      %v1081 = vrot.slane %v595, 1
      %v1082 = vsel %vm824, %v1080, %v1081
      %v1083 = vrot.slane %v596, 1
      %v1084 = vrot.slane %v597, 1
      %v1085 = vsel %vm824, %v1083, %v1084
      %v1086 = vrot.slane %v598, 1
      %v1087 = vrot.slane %v599, 1
      %v1088 = vsel %vm824, %v1086, %v1087
      %v1089 = vrot.slane %v600, 1
      %v1090 = vrot.slane %v601, 1
      %v1091 = vsel %vm824, %v1089, %v1090
      %v1092 = vrot.slane %v602, 1
      %v1093 = vrot.slane %v603, 1
      %v1094 = vsel %vm824, %v1092, %v1093
      %v1095 = vrot.slane %v604, 1
      %v1096 = vrot.slane %v605, 1
      %v1097 = vsel %vm824, %v1095, %v1096
      %v1098 = vrot.slane %v606, 1
      %v1099 = vrot.slane %v607, 1
      %v1100 = vsel %vm824, %v1098, %v1099
      %v1101 = vrot.slane %v608, 1
      %v1102 = vrot.slane %v609, 1
      %v1103 = vsel %vm824, %v1101, %v1102
      %v1104 = vrot.slane %v610, 1
      %v1105 = vrot.slane %v611, 1
      %v1106 = vsel %vm824, %v1104, %v1105
      %v1107 = vrot.slane %v612, 1
      %v1108 = vrot.slane %v613, 1
      %v1109 = vsel %vm824, %v1107, %v1108
      %v1110 = vrot.slane %v614, 1
      %v1111 = vrot.slane %v615, 1
      %v1112 = vsel %vm824, %v1110, %v1111
      %v1113 = vrot.slane %v616, 1
      %v1114 = vrot.slane %v617, 1
      %v1115 = vsel %vm824, %v1113, %v1114
      %v1116 = vrot.slane %v618, 1
      %v1117 = vrot.slane %v619, 1
      %v1118 = vsel %vm824, %v1116, %v1117
      %v1119 = vrot.slane %v620, 1
      %v1120 = vrot.slane %v621, 1
      %v1121 = vsel %vm824, %v1119, %v1120
      %v1122 = vrot.slane %v622, 1
      %v1123 = vrot.slane %v623, 1
      %v1124 = vsel %vm824, %v1122, %v1123
      %1125 = vrot.lane.b32.xlu0 %v827, 4
      %v1126 = vpop.permute.xlu0 %1125
      %1127 = vrot.lane.b32.xlu0 %v830, 4
      %v1128 = vpop.permute.xlu0 %1127
      %1129 = vrot.lane.b32.xlu0 %v833, 4
      %v1130 = vpop.permute.xlu0 %1129
      %1131 = vrot.lane.b32.xlu0 %v836, 4
      %v1132 = vpop.permute.xlu0 %1131
      %1133 = vrot.lane.b32.xlu0 %v839, 4
      %v1134 = vpop.permute.xlu0 %1133
      %1135 = vrot.lane.b32.xlu0 %v842, 4
      %v1136 = vpop.permute.xlu0 %1135
      %1137 = vrot.lane.b32.xlu0 %v845, 4
      %v1138 = vpop.permute.xlu0 %1137
      %1139 = vrot.lane.b32.xlu0 %v848, 4
      %v1140 = vpop.permute.xlu0 %1139
      %1141 = vrot.lane.b32.xlu0 %v851, 4
      %v1142 = vpop.permute.xlu0 %1141
      %1143 = vrot.lane.b32.xlu0 %v854, 4
      %v1144 = vpop.permute.xlu0 %1143
      %1145 = vrot.lane.b32.xlu0 %v857, 4
      %v1146 = vpop.permute.xlu0 %1145
      %1147 = vrot.lane.b32.xlu0 %v860, 4
      %v1148 = vpop.permute.xlu0 %1147
      %1149 = vrot.lane.b32.xlu0 %v863, 4
      %v1150 = vpop.permute.xlu0 %1149
      %1151 = vrot.lane.b32.xlu0 %v866, 4
      %v1152 = vpop.permute.xlu0 %1151
      %1153 = vrot.lane.b32.xlu0 %v869, 4
      %v1154 = vpop.permute.xlu0 %1153
      %1155 = vrot.lane.b32.xlu0 %v872, 4
      %v1156 = vpop.permute.xlu0 %1155
      %1157 = vrot.lane.b32.xlu0 %v875, 4
      %v1158 = vpop.permute.xlu0 %1157
      %1159 = vrot.lane.b32.xlu0 %v878, 4
      %v1160 = vpop.permute.xlu0 %1159
      %1161 = vrot.lane.b32.xlu0 %v881, 4
      %v1162 = vpop.permute.xlu0 %1161
      %1163 = vrot.lane.b32.xlu0 %v884, 4
      %v1164 = vpop.permute.xlu0 %1163
      %1165 = vrot.lane.b32.xlu0 %v887, 4
      %v1166 = vpop.permute.xlu0 %1165
      %1167 = vrot.lane.b32.xlu0 %v890, 4
      %v1168 = vpop.permute.xlu0 %1167
      %1169 = vrot.lane.b32.xlu0 %v893, 4
      %v1170 = vpop.permute.xlu0 %1169
      %1171 = vrot.lane.b32.xlu0 %v896, 4
      %v1172 = vpop.permute.xlu0 %1171
      %1173 = vrot.lane.b32.xlu0 %v899, 4
      %v1174 = vpop.permute.xlu0 %1173
      %1175 = vrot.lane.b32.xlu0 %v902, 4
      %v1176 = vpop.permute.xlu0 %1175
      %1177 = vrot.lane.b32.xlu0 %v905, 4
      %v1178 = vpop.permute.xlu0 %1177
      %1179 = vrot.lane.b32.xlu0 %v908, 4
      %v1180 = vpop.permute.xlu0 %1179
      %1181 = vrot.lane.b32.xlu0 %v911, 4
      %v1182 = vpop.permute.xlu0 %1181
      %1183 = vrot.lane.b32.xlu0 %v914, 4
      %v1184 = vpop.permute.xlu0 %1183
      %1185 = vrot.lane.b32.xlu0 %v917, 4
      %v1186 = vpop.permute.xlu0 %1185
      %1187 = vrot.lane.b32.xlu0 %v920, 4
      %v1188 = vpop.permute.xlu0 %1187
      %1189 = vrot.lane.b32.xlu0 %v923, 4
      %v1190 = vpop.permute.xlu0 %1189
      %1191 = vrot.lane.b32.xlu0 %v926, 4
      %v1192 = vpop.permute.xlu0 %1191
      %1193 = vrot.lane.b32.xlu0 %v929, 4
      %v1194 = vpop.permute.xlu0 %1193
      %1195 = vrot.lane.b32.xlu0 %v932, 4
      %v1196 = vpop.permute.xlu0 %1195
      %1197 = vrot.lane.b32.xlu0 %v935, 4
      %v1198 = vpop.permute.xlu0 %1197
      %1199 = vrot.lane.b32.xlu0 %v938, 4
      %v1200 = vpop.permute.xlu0 %1199
      %1201 = vrot.lane.b32.xlu0 %v941, 4
      %v1202 = vpop.permute.xlu0 %1201
      %1203 = vrot.lane.b32.xlu0 %v944, 4
      %v1204 = vpop.permute.xlu0 %1203
      %1205 = vrot.lane.b32.xlu0 %v947, 4
      %v1206 = vpop.permute.xlu0 %1205
      %1207 = vrot.lane.b32.xlu0 %v950, 4
      %v1208 = vpop.permute.xlu0 %1207
      %1209 = vrot.lane.b32.xlu0 %v953, 4
      %v1210 = vpop.permute.xlu0 %1209
      %1211 = vrot.lane.b32.xlu0 %v956, 4
      %v1212 = vpop.permute.xlu0 %1211
      %1213 = vrot.lane.b32.xlu0 %v959, 4
      %v1214 = vpop.permute.xlu0 %1213
      %1215 = vrot.lane.b32.xlu0 %v962, 4
      %v1216 = vpop.permute.xlu0 %1215
      %1217 = vrot.lane.b32.xlu0 %v965, 4
      %v1218 = vpop.permute.xlu0 %1217
      %1219 = vrot.lane.b32.xlu0 %v968, 4
      %v1220 = vpop.permute.xlu0 %1219
      %1221 = vrot.lane.b32.xlu0 %v971, 4
      %v1222 = vpop.permute.xlu0 %1221
      %1223 = vrot.lane.b32.xlu0 %v974, 4
      %v1224 = vpop.permute.xlu0 %1223
      %1225 = vrot.lane.b32.xlu0 %v977, 4
      %v1226 = vpop.permute.xlu0 %1225
      %1227 = vrot.lane.b32.xlu0 %v980, 4
      %v1228 = vpop.permute.xlu0 %1227
      %1229 = vrot.lane.b32.xlu0 %v983, 4
      %v1230 = vpop.permute.xlu0 %1229
      %1231 = vrot.lane.b32.xlu0 %v986, 4
      %v1232 = vpop.permute.xlu0 %1231
      %1233 = vrot.lane.b32.xlu0 %v989, 4
      %v1234 = vpop.permute.xlu0 %1233
      %1235 = vrot.lane.b32.xlu0 %v992, 4
      %v1236 = vpop.permute.xlu0 %1235
      %1237 = vrot.lane.b32.xlu0 %v995, 4
      %v1238 = vpop.permute.xlu0 %1237
      %1239 = vrot.lane.b32.xlu0 %v998, 4
      %v1240 = vpop.permute.xlu0 %1239
      %1241 = vrot.lane.b32.xlu0 %v1001, 4
      %v1242 = vpop.permute.xlu0 %1241
      %1243 = vrot.lane.b32.xlu0 %v1004, 4
      %v1244 = vpop.permute.xlu0 %1243
      %1245 = vrot.lane.b32.xlu0 %v1007, 4
      %v1246 = vpop.permute.xlu0 %1245
      %1247 = vrot.lane.b32.xlu0 %v1010, 4
      %v1248 = vpop.permute.xlu0 %1247
      %1249 = vrot.lane.b32.xlu0 %v1013, 4
      %v1250 = vpop.permute.xlu0 %1249
      %1251 = vrot.lane.b32.xlu0 %v1016, 4
      %v1252 = vpop.permute.xlu0 %1251
      %1253 = vrot.lane.b32.xlu0 %v1019, 4
      %v1254 = vpop.permute.xlu0 %1253
      %1255 = vrot.lane.b32.xlu0 %v1022, 4
      %v1256 = vpop.permute.xlu0 %1255
      %1257 = vrot.lane.b32.xlu0 %v1025, 4
      %v1258 = vpop.permute.xlu0 %1257
      %1259 = vrot.lane.b32.xlu0 %v1028, 4
      %v1260 = vpop.permute.xlu0 %1259
      %1261 = vrot.lane.b32.xlu0 %v1031, 4
      %v1262 = vpop.permute.xlu0 %1261
      %1263 = vrot.lane.b32.xlu0 %v1034, 4
      %v1264 = vpop.permute.xlu0 %1263
      %1265 = vrot.lane.b32.xlu0 %v1037, 4
      %v1266 = vpop.permute.xlu0 %1265
      %1267 = vrot.lane.b32.xlu0 %v1040, 4
      %v1268 = vpop.permute.xlu0 %1267
      %1269 = vrot.lane.b32.xlu0 %v1043, 4
      %v1270 = vpop.permute.xlu0 %1269
      %1271 = vrot.lane.b32.xlu0 %v1046, 4
      %v1272 = vpop.permute.xlu0 %1271
      %1273 = vrot.lane.b32.xlu0 %v1049, 4
      %v1274 = vpop.permute.xlu0 %1273
      %1275 = vrot.lane.b32.xlu0 %v1052, 4
      %v1276 = vpop.permute.xlu0 %1275
      %1277 = vrot.lane.b32.xlu0 %v1055, 4
      %v1278 = vpop.permute.xlu0 %1277
      %1279 = vrot.lane.b32.xlu0 %v1058, 4
      %v1280 = vpop.permute.xlu0 %1279
      %1281 = vrot.lane.b32.xlu0 %v1061, 4
      %v1282 = vpop.permute.xlu0 %1281
      %1283 = vrot.lane.b32.xlu0 %v1064, 4
      %v1284 = vpop.permute.xlu0 %1283
      %1285 = vrot.lane.b32.xlu0 %v1067, 4
      %v1286 = vpop.permute.xlu0 %1285
      %1287 = vrot.lane.b32.xlu0 %v1070, 4
      %v1288 = vpop.permute.xlu0 %1287
      %1289 = vrot.lane.b32.xlu0 %v1073, 4
      %v1290 = vpop.permute.xlu0 %1289
      %1291 = vrot.lane.b32.xlu0 %v1076, 4
      %v1292 = vpop.permute.xlu0 %1291
      %1293 = vrot.lane.b32.xlu0 %v1079, 4
      %v1294 = vpop.permute.xlu0 %1293
      %1295 = vrot.lane.b32.xlu0 %v1082, 4
      %v1296 = vpop.permute.xlu0 %1295
      %1297 = vrot.lane.b32.xlu0 %v1085, 4
      %v1298 = vpop.permute.xlu0 %1297
      %1299 = vrot.lane.b32.xlu0 %v1088, 4
      %v1300 = vpop.permute.xlu0 %1299
      %1301 = vrot.lane.b32.xlu0 %v1091, 4
      %v1302 = vpop.permute.xlu0 %1301
      %1303 = vrot.lane.b32.xlu0 %v1094, 4
      %v1304 = vpop.permute.xlu0 %1303
      %1305 = vrot.lane.b32.xlu0 %v1097, 4
      %v1306 = vpop.permute.xlu0 %1305
      %1307 = vrot.lane.b32.xlu0 %v1100, 4
      %v1308 = vpop.permute.xlu0 %1307
      %1309 = vrot.lane.b32.xlu0 %v1103, 4
      %v1310 = vpop.permute.xlu0 %1309
      %1311 = vrot.lane.b32.xlu0 %v1106, 4
      %v1312 = vpop.permute.xlu0 %1311
      %1313 = vrot.lane.b32.xlu0 %v1109, 4
      %v1314 = vpop.permute.xlu0 %1313
      %1315 = vrot.lane.b32.xlu0 %v1112, 4
      %v1316 = vpop.permute.xlu0 %1315
      %1317 = vrot.lane.b32.xlu0 %v1115, 4
      %v1318 = vpop.permute.xlu0 %1317
      %1319 = vrot.lane.b32.xlu0 %v1118, 4
      %v1320 = vpop.permute.xlu0 %1319
      %1321 = vrot.lane.b32.xlu0 %v1121, 4
      %v1322 = vpop.permute.xlu0 %1321
      %1323 = vrot.lane.b32.xlu0 %v1124, 4
      %v1324 = vpop.permute.xlu0 %1323
      %vm1425 = vcmask 1045504
      %v1426 = vrot.slane %v424, 2
      %v1427 = vrot.slane %v425, 2
      %v1428 = vsel %vm1425, %v1426, %v1427
      %v1429 = vrot.slane %v426, 2
      %v1430 = vrot.slane %v427, 2
      %v1431 = vsel %vm1425, %v1429, %v1430
      %v1432 = vrot.slane %v428, 2
      %v1433 = vrot.slane %v429, 2
      %v1434 = vsel %vm1425, %v1432, %v1433
      %v1435 = vrot.slane %v430, 2
      %v1436 = vrot.slane %v431, 2
      %v1437 = vsel %vm1425, %v1435, %v1436
      %v1438 = vrot.slane %v432, 2
      %v1439 = vrot.slane %v433, 2
      %v1440 = vsel %vm1425, %v1438, %v1439
      %v1441 = vrot.slane %v434, 2
      %v1442 = vrot.slane %v435, 2
      %v1443 = vsel %vm1425, %v1441, %v1442
      %v1444 = vrot.slane %v436, 2
      %v1445 = vrot.slane %v437, 2
      %v1446 = vsel %vm1425, %v1444, %v1445
      %v1447 = vrot.slane %v438, 2
      %v1448 = vrot.slane %v439, 2
      %v1449 = vsel %vm1425, %v1447, %v1448
      %v1450 = vrot.slane %v440, 2
      %v1451 = vrot.slane %v441, 2
      %v1452 = vsel %vm1425, %v1450, %v1451
      %v1453 = vrot.slane %v442, 2
      %v1454 = vrot.slane %v443, 2
      %v1455 = vsel %vm1425, %v1453, %v1454
      %v1456 = vrot.slane %v444, 2
      %v1457 = vrot.slane %v445, 2
      %v1458 = vsel %vm1425, %v1456, %v1457
      %v1459 = vrot.slane %v446, 2
      %v1460 = vrot.slane %v447, 2
      %v1461 = vsel %vm1425, %v1459, %v1460
      %v1462 = vrot.slane %v448, 2
      %v1463 = vrot.slane %v449, 2
      %v1464 = vsel %vm1425, %v1462, %v1463
      %v1465 = vrot.slane %v450, 2
      %v1466 = vrot.slane %v451, 2
      %v1467 = vsel %vm1425, %v1465, %v1466
      %v1468 = vrot.slane %v452, 2
      %v1469 = vrot.slane %v453, 2
      %v1470 = vsel %vm1425, %v1468, %v1469
      %v1471 = vrot.slane %v454, 2
      %v1472 = vrot.slane %v455, 2
      %v1473 = vsel %vm1425, %v1471, %v1472
      %v1474 = vrot.slane %v456, 2
      %v1475 = vrot.slane %v457, 2
      %v1476 = vsel %vm1425, %v1474, %v1475
      %v1477 = vrot.slane %v458, 2
      %v1478 = vrot.slane %v459, 2
      %v1479 = vsel %vm1425, %v1477, %v1478
      %v1480 = vrot.slane %v460, 2
      %v1481 = vrot.slane %v461, 2
      %v1482 = vsel %vm1425, %v1480, %v1481
      %v1483 = vrot.slane %v462, 2
      %v1484 = vrot.slane %v463, 2
      %v1485 = vsel %vm1425, %v1483, %v1484
      %v1486 = vrot.slane %v464, 2
      %v1487 = vrot.slane %v465, 2
      %v1488 = vsel %vm1425, %v1486, %v1487
      %v1489 = vrot.slane %v466, 2
      %v1490 = vrot.slane %v467, 2
      %v1491 = vsel %vm1425, %v1489, %v1490
      %v1492 = vrot.slane %v468, 2
      %v1493 = vrot.slane %v469, 2
      %v1494 = vsel %vm1425, %v1492, %v1493
      %v1495 = vrot.slane %v470, 2
      %v1496 = vrot.slane %v471, 2
      %v1497 = vsel %vm1425, %v1495, %v1496
      %v1498 = vrot.slane %v472, 2
      %v1499 = vrot.slane %v473, 2
      %v1500 = vsel %vm1425, %v1498, %v1499
      %v1501 = vrot.slane %v474, 2
      %v1502 = vrot.slane %v475, 2
      %v1503 = vsel %vm1425, %v1501, %v1502
      %v1504 = vrot.slane %v476, 2
      %v1505 = vrot.slane %v477, 2
      %v1506 = vsel %vm1425, %v1504, %v1505
      %v1507 = vrot.slane %v478, 2
      %v1508 = vrot.slane %v479, 2
      %v1509 = vsel %vm1425, %v1507, %v1508
      %v1510 = vrot.slane %v480, 2
      %v1511 = vrot.slane %v481, 2
      %v1512 = vsel %vm1425, %v1510, %v1511
      %v1513 = vrot.slane %v482, 2
      %v1514 = vrot.slane %v483, 2
      %v1515 = vsel %vm1425, %v1513, %v1514
      %v1516 = vrot.slane %v484, 2
      %v1517 = vrot.slane %v485, 2
      %v1518 = vsel %vm1425, %v1516, %v1517
      %v1519 = vrot.slane %v486, 2
      %v1520 = vrot.slane %v487, 2
      %v1521 = vsel %vm1425, %v1519, %v1520
      %v1522 = vrot.slane %v488, 2
      %v1523 = vrot.slane %v489, 2
      %v1524 = vsel %vm1425, %v1522, %v1523
      %v1525 = vrot.slane %v490, 2
      %v1526 = vrot.slane %v491, 2
      %v1527 = vsel %vm1425, %v1525, %v1526
      %v1528 = vrot.slane %v492, 2
      %v1529 = vrot.slane %v493, 2
      %v1530 = vsel %vm1425, %v1528, %v1529
      %v1531 = vrot.slane %v494, 2
      %v1532 = vrot.slane %v495, 2
      %v1533 = vsel %vm1425, %v1531, %v1532
      %v1534 = vrot.slane %v496, 2
      %v1535 = vrot.slane %v497, 2
      %v1536 = vsel %vm1425, %v1534, %v1535
      %v1537 = vrot.slane %v498, 2
      %v1538 = vrot.slane %v499, 2
      %v1539 = vsel %vm1425, %v1537, %v1538
      %v1540 = vrot.slane %v500, 2
      %v1541 = vrot.slane %v501, 2
      %v1542 = vsel %vm1425, %v1540, %v1541
      %v1543 = vrot.slane %v502, 2
      %v1544 = vrot.slane %v503, 2
      %v1545 = vsel %vm1425, %v1543, %v1544
      %v1546 = vrot.slane %v504, 2
      %v1547 = vrot.slane %v505, 2
      %v1548 = vsel %vm1425, %v1546, %v1547
      %v1549 = vrot.slane %v506, 2
      %v1550 = vrot.slane %v507, 2
      %v1551 = vsel %vm1425, %v1549, %v1550
      %v1552 = vrot.slane %v508, 2
      %v1553 = vrot.slane %v509, 2
      %v1554 = vsel %vm1425, %v1552, %v1553
      %v1555 = vrot.slane %v510, 2
      %v1556 = vrot.slane %v511, 2
      %v1557 = vsel %vm1425, %v1555, %v1556
      %v1558 = vrot.slane %v512, 2
      %v1559 = vrot.slane %v513, 2
      %v1560 = vsel %vm1425, %v1558, %v1559
      %v1561 = vrot.slane %v514, 2
      %v1562 = vrot.slane %v515, 2
      %v1563 = vsel %vm1425, %v1561, %v1562
      %v1564 = vrot.slane %v516, 2
      %v1565 = vrot.slane %v517, 2
      %v1566 = vsel %vm1425, %v1564, %v1565
      %v1567 = vrot.slane %v518, 2
      %v1568 = vrot.slane %v519, 2
      %v1569 = vsel %vm1425, %v1567, %v1568
      %v1570 = vrot.slane %v520, 2
      %v1571 = vrot.slane %v521, 2
      %v1572 = vsel %vm1425, %v1570, %v1571
      %v1573 = vrot.slane %v522, 2
      %v1574 = vrot.slane %v523, 2
      %v1575 = vsel %vm1425, %v1573, %v1574
      %v1576 = vrot.slane %v524, 2
      %v1577 = vrot.slane %v525, 2
      %v1578 = vsel %vm1425, %v1576, %v1577
      %v1579 = vrot.slane %v526, 2
      %v1580 = vrot.slane %v527, 2
      %v1581 = vsel %vm1425, %v1579, %v1580
      %v1582 = vrot.slane %v528, 2
      %v1583 = vrot.slane %v529, 2
      %v1584 = vsel %vm1425, %v1582, %v1583
      %v1585 = vrot.slane %v530, 2
      %v1586 = vrot.slane %v531, 2
      %v1587 = vsel %vm1425, %v1585, %v1586
      %v1588 = vrot.slane %v532, 2
      %v1589 = vrot.slane %v533, 2
      %v1590 = vsel %vm1425, %v1588, %v1589
      %v1591 = vrot.slane %v534, 2
      %v1592 = vrot.slane %v535, 2
      %v1593 = vsel %vm1425, %v1591, %v1592
      %v1594 = vrot.slane %v536, 2
      %v1595 = vrot.slane %v537, 2
      %v1596 = vsel %vm1425, %v1594, %v1595
      %v1597 = vrot.slane %v538, 2
      %v1598 = vrot.slane %v539, 2
      %v1599 = vsel %vm1425, %v1597, %v1598
      %v1600 = vrot.slane %v540, 2
      %v1601 = vrot.slane %v541, 2
      %v1602 = vsel %vm1425, %v1600, %v1601
      %v1603 = vrot.slane %v542, 2
      %v1604 = vrot.slane %v543, 2
      %v1605 = vsel %vm1425, %v1603, %v1604
      %v1606 = vrot.slane %v544, 2
      %v1607 = vrot.slane %v545, 2
      %v1608 = vsel %vm1425, %v1606, %v1607
      %v1609 = vrot.slane %v546, 2
      %v1610 = vrot.slane %v547, 2
      %v1611 = vsel %vm1425, %v1609, %v1610
      %v1612 = vrot.slane %v548, 2
      %v1613 = vrot.slane %v549, 2
      %v1614 = vsel %vm1425, %v1612, %v1613
      %v1615 = vrot.slane %v550, 2
      %v1616 = vrot.slane %v551, 2
      %v1617 = vsel %vm1425, %v1615, %v1616
      %v1618 = vrot.slane %v552, 2
      %v1619 = vrot.slane %v553, 2
      %v1620 = vsel %vm1425, %v1618, %v1619
      %v1621 = vrot.slane %v554, 2
      %v1622 = vrot.slane %v555, 2
      %v1623 = vsel %vm1425, %v1621, %v1622
      %v1624 = vrot.slane %v556, 2
      %v1625 = vrot.slane %v557, 2
      %v1626 = vsel %vm1425, %v1624, %v1625
      %v1627 = vrot.slane %v558, 2
      %v1628 = vrot.slane %v559, 2
      %v1629 = vsel %vm1425, %v1627, %v1628
      %v1630 = vrot.slane %v560, 2
      %v1631 = vrot.slane %v561, 2
      %v1632 = vsel %vm1425, %v1630, %v1631
      %v1633 = vrot.slane %v562, 2
      %v1634 = vrot.slane %v563, 2
      %v1635 = vsel %vm1425, %v1633, %v1634
      %v1636 = vrot.slane %v564, 2
      %v1637 = vrot.slane %v565, 2
      %v1638 = vsel %vm1425, %v1636, %v1637
      %v1639 = vrot.slane %v566, 2
      %v1640 = vrot.slane %v567, 2
      %v1641 = vsel %vm1425, %v1639, %v1640
      %v1642 = vrot.slane %v568, 2
      %v1643 = vrot.slane %v569, 2
      %v1644 = vsel %vm1425, %v1642, %v1643
      %v1645 = vrot.slane %v570, 2
      %v1646 = vrot.slane %v571, 2
      %v1647 = vsel %vm1425, %v1645, %v1646
      %v1648 = vrot.slane %v572, 2
      %v1649 = vrot.slane %v573, 2
      %v1650 = vsel %vm1425, %v1648, %v1649
      %v1651 = vrot.slane %v574, 2
      %v1652 = vrot.slane %v575, 2
      %v1653 = vsel %vm1425, %v1651, %v1652
      %v1654 = vrot.slane %v576, 2
      %v1655 = vrot.slane %v577, 2
      %v1656 = vsel %vm1425, %v1654, %v1655
      %v1657 = vrot.slane %v578, 2
      %v1658 = vrot.slane %v579, 2
      %v1659 = vsel %vm1425, %v1657, %v1658
      %v1660 = vrot.slane %v580, 2
      %v1661 = vrot.slane %v581, 2
      %v1662 = vsel %vm1425, %v1660, %v1661
      %v1663 = vrot.slane %v582, 2
      %v1664 = vrot.slane %v583, 2
      %v1665 = vsel %vm1425, %v1663, %v1664
      %v1666 = vrot.slane %v584, 2
      %v1667 = vrot.slane %v585, 2
      %v1668 = vsel %vm1425, %v1666, %v1667
      %v1669 = vrot.slane %v586, 2
      %v1670 = vrot.slane %v587, 2
      %v1671 = vsel %vm1425, %v1669, %v1670
      %v1672 = vrot.slane %v588, 2
      %v1673 = vrot.slane %v589, 2
      %v1674 = vsel %vm1425, %v1672, %v1673
      %v1675 = vrot.slane %v590, 2
      %v1676 = vrot.slane %v591, 2
      %v1677 = vsel %vm1425, %v1675, %v1676
      %v1678 = vrot.slane %v592, 2
      %v1679 = vrot.slane %v593, 2
      %v1680 = vsel %vm1425, %v1678, %v1679
      %v1681 = vrot.slane %v594, 2
      %v1682 = vrot.slane %v595, 2
      %v1683 = vsel %vm1425, %v1681, %v1682
      %v1684 = vrot.slane %v596, 2
      %v1685 = vrot.slane %v597, 2
      %v1686 = vsel %vm1425, %v1684, %v1685
      %v1687 = vrot.slane %v598, 2
      %v1688 = vrot.slane %v599, 2
      %v1689 = vsel %vm1425, %v1687, %v1688
      %v1690 = vrot.slane %v600, 2
      %v1691 = vrot.slane %v601, 2
      %v1692 = vsel %vm1425, %v1690, %v1691
      %v1693 = vrot.slane %v602, 2
      %v1694 = vrot.slane %v603, 2
      %v1695 = vsel %vm1425, %v1693, %v1694
      %v1696 = vrot.slane %v604, 2
      %v1697 = vrot.slane %v605, 2
      %v1698 = vsel %vm1425, %v1696, %v1697
      %v1699 = vrot.slane %v606, 2
      %v1700 = vrot.slane %v607, 2
      %v1701 = vsel %vm1425, %v1699, %v1700
      %v1702 = vrot.slane %v608, 2
      %v1703 = vrot.slane %v609, 2
      %v1704 = vsel %vm1425, %v1702, %v1703
      %v1705 = vrot.slane %v610, 2
      %v1706 = vrot.slane %v611, 2
      %v1707 = vsel %vm1425, %v1705, %v1706
      %v1708 = vrot.slane %v612, 2
      %v1709 = vrot.slane %v613, 2
      %v1710 = vsel %vm1425, %v1708, %v1709
      %v1711 = vrot.slane %v614, 2
      %v1712 = vrot.slane %v615, 2
      %v1713 = vsel %vm1425, %v1711, %v1712
      %v1714 = vrot.slane %v616, 2
      %v1715 = vrot.slane %v617, 2
      %v1716 = vsel %vm1425, %v1714, %v1715
      %v1717 = vrot.slane %v618, 2
      %v1718 = vrot.slane %v619, 2
      %v1719 = vsel %vm1425, %v1717, %v1718
      %v1720 = vrot.slane %v620, 2
      %v1721 = vrot.slane %v621, 2
      %v1722 = vsel %vm1425, %v1720, %v1721
      %v1723 = vrot.slane %v622, 2
      %v1724 = vrot.slane %v623, 2
      %v1725 = vsel %vm1425, %v1723, %v1724
      %1726 = vrot.lane.b32.xlu0 %v1428, 8
      %v1727 = vpop.permute.xlu0 %1726
      %1728 = vrot.lane.b32.xlu0 %v1431, 8
      %v1729 = vpop.permute.xlu0 %1728
      %1730 = vrot.lane.b32.xlu0 %v1434, 8
      %v1731 = vpop.permute.xlu0 %1730
      %1732 = vrot.lane.b32.xlu0 %v1437, 8
      %v1733 = vpop.permute.xlu0 %1732
      %1734 = vrot.lane.b32.xlu0 %v1440, 8
      %v1735 = vpop.permute.xlu0 %1734
      %1736 = vrot.lane.b32.xlu0 %v1443, 8
      %v1737 = vpop.permute.xlu0 %1736
      %1738 = vrot.lane.b32.xlu0 %v1446, 8
      %v1739 = vpop.permute.xlu0 %1738
      %1740 = vrot.lane.b32.xlu0 %v1449, 8
      %v1741 = vpop.permute.xlu0 %1740
      %1742 = vrot.lane.b32.xlu0 %v1452, 8
      %v1743 = vpop.permute.xlu0 %1742
      %1744 = vrot.lane.b32.xlu0 %v1455, 8
      %v1745 = vpop.permute.xlu0 %1744
      %1746 = vrot.lane.b32.xlu0 %v1458, 8
      %v1747 = vpop.permute.xlu0 %1746
      %1748 = vrot.lane.b32.xlu0 %v1461, 8
      %v1749 = vpop.permute.xlu0 %1748
      %1750 = vrot.lane.b32.xlu0 %v1464, 8
      %v1751 = vpop.permute.xlu0 %1750
      %1752 = vrot.lane.b32.xlu0 %v1467, 8
      %v1753 = vpop.permute.xlu0 %1752
      %1754 = vrot.lane.b32.xlu0 %v1470, 8
      %v1755 = vpop.permute.xlu0 %1754
      %1756 = vrot.lane.b32.xlu0 %v1473, 8
      %v1757 = vpop.permute.xlu0 %1756
      %1758 = vrot.lane.b32.xlu0 %v1476, 8
      %v1759 = vpop.permute.xlu0 %1758
      %1760 = vrot.lane.b32.xlu0 %v1479, 8
      %v1761 = vpop.permute.xlu0 %1760
      %1762 = vrot.lane.b32.xlu0 %v1482, 8
      %v1763 = vpop.permute.xlu0 %1762
      %1764 = vrot.lane.b32.xlu0 %v1485, 8
      %v1765 = vpop.permute.xlu0 %1764
      %1766 = vrot.lane.b32.xlu0 %v1488, 8
      %v1767 = vpop.permute.xlu0 %1766
      %1768 = vrot.lane.b32.xlu0 %v1491, 8
      %v1769 = vpop.permute.xlu0 %1768
      %1770 = vrot.lane.b32.xlu0 %v1494, 8
      %v1771 = vpop.permute.xlu0 %1770
      %1772 = vrot.lane.b32.xlu0 %v1497, 8
      %v1773 = vpop.permute.xlu0 %1772
      %1774 = vrot.lane.b32.xlu0 %v1500, 8
      %v1775 = vpop.permute.xlu0 %1774
      %1776 = vrot.lane.b32.xlu0 %v1503, 8
      %v1777 = vpop.permute.xlu0 %1776
      %1778 = vrot.lane.b32.xlu0 %v1506, 8
      %v1779 = vpop.permute.xlu0 %1778
      %1780 = vrot.lane.b32.xlu0 %v1509, 8
      %v1781 = vpop.permute.xlu0 %1780
      %1782 = vrot.lane.b32.xlu0 %v1512, 8
      %v1783 = vpop.permute.xlu0 %1782
      %1784 = vrot.lane.b32.xlu0 %v1515, 8
      %v1785 = vpop.permute.xlu0 %1784
      %1786 = vrot.lane.b32.xlu0 %v1518, 8
      %v1787 = vpop.permute.xlu0 %1786
      %1788 = vrot.lane.b32.xlu0 %v1521, 8
      %v1789 = vpop.permute.xlu0 %1788
      %1790 = vrot.lane.b32.xlu0 %v1524, 8
      %v1791 = vpop.permute.xlu0 %1790
      %1792 = vrot.lane.b32.xlu0 %v1527, 8
      %v1793 = vpop.permute.xlu0 %1792
      %1794 = vrot.lane.b32.xlu0 %v1530, 8
      %v1795 = vpop.permute.xlu0 %1794
      %1796 = vrot.lane.b32.xlu0 %v1533, 8
      %v1797 = vpop.permute.xlu0 %1796
      %1798 = vrot.lane.b32.xlu0 %v1536, 8
      %v1799 = vpop.permute.xlu0 %1798
      %1800 = vrot.lane.b32.xlu0 %v1539, 8
      %v1801 = vpop.permute.xlu0 %1800
      %1802 = vrot.lane.b32.xlu0 %v1542, 8
      %v1803 = vpop.permute.xlu0 %1802
      %1804 = vrot.lane.b32.xlu0 %v1545, 8
      %v1805 = vpop.permute.xlu0 %1804
      %1806 = vrot.lane.b32.xlu0 %v1548, 8
      %v1807 = vpop.permute.xlu0 %1806
      %1808 = vrot.lane.b32.xlu0 %v1551, 8
      %v1809 = vpop.permute.xlu0 %1808
      %1810 = vrot.lane.b32.xlu0 %v1554, 8
      %v1811 = vpop.permute.xlu0 %1810
      %1812 = vrot.lane.b32.xlu0 %v1557, 8
      %v1813 = vpop.permute.xlu0 %1812
      %1814 = vrot.lane.b32.xlu0 %v1560, 8
      %v1815 = vpop.permute.xlu0 %1814
      %1816 = vrot.lane.b32.xlu0 %v1563, 8
      %v1817 = vpop.permute.xlu0 %1816
      %1818 = vrot.lane.b32.xlu0 %v1566, 8
      %v1819 = vpop.permute.xlu0 %1818
      %1820 = vrot.lane.b32.xlu0 %v1569, 8
      %v1821 = vpop.permute.xlu0 %1820
      %1822 = vrot.lane.b32.xlu0 %v1572, 8
      %v1823 = vpop.permute.xlu0 %1822
      %1824 = vrot.lane.b32.xlu0 %v1575, 8
      %v1825 = vpop.permute.xlu0 %1824
      %1826 = vrot.lane.b32.xlu0 %v1578, 8
      %v1827 = vpop.permute.xlu0 %1826
      %1828 = vrot.lane.b32.xlu0 %v1581, 8
      %v1829 = vpop.permute.xlu0 %1828
      %1830 = vrot.lane.b32.xlu0 %v1584, 8
      %v1831 = vpop.permute.xlu0 %1830
      %1832 = vrot.lane.b32.xlu0 %v1587, 8
      %v1833 = vpop.permute.xlu0 %1832
      %1834 = vrot.lane.b32.xlu0 %v1590, 8
      %v1835 = vpop.permute.xlu0 %1834
      %1836 = vrot.lane.b32.xlu0 %v1593, 8
      %v1837 = vpop.permute.xlu0 %1836
      %1838 = vrot.lane.b32.xlu0 %v1596, 8
      %v1839 = vpop.permute.xlu0 %1838
      %1840 = vrot.lane.b32.xlu0 %v1599, 8
      %v1841 = vpop.permute.xlu0 %1840
      %1842 = vrot.lane.b32.xlu0 %v1602, 8
      %v1843 = vpop.permute.xlu0 %1842
      %1844 = vrot.lane.b32.xlu0 %v1605, 8
      %v1845 = vpop.permute.xlu0 %1844
      %1846 = vrot.lane.b32.xlu0 %v1608, 8
      %v1847 = vpop.permute.xlu0 %1846
      %1848 = vrot.lane.b32.xlu0 %v1611, 8
      %v1849 = vpop.permute.xlu0 %1848
      %1850 = vrot.lane.b32.xlu0 %v1614, 8
      %v1851 = vpop.permute.xlu0 %1850
      %1852 = vrot.lane.b32.xlu0 %v1617, 8
      %v1853 = vpop.permute.xlu0 %1852
      %1854 = vrot.lane.b32.xlu0 %v1620, 8
      %v1855 = vpop.permute.xlu0 %1854
      %1856 = vrot.lane.b32.xlu0 %v1623, 8
      %v1857 = vpop.permute.xlu0 %1856
      %1858 = vrot.lane.b32.xlu0 %v1626, 8
      %v1859 = vpop.permute.xlu0 %1858
      %1860 = vrot.lane.b32.xlu0 %v1629, 8
      %v1861 = vpop.permute.xlu0 %1860
      %1862 = vrot.lane.b32.xlu0 %v1632, 8
      %v1863 = vpop.permute.xlu0 %1862
      %1864 = vrot.lane.b32.xlu0 %v1635, 8
      %v1865 = vpop.permute.xlu0 %1864
      %1866 = vrot.lane.b32.xlu0 %v1638, 8
      %v1867 = vpop.permute.xlu0 %1866
      %1868 = vrot.lane.b32.xlu0 %v1641, 8
      %v1869 = vpop.permute.xlu0 %1868
      %1870 = vrot.lane.b32.xlu0 %v1644, 8
      %v1871 = vpop.permute.xlu0 %1870
      %1872 = vrot.lane.b32.xlu0 %v1647, 8
      %v1873 = vpop.permute.xlu0 %1872
      %1874 = vrot.lane.b32.xlu0 %v1650, 8
      %v1875 = vpop.permute.xlu0 %1874
      %1876 = vrot.lane.b32.xlu0 %v1653, 8
      %v1877 = vpop.permute.xlu0 %1876
      %1878 = vrot.lane.b32.xlu0 %v1656, 8
      %v1879 = vpop.permute.xlu0 %1878
      %1880 = vrot.lane.b32.xlu0 %v1659, 8
      %v1881 = vpop.permute.xlu0 %1880
      %1882 = vrot.lane.b32.xlu0 %v1662, 8
      %v1883 = vpop.permute.xlu0 %1882
      %1884 = vrot.lane.b32.xlu0 %v1665, 8
      %v1885 = vpop.permute.xlu0 %1884
      %1886 = vrot.lane.b32.xlu0 %v1668, 8
      %v1887 = vpop.permute.xlu0 %1886
      %1888 = vrot.lane.b32.xlu0 %v1671, 8
      %v1889 = vpop.permute.xlu0 %1888
      %1890 = vrot.lane.b32.xlu0 %v1674, 8
      %v1891 = vpop.permute.xlu0 %1890
      %1892 = vrot.lane.b32.xlu0 %v1677, 8
      %v1893 = vpop.permute.xlu0 %1892
      %1894 = vrot.lane.b32.xlu0 %v1680, 8
      %v1895 = vpop.permute.xlu0 %1894
      %1896 = vrot.lane.b32.xlu0 %v1683, 8
      %v1897 = vpop.permute.xlu0 %1896
      %1898 = vrot.lane.b32.xlu0 %v1686, 8
      %v1899 = vpop.permute.xlu0 %1898
      %1900 = vrot.lane.b32.xlu0 %v1689, 8
      %v1901 = vpop.permute.xlu0 %1900
      %1902 = vrot.lane.b32.xlu0 %v1692, 8
      %v1903 = vpop.permute.xlu0 %1902
      %1904 = vrot.lane.b32.xlu0 %v1695, 8
      %v1905 = vpop.permute.xlu0 %1904
      %1906 = vrot.lane.b32.xlu0 %v1698, 8
      %v1907 = vpop.permute.xlu0 %1906
      %1908 = vrot.lane.b32.xlu0 %v1701, 8
      %v1909 = vpop.permute.xlu0 %1908
      %1910 = vrot.lane.b32.xlu0 %v1704, 8
      %v1911 = vpop.permute.xlu0 %1910
      %1912 = vrot.lane.b32.xlu0 %v1707, 8
      %v1913 = vpop.permute.xlu0 %1912
      %1914 = vrot.lane.b32.xlu0 %v1710, 8
      %v1915 = vpop.permute.xlu0 %1914
      %1916 = vrot.lane.b32.xlu0 %v1713, 8
      %v1917 = vpop.permute.xlu0 %1916
      %1918 = vrot.lane.b32.xlu0 %v1716, 8
      %v1919 = vpop.permute.xlu0 %1918
      %1920 = vrot.lane.b32.xlu0 %v1719, 8
      %v1921 = vpop.permute.xlu0 %1920
      %1922 = vrot.lane.b32.xlu0 %v1722, 8
      %v1923 = vpop.permute.xlu0 %1922
      %1924 = vrot.lane.b32.xlu0 %v1725, 8
      %v1925 = vpop.permute.xlu0 %1924
      %vm2026 = vcmask 31744
      %v2027 = vsel %vm2026, %v424, %v1126
      %v2028 = vsel %vm2026, %v426, %v1128
      %v2029 = vsel %vm2026, %v428, %v1130
      %v2030 = vsel %vm2026, %v430, %v1132
      %v2031 = vsel %vm2026, %v432, %v1134
      %v2032 = vsel %vm2026, %v434, %v1136
      %v2033 = vsel %vm2026, %v436, %v1138
      %v2034 = vsel %vm2026, %v438, %v1140
      %v2035 = vsel %vm2026, %v440, %v1142
      %v2036 = vsel %vm2026, %v442, %v1144
      %v2037 = vsel %vm2026, %v444, %v1146
      %v2038 = vsel %vm2026, %v446, %v1148
      %v2039 = vsel %vm2026, %v448, %v1150
      %v2040 = vsel %vm2026, %v450, %v1152
      %v2041 = vsel %vm2026, %v452, %v1154
      %v2042 = vsel %vm2026, %v454, %v1156
      %v2043 = vsel %vm2026, %v456, %v1158
      %v2044 = vsel %vm2026, %v458, %v1160
      %v2045 = vsel %vm2026, %v460, %v1162
      %v2046 = vsel %vm2026, %v462, %v1164
      %v2047 = vsel %vm2026, %v464, %v1166
      %v2048 = vsel %vm2026, %v466, %v1168
      %v2049 = vsel %vm2026, %v468, %v1170
      %v2050 = vsel %vm2026, %v470, %v1172
      %v2051 = vsel %vm2026, %v472, %v1174
      %v2052 = vsel %vm2026, %v474, %v1176
      %v2053 = vsel %vm2026, %v476, %v1178
      %v2054 = vsel %vm2026, %v478, %v1180
      %v2055 = vsel %vm2026, %v480, %v1182
      %v2056 = vsel %vm2026, %v482, %v1184
      %v2057 = vsel %vm2026, %v484, %v1186
      %v2058 = vsel %vm2026, %v486, %v1188
      %v2059 = vsel %vm2026, %v488, %v1190
      %v2060 = vsel %vm2026, %v490, %v1192
      %v2061 = vsel %vm2026, %v492, %v1194
      %v2062 = vsel %vm2026, %v494, %v1196
      %v2063 = vsel %vm2026, %v496, %v1198
      %v2064 = vsel %vm2026, %v498, %v1200
      %v2065 = vsel %vm2026, %v500, %v1202
      %v2066 = vsel %vm2026, %v502, %v1204
      %v2067 = vsel %vm2026, %v504, %v1206
      %v2068 = vsel %vm2026, %v506, %v1208
      %v2069 = vsel %vm2026, %v508, %v1210
      %v2070 = vsel %vm2026, %v510, %v1212
      %v2071 = vsel %vm2026, %v512, %v1214
      %v2072 = vsel %vm2026, %v514, %v1216
      %v2073 = vsel %vm2026, %v516, %v1218
      %v2074 = vsel %vm2026, %v518, %v1220
      %v2075 = vsel %vm2026, %v520, %v1222
      %v2076 = vsel %vm2026, %v522, %v1224
      %v2077 = vsel %vm2026, %v524, %v1226
      %v2078 = vsel %vm2026, %v526, %v1228
      %v2079 = vsel %vm2026, %v528, %v1230
      %v2080 = vsel %vm2026, %v530, %v1232
      %v2081 = vsel %vm2026, %v532, %v1234
      %v2082 = vsel %vm2026, %v534, %v1236
      %v2083 = vsel %vm2026, %v536, %v1238
      %v2084 = vsel %vm2026, %v538, %v1240
      %v2085 = vsel %vm2026, %v540, %v1242
      %v2086 = vsel %vm2026, %v542, %v1244
      %v2087 = vsel %vm2026, %v544, %v1246
      %v2088 = vsel %vm2026, %v546, %v1248
      %v2089 = vsel %vm2026, %v548, %v1250
      %v2090 = vsel %vm2026, %v550, %v1252
      %v2091 = vsel %vm2026, %v552, %v1254
      %v2092 = vsel %vm2026, %v554, %v1256
      %v2093 = vsel %vm2026, %v556, %v1258
      %v2094 = vsel %vm2026, %v558, %v1260
      %v2095 = vsel %vm2026, %v560, %v1262
      %v2096 = vsel %vm2026, %v562, %v1264
      %v2097 = vsel %vm2026, %v564, %v1266
      %v2098 = vsel %vm2026, %v566, %v1268
      %v2099 = vsel %vm2026, %v568, %v1270
      %v2100 = vsel %vm2026, %v570, %v1272
      %v2101 = vsel %vm2026, %v572, %v1274
      %v2102 = vsel %vm2026, %v574, %v1276
      %v2103 = vsel %vm2026, %v576, %v1278
      %v2104 = vsel %vm2026, %v578, %v1280
      %v2105 = vsel %vm2026, %v580, %v1282
      %v2106 = vsel %vm2026, %v582, %v1284
      %v2107 = vsel %vm2026, %v584, %v1286
      %v2108 = vsel %vm2026, %v586, %v1288
      %v2109 = vsel %vm2026, %v588, %v1290
      %v2110 = vsel %vm2026, %v590, %v1292
      %v2111 = vsel %vm2026, %v592, %v1294
      %v2112 = vsel %vm2026, %v594, %v1296
      %v2113 = vsel %vm2026, %v596, %v1298
      %v2114 = vsel %vm2026, %v598, %v1300
      %v2115 = vsel %vm2026, %v600, %v1302
      %v2116 = vsel %vm2026, %v602, %v1304
      %v2117 = vsel %vm2026, %v604, %v1306
      %v2118 = vsel %vm2026, %v606, %v1308
      %v2119 = vsel %vm2026, %v608, %v1310
      %v2120 = vsel %vm2026, %v610, %v1312
      %v2121 = vsel %vm2026, %v612, %v1314
      %v2122 = vsel %vm2026, %v614, %v1316
      %v2123 = vsel %vm2026, %v616, %v1318
      %v2124 = vsel %vm2026, %v618, %v1320
      %v2125 = vsel %vm2026, %v620, %v1322
      %v2126 = vsel %vm2026, %v622, %v1324
      %vm2127 = vcmask 64512
      %v2128 = vsel %vm2127, %v2027, %v1727
      %v2129 = vsel %vm2127, %v2028, %v1729
      %v2130 = vsel %vm2127, %v2029, %v1731
      %v2131 = vsel %vm2127, %v2030, %v1733
      %v2132 = vsel %vm2127, %v2031, %v1735
      %v2133 = vsel %vm2127, %v2032, %v1737
      %v2134 = vsel %vm2127, %v2033, %v1739
      %v2135 = vsel %vm2127, %v2034, %v1741
      %v2136 = vsel %vm2127, %v2035, %v1743
      %v2137 = vsel %vm2127, %v2036, %v1745
      %v2138 = vsel %vm2127, %v2037, %v1747
      %v2139 = vsel %vm2127, %v2038, %v1749
      %v2140 = vsel %vm2127, %v2039, %v1751
      %v2141 = vsel %vm2127, %v2040, %v1753
      %v2142 = vsel %vm2127, %v2041, %v1755
      %v2143 = vsel %vm2127, %v2042, %v1757
      %v2144 = vsel %vm2127, %v2043, %v1759
      %v2145 = vsel %vm2127, %v2044, %v1761
      %v2146 = vsel %vm2127, %v2045, %v1763
      %v2147 = vsel %vm2127, %v2046, %v1765
      %v2148 = vsel %vm2127, %v2047, %v1767
      %v2149 = vsel %vm2127, %v2048, %v1769
      %v2150 = vsel %vm2127, %v2049, %v1771
      %v2151 = vsel %vm2127, %v2050, %v1773
      %v2152 = vsel %vm2127, %v2051, %v1775
      %v2153 = vsel %vm2127, %v2052, %v1777
      %v2154 = vsel %vm2127, %v2053, %v1779
      %v2155 = vsel %vm2127, %v2054, %v1781
      %v2156 = vsel %vm2127, %v2055, %v1783
      %v2157 = vsel %vm2127, %v2056, %v1785
      %v2158 = vsel %vm2127, %v2057, %v1787
      %v2159 = vsel %vm2127, %v2058, %v1789
      %v2160 = vsel %vm2127, %v2059, %v1791
      %v2161 = vsel %vm2127, %v2060, %v1793
      %v2162 = vsel %vm2127, %v2061, %v1795
      %v2163 = vsel %vm2127, %v2062, %v1797
      %v2164 = vsel %vm2127, %v2063, %v1799
      %v2165 = vsel %vm2127, %v2064, %v1801
      %v2166 = vsel %vm2127, %v2065, %v1803
      %v2167 = vsel %vm2127, %v2066, %v1805
      %v2168 = vsel %vm2127, %v2067, %v1807
      %v2169 = vsel %vm2127, %v2068, %v1809
      %v2170 = vsel %vm2127, %v2069, %v1811
      %v2171 = vsel %vm2127, %v2070, %v1813
      %v2172 = vsel %vm2127, %v2071, %v1815
      %v2173 = vsel %vm2127, %v2072, %v1817
      %v2174 = vsel %vm2127, %v2073, %v1819
      %v2175 = vsel %vm2127, %v2074, %v1821
      %v2176 = vsel %vm2127, %v2075, %v1823
      %v2177 = vsel %vm2127, %v2076, %v1825
      %v2178 = vsel %vm2127, %v2077, %v1827
      %v2179 = vsel %vm2127, %v2078, %v1829
      %v2180 = vsel %vm2127, %v2079, %v1831
      %v2181 = vsel %vm2127, %v2080, %v1833
      %v2182 = vsel %vm2127, %v2081, %v1835
      %v2183 = vsel %vm2127, %v2082, %v1837
      %v2184 = vsel %vm2127, %v2083, %v1839
      %v2185 = vsel %vm2127, %v2084, %v1841
      %v2186 = vsel %vm2127, %v2085, %v1843
      %v2187 = vsel %vm2127, %v2086, %v1845
      %v2188 = vsel %vm2127, %v2087, %v1847
      %v2189 = vsel %vm2127, %v2088, %v1849
      %v2190 = vsel %vm2127, %v2089, %v1851
      %v2191 = vsel %vm2127, %v2090, %v1853
      %v2192 = vsel %vm2127, %v2091, %v1855
      %v2193 = vsel %vm2127, %v2092, %v1857
      %v2194 = vsel %vm2127, %v2093, %v1859
      %v2195 = vsel %vm2127, %v2094, %v1861
      %v2196 = vsel %vm2127, %v2095, %v1863
      %v2197 = vsel %vm2127, %v2096, %v1865
      %v2198 = vsel %vm2127, %v2097, %v1867
      %v2199 = vsel %vm2127, %v2098, %v1869
      %v2200 = vsel %vm2127, %v2099, %v1871
      %v2201 = vsel %vm2127, %v2100, %v1873
      %v2202 = vsel %vm2127, %v2101, %v1875
      %v2203 = vsel %vm2127, %v2102, %v1877
      %v2204 = vsel %vm2127, %v2103, %v1879
      %v2205 = vsel %vm2127, %v2104, %v1881
      %v2206 = vsel %vm2127, %v2105, %v1883
      %v2207 = vsel %vm2127, %v2106, %v1885
      %v2208 = vsel %vm2127, %v2107, %v1887
      %v2209 = vsel %vm2127, %v2108, %v1889
      %v2210 = vsel %vm2127, %v2109, %v1891
      %v2211 = vsel %vm2127, %v2110, %v1893
      %v2212 = vsel %vm2127, %v2111, %v1895
      %v2213 = vsel %vm2127, %v2112, %v1897
      %v2214 = vsel %vm2127, %v2113, %v1899
      %v2215 = vsel %vm2127, %v2114, %v1901
      %v2216 = vsel %vm2127, %v2115, %v1903
      %v2217 = vsel %vm2127, %v2116, %v1905
      %v2218 = vsel %vm2127, %v2117, %v1907
      %v2219 = vsel %vm2127, %v2118, %v1909
      %v2220 = vsel %vm2127, %v2119, %v1911
      %v2221 = vsel %vm2127, %v2120, %v1913
      %v2222 = vsel %vm2127, %v2121, %v1915
      %v2223 = vsel %vm2127, %v2122, %v1917
      %v2224 = vsel %vm2127, %v2123, %v1919
      %v2225 = vsel %vm2127, %v2124, %v1921
      %v2226 = vsel %vm2127, %v2125, %v1923
      %v2227 = vsel %vm2127, %v2126, %v1925
      %v2228 = vld [vmem:[%s1] sm:$0xf]
      %v2229 = vld [vmem:[%s1 + $0x4] sm:$0x3]
      %v2230 = vld [vmem:[%s1 + $0x8] sm:$0xf]
      %v2231 = vld [vmem:[%s1 + $0xc] sm:$0x3]
      %v2232 = vld [vmem:[%s1 + $0x10] sm:$0xf]
      %v2233 = vld [vmem:[%s1 + $0x14] sm:$0x3]
      %v2234 = vld [vmem:[%s1 + $0x18] sm:$0xf]
      %v2235 = vld [vmem:[%s1 + $0x1c] sm:$0x3]
      %v2236 = vld [vmem:[%s1 + $0x20] sm:$0xf]
      %v2237 = vld [vmem:[%s1 + $0x24] sm:$0x3]
      %v2238 = vld [vmem:[%s1 + $0x28] sm:$0xf]
      %v2239 = vld [vmem:[%s1 + $0x2c] sm:$0x3]
      %v2240 = vld [vmem:[%s1 + $0x30] sm:$0xf]
      %v2241 = vld [vmem:[%s1 + $0x34] sm:$0x3]
      %v2242 = vld [vmem:[%s1 + $0x38] sm:$0xf]
      %v2243 = vld [vmem:[%s1 + $0x3c] sm:$0x3]
      %v2244 = vld [vmem:[%s1 + $0x40] sm:$0xf]
      %v2245 = vld [vmem:[%s1 + $0x44] sm:$0x3]
      %v2246 = vunpack.c.l.bf16 %v2228
      %v2247 = vunpack.c.l.bf16 %v2229
      %v2248 = vunpack.c.l.bf16 %v2230
      %v2249 = vunpack.c.l.bf16 %v2231
      %v2250 = vunpack.c.l.bf16 %v2232
      %v2251 = vunpack.c.l.bf16 %v2233
      %v2252 = vunpack.c.l.bf16 %v2234
      %v2253 = vunpack.c.l.bf16 %v2235
      %v2254 = vunpack.c.l.bf16 %v2236
      %v2255 = vunpack.c.l.bf16 %v2237
      %v2256 = vunpack.c.l.bf16 %v2238
      %v2257 = vunpack.c.l.bf16 %v2239
      %v2258 = vunpack.c.l.bf16 %v2240
      %v2259 = vunpack.c.l.bf16 %v2241
      %v2260 = vunpack.c.l.bf16 %v2242
      %v2261 = vunpack.c.l.bf16 %v2243
      %v2262 = vunpack.c.l.bf16 %v2244
      %v2263 = vunpack.c.l.bf16 %v2245
      %2264 = vst.msk [vmem:[#allocation2] sm:$0xff] %vm2127, 0.0
      %2265 = vst.msk [vmem:[#allocation2 + $0x8] sm:$0xff] %vm2127, 0.0
      %2266 = vst.msk [vmem:[#allocation2 + $0x10] sm:$0xff] %vm2127, 0.0
      %2267 = vst.msk [vmem:[#allocation2 + $0x18] sm:$0xff] %vm2127, 0.0
      %2268 = vst.msk [vmem:[#allocation2 + $0x20] sm:$0xff] %vm2127, 0.0
      %2269 = vst.msk [vmem:[#allocation2 + $0x28] sm:$0xff] %vm2127, 0.0
      %2270 = vst.msk [vmem:[#allocation2 + $0x30] sm:$0xff] %vm2127, 0.0
      %2271 = vst.msk [vmem:[#allocation2 + $0x38] sm:$0xff] %vm2127, 0.0
      %2272 = vst.msk [vmem:[#allocation2 + $0x40] sm:$0xff] %vm2127, 0.0
      %2273 = vst.msk [vmem:[#allocation2 + $0x48] sm:$0xff] %vm2127, 0.0
      %2274 = vst.msk [vmem:[#allocation2 + $0x50] sm:$0xff] %vm2127, 0.0
      %2275 = vst.msk [vmem:[#allocation2 + $0x58] sm:$0xff] %vm2127, 0.0
      %2276 = vst.msk [vmem:[#allocation2 + $0x60] sm:$0xff] %vm2127, 0.0
      %2277 = vst.msk [vmem:[#allocation2 + $0x68] sm:$0xff] %vm2127, 0.0
      %2278 = vst.msk [vmem:[#allocation2 + $0x70] sm:$0xff] %vm2127, 0.0
      %2279 = vst.msk [vmem:[#allocation2 + $0x78] sm:$0xff] %vm2127, 0.0
      %2280 = vst.msk [vmem:[#allocation2 + $0x80] sm:$0xff] %vm2127, 0.0
      %2281 = vst.msk [vmem:[#allocation2 + $0x88] sm:$0xff] %vm2127, 0.0
      %2282 = vst.msk [vmem:[#allocation2 + $0x90] sm:$0xff] %vm2127, 0.0
      %2283 = vst.msk [vmem:[#allocation2 + $0x98] sm:$0xff] %vm2127, 0.0
      %2284 = vst.msk [vmem:[#allocation2 + $0xa0] sm:$0xff] %vm2127, 0.0
      %2285 = vst.msk [vmem:[#allocation2 + $0xa8] sm:$0xff] %vm2127, 0.0
      %2286 = vst.msk [vmem:[#allocation2 + $0xb0] sm:$0xff] %vm2127, 0.0
      %2287 = vst.msk [vmem:[#allocation2 + $0xb8] sm:$0xff] %vm2127, 0.0
      %2288 = vst.msk [vmem:[#allocation2 + $0xc0] sm:$0xff] %vm2127, 0.0
      %2289 = vst.msk [vmem:[#allocation2 + $0xc8] sm:$0xff] %vm2127, 0.0
      %2290 = vst.msk [vmem:[#allocation2 + $0xd0] sm:$0xff] %vm2127, 0.0
      %2291 = vst.msk [vmem:[#allocation2 + $0xd8] sm:$0xff] %vm2127, 0.0
      %2292 = vst.msk [vmem:[#allocation2 + $0xe0] sm:$0xff] %vm2127, 0.0
      %2293 = vst.msk [vmem:[#allocation2 + $0xe8] sm:$0xff] %vm2127, 0.0
      %2294 = vst.msk [vmem:[#allocation2 + $0xf0] sm:$0xff] %vm2127, 0.0
      %2295 = vst.msk [vmem:[#allocation2 + $0xf8] sm:$0xff] %vm2127, 0.0
      %2296 = vst.msk [vmem:[#allocation2 + $0x100] sm:$0xff] %vm2127, 0.0
      %2297 = vst.msk [vmem:[#allocation2 + $0x108] sm:$0xff] %vm2127, 0.0
      %2298 = vst.msk [vmem:[#allocation2 + $0x110] sm:$0xff] %vm2127, 0.0
      %2299 = vst.msk [vmem:[#allocation2 + $0x118] sm:$0xff] %vm2127, 0.0
      %2300 = vst.msk [vmem:[#allocation2 + $0x120] sm:$0xff] %vm2127, 0.0
      %2301 = vst.msk [vmem:[#allocation2 + $0x128] sm:$0xff] %vm2127, 0.0
      %2302 = vst.msk [vmem:[#allocation2 + $0x130] sm:$0xff] %vm2127, 0.0
      %2303 = vst.msk [vmem:[#allocation2 + $0x138] sm:$0xff] %vm2127, 0.0
      %2304 = vst.msk [vmem:[#allocation2 + $0x140] sm:$0xff] %vm2127, 0.0
      %2305 = vst.msk [vmem:[#allocation2 + $0x148] sm:$0xff] %vm2127, 0.0
      %2306 = vst.msk [vmem:[#allocation2 + $0x150] sm:$0xff] %vm2127, 0.0
      %2307 = vst.msk [vmem:[#allocation2 + $0x158] sm:$0xff] %vm2127, 0.0
      %2308 = vst.msk [vmem:[#allocation2 + $0x160] sm:$0xff] %vm2127, 0.0
      %2309 = vst.msk [vmem:[#allocation2 + $0x168] sm:$0xff] %vm2127, 0.0
      %2310 = vst.msk [vmem:[#allocation2 + $0x170] sm:$0xff] %vm2127, 0.0
      %2311 = vst.msk [vmem:[#allocation2 + $0x178] sm:$0xff] %vm2127, 0.0
      %2312 = vst.msk [vmem:[#allocation2 + $0x180] sm:$0xff] %vm2127, 0.0
      %2313 = vst.msk [vmem:[#allocation2 + $0x188] sm:$0xff] %vm2127, 0.0
      %2314 = vst.msk [vmem:[#allocation2 + $0x190] sm:$0xff] %vm2127, 0.0
      %2315 = vst.msk [vmem:[#allocation2 + $0x198] sm:$0xff] %vm2127, 0.0
      %2316 = vst.msk [vmem:[#allocation2 + $0x1a0] sm:$0xff] %vm2127, 0.0
      %2317 = vst.msk [vmem:[#allocation2 + $0x1a8] sm:$0xff] %vm2127, 0.0
      %2318 = vst.msk [vmem:[#allocation2 + $0x1b0] sm:$0xff] %vm2127, 0.0
      %2319 = vst.msk [vmem:[#allocation2 + $0x1b8] sm:$0xff] %vm2127, 0.0
      %2320 = vst.msk [vmem:[#allocation2 + $0x1c0] sm:$0xff] %vm2127, 0.0
      %2321 = vst.msk [vmem:[#allocation2 + $0x1c8] sm:$0xff] %vm2127, 0.0
      %2322 = vst.msk [vmem:[#allocation2 + $0x1d0] sm:$0xff] %vm2127, 0.0
      %2323 = vst.msk [vmem:[#allocation2 + $0x1d8] sm:$0xff] %vm2127, 0.0
      %2324 = vst.msk [vmem:[#allocation2 + $0x1e0] sm:$0xff] %vm2127, 0.0
      %2325 = vst.msk [vmem:[#allocation2 + $0x1e8] sm:$0xff] %vm2127, 0.0
      %2326 = vst.msk [vmem:[#allocation2 + $0x1f0] sm:$0xff] %vm2127, 0.0
      %2327 = vst.msk [vmem:[#allocation2 + $0x1f8] sm:$0xff] %vm2127, 0.0
      %v2328 = vld [vmem:[#allocation2] sm:$0xff]
      %v2329 = vld [vmem:[#allocation2 + $0x8] sm:$0xff]
      %v2330 = vld [vmem:[#allocation2 + $0x10] sm:$0xff]
      %v2331 = vld [vmem:[#allocation2 + $0x18] sm:$0xff]
      %v2332 = vld [vmem:[#allocation2 + $0x20] sm:$0xff]
      %v2333 = vld [vmem:[#allocation2 + $0x28] sm:$0xff]
      %v2334 = vld [vmem:[#allocation2 + $0x30] sm:$0xff]
      %v2335 = vld [vmem:[#allocation2 + $0x38] sm:$0xff]
      %v2336 = vld [vmem:[#allocation2 + $0x40] sm:$0xff]
      %v2337 = vld [vmem:[#allocation2 + $0x48] sm:$0xff]
      %v2338 = vld [vmem:[#allocation2 + $0x50] sm:$0xff]
      %v2339 = vld [vmem:[#allocation2 + $0x58] sm:$0xff]
      %v2340 = vld [vmem:[#allocation2 + $0x60] sm:$0xff]
      %v2341 = vld [vmem:[#allocation2 + $0x68] sm:$0xff]
      %v2342 = vld [vmem:[#allocation2 + $0x70] sm:$0xff]
      %v2343 = vld [vmem:[#allocation2 + $0x78] sm:$0xff]
      %v2344 = vld [vmem:[#allocation2 + $0x80] sm:$0xff]
      %v2345 = vld [vmem:[#allocation2 + $0x88] sm:$0xff]
      %v2346 = vld [vmem:[#allocation2 + $0x90] sm:$0xff]
      %v2347 = vld [vmem:[#allocation2 + $0x98] sm:$0xff]
      %v2348 = vld [vmem:[#allocation2 + $0xa0] sm:$0xff]
      %v2349 = vld [vmem:[#allocation2 + $0xa8] sm:$0xff]
      %v2350 = vld [vmem:[#allocation2 + $0xb0] sm:$0xff]
      %v2351 = vld [vmem:[#allocation2 + $0xb8] sm:$0xff]
      %v2352 = vld [vmem:[#allocation2 + $0xc0] sm:$0xff]
      %v2353 = vld [vmem:[#allocation2 + $0xc8] sm:$0xff]
      %v2354 = vld [vmem:[#allocation2 + $0xd0] sm:$0xff]
      %v2355 = vld [vmem:[#allocation2 + $0xd8] sm:$0xff]
      %v2356 = vld [vmem:[#allocation2 + $0xe0] sm:$0xff]
      %v2357 = vld [vmem:[#allocation2 + $0xe8] sm:$0xff]
      %v2358 = vld [vmem:[#allocation2 + $0xf0] sm:$0xff]
      %v2359 = vld [vmem:[#allocation2 + $0xf8] sm:$0xff]
      %v2360 = vld [vmem:[#allocation2 + $0x100] sm:$0xff]
      %v2361 = vld [vmem:[#allocation2 + $0x108] sm:$0xff]
      %v2362 = vld [vmem:[#allocation2 + $0x110] sm:$0xff]
      %v2363 = vld [vmem:[#allocation2 + $0x118] sm:$0xff]
      %v2364 = vld [vmem:[#allocation2 + $0x120] sm:$0xff]
      %v2365 = vld [vmem:[#allocation2 + $0x128] sm:$0xff]
      %v2366 = vld [vmem:[#allocation2 + $0x130] sm:$0xff]
      %v2367 = vld [vmem:[#allocation2 + $0x138] sm:$0xff]
      %v2368 = vld [vmem:[#allocation2 + $0x140] sm:$0xff]
      %v2369 = vld [vmem:[#allocation2 + $0x148] sm:$0xff]
      %v2370 = vld [vmem:[#allocation2 + $0x150] sm:$0xff]
      %v2371 = vld [vmem:[#allocation2 + $0x158] sm:$0xff]
      %v2372 = vld [vmem:[#allocation2 + $0x160] sm:$0xff]
      %v2373 = vld [vmem:[#allocation2 + $0x168] sm:$0xff]
      %v2374 = vld [vmem:[#allocation2 + $0x170] sm:$0xff]
      %v2375 = vld [vmem:[#allocation2 + $0x178] sm:$0xff]
      %v2376 = vld [vmem:[#allocation2 + $0x180] sm:$0xff]
      %v2377 = vld [vmem:[#allocation2 + $0x188] sm:$0xff]
      %v2378 = vld [vmem:[#allocation2 + $0x190] sm:$0xff]
      %v2379 = vld [vmem:[#allocation2 + $0x198] sm:$0xff]
      %v2380 = vld [vmem:[#allocation2 + $0x1a0] sm:$0xff]
      %v2381 = vld [vmem:[#allocation2 + $0x1a8] sm:$0xff]
      %v2382 = vld [vmem:[#allocation2 + $0x1b0] sm:$0xff]
      %v2383 = vld [vmem:[#allocation2 + $0x1b8] sm:$0xff]
      %v2384 = vld [vmem:[#allocation2 + $0x1c0] sm:$0xff]
      %v2385 = vld [vmem:[#allocation2 + $0x1c8] sm:$0xff]
      %v2386 = vld [vmem:[#allocation2 + $0x1d0] sm:$0xff]
      %v2387 = vld [vmem:[#allocation2 + $0x1d8] sm:$0xff]
      %v2388 = vld [vmem:[#allocation2 + $0x1e0] sm:$0xff]
      %v2389 = vld [vmem:[#allocation2 + $0x1e8] sm:$0xff]
      %v2390 = vld [vmem:[#allocation2 + $0x1f0] sm:$0xff]
      %v2391 = vld [vmem:[#allocation2 + $0x1f8] sm:$0xff]
      %vm2392 = vcmask 97280
      %v2394 = vsel %vm2392, %v2128, 0
      %v2397 = vsel %vm2392, %v2129, 0
      %v2400 = vsel %vm2392, %v2130, 0
      %v2403 = vsel %vm2392, %v2131, 0
      %v2406 = vsel %vm2392, %v2132, 0
      %v2409 = vsel %vm2392, %v2133, 0
      %v2412 = vsel %vm2392, %v2134, 0
      %v2415 = vsel %vm2392, %v2135, 0
      %v2418 = vsel %vm2392, %v2138, 0
      %v2421 = vsel %vm2392, %v2139, 0
      %v2424 = vsel %vm2392, %v2140, 0
      %v2427 = vsel %vm2392, %v2141, 0
      %v2430 = vsel %vm2392, %v2142, 0
      %v2433 = vsel %vm2392, %v2143, 0
      %v2436 = vsel %vm2392, %v2144, 0
      %v2439 = vsel %vm2392, %v2145, 0
      %v2442 = vsel %vm2392, %v2148, 0
      %v2445 = vsel %vm2392, %v2149, 0
      %v2448 = vsel %vm2392, %v2150, 0
      %v2451 = vsel %vm2392, %v2151, 0
      %v2454 = vsel %vm2392, %v2152, 0
      %v2457 = vsel %vm2392, %v2153, 0
      %v2460 = vsel %vm2392, %v2154, 0
      %v2463 = vsel %vm2392, %v2155, 0
      %v2466 = vsel %vm2392, %v2158, 0
      %v2469 = vsel %vm2392, %v2159, 0
      %v2472 = vsel %vm2392, %v2160, 0
      %v2475 = vsel %vm2392, %v2161, 0
      %v2478 = vsel %vm2392, %v2162, 0
      %v2481 = vsel %vm2392, %v2163, 0
      %v2484 = vsel %vm2392, %v2164, 0
      %v2487 = vsel %vm2392, %v2165, 0
      %v2490 = vsel %vm2392, %v2168, 0
      %v2493 = vsel %vm2392, %v2169, 0
      %v2496 = vsel %vm2392, %v2170, 0
      %v2499 = vsel %vm2392, %v2171, 0
      %v2502 = vsel %vm2392, %v2172, 0
      %v2505 = vsel %vm2392, %v2173, 0
      %v2508 = vsel %vm2392, %v2174, 0
      %v2511 = vsel %vm2392, %v2175, 0
      %v2514 = vsel %vm2392, %v2178, 0
      %v2517 = vsel %vm2392, %v2179, 0
      %v2520 = vsel %vm2392, %v2180, 0
      %v2523 = vsel %vm2392, %v2181, 0
      %v2526 = vsel %vm2392, %v2182, 0
      %v2529 = vsel %vm2392, %v2183, 0
      %v2532 = vsel %vm2392, %v2184, 0
      %v2535 = vsel %vm2392, %v2185, 0
      %v2538 = vsel %vm2392, %v2188, 0
      %v2541 = vsel %vm2392, %v2189, 0
      %v2544 = vsel %vm2392, %v2190, 0
      %v2547 = vsel %vm2392, %v2191, 0
      %v2550 = vsel %vm2392, %v2192, 0
      %v2553 = vsel %vm2392, %v2193, 0
      %v2556 = vsel %vm2392, %v2194, 0
      %v2559 = vsel %vm2392, %v2195, 0
      %v2562 = vsel %vm2392, %v2198, 0
      %v2565 = vsel %vm2392, %v2199, 0
      %v2568 = vsel %vm2392, %v2200, 0
      %v2571 = vsel %vm2392, %v2201, 0
      %v2574 = vsel %vm2392, %v2202, 0
      %v2577 = vsel %vm2392, %v2203, 0
      %v2580 = vsel %vm2392, %v2204, 0
      %v2583 = vsel %vm2392, %v2205, 0
      %vm2585 = vcmask 1043456
      %v2587 = vsel %vm2585, %v2247, 0
      %2589 = vmatprep.subr.mxu0 0.0
      %2590 = vmatpush1.msra.mxu0 0.0
      %2591 = vmatprep.subr.mxu0 0.0
      %2592 = vmatpush1.msra.mxu0 0.0
      %2593 = vmatprep.subr.mxu0 0.0
      %2594 = vmatpush1.msra.mxu0 0.0
      %2595 = vmatprep.subr.mxu0 0.0
      %2596 = vmatpush1.msra.mxu0 0.0
      %2597 = vmatprep.subr.mxu0 0.0
      %2598 = vmatpush1.msra.mxu0 0.0
      %2599 = vmatprep.subr.mxu0 0.0
      %2600 = vmatpush1.msra.mxu0 0.0
      %2601 = vmatprep.subr.mxu0 0.0
      %2602 = vmatpush1.msra.mxu0 0.0
      %2603 = vmatprep.subr.mxu0 0.0
      %2604 = vmatpush1.msra.mxu0 0.0
      %2605 = vmatprep.subr.mxu0 0.0
      %2606 = vmatpush1.msra.mxu0 0.0
      %2607 = vmatprep.subr.mxu0 0.0
      %2608 = vmatpush1.msra.mxu0 0.0
      %2609 = vmatprep.subr.mxu0 0.0
      %2610 = vmatpush1.msra.mxu0 0.0
      %2611 = vmatprep.subr.mxu0 0.0
      %2612 = vmatpush1.msra.mxu0 0.0
      %2613 = vmatprep.subr.mxu0 0.0
      %2614 = vmatpush1.msra.mxu0 0.0
      %2615 = vmatprep.subr.mxu0 0.0
      %2616 = vmatpush1.msra.mxu0 0.0
      %2617 = vmatprep.subr.mxu0 0.0
      %2618 = vmatpush1.msra.mxu0 %v2587
      %2619 = vmatprep.subr.mxu0 0.0
      %2620 = vmatpush1.msra.mxu0 %v2246
      %2621 = vmatprep.subr.mxu0 0.0
      %2622 = vmatpush2.msra.mxu0 0.0
      %2623 = vmatprep.subr.mxu0 0.0
      %2624 = vmatpush2.msra.mxu0 0.0
      %2625 = vmatprep.subr.mxu0 0.0
      %2626 = vmatpush2.msra.mxu0 0.0
      %2627 = vmatprep.subr.mxu0 0.0
      %2628 = vmatpush2.msra.mxu0 0.0
      %2629 = vmatprep.subr.mxu0 0.0
      %2630 = vmatpush2.msra.mxu0 0.0
      %2631 = vmatprep.subr.mxu0 0.0
      %2632 = vmatpush2.msra.mxu0 0.0
      %2633 = vmatprep.subr.mxu0 0.0
      %2634 = vmatpush2.msra.mxu0 0.0
      %2635 = vmatprep.subr.mxu0 0.0
      %2636 = vmatpush2.msra.mxu0 0.0
      %2637 = vmatprep.subr.mxu0 0.0
      %2638 = vmatpush2.msra.mxu0 0.0
      %2639 = vmatprep.subr.mxu0 0.0
      %2640 = vmatpush2.msra.mxu0 0.0
      %2641 = vmatprep.subr.mxu0 0.0
      %2642 = vmatpush2.msra.mxu0 0.0
      %2643 = vmatprep.subr.mxu0 0.0
      %2644 = vmatpush2.msra.mxu0 0.0
      %2645 = vmatprep.subr.mxu0 0.0
      %2646 = vmatpush2.msra.mxu0 0.0
      %2647 = vmatprep.subr.mxu0 0.0
      %2648 = vmatpush2.msra.mxu0 0.0
      %2649 = vmatprep.subr.mxu0 0.0
      %2650 = vmatpush2.msra.mxu0 0.0
      %2651 = vmatprep.subr.mxu0 0.0
      %2652 = vmatpush2.msra.mxu0 0.0
      %2653 = vmatprep.mubr.f32.mxu0 0.0
      %2654 = vmatmul.mubr.f32.gmra.mxu0 %v2394
      %v2655 = vpop.f32.mrf.mxu0
      %v2656 = vadd.f32 0.0, %v2655
      %v2657 = vpop.f32.mrf.mxu0
      %2658 = vmatprep.mubr.f32.mxu0 0.0
      %2659 = vmatmul.mubr.f32.gmra.mxu0 %v2397
      %v2660 = vpop.f32.mrf.mxu0
      %v2661 = vadd.f32 0.0, %v2660
      %v2662 = vpop.f32.mrf.mxu0
      %2663 = vmatprep.mubr.f32.mxu0 0.0
      %2664 = vmatmul.mubr.f32.gmra.mxu0 %v2400
      %v2665 = vpop.f32.mrf.mxu0
      %v2666 = vadd.f32 0.0, %v2665
      %v2667 = vpop.f32.mrf.mxu0
      %2668 = vmatprep.mubr.f32.mxu0 0.0
      %2669 = vmatmul.mubr.f32.gmra.mxu0 %v2403
      %v2670 = vpop.f32.mrf.mxu0
      %v2671 = vadd.f32 0.0, %v2670
      %v2672 = vpop.f32.mrf.mxu0
      %2673 = vmatprep.mubr.f32.mxu0 0.0
      %2674 = vmatmul.mubr.f32.gmra.mxu0 %v2406
      %v2675 = vpop.f32.mrf.mxu0
      %v2676 = vadd.f32 0.0, %v2675
      %v2677 = vpop.f32.mrf.mxu0
      %2678 = vmatprep.mubr.f32.mxu0 0.0
      %2679 = vmatmul.mubr.f32.gmra.mxu0 %v2409
      %v2680 = vpop.f32.mrf.mxu0
      %v2681 = vadd.f32 0.0, %v2680
      %v2682 = vpop.f32.mrf.mxu0
      %2683 = vmatprep.mubr.f32.mxu0 0.0
      %2684 = vmatmul.mubr.f32.gmra.mxu0 %v2412
      %v2685 = vpop.f32.mrf.mxu0
      %v2686 = vadd.f32 0.0, %v2685
      %v2687 = vpop.f32.mrf.mxu0
      %2688 = vmatprep.mubr.f32.mxu0 0.0
      %2689 = vmatmul.mubr.f32.gmra.mxu0 %v2415
      %v2690 = vpop.f32.mrf.mxu0
      %v2691 = vadd.f32 0.0, %v2690
      %v2692 = vpop.f32.mrf.mxu0
      %2693 = vmatprep.mubr.f32.mxu0 0.0
      %2694 = vmatmul.mubr.f32.gmra.mxu0 %v2418
      %v2695 = vpop.f32.mrf.mxu0
      %v2696 = vadd.f32 0.0, %v2695
      %v2697 = vpop.f32.mrf.mxu0
      %2698 = vmatprep.mubr.f32.mxu0 0.0
      %2699 = vmatmul.mubr.f32.gmra.mxu0 %v2421
      %v2700 = vpop.f32.mrf.mxu0
      %v2701 = vadd.f32 0.0, %v2700
      %v2702 = vpop.f32.mrf.mxu0
      %2703 = vmatprep.mubr.f32.mxu0 0.0
      %2704 = vmatmul.mubr.f32.gmra.mxu0 %v2424
      %v2705 = vpop.f32.mrf.mxu0
      %v2706 = vadd.f32 0.0, %v2705
      %v2707 = vpop.f32.mrf.mxu0
      %2708 = vmatprep.mubr.f32.mxu0 0.0
      %2709 = vmatmul.mubr.f32.gmra.mxu0 %v2427
      %v2710 = vpop.f32.mrf.mxu0
      %v2711 = vadd.f32 0.0, %v2710
      %v2712 = vpop.f32.mrf.mxu0
      %2713 = vmatprep.mubr.f32.mxu0 0.0
      %2714 = vmatmul.mubr.f32.gmra.mxu0 %v2430
      %v2715 = vpop.f32.mrf.mxu0
      %v2716 = vadd.f32 0.0, %v2715
      %v2717 = vpop.f32.mrf.mxu0
      %2718 = vmatprep.mubr.f32.mxu0 0.0
      %2719 = vmatmul.mubr.f32.gmra.mxu0 %v2433
      %v2720 = vpop.f32.mrf.mxu0
      %v2721 = vadd.f32 0.0, %v2720
      %v2722 = vpop.f32.mrf.mxu0
      %2723 = vmatprep.mubr.f32.mxu0 0.0
      %2724 = vmatmul.mubr.f32.gmra.mxu0 %v2436
      %v2725 = vpop.f32.mrf.mxu0
      %v2726 = vadd.f32 0.0, %v2725
      %v2727 = vpop.f32.mrf.mxu0
      %2728 = vmatprep.mubr.f32.mxu0 0.0
      %2729 = vmatmul.mubr.f32.gmra.mxu0 %v2439
      %v2730 = vpop.f32.mrf.mxu0
      %v2731 = vadd.f32 0.0, %v2730
      %v2732 = vpop.f32.mrf.mxu0
      %2733 = vmatprep.mubr.f32.mxu0 0.0
      %2734 = vmatmul.mubr.f32.gmra.mxu0 %v2442
      %v2735 = vpop.f32.mrf.mxu0
      %v2736 = vadd.f32 0.0, %v2735
      %v2737 = vpop.f32.mrf.mxu0
      %2738 = vmatprep.mubr.f32.mxu0 0.0
      %2739 = vmatmul.mubr.f32.gmra.mxu0 %v2445
      %v2740 = vpop.f32.mrf.mxu0
      %v2741 = vadd.f32 0.0, %v2740
      %v2742 = vpop.f32.mrf.mxu0
      %2743 = vmatprep.mubr.f32.mxu0 0.0
      %2744 = vmatmul.mubr.f32.gmra.mxu0 %v2448
      %v2745 = vpop.f32.mrf.mxu0
      %v2746 = vadd.f32 0.0, %v2745
      %v2747 = vpop.f32.mrf.mxu0
      %2748 = vmatprep.mubr.f32.mxu0 0.0
      %2749 = vmatmul.mubr.f32.gmra.mxu0 %v2451
      %v2750 = vpop.f32.mrf.mxu0
      %v2751 = vadd.f32 0.0, %v2750
      %v2752 = vpop.f32.mrf.mxu0
      %2753 = vmatprep.mubr.f32.mxu0 0.0
      %2754 = vmatmul.mubr.f32.gmra.mxu0 %v2454
      %v2755 = vpop.f32.mrf.mxu0
      %v2756 = vadd.f32 0.0, %v2755
      %v2757 = vpop.f32.mrf.mxu0
      %2758 = vmatprep.mubr.f32.mxu0 0.0
      %2759 = vmatmul.mubr.f32.gmra.mxu0 %v2457
      %v2760 = vpop.f32.mrf.mxu0
      %v2761 = vadd.f32 0.0, %v2760
      %v2762 = vpop.f32.mrf.mxu0
      %2763 = vmatprep.mubr.f32.mxu0 0.0
      %2764 = vmatmul.mubr.f32.gmra.mxu0 %v2460
      %v2765 = vpop.f32.mrf.mxu0
      %v2766 = vadd.f32 0.0, %v2765
      %v2767 = vpop.f32.mrf.mxu0
      %2768 = vmatprep.mubr.f32.mxu0 0.0
      %2769 = vmatmul.mubr.f32.gmra.mxu0 %v2463
      %v2770 = vpop.f32.mrf.mxu0
      %v2771 = vadd.f32 0.0, %v2770
      %v2772 = vpop.f32.mrf.mxu0
      %2773 = vmatprep.mubr.f32.mxu0 0.0
      %2774 = vmatmul.mubr.f32.gmra.mxu0 %v2466
      %v2775 = vpop.f32.mrf.mxu0
      %v2776 = vadd.f32 0.0, %v2775
      %v2777 = vpop.f32.mrf.mxu0
      %2778 = vmatprep.mubr.f32.mxu0 0.0
      %2779 = vmatmul.mubr.f32.gmra.mxu0 %v2469
      %v2780 = vpop.f32.mrf.mxu0
      %v2781 = vadd.f32 0.0, %v2780
      %v2782 = vpop.f32.mrf.mxu0
      %2783 = vmatprep.mubr.f32.mxu0 0.0
      %2784 = vmatmul.mubr.f32.gmra.mxu0 %v2472
      %v2785 = vpop.f32.mrf.mxu0
      %v2786 = vadd.f32 0.0, %v2785
      %v2787 = vpop.f32.mrf.mxu0
      %2788 = vmatprep.mubr.f32.mxu0 0.0
      %2789 = vmatmul.mubr.f32.gmra.mxu0 %v2475
      %v2790 = vpop.f32.mrf.mxu0
      %v2791 = vadd.f32 0.0, %v2790
      %v2792 = vpop.f32.mrf.mxu0
      %2793 = vmatprep.mubr.f32.mxu0 0.0
      %2794 = vmatmul.mubr.f32.gmra.mxu0 %v2478
      %v2795 = vpop.f32.mrf.mxu0
      %v2796 = vadd.f32 0.0, %v2795
      %v2797 = vpop.f32.mrf.mxu0
      %2798 = vmatprep.mubr.f32.mxu0 0.0
      %2799 = vmatmul.mubr.f32.gmra.mxu0 %v2481
      %v2800 = vpop.f32.mrf.mxu0
      %v2801 = vadd.f32 0.0, %v2800
      %v2802 = vpop.f32.mrf.mxu0
      %2803 = vmatprep.mubr.f32.mxu0 0.0
      %2804 = vmatmul.mubr.f32.gmra.mxu0 %v2484
      %v2805 = vpop.f32.mrf.mxu0
      %v2806 = vadd.f32 0.0, %v2805
      %v2807 = vpop.f32.mrf.mxu0
      %2808 = vmatprep.mubr.f32.mxu0 0.0
      %2809 = vmatmul.mubr.f32.gmra.mxu0 %v2487
      %v2810 = vpop.f32.mrf.mxu0
      %v2811 = vadd.f32 0.0, %v2810
      %v2812 = vpop.f32.mrf.mxu0
      %2813 = vmatprep.mubr.f32.mxu0 0.0
      %2814 = vmatmul.mubr.f32.gmra.mxu0 %v2490
      %v2815 = vpop.f32.mrf.mxu0
      %v2816 = vadd.f32 0.0, %v2815
      %v2817 = vpop.f32.mrf.mxu0
      %2818 = vmatprep.mubr.f32.mxu0 0.0
      %2819 = vmatmul.mubr.f32.gmra.mxu0 %v2493
      %v2820 = vpop.f32.mrf.mxu0
      %v2821 = vadd.f32 0.0, %v2820
      %v2822 = vpop.f32.mrf.mxu0
      %2823 = vmatprep.mubr.f32.mxu0 0.0
      %2824 = vmatmul.mubr.f32.gmra.mxu0 %v2496
      %v2825 = vpop.f32.mrf.mxu0
      %v2826 = vadd.f32 0.0, %v2825
      %v2827 = vpop.f32.mrf.mxu0
      %2828 = vmatprep.mubr.f32.mxu0 0.0
      %2829 = vmatmul.mubr.f32.gmra.mxu0 %v2499
      %v2830 = vpop.f32.mrf.mxu0
      %v2831 = vadd.f32 0.0, %v2830
      %v2832 = vpop.f32.mrf.mxu0
      %2833 = vmatprep.mubr.f32.mxu0 0.0
      %2834 = vmatmul.mubr.f32.gmra.mxu0 %v2502
      %v2835 = vpop.f32.mrf.mxu0
      %v2836 = vadd.f32 0.0, %v2835
      %v2837 = vpop.f32.mrf.mxu0
      %2838 = vmatprep.mubr.f32.mxu0 0.0
      %2839 = vmatmul.mubr.f32.gmra.mxu0 %v2505
      %v2840 = vpop.f32.mrf.mxu0
      %v2841 = vadd.f32 0.0, %v2840
      %v2842 = vpop.f32.mrf.mxu0
      %2843 = vmatprep.mubr.f32.mxu0 0.0
      %2844 = vmatmul.mubr.f32.gmra.mxu0 %v2508
      %v2845 = vpop.f32.mrf.mxu0
      %v2846 = vadd.f32 0.0, %v2845
      %v2847 = vpop.f32.mrf.mxu0
      %2848 = vmatprep.mubr.f32.mxu0 0.0
      %2849 = vmatmul.mubr.f32.gmra.mxu0 %v2511
      %v2850 = vpop.f32.mrf.mxu0
      %v2851 = vadd.f32 0.0, %v2850
      %v2852 = vpop.f32.mrf.mxu0
      %2853 = vmatprep.mubr.f32.mxu0 0.0
      %2854 = vmatmul.mubr.f32.gmra.mxu0 %v2514
      %v2855 = vpop.f32.mrf.mxu0
      %v2856 = vadd.f32 0.0, %v2855
      %v2857 = vpop.f32.mrf.mxu0
      %2858 = vmatprep.mubr.f32.mxu0 0.0
      %2859 = vmatmul.mubr.f32.gmra.mxu0 %v2517
      %v2860 = vpop.f32.mrf.mxu0
      %v2861 = vadd.f32 0.0, %v2860
      %v2862 = vpop.f32.mrf.mxu0
      %2863 = vmatprep.mubr.f32.mxu0 0.0
      %2864 = vmatmul.mubr.f32.gmra.mxu0 %v2520
      %v2865 = vpop.f32.mrf.mxu0
      %v2866 = vadd.f32 0.0, %v2865
      %v2867 = vpop.f32.mrf.mxu0
      %2868 = vmatprep.mubr.f32.mxu0 0.0
      %2869 = vmatmul.mubr.f32.gmra.mxu0 %v2523
      %v2870 = vpop.f32.mrf.mxu0
      %v2871 = vadd.f32 0.0, %v2870
      %v2872 = vpop.f32.mrf.mxu0
      %2873 = vmatprep.mubr.f32.mxu0 0.0
      %2874 = vmatmul.mubr.f32.gmra.mxu0 %v2526
      %v2875 = vpop.f32.mrf.mxu0
      %v2876 = vadd.f32 0.0, %v2875
      %v2877 = vpop.f32.mrf.mxu0
      %2878 = vmatprep.mubr.f32.mxu0 0.0
      %2879 = vmatmul.mubr.f32.gmra.mxu0 %v2529
      %v2880 = vpop.f32.mrf.mxu0
      %v2881 = vadd.f32 0.0, %v2880
      %v2882 = vpop.f32.mrf.mxu0
      %2883 = vmatprep.mubr.f32.mxu0 0.0
      %2884 = vmatmul.mubr.f32.gmra.mxu0 %v2532
      %v2885 = vpop.f32.mrf.mxu0
      %v2886 = vadd.f32 0.0, %v2885
      %v2887 = vpop.f32.mrf.mxu0
      %2888 = vmatprep.mubr.f32.mxu0 0.0
      %2889 = vmatmul.mubr.f32.gmra.mxu0 %v2535
      %v2890 = vpop.f32.mrf.mxu0
      %v2891 = vadd.f32 0.0, %v2890
      %v2892 = vpop.f32.mrf.mxu0
      %2893 = vmatprep.mubr.f32.mxu0 0.0
      %2894 = vmatmul.mubr.f32.gmra.mxu0 %v2538
      %v2895 = vpop.f32.mrf.mxu0
      %v2896 = vadd.f32 0.0, %v2895
      %v2897 = vpop.f32.mrf.mxu0
      %2898 = vmatprep.mubr.f32.mxu0 0.0
      %2899 = vmatmul.mubr.f32.gmra.mxu0 %v2541
      %v2900 = vpop.f32.mrf.mxu0
      %v2901 = vadd.f32 0.0, %v2900
      %v2902 = vpop.f32.mrf.mxu0
      %2903 = vmatprep.mubr.f32.mxu0 0.0
      %2904 = vmatmul.mubr.f32.gmra.mxu0 %v2544
      %v2905 = vpop.f32.mrf.mxu0
      %v2906 = vadd.f32 0.0, %v2905
      %v2907 = vpop.f32.mrf.mxu0
      %2908 = vmatprep.mubr.f32.mxu0 0.0
      %2909 = vmatmul.mubr.f32.gmra.mxu0 %v2547
      %v2910 = vpop.f32.mrf.mxu0
      %v2911 = vadd.f32 0.0, %v2910
      %v2912 = vpop.f32.mrf.mxu0
      %2913 = vmatprep.mubr.f32.mxu0 0.0
      %2914 = vmatmul.mubr.f32.gmra.mxu0 %v2550
      %v2915 = vpop.f32.mrf.mxu0
      %v2916 = vadd.f32 0.0, %v2915
      %v2917 = vpop.f32.mrf.mxu0
      %2918 = vmatprep.mubr.f32.mxu0 0.0
      %2919 = vmatmul.mubr.f32.gmra.mxu0 %v2553
      %v2920 = vpop.f32.mrf.mxu0
      %v2921 = vadd.f32 0.0, %v2920
      %v2922 = vpop.f32.mrf.mxu0
      %2923 = vmatprep.mubr.f32.mxu0 0.0
      %2924 = vmatmul.mubr.f32.gmra.mxu0 %v2556
      %v2925 = vpop.f32.mrf.mxu0
      %v2926 = vadd.f32 0.0, %v2925
      %v2927 = vpop.f32.mrf.mxu0
      %2928 = vmatprep.mubr.f32.mxu0 0.0
      %2929 = vmatmul.mubr.f32.gmra.mxu0 %v2559
      %v2930 = vpop.f32.mrf.mxu0
      %v2931 = vadd.f32 0.0, %v2930
      %v2932 = vpop.f32.mrf.mxu0
      %2933 = vmatprep.mubr.f32.mxu0 0.0
      %2934 = vmatmul.mubr.f32.gmra.mxu0 %v2562
      %v2935 = vpop.f32.mrf.mxu0
      %v2936 = vadd.f32 0.0, %v2935
      %v2937 = vpop.f32.mrf.mxu0
      %2938 = vmatprep.mubr.f32.mxu0 0.0
      %2939 = vmatmul.mubr.f32.gmra.mxu0 %v2565
      %v2940 = vpop.f32.mrf.mxu0
      %v2941 = vadd.f32 0.0, %v2940
      %v2942 = vpop.f32.mrf.mxu0
      %2943 = vmatprep.mubr.f32.mxu0 0.0
      %2944 = vmatmul.mubr.f32.gmra.mxu0 %v2568
      %v2945 = vpop.f32.mrf.mxu0
      %v2946 = vadd.f32 0.0, %v2945
      %v2947 = vpop.f32.mrf.mxu0
      %2948 = vmatprep.mubr.f32.mxu0 0.0
      %2949 = vmatmul.mubr.f32.gmra.mxu0 %v2571
      %v2950 = vpop.f32.mrf.mxu0
      %v2951 = vadd.f32 0.0, %v2950
      %v2952 = vpop.f32.mrf.mxu0
      %2953 = vmatprep.mubr.f32.mxu0 0.0
      %2954 = vmatmul.mubr.f32.gmra.mxu0 %v2574
      %v2955 = vpop.f32.mrf.mxu0
      %v2956 = vadd.f32 0.0, %v2955
      %v2957 = vpop.f32.mrf.mxu0
      %2958 = vmatprep.mubr.f32.mxu0 0.0
      %2959 = vmatmul.mubr.f32.gmra.mxu0 %v2577
      %v2960 = vpop.f32.mrf.mxu0
      %v2961 = vadd.f32 0.0, %v2960
      %v2962 = vpop.f32.mrf.mxu0
      %2963 = vmatprep.mubr.f32.mxu0 0.0
      %2964 = vmatmul.mubr.f32.gmra.mxu0 %v2580
      %v2965 = vpop.f32.mrf.mxu0
      %v2966 = vadd.f32 0.0, %v2965
      %v2967 = vpop.f32.mrf.mxu0
      %2968 = vmatprep.mubr.f32.mxu0 0.0
      %2969 = vmatmul.mubr.f32.gmra.mxu0 %v2583
      %v2970 = vpop.f32.mrf.mxu0
      %v2971 = vadd.f32 0.0, %v2970
      %v2972 = vpop.f32.mrf.mxu0
      %2973 = vdwg.mxu0
      %v2974 = vadd.f32 %v2328, %v2656
      %v2975 = vadd.f32 %v2329, %v2661
      %v2976 = vadd.f32 %v2330, %v2666
      %v2977 = vadd.f32 %v2331, %v2671
      %v2978 = vadd.f32 %v2332, %v2676
      %v2979 = vadd.f32 %v2333, %v2681
      %v2980 = vadd.f32 %v2334, %v2686
      %v2981 = vadd.f32 %v2335, %v2691
      %v2982 = vadd.f32 %v2336, %v2696
      %v2983 = vadd.f32 %v2337, %v2701
      %v2984 = vadd.f32 %v2338, %v2706
      %v2985 = vadd.f32 %v2339, %v2711
      %v2986 = vadd.f32 %v2340, %v2716
      %v2987 = vadd.f32 %v2341, %v2721
      %v2988 = vadd.f32 %v2342, %v2726
      %v2989 = vadd.f32 %v2343, %v2731
      %v2990 = vadd.f32 %v2344, %v2736
      %v2991 = vadd.f32 %v2345, %v2741
      %v2992 = vadd.f32 %v2346, %v2746
      %v2993 = vadd.f32 %v2347, %v2751
      %v2994 = vadd.f32 %v2348, %v2756
      %v2995 = vadd.f32 %v2349, %v2761
      %v2996 = vadd.f32 %v2350, %v2766
      %v2997 = vadd.f32 %v2351, %v2771
      %v2998 = vadd.f32 %v2352, %v2776
      %v2999 = vadd.f32 %v2353, %v2781
      %v3000 = vadd.f32 %v2354, %v2786
      %v3001 = vadd.f32 %v2355, %v2791
      %v3002 = vadd.f32 %v2356, %v2796
      %v3003 = vadd.f32 %v2357, %v2801
      %v3004 = vadd.f32 %v2358, %v2806
      %v3005 = vadd.f32 %v2359, %v2811
      %v3006 = vadd.f32 %v2360, %v2816
      %v3007 = vadd.f32 %v2361, %v2821
      %v3008 = vadd.f32 %v2362, %v2826
      %v3009 = vadd.f32 %v2363, %v2831
      %v3010 = vadd.f32 %v2364, %v2836
      %v3011 = vadd.f32 %v2365, %v2841
      %v3012 = vadd.f32 %v2366, %v2846
      %v3013 = vadd.f32 %v2367, %v2851
      %v3014 = vadd.f32 %v2368, %v2856
      %v3015 = vadd.f32 %v2369, %v2861
      %v3016 = vadd.f32 %v2370, %v2866
      %v3017 = vadd.f32 %v2371, %v2871
      %v3018 = vadd.f32 %v2372, %v2876
      %v3019 = vadd.f32 %v2373, %v2881
      %v3020 = vadd.f32 %v2374, %v2886
      %v3021 = vadd.f32 %v2375, %v2891
      %v3022 = vadd.f32 %v2376, %v2896
      %v3023 = vadd.f32 %v2377, %v2901
      %v3024 = vadd.f32 %v2378, %v2906
      %v3025 = vadd.f32 %v2379, %v2911
      %v3026 = vadd.f32 %v2380, %v2916
      %v3027 = vadd.f32 %v2381, %v2921
      %v3028 = vadd.f32 %v2382, %v2926
      %v3029 = vadd.f32 %v2383, %v2931
      %v3030 = vadd.f32 %v2384, %v2936
      %v3031 = vadd.f32 %v2385, %v2941
      %v3032 = vadd.f32 %v2386, %v2946
      %v3033 = vadd.f32 %v2387, %v2951
      %v3034 = vadd.f32 %v2388, %v2956
      %v3035 = vadd.f32 %v2389, %v2961
      %v3036 = vadd.f32 %v2390, %v2966
      %v3037 = vadd.f32 %v2391, %v2971
      %3038 = vst.msk [vmem:[#allocation2] sm:$0xff] %vm2127, %v2974
      %3039 = vst.msk [vmem:[#allocation2 + $0x8] sm:$0xff] %vm2127, %v2975
      %3040 = vst.msk [vmem:[#allocation2 + $0x10] sm:$0xff] %vm2127, %v2976
      %3041 = vst.msk [vmem:[#allocation2 + $0x18] sm:$0xff] %vm2127, %v2977
      %3042 = vst.msk [vmem:[#allocation2 + $0x20] sm:$0xff] %vm2127, %v2978
      %3043 = vst.msk [vmem:[#allocation2 + $0x28] sm:$0xff] %vm2127, %v2979
      %3044 = vst.msk [vmem:[#allocation2 + $0x30] sm:$0xff] %vm2127, %v2980
      %3045 = vst.msk [vmem:[#allocation2 + $0x38] sm:$0xff] %vm2127, %v2981
      %3046 = vst.msk [vmem:[#allocation2 + $0x40] sm:$0xff] %vm2127, %v2982
      %3047 = vst.msk [vmem:[#allocation2 + $0x48] sm:$0xff] %vm2127, %v2983
      %3048 = vst.msk [vmem:[#allocation2 + $0x50] sm:$0xff] %vm2127, %v2984
      %3049 = vst.msk [vmem:[#allocation2 + $0x58] sm:$0xff] %vm2127, %v2985
      %3050 = vst.msk [vmem:[#allocation2 + $0x60] sm:$0xff] %vm2127, %v2986
      %3051 = vst.msk [vmem:[#allocation2 + $0x68] sm:$0xff] %vm2127, %v2987
      %3052 = vst.msk [vmem:[#allocation2 + $0x70] sm:$0xff] %vm2127, %v2988
      %3053 = vst.msk [vmem:[#allocation2 + $0x78] sm:$0xff] %vm2127, %v2989
      %3054 = vst.msk [vmem:[#allocation2 + $0x80] sm:$0xff] %vm2127, %v2990
      %3055 = vst.msk [vmem:[#allocation2 + $0x88] sm:$0xff] %vm2127, %v2991
      %3056 = vst.msk [vmem:[#allocation2 + $0x90] sm:$0xff] %vm2127, %v2992
      %3057 = vst.msk [vmem:[#allocation2 + $0x98] sm:$0xff] %vm2127, %v2993
      %3058 = vst.msk [vmem:[#allocation2 + $0xa0] sm:$0xff] %vm2127, %v2994
      %3059 = vst.msk [vmem:[#allocation2 + $0xa8] sm:$0xff] %vm2127, %v2995
      %3060 = vst.msk [vmem:[#allocation2 + $0xb0] sm:$0xff] %vm2127, %v2996
      %3061 = vst.msk [vmem:[#allocation2 + $0xb8] sm:$0xff] %vm2127, %v2997
      %3062 = vst.msk [vmem:[#allocation2 + $0xc0] sm:$0xff] %vm2127, %v2998
      %3063 = vst.msk [vmem:[#allocation2 + $0xc8] sm:$0xff] %vm2127, %v2999
      %3064 = vst.msk [vmem:[#allocation2 + $0xd0] sm:$0xff] %vm2127, %v3000
      %3065 = vst.msk [vmem:[#allocation2 + $0xd8] sm:$0xff] %vm2127, %v3001
      %3066 = vst.msk [vmem:[#allocation2 + $0xe0] sm:$0xff] %vm2127, %v3002
      %3067 = vst.msk [vmem:[#allocation2 + $0xe8] sm:$0xff] %vm2127, %v3003
      %3068 = vst.msk [vmem:[#allocation2 + $0xf0] sm:$0xff] %vm2127, %v3004
      %3069 = vst.msk [vmem:[#allocation2 + $0xf8] sm:$0xff] %vm2127, %v3005
      %3070 = vst.msk [vmem:[#allocation2 + $0x100] sm:$0xff] %vm2127, %v3006
      %3071 = vst.msk [vmem:[#allocation2 + $0x108] sm:$0xff] %vm2127, %v3007
      %3072 = vst.msk [vmem:[#allocation2 + $0x110] sm:$0xff] %vm2127, %v3008
      %3073 = vst.msk [vmem:[#allocation2 + $0x118] sm:$0xff] %vm2127, %v3009
      %3074 = vst.msk [vmem:[#allocation2 + $0x120] sm:$0xff] %vm2127, %v3010
      %3075 = vst.msk [vmem:[#allocation2 + $0x128] sm:$0xff] %vm2127, %v3011
      %3076 = vst.msk [vmem:[#allocation2 + $0x130] sm:$0xff] %vm2127, %v3012
      %3077 = vst.msk [vmem:[#allocation2 + $0x138] sm:$0xff] %vm2127, %v3013
      %3078 = vst.msk [vmem:[#allocation2 + $0x140] sm:$0xff] %vm2127, %v3014
      %3079 = vst.msk [vmem:[#allocation2 + $0x148] sm:$0xff] %vm2127, %v3015
      %3080 = vst.msk [vmem:[#allocation2 + $0x150] sm:$0xff] %vm2127, %v3016
      %3081 = vst.msk [vmem:[#allocation2 + $0x158] sm:$0xff] %vm2127, %v3017
      %3082 = vst.msk [vmem:[#allocation2 + $0x160] sm:$0xff] %vm2127, %v3018
      %3083 = vst.msk [vmem:[#allocation2 + $0x168] sm:$0xff] %vm2127, %v3019
      %3084 = vst.msk [vmem:[#allocation2 + $0x170] sm:$0xff] %vm2127, %v3020
      %3085 = vst.msk [vmem:[#allocation2 + $0x178] sm:$0xff] %vm2127, %v3021
      %3086 = vst.msk [vmem:[#allocation2 + $0x180] sm:$0xff] %vm2127, %v3022
      %3087 = vst.msk [vmem:[#allocation2 + $0x188] sm:$0xff] %vm2127, %v3023
      %3088 = vst.msk [vmem:[#allocation2 + $0x190] sm:$0xff] %vm2127, %v3024
      %3089 = vst.msk [vmem:[#allocation2 + $0x198] sm:$0xff] %vm2127, %v3025
      %3090 = vst.msk [vmem:[#allocation2 + $0x1a0] sm:$0xff] %vm2127, %v3026
      %3091 = vst.msk [vmem:[#allocation2 + $0x1a8] sm:$0xff] %vm2127, %v3027
      %3092 = vst.msk [vmem:[#allocation2 + $0x1b0] sm:$0xff] %vm2127, %v3028
      %3093 = vst.msk [vmem:[#allocation2 + $0x1b8] sm:$0xff] %vm2127, %v3029
      %3094 = vst.msk [vmem:[#allocation2 + $0x1c0] sm:$0xff] %vm2127, %v3030
      %3095 = vst.msk [vmem:[#allocation2 + $0x1c8] sm:$0xff] %vm2127, %v3031
      %3096 = vst.msk [vmem:[#allocation2 + $0x1d0] sm:$0xff] %vm2127, %v3032
      %3097 = vst.msk [vmem:[#allocation2 + $0x1d8] sm:$0xff] %vm2127, %v3033
      %3098 = vst.msk [vmem:[#allocation2 + $0x1e0] sm:$0xff] %vm2127, %v3034
      %3099 = vst.msk [vmem:[#allocation2 + $0x1e8] sm:$0xff] %vm2127, %v3035
      %3100 = vst.msk [vmem:[#allocation2 + $0x1f0] sm:$0xff] %vm2127, %v3036
      %3101 = vst.msk [vmem:[#allocation2 + $0x1f8] sm:$0xff] %vm2127, %v3037
      %v3102 = vld [vmem:[#allocation2] sm:$0xff]
      %v3103 = vld [vmem:[#allocation2 + $0x8] sm:$0xff]
      %v3104 = vld [vmem:[#allocation2 + $0x10] sm:$0xff]
      %v3105 = vld [vmem:[#allocation2 + $0x18] sm:$0xff]
      %v3106 = vld [vmem:[#allocation2 + $0x20] sm:$0xff]
      %v3107 = vld [vmem:[#allocation2 + $0x28] sm:$0xff]
      %v3108 = vld [vmem:[#allocation2 + $0x30] sm:$0xff]
      %v3109 = vld [vmem:[#allocation2 + $0x38] sm:$0xff]
      %v3110 = vld [vmem:[#allocation2 + $0x40] sm:$0xff]
      %v3111 = vld [vmem:[#allocation2 + $0x48] sm:$0xff]
      %v3112 = vld [vmem:[#allocation2 + $0x50] sm:$0xff]
      %v3113 = vld [vmem:[#allocation2 + $0x58] sm:$0xff]
      %v3114 = vld [vmem:[#allocation2 + $0x60] sm:$0xff]
      %v3115 = vld [vmem:[#allocation2 + $0x68] sm:$0xff]
      %v3116 = vld [vmem:[#allocation2 + $0x70] sm:$0xff]
      %v3117 = vld [vmem:[#allocation2 + $0x78] sm:$0xff]
      %v3118 = vld [vmem:[#allocation2 + $0x80] sm:$0xff]
      %v3119 = vld [vmem:[#allocation2 + $0x88] sm:$0xff]
      %v3120 = vld [vmem:[#allocation2 + $0x90] sm:$0xff]
      %v3121 = vld [vmem:[#allocation2 + $0x98] sm:$0xff]
      %v3122 = vld [vmem:[#allocation2 + $0xa0] sm:$0xff]
      %v3123 = vld [vmem:[#allocation2 + $0xa8] sm:$0xff]
      %v3124 = vld [vmem:[#allocation2 + $0xb0] sm:$0xff]
      %v3125 = vld [vmem:[#allocation2 + $0xb8] sm:$0xff]
      %v3126 = vld [vmem:[#allocation2 + $0xc0] sm:$0xff]
      %v3127 = vld [vmem:[#allocation2 + $0xc8] sm:$0xff]
      %v3128 = vld [vmem:[#allocation2 + $0xd0] sm:$0xff]
      %v3129 = vld [vmem:[#allocation2 + $0xd8] sm:$0xff]
      %v3130 = vld [vmem:[#allocation2 + $0xe0] sm:$0xff]
      %v3131 = vld [vmem:[#allocation2 + $0xe8] sm:$0xff]
      %v3132 = vld [vmem:[#allocation2 + $0xf0] sm:$0xff]
      %v3133 = vld [vmem:[#allocation2 + $0xf8] sm:$0xff]
      %v3134 = vld [vmem:[#allocation2 + $0x100] sm:$0xff]
      %v3135 = vld [vmem:[#allocation2 + $0x108] sm:$0xff]
      %v3136 = vld [vmem:[#allocation2 + $0x110] sm:$0xff]
      %v3137 = vld [vmem:[#allocation2 + $0x118] sm:$0xff]
      %v3138 = vld [vmem:[#allocation2 + $0x120] sm:$0xff]
      %v3139 = vld [vmem:[#allocation2 + $0x128] sm:$0xff]
      %v3140 = vld [vmem:[#allocation2 + $0x130] sm:$0xff]
      %v3141 = vld [vmem:[#allocation2 + $0x138] sm:$0xff]
      %v3142 = vld [vmem:[#allocation2 + $0x140] sm:$0xff]
      %v3143 = vld [vmem:[#allocation2 + $0x148] sm:$0xff]
      %v3144 = vld [vmem:[#allocation2 + $0x150] sm:$0xff]
      %v3145 = vld [vmem:[#allocation2 + $0x158] sm:$0xff]
      %v3146 = vld [vmem:[#allocation2 + $0x160] sm:$0xff]
      %v3147 = vld [vmem:[#allocation2 + $0x168] sm:$0xff]
      %v3148 = vld [vmem:[#allocation2 + $0x170] sm:$0xff]
      %v3149 = vld [vmem:[#allocation2 + $0x178] sm:$0xff]
      %v3150 = vld [vmem:[#allocation2 + $0x180] sm:$0xff]
      %v3151 = vld [vmem:[#allocation2 + $0x188] sm:$0xff]
      %v3152 = vld [vmem:[#allocation2 + $0x190] sm:$0xff]
      %v3153 = vld [vmem:[#allocation2 + $0x198] sm:$0xff]
      %v3154 = vld [vmem:[#allocation2 + $0x1a0] sm:$0xff]
      %v3155 = vld [vmem:[#allocation2 + $0x1a8] sm:$0xff]
      %v3156 = vld [vmem:[#allocation2 + $0x1b0] sm:$0xff]
      %v3157 = vld [vmem:[#allocation2 + $0x1b8] sm:$0xff]
      %v3158 = vld [vmem:[#allocation2 + $0x1c0] sm:$0xff]
      %v3159 = vld [vmem:[#allocation2 + $0x1c8] sm:$0xff]
      %v3160 = vld [vmem:[#allocation2 + $0x1d0] sm:$0xff]
      %v3161 = vld [vmem:[#allocation2 + $0x1d8] sm:$0xff]
      %v3162 = vld [vmem:[#allocation2 + $0x1e0] sm:$0xff]
      %v3163 = vld [vmem:[#allocation2 + $0x1e8] sm:$0xff]
      %v3164 = vld [vmem:[#allocation2 + $0x1f0] sm:$0xff]
      %v3165 = vld [vmem:[#allocation2 + $0x1f8] sm:$0xff]
      %v3167 = vsel %vm2392, %v2136, 0
      %v3170 = vsel %vm2392, %v2146, 0
      %v3173 = vsel %vm2392, %v2156, 0
      %v3176 = vsel %vm2392, %v2166, 0
      %v3179 = vsel %vm2392, %v2176, 0
      %v3182 = vsel %vm2392, %v2186, 0
      %v3185 = vsel %vm2392, %v2196, 0
      %v3188 = vsel %vm2392, %v2206, 0
      %v3191 = vsel %vm2585, %v2249, 0
      %3193 = vmatprep.subr.mxu0 0.0
      %3194 = vmatpush1.msra.mxu0 0.0
      %3195 = vmatprep.subr.mxu0 0.0
      %3196 = vmatpush1.msra.mxu0 0.0
      %3197 = vmatprep.subr.mxu0 0.0
      %3198 = vmatpush1.msra.mxu0 0.0
      %3199 = vmatprep.subr.mxu0 0.0
      %3200 = vmatpush1.msra.mxu0 0.0
      %3201 = vmatprep.subr.mxu0 0.0
      %3202 = vmatpush1.msra.mxu0 0.0
      %3203 = vmatprep.subr.mxu0 0.0
      %3204 = vmatpush1.msra.mxu0 0.0
      %3205 = vmatprep.subr.mxu0 0.0
      %3206 = vmatpush1.msra.mxu0 0.0
      %3207 = vmatprep.subr.mxu0 0.0
      %3208 = vmatpush1.msra.mxu0 0.0
      %3209 = vmatprep.subr.mxu0 0.0
      %3210 = vmatpush1.msra.mxu0 0.0
      %3211 = vmatprep.subr.mxu0 0.0
      %3212 = vmatpush1.msra.mxu0 0.0
      %3213 = vmatprep.subr.mxu0 0.0
      %3214 = vmatpush1.msra.mxu0 0.0
      %3215 = vmatprep.subr.mxu0 0.0
      %3216 = vmatpush1.msra.mxu0 0.0
      %3217 = vmatprep.subr.mxu0 0.0
      %3218 = vmatpush1.msra.mxu0 0.0
      %3219 = vmatprep.subr.mxu0 0.0
      %3220 = vmatpush1.msra.mxu0 0.0
      %3221 = vmatprep.subr.mxu0 0.0
      %3222 = vmatpush1.msra.mxu0 %v3191
      %3223 = vmatprep.subr.mxu0 0.0
      %3224 = vmatpush1.msra.mxu0 %v2248
      %3225 = vmatprep.subr.mxu0 0.0
      %3226 = vmatpush2.msra.mxu0 0.0
      %3227 = vmatprep.subr.mxu0 0.0
      %3228 = vmatpush2.msra.mxu0 0.0
      %3229 = vmatprep.subr.mxu0 0.0
      %3230 = vmatpush2.msra.mxu0 0.0
      %3231 = vmatprep.subr.mxu0 0.0
      %3232 = vmatpush2.msra.mxu0 0.0
      %3233 = vmatprep.subr.mxu0 0.0
      %3234 = vmatpush2.msra.mxu0 0.0
      %3235 = vmatprep.subr.mxu0 0.0
      %3236 = vmatpush2.msra.mxu0 0.0
      %3237 = vmatprep.subr.mxu0 0.0
      %3238 = vmatpush2.msra.mxu0 0.0
      %3239 = vmatprep.subr.mxu0 0.0
      %3240 = vmatpush2.msra.mxu0 0.0
      %3241 = vmatprep.subr.mxu0 0.0
      %3242 = vmatpush2.msra.mxu0 0.0
      %3243 = vmatprep.subr.mxu0 0.0
      %3244 = vmatpush2.msra.mxu0 0.0
      %3245 = vmatprep.subr.mxu0 0.0
      %3246 = vmatpush2.msra.mxu0 0.0
      %3247 = vmatprep.subr.mxu0 0.0
      %3248 = vmatpush2.msra.mxu0 0.0
      %3249 = vmatprep.subr.mxu0 0.0
      %3250 = vmatpush2.msra.mxu0 0.0
      %3251 = vmatprep.subr.mxu0 0.0
      %3252 = vmatpush2.msra.mxu0 0.0
      %3253 = vmatprep.subr.mxu0 0.0
      %3254 = vmatpush2.msra.mxu0 0.0
      %3255 = vmatprep.subr.mxu0 0.0
      %3256 = vmatpush2.msra.mxu0 0.0
      %3257 = vmatprep.mubr.f32.mxu0 0.0
      %3258 = vmatmul.mubr.f32.gmra.mxu0 %v2397
      %v3259 = vpop.f32.mrf.mxu0
      %v3260 = vadd.f32 0.0, %v3259
      %v3261 = vpop.f32.mrf.mxu0
      %3262 = vmatprep.mubr.f32.mxu0 0.0
      %3263 = vmatmul.mubr.f32.gmra.mxu0 %v2400
      %v3264 = vpop.f32.mrf.mxu0
      %v3265 = vadd.f32 0.0, %v3264
      %v3266 = vpop.f32.mrf.mxu0
      %3267 = vmatprep.mubr.f32.mxu0 0.0
      %3268 = vmatmul.mubr.f32.gmra.mxu0 %v2403
      %v3269 = vpop.f32.mrf.mxu0
      %v3270 = vadd.f32 0.0, %v3269
      %v3271 = vpop.f32.mrf.mxu0
      %3272 = vmatprep.mubr.f32.mxu0 0.0
      %3273 = vmatmul.mubr.f32.gmra.mxu0 %v2406
      %v3274 = vpop.f32.mrf.mxu0
      %v3275 = vadd.f32 0.0, %v3274
      %v3276 = vpop.f32.mrf.mxu0
      %3277 = vmatprep.mubr.f32.mxu0 0.0
      %3278 = vmatmul.mubr.f32.gmra.mxu0 %v2409
      %v3279 = vpop.f32.mrf.mxu0
      %v3280 = vadd.f32 0.0, %v3279
      %v3281 = vpop.f32.mrf.mxu0
      %3282 = vmatprep.mubr.f32.mxu0 0.0
      %3283 = vmatmul.mubr.f32.gmra.mxu0 %v2412
      %v3284 = vpop.f32.mrf.mxu0
      %v3285 = vadd.f32 0.0, %v3284
      %v3286 = vpop.f32.mrf.mxu0
      %3287 = vmatprep.mubr.f32.mxu0 0.0
      %3288 = vmatmul.mubr.f32.gmra.mxu0 %v2415
      %v3289 = vpop.f32.mrf.mxu0
      %v3290 = vadd.f32 0.0, %v3289
      %v3291 = vpop.f32.mrf.mxu0
      %3292 = vmatprep.mubr.f32.mxu0 0.0
      %3293 = vmatmul.mubr.f32.gmra.mxu0 %v3167
      %v3294 = vpop.f32.mrf.mxu0
      %v3295 = vadd.f32 0.0, %v3294
      %v3296 = vpop.f32.mrf.mxu0
      %3297 = vmatprep.mubr.f32.mxu0 0.0
      %3298 = vmatmul.mubr.f32.gmra.mxu0 %v2421
      %v3299 = vpop.f32.mrf.mxu0
      %v3300 = vadd.f32 0.0, %v3299
      %v3301 = vpop.f32.mrf.mxu0
      %3302 = vmatprep.mubr.f32.mxu0 0.0
      %3303 = vmatmul.mubr.f32.gmra.mxu0 %v2424
      %v3304 = vpop.f32.mrf.mxu0
      %v3305 = vadd.f32 0.0, %v3304
      %v3306 = vpop.f32.mrf.mxu0
      %3307 = vmatprep.mubr.f32.mxu0 0.0
      %3308 = vmatmul.mubr.f32.gmra.mxu0 %v2427
      %v3309 = vpop.f32.mrf.mxu0
      %v3310 = vadd.f32 0.0, %v3309
      %v3311 = vpop.f32.mrf.mxu0
      %3312 = vmatprep.mubr.f32.mxu0 0.0
      %3313 = vmatmul.mubr.f32.gmra.mxu0 %v2430
      %v3314 = vpop.f32.mrf.mxu0
      %v3315 = vadd.f32 0.0, %v3314
      %v3316 = vpop.f32.mrf.mxu0
      %3317 = vmatprep.mubr.f32.mxu0 0.0
      %3318 = vmatmul.mubr.f32.gmra.mxu0 %v2433
      %v3319 = vpop.f32.mrf.mxu0
      %v3320 = vadd.f32 0.0, %v3319
      %v3321 = vpop.f32.mrf.mxu0
      %3322 = vmatprep.mubr.f32.mxu0 0.0
      %3323 = vmatmul.mubr.f32.gmra.mxu0 %v2436
      %v3324 = vpop.f32.mrf.mxu0
      %v3325 = vadd.f32 0.0, %v3324
      %v3326 = vpop.f32.mrf.mxu0
      %3327 = vmatprep.mubr.f32.mxu0 0.0
      %3328 = vmatmul.mubr.f32.gmra.mxu0 %v2439
      %v3329 = vpop.f32.mrf.mxu0
      %v3330 = vadd.f32 0.0, %v3329
      %v3331 = vpop.f32.mrf.mxu0
      %3332 = vmatprep.mubr.f32.mxu0 0.0
      %3333 = vmatmul.mubr.f32.gmra.mxu0 %v3170
      %v3334 = vpop.f32.mrf.mxu0
      %v3335 = vadd.f32 0.0, %v3334
      %v3336 = vpop.f32.mrf.mxu0
      %3337 = vmatprep.mubr.f32.mxu0 0.0
      %3338 = vmatmul.mubr.f32.gmra.mxu0 %v2445
      %v3339 = vpop.f32.mrf.mxu0
      %v3340 = vadd.f32 0.0, %v3339
      %v3341 = vpop.f32.mrf.mxu0
      %3342 = vmatprep.mubr.f32.mxu0 0.0
      %3343 = vmatmul.mubr.f32.gmra.mxu0 %v2448
      %v3344 = vpop.f32.mrf.mxu0
      %v3345 = vadd.f32 0.0, %v3344
      %v3346 = vpop.f32.mrf.mxu0
      %3347 = vmatprep.mubr.f32.mxu0 0.0
      %3348 = vmatmul.mubr.f32.gmra.mxu0 %v2451
      %v3349 = vpop.f32.mrf.mxu0
      %v3350 = vadd.f32 0.0, %v3349
      %v3351 = vpop.f32.mrf.mxu0
      %3352 = vmatprep.mubr.f32.mxu0 0.0
      %3353 = vmatmul.mubr.f32.gmra.mxu0 %v2454
      %v3354 = vpop.f32.mrf.mxu0
      %v3355 = vadd.f32 0.0, %v3354
      %v3356 = vpop.f32.mrf.mxu0
      %3357 = vmatprep.mubr.f32.mxu0 0.0
      %3358 = vmatmul.mubr.f32.gmra.mxu0 %v2457
      %v3359 = vpop.f32.mrf.mxu0
      %v3360 = vadd.f32 0.0, %v3359
      %v3361 = vpop.f32.mrf.mxu0
      %3362 = vmatprep.mubr.f32.mxu0 0.0
      %3363 = vmatmul.mubr.f32.gmra.mxu0 %v2460
      %v3364 = vpop.f32.mrf.mxu0
      %v3365 = vadd.f32 0.0, %v3364
      %v3366 = vpop.f32.mrf.mxu0
      %3367 = vmatprep.mubr.f32.mxu0 0.0
      %3368 = vmatmul.mubr.f32.gmra.mxu0 %v2463
      %v3369 = vpop.f32.mrf.mxu0
      %v3370 = vadd.f32 0.0, %v3369
      %v3371 = vpop.f32.mrf.mxu0
      %3372 = vmatprep.mubr.f32.mxu0 0.0
      %3373 = vmatmul.mubr.f32.gmra.mxu0 %v3173
      %v3374 = vpop.f32.mrf.mxu0
      %v3375 = vadd.f32 0.0, %v3374
      %v3376 = vpop.f32.mrf.mxu0
      %3377 = vmatprep.mubr.f32.mxu0 0.0
      %3378 = vmatmul.mubr.f32.gmra.mxu0 %v2469
      %v3379 = vpop.f32.mrf.mxu0
      %v3380 = vadd.f32 0.0, %v3379
      %v3381 = vpop.f32.mrf.mxu0
      %3382 = vmatprep.mubr.f32.mxu0 0.0
      %3383 = vmatmul.mubr.f32.gmra.mxu0 %v2472
      %v3384 = vpop.f32.mrf.mxu0
      %v3385 = vadd.f32 0.0, %v3384
      %v3386 = vpop.f32.mrf.mxu0
      %3387 = vmatprep.mubr.f32.mxu0 0.0
      %3388 = vmatmul.mubr.f32.gmra.mxu0 %v2475
      %v3389 = vpop.f32.mrf.mxu0
      %v3390 = vadd.f32 0.0, %v3389
      %v3391 = vpop.f32.mrf.mxu0
      %3392 = vmatprep.mubr.f32.mxu0 0.0
      %3393 = vmatmul.mubr.f32.gmra.mxu0 %v2478
      %v3394 = vpop.f32.mrf.mxu0
      %v3395 = vadd.f32 0.0, %v3394
      %v3396 = vpop.f32.mrf.mxu0
      %3397 = vmatprep.mubr.f32.mxu0 0.0
      %3398 = vmatmul.mubr.f32.gmra.mxu0 %v2481
      %v3399 = vpop.f32.mrf.mxu0
      %v3400 = vadd.f32 0.0, %v3399
      %v3401 = vpop.f32.mrf.mxu0
      %3402 = vmatprep.mubr.f32.mxu0 0.0
      %3403 = vmatmul.mubr.f32.gmra.mxu0 %v2484
      %v3404 = vpop.f32.mrf.mxu0
      %v3405 = vadd.f32 0.0, %v3404
      %v3406 = vpop.f32.mrf.mxu0
      %3407 = vmatprep.mubr.f32.mxu0 0.0
      %3408 = vmatmul.mubr.f32.gmra.mxu0 %v2487
      %v3409 = vpop.f32.mrf.mxu0
      %v3410 = vadd.f32 0.0, %v3409
      %v3411 = vpop.f32.mrf.mxu0
      %3412 = vmatprep.mubr.f32.mxu0 0.0
      %3413 = vmatmul.mubr.f32.gmra.mxu0 %v3176
      %v3414 = vpop.f32.mrf.mxu0
      %v3415 = vadd.f32 0.0, %v3414
      %v3416 = vpop.f32.mrf.mxu0
      %3417 = vmatprep.mubr.f32.mxu0 0.0
      %3418 = vmatmul.mubr.f32.gmra.mxu0 %v2493
      %v3419 = vpop.f32.mrf.mxu0
      %v3420 = vadd.f32 0.0, %v3419
      %v3421 = vpop.f32.mrf.mxu0
      %3422 = vmatprep.mubr.f32.mxu0 0.0
      %3423 = vmatmul.mubr.f32.gmra.mxu0 %v2496
      %v3424 = vpop.f32.mrf.mxu0
      %v3425 = vadd.f32 0.0, %v3424
      %v3426 = vpop.f32.mrf.mxu0
      %3427 = vmatprep.mubr.f32.mxu0 0.0
      %3428 = vmatmul.mubr.f32.gmra.mxu0 %v2499
      %v3429 = vpop.f32.mrf.mxu0
      %v3430 = vadd.f32 0.0, %v3429
      %v3431 = vpop.f32.mrf.mxu0
      %3432 = vmatprep.mubr.f32.mxu0 0.0
      %3433 = vmatmul.mubr.f32.gmra.mxu0 %v2502
      %v3434 = vpop.f32.mrf.mxu0
      %v3435 = vadd.f32 0.0, %v3434
      %v3436 = vpop.f32.mrf.mxu0
      %3437 = vmatprep.mubr.f32.mxu0 0.0
      %3438 = vmatmul.mubr.f32.gmra.mxu0 %v2505
      %v3439 = vpop.f32.mrf.mxu0
      %v3440 = vadd.f32 0.0, %v3439
      %v3441 = vpop.f32.mrf.mxu0
      %3442 = vmatprep.mubr.f32.mxu0 0.0
      %3443 = vmatmul.mubr.f32.gmra.mxu0 %v2508
      %v3444 = vpop.f32.mrf.mxu0
      %v3445 = vadd.f32 0.0, %v3444
      %v3446 = vpop.f32.mrf.mxu0
      %3447 = vmatprep.mubr.f32.mxu0 0.0
      %3448 = vmatmul.mubr.f32.gmra.mxu0 %v2511
      %v3449 = vpop.f32.mrf.mxu0
      %v3450 = vadd.f32 0.0, %v3449
      %v3451 = vpop.f32.mrf.mxu0
      %3452 = vmatprep.mubr.f32.mxu0 0.0
      %3453 = vmatmul.mubr.f32.gmra.mxu0 %v3179
      %v3454 = vpop.f32.mrf.mxu0
      %v3455 = vadd.f32 0.0, %v3454
      %v3456 = vpop.f32.mrf.mxu0
      %3457 = vmatprep.mubr.f32.mxu0 0.0
      %3458 = vmatmul.mubr.f32.gmra.mxu0 %v2517
      %v3459 = vpop.f32.mrf.mxu0
      %v3460 = vadd.f32 0.0, %v3459
      %v3461 = vpop.f32.mrf.mxu0
      %3462 = vmatprep.mubr.f32.mxu0 0.0
      %3463 = vmatmul.mubr.f32.gmra.mxu0 %v2520
      %v3464 = vpop.f32.mrf.mxu0
      %v3465 = vadd.f32 0.0, %v3464
      %v3466 = vpop.f32.mrf.mxu0
      %3467 = vmatprep.mubr.f32.mxu0 0.0
      %3468 = vmatmul.mubr.f32.gmra.mxu0 %v2523
      %v3469 = vpop.f32.mrf.mxu0
      %v3470 = vadd.f32 0.0, %v3469
      %v3471 = vpop.f32.mrf.mxu0
      %3472 = vmatprep.mubr.f32.mxu0 0.0
      %3473 = vmatmul.mubr.f32.gmra.mxu0 %v2526
      %v3474 = vpop.f32.mrf.mxu0
      %v3475 = vadd.f32 0.0, %v3474
      %v3476 = vpop.f32.mrf.mxu0
      %3477 = vmatprep.mubr.f32.mxu0 0.0
      %3478 = vmatmul.mubr.f32.gmra.mxu0 %v2529
      %v3479 = vpop.f32.mrf.mxu0
      %v3480 = vadd.f32 0.0, %v3479
      %v3481 = vpop.f32.mrf.mxu0
      %3482 = vmatprep.mubr.f32.mxu0 0.0
      %3483 = vmatmul.mubr.f32.gmra.mxu0 %v2532
      %v3484 = vpop.f32.mrf.mxu0
      %v3485 = vadd.f32 0.0, %v3484
      %v3486 = vpop.f32.mrf.mxu0
      %3487 = vmatprep.mubr.f32.mxu0 0.0
      %3488 = vmatmul.mubr.f32.gmra.mxu0 %v2535
      %v3489 = vpop.f32.mrf.mxu0
      %v3490 = vadd.f32 0.0, %v3489
      %v3491 = vpop.f32.mrf.mxu0
      %3492 = vmatprep.mubr.f32.mxu0 0.0
      %3493 = vmatmul.mubr.f32.gmra.mxu0 %v3182
      %v3494 = vpop.f32.mrf.mxu0
      %v3495 = vadd.f32 0.0, %v3494
      %v3496 = vpop.f32.mrf.mxu0
      %3497 = vmatprep.mubr.f32.mxu0 0.0
      %3498 = vmatmul.mubr.f32.gmra.mxu0 %v2541
      %v3499 = vpop.f32.mrf.mxu0
      %v3500 = vadd.f32 0.0, %v3499
      %v3501 = vpop.f32.mrf.mxu0
      %3502 = vmatprep.mubr.f32.mxu0 0.0
      %3503 = vmatmul.mubr.f32.gmra.mxu0 %v2544
      %v3504 = vpop.f32.mrf.mxu0
      %v3505 = vadd.f32 0.0, %v3504
      %v3506 = vpop.f32.mrf.mxu0
      %3507 = vmatprep.mubr.f32.mxu0 0.0
      %3508 = vmatmul.mubr.f32.gmra.mxu0 %v2547
      %v3509 = vpop.f32.mrf.mxu0
      %v3510 = vadd.f32 0.0, %v3509
      %v3511 = vpop.f32.mrf.mxu0
      %3512 = vmatprep.mubr.f32.mxu0 0.0
      %3513 = vmatmul.mubr.f32.gmra.mxu0 %v2550
      %v3514 = vpop.f32.mrf.mxu0
      %v3515 = vadd.f32 0.0, %v3514
      %v3516 = vpop.f32.mrf.mxu0
      %3517 = vmatprep.mubr.f32.mxu0 0.0
      %3518 = vmatmul.mubr.f32.gmra.mxu0 %v2553
      %v3519 = vpop.f32.mrf.mxu0
      %v3520 = vadd.f32 0.0, %v3519
      %v3521 = vpop.f32.mrf.mxu0
      %3522 = vmatprep.mubr.f32.mxu0 0.0
      %3523 = vmatmul.mubr.f32.gmra.mxu0 %v2556
      %v3524 = vpop.f32.mrf.mxu0
      %v3525 = vadd.f32 0.0, %v3524
      %v3526 = vpop.f32.mrf.mxu0
      %3527 = vmatprep.mubr.f32.mxu0 0.0
      %3528 = vmatmul.mubr.f32.gmra.mxu0 %v2559
      %v3529 = vpop.f32.mrf.mxu0
      %v3530 = vadd.f32 0.0, %v3529
      %v3531 = vpop.f32.mrf.mxu0
      %3532 = vmatprep.mubr.f32.mxu0 0.0
      %3533 = vmatmul.mubr.f32.gmra.mxu0 %v3185
      %v3534 = vpop.f32.mrf.mxu0
      %v3535 = vadd.f32 0.0, %v3534
      %v3536 = vpop.f32.mrf.mxu0
      %3537 = vmatprep.mubr.f32.mxu0 0.0
      %3538 = vmatmul.mubr.f32.gmra.mxu0 %v2565
      %v3539 = vpop.f32.mrf.mxu0
      %v3540 = vadd.f32 0.0, %v3539
      %v3541 = vpop.f32.mrf.mxu0
      %3542 = vmatprep.mubr.f32.mxu0 0.0
      %3543 = vmatmul.mubr.f32.gmra.mxu0 %v2568
      %v3544 = vpop.f32.mrf.mxu0
      %v3545 = vadd.f32 0.0, %v3544
      %v3546 = vpop.f32.mrf.mxu0
      %3547 = vmatprep.mubr.f32.mxu0 0.0
      %3548 = vmatmul.mubr.f32.gmra.mxu0 %v2571
      %v3549 = vpop.f32.mrf.mxu0
      %v3550 = vadd.f32 0.0, %v3549
      %v3551 = vpop.f32.mrf.mxu0
      %3552 = vmatprep.mubr.f32.mxu0 0.0
      %3553 = vmatmul.mubr.f32.gmra.mxu0 %v2574
      %v3554 = vpop.f32.mrf.mxu0
      %v3555 = vadd.f32 0.0, %v3554
      %v3556 = vpop.f32.mrf.mxu0
      %3557 = vmatprep.mubr.f32.mxu0 0.0
      %3558 = vmatmul.mubr.f32.gmra.mxu0 %v2577
      %v3559 = vpop.f32.mrf.mxu0
      %v3560 = vadd.f32 0.0, %v3559
      %v3561 = vpop.f32.mrf.mxu0
      %3562 = vmatprep.mubr.f32.mxu0 0.0
      %3563 = vmatmul.mubr.f32.gmra.mxu0 %v2580
      %v3564 = vpop.f32.mrf.mxu0
      %v3565 = vadd.f32 0.0, %v3564
      %v3566 = vpop.f32.mrf.mxu0
      %3567 = vmatprep.mubr.f32.mxu0 0.0
      %3568 = vmatmul.mubr.f32.gmra.mxu0 %v2583
      %v3569 = vpop.f32.mrf.mxu0
      %v3570 = vadd.f32 0.0, %v3569
      %v3571 = vpop.f32.mrf.mxu0
      %3572 = vmatprep.mubr.f32.mxu0 0.0
      %3573 = vmatmul.mubr.f32.gmra.mxu0 %v3188
      %v3574 = vpop.f32.mrf.mxu0
      %v3575 = vadd.f32 0.0, %v3574
      %v3576 = vpop.f32.mrf.mxu0
      %3577 = vdwg.mxu0
      %v3578 = vadd.f32 %v3102, %v3260
      %v3579 = vadd.f32 %v3103, %v3265
      %v3580 = vadd.f32 %v3104, %v3270
      %v3581 = vadd.f32 %v3105, %v3275
      %v3582 = vadd.f32 %v3106, %v3280
      %v3583 = vadd.f32 %v3107, %v3285
      %v3584 = vadd.f32 %v3108, %v3290
      %v3585 = vadd.f32 %v3109, %v3295
      %v3586 = vadd.f32 %v3110, %v3300
      %v3587 = vadd.f32 %v3111, %v3305
      %v3588 = vadd.f32 %v3112, %v3310
      %v3589 = vadd.f32 %v3113, %v3315
      %v3590 = vadd.f32 %v3114, %v3320
      %v3591 = vadd.f32 %v3115, %v3325
      %v3592 = vadd.f32 %v3116, %v3330
      %v3593 = vadd.f32 %v3117, %v3335
      %v3594 = vadd.f32 %v3118, %v3340
      %v3595 = vadd.f32 %v3119, %v3345
      %v3596 = vadd.f32 %v3120, %v3350
      %v3597 = vadd.f32 %v3121, %v3355
      %v3598 = vadd.f32 %v3122, %v3360
      %v3599 = vadd.f32 %v3123, %v3365
      %v3600 = vadd.f32 %v3124, %v3370
      %v3601 = vadd.f32 %v3125, %v3375
      %v3602 = vadd.f32 %v3126, %v3380
      %v3603 = vadd.f32 %v3127, %v3385
      %v3604 = vadd.f32 %v3128, %v3390
      %v3605 = vadd.f32 %v3129, %v3395
      %v3606 = vadd.f32 %v3130, %v3400
      %v3607 = vadd.f32 %v3131, %v3405
      %v3608 = vadd.f32 %v3132, %v3410
      %v3609 = vadd.f32 %v3133, %v3415
      %v3610 = vadd.f32 %v3134, %v3420
      %v3611 = vadd.f32 %v3135, %v3425
      %v3612 = vadd.f32 %v3136, %v3430
      %v3613 = vadd.f32 %v3137, %v3435
      %v3614 = vadd.f32 %v3138, %v3440
      %v3615 = vadd.f32 %v3139, %v3445
      %v3616 = vadd.f32 %v3140, %v3450
      %v3617 = vadd.f32 %v3141, %v3455
      %v3618 = vadd.f32 %v3142, %v3460
      %v3619 = vadd.f32 %v3143, %v3465
      %v3620 = vadd.f32 %v3144, %v3470
      %v3621 = vadd.f32 %v3145, %v3475
      %v3622 = vadd.f32 %v3146, %v3480
      %v3623 = vadd.f32 %v3147, %v3485
      %v3624 = vadd.f32 %v3148, %v3490
      %v3625 = vadd.f32 %v3149, %v3495
      %v3626 = vadd.f32 %v3150, %v3500
      %v3627 = vadd.f32 %v3151, %v3505
      %v3628 = vadd.f32 %v3152, %v3510
      %v3629 = vadd.f32 %v3153, %v3515
      %v3630 = vadd.f32 %v3154, %v3520
      %v3631 = vadd.f32 %v3155, %v3525
      %v3632 = vadd.f32 %v3156, %v3530
      %v3633 = vadd.f32 %v3157, %v3535
      %v3634 = vadd.f32 %v3158, %v3540
      %v3635 = vadd.f32 %v3159, %v3545
      %v3636 = vadd.f32 %v3160, %v3550
      %v3637 = vadd.f32 %v3161, %v3555
      %v3638 = vadd.f32 %v3162, %v3560
      %v3639 = vadd.f32 %v3163, %v3565
      %v3640 = vadd.f32 %v3164, %v3570
      %v3641 = vadd.f32 %v3165, %v3575
      %3642 = vst.msk [vmem:[#allocation2] sm:$0xff] %vm2127, %v3578
      %3643 = vst.msk [vmem:[#allocation2 + $0x8] sm:$0xff] %vm2127, %v3579
      %3644 = vst.msk [vmem:[#allocation2 + $0x10] sm:$0xff] %vm2127, %v3580
      %3645 = vst.msk [vmem:[#allocation2 + $0x18] sm:$0xff] %vm2127, %v3581
      %3646 = vst.msk [vmem:[#allocation2 + $0x20] sm:$0xff] %vm2127, %v3582
      %3647 = vst.msk [vmem:[#allocation2 + $0x28] sm:$0xff] %vm2127, %v3583
      %3648 = vst.msk [vmem:[#allocation2 + $0x30] sm:$0xff] %vm2127, %v3584
      %3649 = vst.msk [vmem:[#allocation2 + $0x38] sm:$0xff] %vm2127, %v3585
      %3650 = vst.msk [vmem:[#allocation2 + $0x40] sm:$0xff] %vm2127, %v3586
      %3651 = vst.msk [vmem:[#allocation2 + $0x48] sm:$0xff] %vm2127, %v3587
      %3652 = vst.msk [vmem:[#allocation2 + $0x50] sm:$0xff] %vm2127, %v3588
      %3653 = vst.msk [vmem:[#allocation2 + $0x58] sm:$0xff] %vm2127, %v3589
      %3654 = vst.msk [vmem:[#allocation2 + $0x60] sm:$0xff] %vm2127, %v3590
      %3655 = vst.msk [vmem:[#allocation2 + $0x68] sm:$0xff] %vm2127, %v3591
      %3656 = vst.msk [vmem:[#allocation2 + $0x70] sm:$0xff] %vm2127, %v3592
      %3657 = vst.msk [vmem:[#allocation2 + $0x78] sm:$0xff] %vm2127, %v3593
      %3658 = vst.msk [vmem:[#allocation2 + $0x80] sm:$0xff] %vm2127, %v3594
      %3659 = vst.msk [vmem:[#allocation2 + $0x88] sm:$0xff] %vm2127, %v3595
      %3660 = vst.msk [vmem:[#allocation2 + $0x90] sm:$0xff] %vm2127, %v3596
      %3661 = vst.msk [vmem:[#allocation2 + $0x98] sm:$0xff] %vm2127, %v3597
      %3662 = vst.msk [vmem:[#allocation2 + $0xa0] sm:$0xff] %vm2127, %v3598
      %3663 = vst.msk [vmem:[#allocation2 + $0xa8] sm:$0xff] %vm2127, %v3599
      %3664 = vst.msk [vmem:[#allocation2 + $0xb0] sm:$0xff] %vm2127, %v3600
      %3665 = vst.msk [vmem:[#allocation2 + $0xb8] sm:$0xff] %vm2127, %v3601
      %3666 = vst.msk [vmem:[#allocation2 + $0xc0] sm:$0xff] %vm2127, %v3602
      %3667 = vst.msk [vmem:[#allocation2 + $0xc8] sm:$0xff] %vm2127, %v3603
      %3668 = vst.msk [vmem:[#allocation2 + $0xd0] sm:$0xff] %vm2127, %v3604
      %3669 = vst.msk [vmem:[#allocation2 + $0xd8] sm:$0xff] %vm2127, %v3605
      %3670 = vst.msk [vmem:[#allocation2 + $0xe0] sm:$0xff] %vm2127, %v3606
      %3671 = vst.msk [vmem:[#allocation2 + $0xe8] sm:$0xff] %vm2127, %v3607
      %3672 = vst.msk [vmem:[#allocation2 + $0xf0] sm:$0xff] %vm2127, %v3608
      %3673 = vst.msk [vmem:[#allocation2 + $0xf8] sm:$0xff] %vm2127, %v3609
      %3674 = vst.msk [vmem:[#allocation2 + $0x100] sm:$0xff] %vm2127, %v3610
      %3675 = vst.msk [vmem:[#allocation2 + $0x108] sm:$0xff] %vm2127, %v3611
      %3676 = vst.msk [vmem:[#allocation2 + $0x110] sm:$0xff] %vm2127, %v3612
      %3677 = vst.msk [vmem:[#allocation2 + $0x118] sm:$0xff] %vm2127, %v3613
      %3678 = vst.msk [vmem:[#allocation2 + $0x120] sm:$0xff] %vm2127, %v3614
      %3679 = vst.msk [vmem:[#allocation2 + $0x128] sm:$0xff] %vm2127, %v3615
      %3680 = vst.msk [vmem:[#allocation2 + $0x130] sm:$0xff] %vm2127, %v3616
      %3681 = vst.msk [vmem:[#allocation2 + $0x138] sm:$0xff] %vm2127, %v3617
      %3682 = vst.msk [vmem:[#allocation2 + $0x140] sm:$0xff] %vm2127, %v3618
      %3683 = vst.msk [vmem:[#allocation2 + $0x148] sm:$0xff] %vm2127, %v3619
      %3684 = vst.msk [vmem:[#allocation2 + $0x150] sm:$0xff] %vm2127, %v3620
      %3685 = vst.msk [vmem:[#allocation2 + $0x158] sm:$0xff] %vm2127, %v3621
      %3686 = vst.msk [vmem:[#allocation2 + $0x160] sm:$0xff] %vm2127, %v3622
      %3687 = vst.msk [vmem:[#allocation2 + $0x168] sm:$0xff] %vm2127, %v3623
      %3688 = vst.msk [vmem:[#allocation2 + $0x170] sm:$0xff] %vm2127, %v3624
      %3689 = vst.msk [vmem:[#allocation2 + $0x178] sm:$0xff] %vm2127, %v3625
      %3690 = vst.msk [vmem:[#allocation2 + $0x180] sm:$0xff] %vm2127, %v3626
      %3691 = vst.msk [vmem:[#allocation2 + $0x188] sm:$0xff] %vm2127, %v3627
      %3692 = vst.msk [vmem:[#allocation2 + $0x190] sm:$0xff] %vm2127, %v3628
      %3693 = vst.msk [vmem:[#allocation2 + $0x198] sm:$0xff] %vm2127, %v3629
      %3694 = vst.msk [vmem:[#allocation2 + $0x1a0] sm:$0xff] %vm2127, %v3630
      %3695 = vst.msk [vmem:[#allocation2 + $0x1a8] sm:$0xff] %vm2127, %v3631
      %3696 = vst.msk [vmem:[#allocation2 + $0x1b0] sm:$0xff] %vm2127, %v3632
      %3697 = vst.msk [vmem:[#allocation2 + $0x1b8] sm:$0xff] %vm2127, %v3633
      %3698 = vst.msk [vmem:[#allocation2 + $0x1c0] sm:$0xff] %vm2127, %v3634
      %3699 = vst.msk [vmem:[#allocation2 + $0x1c8] sm:$0xff] %vm2127, %v3635
      %3700 = vst.msk [vmem:[#allocation2 + $0x1d0] sm:$0xff] %vm2127, %v3636
      %3701 = vst.msk [vmem:[#allocation2 + $0x1d8] sm:$0xff] %vm2127, %v3637
      %3702 = vst.msk [vmem:[#allocation2 + $0x1e0] sm:$0xff] %vm2127, %v3638
      %3703 = vst.msk [vmem:[#allocation2 + $0x1e8] sm:$0xff] %vm2127, %v3639
      %3704 = vst.msk [vmem:[#allocation2 + $0x1f0] sm:$0xff] %vm2127, %v3640
      %3705 = vst.msk [vmem:[#allocation2 + $0x1f8] sm:$0xff] %vm2127, %v3641
      %v3706 = vld [vmem:[#allocation2] sm:$0xff]
      %v3707 = vld [vmem:[#allocation2 + $0x8] sm:$0xff]
      %v3708 = vld [vmem:[#allocation2 + $0x10] sm:$0xff]
      %v3709 = vld [vmem:[#allocation2 + $0x18] sm:$0xff]
      %v3710 = vld [vmem:[#allocation2 + $0x20] sm:$0xff]
      %v3711 = vld [vmem:[#allocation2 + $0x28] sm:$0xff]
      %v3712 = vld [vmem:[#allocation2 + $0x30] sm:$0xff]
      %v3713 = vld [vmem:[#allocation2 + $0x38] sm:$0xff]
      %v3714 = vld [vmem:[#allocation2 + $0x40] sm:$0xff]
      %v3715 = vld [vmem:[#allocation2 + $0x48] sm:$0xff]
      %v3716 = vld [vmem:[#allocation2 + $0x50] sm:$0xff]
      %v3717 = vld [vmem:[#allocation2 + $0x58] sm:$0xff]
      %v3718 = vld [vmem:[#allocation2 + $0x60] sm:$0xff]
      %v3719 = vld [vmem:[#allocation2 + $0x68] sm:$0xff]
      %v3720 = vld [vmem:[#allocation2 + $0x70] sm:$0xff]
      %v3721 = vld [vmem:[#allocation2 + $0x78] sm:$0xff]
      %v3722 = vld [vmem:[#allocation2 + $0x80] sm:$0xff]
      %v3723 = vld [vmem:[#allocation2 + $0x88] sm:$0xff]
      %v3724 = vld [vmem:[#allocation2 + $0x90] sm:$0xff]
      %v3725 = vld [vmem:[#allocation2 + $0x98] sm:$0xff]
      %v3726 = vld [vmem:[#allocation2 + $0xa0] sm:$0xff]
      %v3727 = vld [vmem:[#allocation2 + $0xa8] sm:$0xff]
      %v3728 = vld [vmem:[#allocation2 + $0xb0] sm:$0xff]
      %v3729 = vld [vmem:[#allocation2 + $0xb8] sm:$0xff]
      %v3730 = vld [vmem:[#allocation2 + $0xc0] sm:$0xff]
      %v3731 = vld [vmem:[#allocation2 + $0xc8] sm:$0xff]
      %v3732 = vld [vmem:[#allocation2 + $0xd0] sm:$0xff]
      %v3733 = vld [vmem:[#allocation2 + $0xd8] sm:$0xff]
      %v3734 = vld [vmem:[#allocation2 + $0xe0] sm:$0xff]
      %v3735 = vld [vmem:[#allocation2 + $0xe8] sm:$0xff]
      %v3736 = vld [vmem:[#allocation2 + $0xf0] sm:$0xff]
      %v3737 = vld [vmem:[#allocation2 + $0xf8] sm:$0xff]
      %v3738 = vld [vmem:[#allocation2 + $0x100] sm:$0xff]
      %v3739 = vld [vmem:[#allocation2 + $0x108] sm:$0xff]
      %v3740 = vld [vmem:[#allocation2 + $0x110] sm:$0xff]
      %v3741 = vld [vmem:[#allocation2 + $0x118] sm:$0xff]
      %v3742 = vld [vmem:[#allocation2 + $0x120] sm:$0xff]
      %v3743 = vld [vmem:[#allocation2 + $0x128] sm:$0xff]
      %v3744 = vld [vmem:[#allocation2 + $0x130] sm:$0xff]
      %v3745 = vld [vmem:[#allocation2 + $0x138] sm:$0xff]
      %v3746 = vld [vmem:[#allocation2 + $0x140] sm:$0xff]
      %v3747 = vld [vmem:[#allocation2 + $0x148] sm:$0xff]
      %v3748 = vld [vmem:[#allocation2 + $0x150] sm:$0xff]
      %v3749 = vld [vmem:[#allocation2 + $0x158] sm:$0xff]
      %v3750 = vld [vmem:[#allocation2 + $0x160] sm:$0xff]
      %v3751 = vld [vmem:[#allocation2 + $0x168] sm:$0xff]
      %v3752 = vld [vmem:[#allocation2 + $0x170] sm:$0xff]
      %v3753 = vld [vmem:[#allocation2 + $0x178] sm:$0xff]
      %v3754 = vld [vmem:[#allocation2 + $0x180] sm:$0xff]
      %v3755 = vld [vmem:[#allocation2 + $0x188] sm:$0xff]
      %v3756 = vld [vmem:[#allocation2 + $0x190] sm:$0xff]
      %v3757 = vld [vmem:[#allocation2 + $0x198] sm:$0xff]
      %v3758 = vld [vmem:[#allocation2 + $0x1a0] sm:$0xff]
      %v3759 = vld [vmem:[#allocation2 + $0x1a8] sm:$0xff]
      %v3760 = vld [vmem:[#allocation2 + $0x1b0] sm:$0xff]
      %v3761 = vld [vmem:[#allocation2 + $0x1b8] sm:$0xff]
      %v3762 = vld [vmem:[#allocation2 + $0x1c0] sm:$0xff]
      %v3763 = vld [vmem:[#allocation2 + $0x1c8] sm:$0xff]
      %v3764 = vld [vmem:[#allocation2 + $0x1d0] sm:$0xff]
      %v3765 = vld [vmem:[#allocation2 + $0x1d8] sm:$0xff]
      %v3766 = vld [vmem:[#allocation2 + $0x1e0] sm:$0xff]
      %v3767 = vld [vmem:[#allocation2 + $0x1e8] sm:$0xff]
      %v3768 = vld [vmem:[#allocation2 + $0x1f0] sm:$0xff]
      %v3769 = vld [vmem:[#allocation2 + $0x1f8] sm:$0xff]
      %v3771 = vsel %vm2392, %v2137, 0
      %v3774 = vsel %vm2392, %v2147, 0
      %v3777 = vsel %vm2392, %v2157, 0
      %v3780 = vsel %vm2392, %v2167, 0
      %v3783 = vsel %vm2392, %v2177, 0
      %v3786 = vsel %vm2392, %v2187, 0
      %v3789 = vsel %vm2392, %v2197, 0
      %v3792 = vsel %vm2392, %v2207, 0
      %v3795 = vsel %vm2585, %v2251, 0
      %3797 = vmatprep.subr.mxu0 0.0
      %3798 = vmatpush1.msra.mxu0 0.0
      %3799 = vmatprep.subr.mxu0 0.0
      %3800 = vmatpush1.msra.mxu0 0.0
      %3801 = vmatprep.subr.mxu0 0.0
      %3802 = vmatpush1.msra.mxu0 0.0
      %3803 = vmatprep.subr.mxu0 0.0
      %3804 = vmatpush1.msra.mxu0 0.0
      %3805 = vmatprep.subr.mxu0 0.0
      %3806 = vmatpush1.msra.mxu0 0.0
      %3807 = vmatprep.subr.mxu0 0.0
      %3808 = vmatpush1.msra.mxu0 0.0
      %3809 = vmatprep.subr.mxu0 0.0
      %3810 = vmatpush1.msra.mxu0 0.0
      %3811 = vmatprep.subr.mxu0 0.0
      %3812 = vmatpush1.msra.mxu0 0.0
      %3813 = vmatprep.subr.mxu0 0.0
      %3814 = vmatpush1.msra.mxu0 0.0
      %3815 = vmatprep.subr.mxu0 0.0
      %3816 = vmatpush1.msra.mxu0 0.0
      %3817 = vmatprep.subr.mxu0 0.0
      %3818 = vmatpush1.msra.mxu0 0.0
      %3819 = vmatprep.subr.mxu0 0.0
      %3820 = vmatpush1.msra.mxu0 0.0
      %3821 = vmatprep.subr.mxu0 0.0
      %3822 = vmatpush1.msra.mxu0 0.0
      %3823 = vmatprep.subr.mxu0 0.0
      %3824 = vmatpush1.msra.mxu0 0.0
      %3825 = vmatprep.subr.mxu0 0.0
      %3826 = vmatpush1.msra.mxu0 %v3795
      %3827 = vmatprep.subr.mxu0 0.0
      %3828 = vmatpush1.msra.mxu0 %v2250
      %3829 = vmatprep.subr.mxu0 0.0
      %3830 = vmatpush2.msra.mxu0 0.0
      %3831 = vmatprep.subr.mxu0 0.0
      %3832 = vmatpush2.msra.mxu0 0.0
      %3833 = vmatprep.subr.mxu0 0.0
      %3834 = vmatpush2.msra.mxu0 0.0
      %3835 = vmatprep.subr.mxu0 0.0
      %3836 = vmatpush2.msra.mxu0 0.0
      %3837 = vmatprep.subr.mxu0 0.0
      %3838 = vmatpush2.msra.mxu0 0.0
      %3839 = vmatprep.subr.mxu0 0.0
      %3840 = vmatpush2.msra.mxu0 0.0
      %3841 = vmatprep.subr.mxu0 0.0
      %3842 = vmatpush2.msra.mxu0 0.0
      %3843 = vmatprep.subr.mxu0 0.0
      %3844 = vmatpush2.msra.mxu0 0.0
      %3845 = vmatprep.subr.mxu0 0.0
      %3846 = vmatpush2.msra.mxu0 0.0
      %3847 = vmatprep.subr.mxu0 0.0
      %3848 = vmatpush2.msra.mxu0 0.0
      %3849 = vmatprep.subr.mxu0 0.0
      %3850 = vmatpush2.msra.mxu0 0.0
      %3851 = vmatprep.subr.mxu0 0.0
      %3852 = vmatpush2.msra.mxu0 0.0
      %3853 = vmatprep.subr.mxu0 0.0
      %3854 = vmatpush2.msra.mxu0 0.0
      %3855 = vmatprep.subr.mxu0 0.0
      %3856 = vmatpush2.msra.mxu0 0.0
      %3857 = vmatprep.subr.mxu0 0.0
      %3858 = vmatpush2.msra.mxu0 0.0
      %3859 = vmatprep.subr.mxu0 0.0
      %3860 = vmatpush2.msra.mxu0 0.0
      %3861 = vmatprep.mubr.f32.mxu0 0.0
      %3862 = vmatmul.mubr.f32.gmra.mxu0 %v2400
      %v3863 = vpop.f32.mrf.mxu0
      %v3864 = vadd.f32 0.0, %v3863
      %v3865 = vpop.f32.mrf.mxu0
      %3866 = vmatprep.mubr.f32.mxu0 0.0
      %3867 = vmatmul.mubr.f32.gmra.mxu0 %v2403
      %v3868 = vpop.f32.mrf.mxu0
      %v3869 = vadd.f32 0.0, %v3868
      %v3870 = vpop.f32.mrf.mxu0
      %3871 = vmatprep.mubr.f32.mxu0 0.0
      %3872 = vmatmul.mubr.f32.gmra.mxu0 %v2406
      %v3873 = vpop.f32.mrf.mxu0
      %v3874 = vadd.f32 0.0, %v3873
      %v3875 = vpop.f32.mrf.mxu0
      %3876 = vmatprep.mubr.f32.mxu0 0.0
      %3877 = vmatmul.mubr.f32.gmra.mxu0 %v2409
      %v3878 = vpop.f32.mrf.mxu0
      %v3879 = vadd.f32 0.0, %v3878
      %v3880 = vpop.f32.mrf.mxu0
      %3881 = vmatprep.mubr.f32.mxu0 0.0
      %3882 = vmatmul.mubr.f32.gmra.mxu0 %v2412
      %v3883 = vpop.f32.mrf.mxu0
      %v3884 = vadd.f32 0.0, %v3883
      %v3885 = vpop.f32.mrf.mxu0
      %3886 = vmatprep.mubr.f32.mxu0 0.0
      %3887 = vmatmul.mubr.f32.gmra.mxu0 %v2415
      %v3888 = vpop.f32.mrf.mxu0
      %v3889 = vadd.f32 0.0, %v3888
      %v3890 = vpop.f32.mrf.mxu0
      %3891 = vmatprep.mubr.f32.mxu0 0.0
      %3892 = vmatmul.mubr.f32.gmra.mxu0 %v3167
      %v3893 = vpop.f32.mrf.mxu0
      %v3894 = vadd.f32 0.0, %v3893
      %v3895 = vpop.f32.mrf.mxu0
      %3896 = vmatprep.mubr.f32.mxu0 0.0
      %3897 = vmatmul.mubr.f32.gmra.mxu0 %v3771
      %v3898 = vpop.f32.mrf.mxu0
      %v3899 = vadd.f32 0.0, %v3898
      %v3900 = vpop.f32.mrf.mxu0
      %3901 = vmatprep.mubr.f32.mxu0 0.0
      %3902 = vmatmul.mubr.f32.gmra.mxu0 %v2424
      %v3903 = vpop.f32.mrf.mxu0
      %v3904 = vadd.f32 0.0, %v3903
      %v3905 = vpop.f32.mrf.mxu0
      %3906 = vmatprep.mubr.f32.mxu0 0.0
      %3907 = vmatmul.mubr.f32.gmra.mxu0 %v2427
      %v3908 = vpop.f32.mrf.mxu0
      %v3909 = vadd.f32 0.0, %v3908
      %v3910 = vpop.f32.mrf.mxu0
      %3911 = vmatprep.mubr.f32.mxu0 0.0
      %3912 = vmatmul.mubr.f32.gmra.mxu0 %v2430
      %v3913 = vpop.f32.mrf.mxu0
      %v3914 = vadd.f32 0.0, %v3913
      %v3915 = vpop.f32.mrf.mxu0
      %3916 = vmatprep.mubr.f32.mxu0 0.0
      %3917 = vmatmul.mubr.f32.gmra.mxu0 %v2433
      %v3918 = vpop.f32.mrf.mxu0
      %v3919 = vadd.f32 0.0, %v3918
      %v3920 = vpop.f32.mrf.mxu0
      %3921 = vmatprep.mubr.f32.mxu0 0.0
      %3922 = vmatmul.mubr.f32.gmra.mxu0 %v2436
      %v3923 = vpop.f32.mrf.mxu0
      %v3924 = vadd.f32 0.0, %v3923
      %v3925 = vpop.f32.mrf.mxu0
      %3926 = vmatprep.mubr.f32.mxu0 0.0
      %3927 = vmatmul.mubr.f32.gmra.mxu0 %v2439
      %v3928 = vpop.f32.mrf.mxu0
      %v3929 = vadd.f32 0.0, %v3928
      %v3930 = vpop.f32.mrf.mxu0
      %3931 = vmatprep.mubr.f32.mxu0 0.0
      %3932 = vmatmul.mubr.f32.gmra.mxu0 %v3170
      %v3933 = vpop.f32.mrf.mxu0
      %v3934 = vadd.f32 0.0, %v3933
      %v3935 = vpop.f32.mrf.mxu0
      %3936 = vmatprep.mubr.f32.mxu0 0.0
      %3937 = vmatmul.mubr.f32.gmra.mxu0 %v3774
      %v3938 = vpop.f32.mrf.mxu0
      %v3939 = vadd.f32 0.0, %v3938
      %v3940 = vpop.f32.mrf.mxu0
      %3941 = vmatprep.mubr.f32.mxu0 0.0
      %3942 = vmatmul.mubr.f32.gmra.mxu0 %v2448
      %v3943 = vpop.f32.mrf.mxu0
      %v3944 = vadd.f32 0.0, %v3943
      %v3945 = vpop.f32.mrf.mxu0
      %3946 = vmatprep.mubr.f32.mxu0 0.0
      %3947 = vmatmul.mubr.f32.gmra.mxu0 %v2451
      %v3948 = vpop.f32.mrf.mxu0
      %v3949 = vadd.f32 0.0, %v3948
      %v3950 = vpop.f32.mrf.mxu0
      %3951 = vmatprep.mubr.f32.mxu0 0.0
      %3952 = vmatmul.mubr.f32.gmra.mxu0 %v2454
      %v3953 = vpop.f32.mrf.mxu0
      %v3954 = vadd.f32 0.0, %v3953
      %v3955 = vpop.f32.mrf.mxu0
      %3956 = vmatprep.mubr.f32.mxu0 0.0
      %3957 = vmatmul.mubr.f32.gmra.mxu0 %v2457
      %v3958 = vpop.f32.mrf.mxu0
      %v3959 = vadd.f32 0.0, %v3958
      %v3960 = vpop.f32.mrf.mxu0
      %3961 = vmatprep.mubr.f32.mxu0 0.0
      %3962 = vmatmul.mubr.f32.gmra.mxu0 %v2460
      %v3963 = vpop.f32.mrf.mxu0
      %v3964 = vadd.f32 0.0, %v3963
      %v3965 = vpop.f32.mrf.mxu0
      %3966 = vmatprep.mubr.f32.mxu0 0.0
      %3967 = vmatmul.mubr.f32.gmra.mxu0 %v2463
      %v3968 = vpop.f32.mrf.mxu0
      %v3969 = vadd.f32 0.0, %v3968
      %v3970 = vpop.f32.mrf.mxu0
      %3971 = vmatprep.mubr.f32.mxu0 0.0
      %3972 = vmatmul.mubr.f32.gmra.mxu0 %v3173
      %v3973 = vpop.f32.mrf.mxu0
      %v3974 = vadd.f32 0.0, %v3973
      %v3975 = vpop.f32.mrf.mxu0
      %3976 = vmatprep.mubr.f32.mxu0 0.0
      %3977 = vmatmul.mubr.f32.gmra.mxu0 %v3777
      %v3978 = vpop.f32.mrf.mxu0
      %v3979 = vadd.f32 0.0, %v3978
      %v3980 = vpop.f32.mrf.mxu0
      %3981 = vmatprep.mubr.f32.mxu0 0.0
      %3982 = vmatmul.mubr.f32.gmra.mxu0 %v2472
      %v3983 = vpop.f32.mrf.mxu0
      %v3984 = vadd.f32 0.0, %v3983
      %v3985 = vpop.f32.mrf.mxu0
      %3986 = vmatprep.mubr.f32.mxu0 0.0
      %3987 = vmatmul.mubr.f32.gmra.mxu0 %v2475
      %v3988 = vpop.f32.mrf.mxu0
      %v3989 = vadd.f32 0.0, %v3988
      %v3990 = vpop.f32.mrf.mxu0
      %3991 = vmatprep.mubr.f32.mxu0 0.0
      %3992 = vmatmul.mubr.f32.gmra.mxu0 %v2478
      %v3993 = vpop.f32.mrf.mxu0
      %v3994 = vadd.f32 0.0, %v3993
      %v3995 = vpop.f32.mrf.mxu0
      %3996 = vmatprep.mubr.f32.mxu0 0.0
      %3997 = vmatmul.mubr.f32.gmra.mxu0 %v2481
      %v3998 = vpop.f32.mrf.mxu0
      %v3999 = vadd.f32 0.0, %v3998
      %v4000 = vpop.f32.mrf.mxu0
      %4001 = vmatprep.mubr.f32.mxu0 0.0
      %4002 = vmatmul.mubr.f32.gmra.mxu0 %v2484
      %v4003 = vpop.f32.mrf.mxu0
      %v4004 = vadd.f32 0.0, %v4003
      %v4005 = vpop.f32.mrf.mxu0
      %4006 = vmatprep.mubr.f32.mxu0 0.0
      %4007 = vmatmul.mubr.f32.gmra.mxu0 %v2487
      %v4008 = vpop.f32.mrf.mxu0
      %v4009 = vadd.f32 0.0, %v4008
      %v4010 = vpop.f32.mrf.mxu0
      %4011 = vmatprep.mubr.f32.mxu0 0.0
      %4012 = vmatmul.mubr.f32.gmra.mxu0 %v3176
      %v4013 = vpop.f32.mrf.mxu0
      %v4014 = vadd.f32 0.0, %v4013
      %v4015 = vpop.f32.mrf.mxu0
      %4016 = vmatprep.mubr.f32.mxu0 0.0
      %4017 = vmatmul.mubr.f32.gmra.mxu0 %v3780
      %v4018 = vpop.f32.mrf.mxu0
      %v4019 = vadd.f32 0.0, %v4018
      %v4020 = vpop.f32.mrf.mxu0
      %4021 = vmatprep.mubr.f32.mxu0 0.0
      %4022 = vmatmul.mubr.f32.gmra.mxu0 %v2496
      %v4023 = vpop.f32.mrf.mxu0
      %v4024 = vadd.f32 0.0, %v4023
      %v4025 = vpop.f32.mrf.mxu0
      %4026 = vmatprep.mubr.f32.mxu0 0.0
      %4027 = vmatmul.mubr.f32.gmra.mxu0 %v2499
      %v4028 = vpop.f32.mrf.mxu0
      %v4029 = vadd.f32 0.0, %v4028
      %v4030 = vpop.f32.mrf.mxu0
      %4031 = vmatprep.mubr.f32.mxu0 0.0
      %4032 = vmatmul.mubr.f32.gmra.mxu0 %v2502
      %v4033 = vpop.f32.mrf.mxu0
      %v4034 = vadd.f32 0.0, %v4033
      %v4035 = vpop.f32.mrf.mxu0
      %4036 = vmatprep.mubr.f32.mxu0 0.0
      %4037 = vmatmul.mubr.f32.gmra.mxu0 %v2505
      %v4038 = vpop.f32.mrf.mxu0
      %v4039 = vadd.f32 0.0, %v4038
      %v4040 = vpop.f32.mrf.mxu0
      %4041 = vmatprep.mubr.f32.mxu0 0.0
      %4042 = vmatmul.mubr.f32.gmra.mxu0 %v2508
      %v4043 = vpop.f32.mrf.mxu0
      %v4044 = vadd.f32 0.0, %v4043
      %v4045 = vpop.f32.mrf.mxu0
      %4046 = vmatprep.mubr.f32.mxu0 0.0
      %4047 = vmatmul.mubr.f32.gmra.mxu0 %v2511
      %v4048 = vpop.f32.mrf.mxu0
      %v4049 = vadd.f32 0.0, %v4048
      %v4050 = vpop.f32.mrf.mxu0
      %4051 = vmatprep.mubr.f32.mxu0 0.0
      %4052 = vmatmul.mubr.f32.gmra.mxu0 %v3179
      %v4053 = vpop.f32.mrf.mxu0
      %v4054 = vadd.f32 0.0, %v4053
      %v4055 = vpop.f32.mrf.mxu0
      %4056 = vmatprep.mubr.f32.mxu0 0.0
      %4057 = vmatmul.mubr.f32.gmra.mxu0 %v3783
      %v4058 = vpop.f32.mrf.mxu0
      %v4059 = vadd.f32 0.0, %v4058
      %v4060 = vpop.f32.mrf.mxu0
      %4061 = vmatprep.mubr.f32.mxu0 0.0
      %4062 = vmatmul.mubr.f32.gmra.mxu0 %v2520
      %v4063 = vpop.f32.mrf.mxu0
      %v4064 = vadd.f32 0.0, %v4063
      %v4065 = vpop.f32.mrf.mxu0
      %4066 = vmatprep.mubr.f32.mxu0 0.0
      %4067 = vmatmul.mubr.f32.gmra.mxu0 %v2523
      %v4068 = vpop.f32.mrf.mxu0
      %v4069 = vadd.f32 0.0, %v4068
      %v4070 = vpop.f32.mrf.mxu0
      %4071 = vmatprep.mubr.f32.mxu0 0.0
      %4072 = vmatmul.mubr.f32.gmra.mxu0 %v2526
      %v4073 = vpop.f32.mrf.mxu0
      %v4074 = vadd.f32 0.0, %v4073
      %v4075 = vpop.f32.mrf.mxu0
      %4076 = vmatprep.mubr.f32.mxu0 0.0
      %4077 = vmatmul.mubr.f32.gmra.mxu0 %v2529
      %v4078 = vpop.f32.mrf.mxu0
      %v4079 = vadd.f32 0.0, %v4078
      %v4080 = vpop.f32.mrf.mxu0
      %4081 = vmatprep.mubr.f32.mxu0 0.0
      %4082 = vmatmul.mubr.f32.gmra.mxu0 %v2532
      %v4083 = vpop.f32.mrf.mxu0
      %v4084 = vadd.f32 0.0, %v4083
      %v4085 = vpop.f32.mrf.mxu0
      %4086 = vmatprep.mubr.f32.mxu0 0.0
      %4087 = vmatmul.mubr.f32.gmra.mxu0 %v2535
      %v4088 = vpop.f32.mrf.mxu0
      %v4089 = vadd.f32 0.0, %v4088
      %v4090 = vpop.f32.mrf.mxu0
      %4091 = vmatprep.mubr.f32.mxu0 0.0
      %4092 = vmatmul.mubr.f32.gmra.mxu0 %v3182
      %v4093 = vpop.f32.mrf.mxu0
      %v4094 = vadd.f32 0.0, %v4093
      %v4095 = vpop.f32.mrf.mxu0
      %4096 = vmatprep.mubr.f32.mxu0 0.0
      %4097 = vmatmul.mubr.f32.gmra.mxu0 %v3786
      %v4098 = vpop.f32.mrf.mxu0
      %v4099 = vadd.f32 0.0, %v4098
      %v4100 = vpop.f32.mrf.mxu0
      %4101 = vmatprep.mubr.f32.mxu0 0.0
      %4102 = vmatmul.mubr.f32.gmra.mxu0 %v2544
      %v4103 = vpop.f32.mrf.mxu0
      %v4104 = vadd.f32 0.0, %v4103
      %v4105 = vpop.f32.mrf.mxu0
      %4106 = vmatprep.mubr.f32.mxu0 0.0
      %4107 = vmatmul.mubr.f32.gmra.mxu0 %v2547
      %v4108 = vpop.f32.mrf.mxu0
      %v4109 = vadd.f32 0.0, %v4108
      %v4110 = vpop.f32.mrf.mxu0
      %4111 = vmatprep.mubr.f32.mxu0 0.0
      %4112 = vmatmul.mubr.f32.gmra.mxu0 %v2550
      %v4113 = vpop.f32.mrf.mxu0
      %v4114 = vadd.f32 0.0, %v4113
      %v4115 = vpop.f32.mrf.mxu0
      %4116 = vmatprep.mubr.f32.mxu0 0.0
      %4117 = vmatmul.mubr.f32.gmra.mxu0 %v2553
      %v4118 = vpop.f32.mrf.mxu0
      %v4119 = vadd.f32 0.0, %v4118
      %v4120 = vpop.f32.mrf.mxu0
      %4121 = vmatprep.mubr.f32.mxu0 0.0
      %4122 = vmatmul.mubr.f32.gmra.mxu0 %v2556
      %v4123 = vpop.f32.mrf.mxu0
      %v4124 = vadd.f32 0.0, %v4123
      %v4125 = vpop.f32.mrf.mxu0
      %4126 = vmatprep.mubr.f32.mxu0 0.0
      %4127 = vmatmul.mubr.f32.gmra.mxu0 %v2559
      %v4128 = vpop.f32.mrf.mxu0
      %v4129 = vadd.f32 0.0, %v4128
      %v4130 = vpop.f32.mrf.mxu0
      %4131 = vmatprep.mubr.f32.mxu0 0.0
      %4132 = vmatmul.mubr.f32.gmra.mxu0 %v3185
      %v4133 = vpop.f32.mrf.mxu0
      %v4134 = vadd.f32 0.0, %v4133
      %v4135 = vpop.f32.mrf.mxu0
      %4136 = vmatprep.mubr.f32.mxu0 0.0
      %4137 = vmatmul.mubr.f32.gmra.mxu0 %v3789
      %v4138 = vpop.f32.mrf.mxu0
      %v4139 = vadd.f32 0.0, %v4138
      %v4140 = vpop.f32.mrf.mxu0
      %4141 = vmatprep.mubr.f32.mxu0 0.0
      %4142 = vmatmul.mubr.f32.gmra.mxu0 %v2568
      %v4143 = vpop.f32.mrf.mxu0
      %v4144 = vadd.f32 0.0, %v4143
      %v4145 = vpop.f32.mrf.mxu0
      %4146 = vmatprep.mubr.f32.mxu0 0.0
      %4147 = vmatmul.mubr.f32.gmra.mxu0 %v2571
      %v4148 = vpop.f32.mrf.mxu0
      %v4149 = vadd.f32 0.0, %v4148
      %v4150 = vpop.f32.mrf.mxu0
      %4151 = vmatprep.mubr.f32.mxu0 0.0
      %4152 = vmatmul.mubr.f32.gmra.mxu0 %v2574
      %v4153 = vpop.f32.mrf.mxu0
      %v4154 = vadd.f32 0.0, %v4153
      %v4155 = vpop.f32.mrf.mxu0
      %4156 = vmatprep.mubr.f32.mxu0 0.0
      %4157 = vmatmul.mubr.f32.gmra.mxu0 %v2577
      %v4158 = vpop.f32.mrf.mxu0
      %v4159 = vadd.f32 0.0, %v4158
      %v4160 = vpop.f32.mrf.mxu0
      %4161 = vmatprep.mubr.f32.mxu0 0.0
      %4162 = vmatmul.mubr.f32.gmra.mxu0 %v2580
      %v4163 = vpop.f32.mrf.mxu0
      %v4164 = vadd.f32 0.0, %v4163
      %v4165 = vpop.f32.mrf.mxu0
      %4166 = vmatprep.mubr.f32.mxu0 0.0
      %4167 = vmatmul.mubr.f32.gmra.mxu0 %v2583
      %v4168 = vpop.f32.mrf.mxu0
      %v4169 = vadd.f32 0.0, %v4168
      %v4170 = vpop.f32.mrf.mxu0
      %4171 = vmatprep.mubr.f32.mxu0 0.0
      %4172 = vmatmul.mubr.f32.gmra.mxu0 %v3188
      %v4173 = vpop.f32.mrf.mxu0
      %v4174 = vadd.f32 0.0, %v4173
      %v4175 = vpop.f32.mrf.mxu0
      %4176 = vmatprep.mubr.f32.mxu0 0.0
      %4177 = vmatmul.mubr.f32.gmra.mxu0 %v3792
      %v4178 = vpop.f32.mrf.mxu0
      %v4179 = vadd.f32 0.0, %v4178
      %v4180 = vpop.f32.mrf.mxu0
      %4181 = vdwg.mxu0
      %v4182 = vadd.f32 %v3706, %v3864
      %v4183 = vadd.f32 %v3707, %v3869
      %v4184 = vadd.f32 %v3708, %v3874
      %v4185 = vadd.f32 %v3709, %v3879
      %v4186 = vadd.f32 %v3710, %v3884
      %v4187 = vadd.f32 %v3711, %v3889
      %v4188 = vadd.f32 %v3712, %v3894
      %v4189 = vadd.f32 %v3713, %v3899
      %v4190 = vadd.f32 %v3714, %v3904
      %v4191 = vadd.f32 %v3715, %v3909
      %v4192 = vadd.f32 %v3716, %v3914
      %v4193 = vadd.f32 %v3717, %v3919
      %v4194 = vadd.f32 %v3718, %v3924
      %v4195 = vadd.f32 %v3719, %v3929
      %v4196 = vadd.f32 %v3720, %v3934
      %v4197 = vadd.f32 %v3721, %v3939
      %v4198 = vadd.f32 %v3722, %v3944
      %v4199 = vadd.f32 %v3723, %v3949
      %v4200 = vadd.f32 %v3724, %v3954
      %v4201 = vadd.f32 %v3725, %v3959
      %v4202 = vadd.f32 %v3726, %v3964
      %v4203 = vadd.f32 %v3727, %v3969
      %v4204 = vadd.f32 %v3728, %v3974
      %v4205 = vadd.f32 %v3729, %v3979
      %v4206 = vadd.f32 %v3730, %v3984
      %v4207 = vadd.f32 %v3731, %v3989
      %v4208 = vadd.f32 %v3732, %v3994
      %v4209 = vadd.f32 %v3733, %v3999
      %v4210 = vadd.f32 %v3734, %v4004
      %v4211 = vadd.f32 %v3735, %v4009
      %v4212 = vadd.f32 %v3736, %v4014
      %v4213 = vadd.f32 %v3737, %v4019
      %v4214 = vadd.f32 %v3738, %v4024
      %v4215 = vadd.f32 %v3739, %v4029
      %v4216 = vadd.f32 %v3740, %v4034
      %v4217 = vadd.f32 %v3741, %v4039
      %v4218 = vadd.f32 %v3742, %v4044
      %v4219 = vadd.f32 %v3743, %v4049
      %v4220 = vadd.f32 %v3744, %v4054
      %v4221 = vadd.f32 %v3745, %v4059
      %v4222 = vadd.f32 %v3746, %v4064
      %v4223 = vadd.f32 %v3747, %v4069
      %v4224 = vadd.f32 %v3748, %v4074
      %v4225 = vadd.f32 %v3749, %v4079
      %v4226 = vadd.f32 %v3750, %v4084
      %v4227 = vadd.f32 %v3751, %v4089
      %v4228 = vadd.f32 %v3752, %v4094
      %v4229 = vadd.f32 %v3753, %v4099
      %v4230 = vadd.f32 %v3754, %v4104
      %v4231 = vadd.f32 %v3755, %v4109
      %v4232 = vadd.f32 %v3756, %v4114
      %v4233 = vadd.f32 %v3757, %v4119
      %v4234 = vadd.f32 %v3758, %v4124
      %v4235 = vadd.f32 %v3759, %v4129
      %v4236 = vadd.f32 %v3760, %v4134
      %v4237 = vadd.f32 %v3761, %v4139
      %v4238 = vadd.f32 %v3762, %v4144
      %v4239 = vadd.f32 %v3763, %v4149
      %v4240 = vadd.f32 %v3764, %v4154
      %v4241 = vadd.f32 %v3765, %v4159
      %v4242 = vadd.f32 %v3766, %v4164
      %v4243 = vadd.f32 %v3767, %v4169
      %v4244 = vadd.f32 %v3768, %v4174
      %v4245 = vadd.f32 %v3769, %v4179
      %4246 = vst.msk [vmem:[#allocation2] sm:$0xff] %vm2127, %v4182
      %4247 = vst.msk [vmem:[#allocation2 + $0x8] sm:$0xff] %vm2127, %v4183
      %4248 = vst.msk [vmem:[#allocation2 + $0x10] sm:$0xff] %vm2127, %v4184
      %4249 = vst.msk [vmem:[#allocation2 + $0x18] sm:$0xff] %vm2127, %v4185
      %4250 = vst.msk [vmem:[#allocation2 + $0x20] sm:$0xff] %vm2127, %v4186
      %4251 = vst.msk [vmem:[#allocation2 + $0x28] sm:$0xff] %vm2127, %v4187
      %4252 = vst.msk [vmem:[#allocation2 + $0x30] sm:$0xff] %vm2127, %v4188
      %4253 = vst.msk [vmem:[#allocation2 + $0x38] sm:$0xff] %vm2127, %v4189
      %4254 = vst.msk [vmem:[#allocation2 + $0x40] sm:$0xff] %vm2127, %v4190
      %4255 = vst.msk [vmem:[#allocation2 + $0x48] sm:$0xff] %vm2127, %v4191
      %4256 = vst.msk [vmem:[#allocation2 + $0x50] sm:$0xff] %vm2127, %v4192
      %4257 = vst.msk [vmem:[#allocation2 + $0x58] sm:$0xff] %vm2127, %v4193
      %4258 = vst.msk [vmem:[#allocation2 + $0x60] sm:$0xff] %vm2127, %v4194
      %4259 = vst.msk [vmem:[#allocation2 + $0x68] sm:$0xff] %vm2127, %v4195
      %4260 = vst.msk [vmem:[#allocation2 + $0x70] sm:$0xff] %vm2127, %v4196
      %4261 = vst.msk [vmem:[#allocation2 + $0x78] sm:$0xff] %vm2127, %v4197
      %4262 = vst.msk [vmem:[#allocation2 + $0x80] sm:$0xff] %vm2127, %v4198
      %4263 = vst.msk [vmem:[#allocation2 + $0x88] sm:$0xff] %vm2127, %v4199
      %4264 = vst.msk [vmem:[#allocation2 + $0x90] sm:$0xff] %vm2127, %v4200
      %4265 = vst.msk [vmem:[#allocation2 + $0x98] sm:$0xff] %vm2127, %v4201
      %4266 = vst.msk [vmem:[#allocation2 + $0xa0] sm:$0xff] %vm2127, %v4202
      %4267 = vst.msk [vmem:[#allocation2 + $0xa8] sm:$0xff] %vm2127, %v4203
      %4268 = vst.msk [vmem:[#allocation2 + $0xb0] sm:$0xff] %vm2127, %v4204
      %4269 = vst.msk [vmem:[#allocation2 + $0xb8] sm:$0xff] %vm2127, %v4205
      %4270 = vst.msk [vmem:[#allocation2 + $0xc0] sm:$0xff] %vm2127, %v4206
      %4271 = vst.msk [vmem:[#allocation2 + $0xc8] sm:$0xff] %vm2127, %v4207
      %4272 = vst.msk [vmem:[#allocation2 + $0xd0] sm:$0xff] %vm2127, %v4208
      %4273 = vst.msk [vmem:[#allocation2 + $0xd8] sm:$0xff] %vm2127, %v4209
      %4274 = vst.msk [vmem:[#allocation2 + $0xe0] sm:$0xff] %vm2127, %v4210
      %4275 = vst.msk [vmem:[#allocation2 + $0xe8] sm:$0xff] %vm2127, %v4211
      %4276 = vst.msk [vmem:[#allocation2 + $0xf0] sm:$0xff] %vm2127, %v4212
      %4277 = vst.msk [vmem:[#allocation2 + $0xf8] sm:$0xff] %vm2127, %v4213
      %4278 = vst.msk [vmem:[#allocation2 + $0x100] sm:$0xff] %vm2127, %v4214
      %4279 = vst.msk [vmem:[#allocation2 + $0x108] sm:$0xff] %vm2127, %v4215
      %4280 = vst.msk [vmem:[#allocation2 + $0x110] sm:$0xff] %vm2127, %v4216
      %4281 = vst.msk [vmem:[#allocation2 + $0x118] sm:$0xff] %vm2127, %v4217
      %4282 = vst.msk [vmem:[#allocation2 + $0x120] sm:$0xff] %vm2127, %v4218
      %4283 = vst.msk [vmem:[#allocation2 + $0x128] sm:$0xff] %vm2127, %v4219
      %4284 = vst.msk [vmem:[#allocation2 + $0x130] sm:$0xff] %vm2127, %v4220
      %4285 = vst.msk [vmem:[#allocation2 + $0x138] sm:$0xff] %vm2127, %v4221
      %4286 = vst.msk [vmem:[#allocation2 + $0x140] sm:$0xff] %vm2127, %v4222
      %4287 = vst.msk [vmem:[#allocation2 + $0x148] sm:$0xff] %vm2127, %v4223
      %4288 = vst.msk [vmem:[#allocation2 + $0x150] sm:$0xff] %vm2127, %v4224
      %4289 = vst.msk [vmem:[#allocation2 + $0x158] sm:$0xff] %vm2127, %v4225
      %4290 = vst.msk [vmem:[#allocation2 + $0x160] sm:$0xff] %vm2127, %v4226
      %4291 = vst.msk [vmem:[#allocation2 + $0x168] sm:$0xff] %vm2127, %v4227
      %4292 = vst.msk [vmem:[#allocation2 + $0x170] sm:$0xff] %vm2127, %v4228
      %4293 = vst.msk [vmem:[#allocation2 + $0x178] sm:$0xff] %vm2127, %v4229
      %4294 = vst.msk [vmem:[#allocation2 + $0x180] sm:$0xff] %vm2127, %v4230
      %4295 = vst.msk [vmem:[#allocation2 + $0x188] sm:$0xff] %vm2127, %v4231
      %4296 = vst.msk [vmem:[#allocation2 + $0x190] sm:$0xff] %vm2127, %v4232
      %4297 = vst.msk [vmem:[#allocation2 + $0x198] sm:$0xff] %vm2127, %v4233
      %4298 = vst.msk [vmem:[#allocation2 + $0x1a0] sm:$0xff] %vm2127, %v4234
      %4299 = vst.msk [vmem:[#allocation2 + $0x1a8] sm:$0xff] %vm2127, %v4235
      %4300 = vst.msk [vmem:[#allocation2 + $0x1b0] sm:$0xff] %vm2127, %v4236
      %4301 = vst.msk [vmem:[#allocation2 + $0x1b8] sm:$0xff] %vm2127, %v4237
      %4302 = vst.msk [vmem:[#allocation2 + $0x1c0] sm:$0xff] %vm2127, %v4238
      %4303 = vst.msk [vmem:[#allocation2 + $0x1c8] sm:$0xff] %vm2127, %v4239
      %4304 = vst.msk [vmem:[#allocation2 + $0x1d0] sm:$0xff] %vm2127, %v4240
      %4305 = vst.msk [vmem:[#allocation2 + $0x1d8] sm:$0xff] %vm2127, %v4241
      %4306 = vst.msk [vmem:[#allocation2 + $0x1e0] sm:$0xff] %vm2127, %v4242
      %4307 = vst.msk [vmem:[#allocation2 + $0x1e8] sm:$0xff] %vm2127, %v4243
      %4308 = vst.msk [vmem:[#allocation2 + $0x1f0] sm:$0xff] %vm2127, %v4244
      %4309 = vst.msk [vmem:[#allocation2 + $0x1f8] sm:$0xff] %vm2127, %v4245
      %v4310 = vld [vmem:[#allocation2] sm:$0xff]
      %v4311 = vld [vmem:[#allocation2 + $0x8] sm:$0xff]
      %v4312 = vld [vmem:[#allocation2 + $0x10] sm:$0xff]
      %v4313 = vld [vmem:[#allocation2 + $0x18] sm:$0xff]
      %v4314 = vld [vmem:[#allocation2 + $0x20] sm:$0xff]
      %v4315 = vld [vmem:[#allocation2 + $0x28] sm:$0xff]
      %v4316 = vld [vmem:[#allocation2 + $0x30] sm:$0xff]
      %v4317 = vld [vmem:[#allocation2 + $0x38] sm:$0xff]
      %v4318 = vld [vmem:[#allocation2 + $0x40] sm:$0xff]
      %v4319 = vld [vmem:[#allocation2 + $0x48] sm:$0xff]
      %v4320 = vld [vmem:[#allocation2 + $0x50] sm:$0xff]
      %v4321 = vld [vmem:[#allocation2 + $0x58] sm:$0xff]
      %v4322 = vld [vmem:[#allocation2 + $0x60] sm:$0xff]
      %v4323 = vld [vmem:[#allocation2 + $0x68] sm:$0xff]
      %v4324 = vld [vmem:[#allocation2 + $0x70] sm:$0xff]
      %v4325 = vld [vmem:[#allocation2 + $0x78] sm:$0xff]
      %v4326 = vld [vmem:[#allocation2 + $0x80] sm:$0xff]
      %v4327 = vld [vmem:[#allocation2 + $0x88] sm:$0xff]
      %v4328 = vld [vmem:[#allocation2 + $0x90] sm:$0xff]
      %v4329 = vld [vmem:[#allocation2 + $0x98] sm:$0xff]
      %v4330 = vld [vmem:[#allocation2 + $0xa0] sm:$0xff]
      %v4331 = vld [vmem:[#allocation2 + $0xa8] sm:$0xff]
      %v4332 = vld [vmem:[#allocation2 + $0xb0] sm:$0xff]
      %v4333 = vld [vmem:[#allocation2 + $0xb8] sm:$0xff]
      %v4334 = vld [vmem:[#allocation2 + $0xc0] sm:$0xff]
      %v4335 = vld [vmem:[#allocation2 + $0xc8] sm:$0xff]
      %v4336 = vld [vmem:[#allocation2 + $0xd0] sm:$0xff]
      %v4337 = vld [vmem:[#allocation2 + $0xd8] sm:$0xff]
      %v4338 = vld [vmem:[#allocation2 + $0xe0] sm:$0xff]
      %v4339 = vld [vmem:[#allocation2 + $0xe8] sm:$0xff]
      %v4340 = vld [vmem:[#allocation2 + $0xf0] sm:$0xff]
      %v4341 = vld [vmem:[#allocation2 + $0xf8] sm:$0xff]
      %v4342 = vld [vmem:[#allocation2 + $0x100] sm:$0xff]
      %v4343 = vld [vmem:[#allocation2 + $0x108] sm:$0xff]
      %v4344 = vld [vmem:[#allocation2 + $0x110] sm:$0xff]
      %v4345 = vld [vmem:[#allocation2 + $0x118] sm:$0xff]
      %v4346 = vld [vmem:[#allocation2 + $0x120] sm:$0xff]
      %v4347 = vld [vmem:[#allocation2 + $0x128] sm:$0xff]
      %v4348 = vld [vmem:[#allocation2 + $0x130] sm:$0xff]
      %v4349 = vld [vmem:[#allocation2 + $0x138] sm:$0xff]
      %v4350 = vld [vmem:[#allocation2 + $0x140] sm:$0xff]
      %v4351 = vld [vmem:[#allocation2 + $0x148] sm:$0xff]
      %v4352 = vld [vmem:[#allocation2 + $0x150] sm:$0xff]
      %v4353 = vld [vmem:[#allocation2 + $0x158] sm:$0xff]
      %v4354 = vld [vmem:[#allocation2 + $0x160] sm:$0xff]
      %v4355 = vld [vmem:[#allocation2 + $0x168] sm:$0xff]
      %v4356 = vld [vmem:[#allocation2 + $0x170] sm:$0xff]
      %v4357 = vld [vmem:[#allocation2 + $0x178] sm:$0xff]
      %v4358 = vld [vmem:[#allocation2 + $0x180] sm:$0xff]
      %v4359 = vld [vmem:[#allocation2 + $0x188] sm:$0xff]
      %v4360 = vld [vmem:[#allocation2 + $0x190] sm:$0xff]
      %v4361 = vld [vmem:[#allocation2 + $0x198] sm:$0xff]
      %v4362 = vld [vmem:[#allocation2 + $0x1a0] sm:$0xff]
      %v4363 = vld [vmem:[#allocation2 + $0x1a8] sm:$0xff]
      %v4364 = vld [vmem:[#allocation2 + $0x1b0] sm:$0xff]
      %v4365 = vld [vmem:[#allocation2 + $0x1b8] sm:$0xff]
      %v4366 = vld [vmem:[#allocation2 + $0x1c0] sm:$0xff]
      %v4367 = vld [vmem:[#allocation2 + $0x1c8] sm:$0xff]
      %v4368 = vld [vmem:[#allocation2 + $0x1d0] sm:$0xff]
      %v4369 = vld [vmem:[#allocation2 + $0x1d8] sm:$0xff]
      %v4370 = vld [vmem:[#allocation2 + $0x1e0] sm:$0xff]
      %v4371 = vld [vmem:[#allocation2 + $0x1e8] sm:$0xff]
      %v4372 = vld [vmem:[#allocation2 + $0x1f0] sm:$0xff]
      %v4373 = vld [vmem:[#allocation2 + $0x1f8] sm:$0xff]
      %v4375 = vsel %vm2392, %v2208, 0
      %v4378 = vsel %vm2392, %v2209, 0
      %v4381 = vsel %vm2392, %v2210, 0
      %v4384 = vsel %vm2392, %v2211, 0
      %v4387 = vsel %vm2392, %v2212, 0
      %v4390 = vsel %vm2392, %v2213, 0
      %v4393 = vsel %vm2392, %v2214, 0
      %v4396 = vsel %vm2392, %v2215, 0
      %v4399 = vsel %vm2585, %v2253, 0
      %4401 = vmatprep.subr.mxu0 0.0
      %4402 = vmatpush1.msra.mxu0 0.0
      %4403 = vmatprep.subr.mxu0 0.0
      %4404 = vmatpush1.msra.mxu0 0.0
      %4405 = vmatprep.subr.mxu0 0.0
      %4406 = vmatpush1.msra.mxu0 0.0
      %4407 = vmatprep.subr.mxu0 0.0
      %4408 = vmatpush1.msra.mxu0 0.0
      %4409 = vmatprep.subr.mxu0 0.0
      %4410 = vmatpush1.msra.mxu0 0.0
      %4411 = vmatprep.subr.mxu0 0.0
      %4412 = vmatpush1.msra.mxu0 0.0
      %4413 = vmatprep.subr.mxu0 0.0
      %4414 = vmatpush1.msra.mxu0 0.0
      %4415 = vmatprep.subr.mxu0 0.0
      %4416 = vmatpush1.msra.mxu0 0.0
      %4417 = vmatprep.subr.mxu0 0.0
      %4418 = vmatpush1.msra.mxu0 0.0
      %4419 = vmatprep.subr.mxu0 0.0
      %4420 = vmatpush1.msra.mxu0 0.0
      %4421 = vmatprep.subr.mxu0 0.0
      %4422 = vmatpush1.msra.mxu0 0.0
      %4423 = vmatprep.subr.mxu0 0.0
      %4424 = vmatpush1.msra.mxu0 0.0
      %4425 = vmatprep.subr.mxu0 0.0
      %4426 = vmatpush1.msra.mxu0 0.0
      %4427 = vmatprep.subr.mxu0 0.0
      %4428 = vmatpush1.msra.mxu0 0.0
      %4429 = vmatprep.subr.mxu0 0.0
      %4430 = vmatpush1.msra.mxu0 %v4399
      %4431 = vmatprep.subr.mxu0 0.0
      %4432 = vmatpush1.msra.mxu0 %v2252
      %4433 = vmatprep.subr.mxu0 0.0
      %4434 = vmatpush2.msra.mxu0 0.0
      %4435 = vmatprep.subr.mxu0 0.0
      %4436 = vmatpush2.msra.mxu0 0.0
      %4437 = vmatprep.subr.mxu0 0.0
      %4438 = vmatpush2.msra.mxu0 0.0
      %4439 = vmatprep.subr.mxu0 0.0
      %4440 = vmatpush2.msra.mxu0 0.0
      %4441 = vmatprep.subr.mxu0 0.0
      %4442 = vmatpush2.msra.mxu0 0.0
      %4443 = vmatprep.subr.mxu0 0.0
      %4444 = vmatpush2.msra.mxu0 0.0
      %4445 = vmatprep.subr.mxu0 0.0
      %4446 = vmatpush2.msra.mxu0 0.0
      %4447 = vmatprep.subr.mxu0 0.0
      %4448 = vmatpush2.msra.mxu0 0.0
      %4449 = vmatprep.subr.mxu0 0.0
      %4450 = vmatpush2.msra.mxu0 0.0
      %4451 = vmatprep.subr.mxu0 0.0
      %4452 = vmatpush2.msra.mxu0 0.0
      %4453 = vmatprep.subr.mxu0 0.0
      %4454 = vmatpush2.msra.mxu0 0.0
      %4455 = vmatprep.subr.mxu0 0.0
      %4456 = vmatpush2.msra.mxu0 0.0
      %4457 = vmatprep.subr.mxu0 0.0
      %4458 = vmatpush2.msra.mxu0 0.0
      %4459 = vmatprep.subr.mxu0 0.0
      %4460 = vmatpush2.msra.mxu0 0.0
      %4461 = vmatprep.subr.mxu0 0.0
      %4462 = vmatpush2.msra.mxu0 0.0
      %4463 = vmatprep.subr.mxu0 0.0
      %4464 = vmatpush2.msra.mxu0 0.0
      %4465 = vmatprep.mubr.f32.mxu0 0.0
      %4466 = vmatmul.mubr.f32.gmra.mxu0 %v2418
      %v4467 = vpop.f32.mrf.mxu0
      %v4468 = vadd.f32 0.0, %v4467
      %v4469 = vpop.f32.mrf.mxu0
      %4470 = vmatprep.mubr.f32.mxu0 0.0
      %4471 = vmatmul.mubr.f32.gmra.mxu0 %v2421
      %v4472 = vpop.f32.mrf.mxu0
      %v4473 = vadd.f32 0.0, %v4472
      %v4474 = vpop.f32.mrf.mxu0
      %4475 = vmatprep.mubr.f32.mxu0 0.0
      %4476 = vmatmul.mubr.f32.gmra.mxu0 %v2424
      %v4477 = vpop.f32.mrf.mxu0
      %v4478 = vadd.f32 0.0, %v4477
      %v4479 = vpop.f32.mrf.mxu0
      %4480 = vmatprep.mubr.f32.mxu0 0.0
      %4481 = vmatmul.mubr.f32.gmra.mxu0 %v2427
      %v4482 = vpop.f32.mrf.mxu0
      %v4483 = vadd.f32 0.0, %v4482
      %v4484 = vpop.f32.mrf.mxu0
      %4485 = vmatprep.mubr.f32.mxu0 0.0
      %4486 = vmatmul.mubr.f32.gmra.mxu0 %v2430
      %v4487 = vpop.f32.mrf.mxu0
      %v4488 = vadd.f32 0.0, %v4487
      %v4489 = vpop.f32.mrf.mxu0
      %4490 = vmatprep.mubr.f32.mxu0 0.0
      %4491 = vmatmul.mubr.f32.gmra.mxu0 %v2433
      %v4492 = vpop.f32.mrf.mxu0
      %v4493 = vadd.f32 0.0, %v4492
      %v4494 = vpop.f32.mrf.mxu0
      %4495 = vmatprep.mubr.f32.mxu0 0.0
      %4496 = vmatmul.mubr.f32.gmra.mxu0 %v2436
      %v4497 = vpop.f32.mrf.mxu0
      %v4498 = vadd.f32 0.0, %v4497
      %v4499 = vpop.f32.mrf.mxu0
      %4500 = vmatprep.mubr.f32.mxu0 0.0
      %4501 = vmatmul.mubr.f32.gmra.mxu0 %v2439
      %v4502 = vpop.f32.mrf.mxu0
      %v4503 = vadd.f32 0.0, %v4502
      %v4504 = vpop.f32.mrf.mxu0
      %4505 = vmatprep.mubr.f32.mxu0 0.0
      %4506 = vmatmul.mubr.f32.gmra.mxu0 %v2442
      %v4507 = vpop.f32.mrf.mxu0
      %v4508 = vadd.f32 0.0, %v4507
      %v4509 = vpop.f32.mrf.mxu0
      %4510 = vmatprep.mubr.f32.mxu0 0.0
      %4511 = vmatmul.mubr.f32.gmra.mxu0 %v2445
      %v4512 = vpop.f32.mrf.mxu0
      %v4513 = vadd.f32 0.0, %v4512
      %v4514 = vpop.f32.mrf.mxu0
      %4515 = vmatprep.mubr.f32.mxu0 0.0
      %4516 = vmatmul.mubr.f32.gmra.mxu0 %v2448
      %v4517 = vpop.f32.mrf.mxu0
      %v4518 = vadd.f32 0.0, %v4517
      %v4519 = vpop.f32.mrf.mxu0
      %4520 = vmatprep.mubr.f32.mxu0 0.0
      %4521 = vmatmul.mubr.f32.gmra.mxu0 %v2451
      %v4522 = vpop.f32.mrf.mxu0
      %v4523 = vadd.f32 0.0, %v4522
      %v4524 = vpop.f32.mrf.mxu0
      %4525 = vmatprep.mubr.f32.mxu0 0.0
      %4526 = vmatmul.mubr.f32.gmra.mxu0 %v2454
      %v4527 = vpop.f32.mrf.mxu0
      %v4528 = vadd.f32 0.0, %v4527
      %v4529 = vpop.f32.mrf.mxu0
      %4530 = vmatprep.mubr.f32.mxu0 0.0
      %4531 = vmatmul.mubr.f32.gmra.mxu0 %v2457
      %v4532 = vpop.f32.mrf.mxu0
      %v4533 = vadd.f32 0.0, %v4532
      %v4534 = vpop.f32.mrf.mxu0
      %4535 = vmatprep.mubr.f32.mxu0 0.0
      %4536 = vmatmul.mubr.f32.gmra.mxu0 %v2460
      %v4537 = vpop.f32.mrf.mxu0
      %v4538 = vadd.f32 0.0, %v4537
      %v4539 = vpop.f32.mrf.mxu0
      %4540 = vmatprep.mubr.f32.mxu0 0.0
      %4541 = vmatmul.mubr.f32.gmra.mxu0 %v2463
      %v4542 = vpop.f32.mrf.mxu0
      %v4543 = vadd.f32 0.0, %v4542
      %v4544 = vpop.f32.mrf.mxu0
      %4545 = vmatprep.mubr.f32.mxu0 0.0
      %4546 = vmatmul.mubr.f32.gmra.mxu0 %v2466
      %v4547 = vpop.f32.mrf.mxu0
      %v4548 = vadd.f32 0.0, %v4547
      %v4549 = vpop.f32.mrf.mxu0
      %4550 = vmatprep.mubr.f32.mxu0 0.0
      %4551 = vmatmul.mubr.f32.gmra.mxu0 %v2469
      %v4552 = vpop.f32.mrf.mxu0
      %v4553 = vadd.f32 0.0, %v4552
      %v4554 = vpop.f32.mrf.mxu0
      %4555 = vmatprep.mubr.f32.mxu0 0.0
      %4556 = vmatmul.mubr.f32.gmra.mxu0 %v2472
      %v4557 = vpop.f32.mrf.mxu0
      %v4558 = vadd.f32 0.0, %v4557
      %v4559 = vpop.f32.mrf.mxu0
      %4560 = vmatprep.mubr.f32.mxu0 0.0
      %4561 = vmatmul.mubr.f32.gmra.mxu0 %v2475
      %v4562 = vpop.f32.mrf.mxu0
      %v4563 = vadd.f32 0.0, %v4562
      %v4564 = vpop.f32.mrf.mxu0
      %4565 = vmatprep.mubr.f32.mxu0 0.0
      %4566 = vmatmul.mubr.f32.gmra.mxu0 %v2478
      %v4567 = vpop.f32.mrf.mxu0
      %v4568 = vadd.f32 0.0, %v4567
      %v4569 = vpop.f32.mrf.mxu0
      %4570 = vmatprep.mubr.f32.mxu0 0.0
      %4571 = vmatmul.mubr.f32.gmra.mxu0 %v2481
      %v4572 = vpop.f32.mrf.mxu0
      %v4573 = vadd.f32 0.0, %v4572
      %v4574 = vpop.f32.mrf.mxu0
      %4575 = vmatprep.mubr.f32.mxu0 0.0
      %4576 = vmatmul.mubr.f32.gmra.mxu0 %v2484
      %v4577 = vpop.f32.mrf.mxu0
      %v4578 = vadd.f32 0.0, %v4577
      %v4579 = vpop.f32.mrf.mxu0
      %4580 = vmatprep.mubr.f32.mxu0 0.0
      %4581 = vmatmul.mubr.f32.gmra.mxu0 %v2487
      %v4582 = vpop.f32.mrf.mxu0
      %v4583 = vadd.f32 0.0, %v4582
      %v4584 = vpop.f32.mrf.mxu0
      %4585 = vmatprep.mubr.f32.mxu0 0.0
      %4586 = vmatmul.mubr.f32.gmra.mxu0 %v2490
      %v4587 = vpop.f32.mrf.mxu0
      %v4588 = vadd.f32 0.0, %v4587
      %v4589 = vpop.f32.mrf.mxu0
      %4590 = vmatprep.mubr.f32.mxu0 0.0
      %4591 = vmatmul.mubr.f32.gmra.mxu0 %v2493
      %v4592 = vpop.f32.mrf.mxu0
      %v4593 = vadd.f32 0.0, %v4592
      %v4594 = vpop.f32.mrf.mxu0
      %4595 = vmatprep.mubr.f32.mxu0 0.0
      %4596 = vmatmul.mubr.f32.gmra.mxu0 %v2496
      %v4597 = vpop.f32.mrf.mxu0
      %v4598 = vadd.f32 0.0, %v4597
      %v4599 = vpop.f32.mrf.mxu0
      %4600 = vmatprep.mubr.f32.mxu0 0.0
      %4601 = vmatmul.mubr.f32.gmra.mxu0 %v2499
      %v4602 = vpop.f32.mrf.mxu0
      %v4603 = vadd.f32 0.0, %v4602
      %v4604 = vpop.f32.mrf.mxu0
      %4605 = vmatprep.mubr.f32.mxu0 0.0
      %4606 = vmatmul.mubr.f32.gmra.mxu0 %v2502
      %v4607 = vpop.f32.mrf.mxu0
      %v4608 = vadd.f32 0.0, %v4607
      %v4609 = vpop.f32.mrf.mxu0
      %4610 = vmatprep.mubr.f32.mxu0 0.0
      %4611 = vmatmul.mubr.f32.gmra.mxu0 %v2505
      %v4612 = vpop.f32.mrf.mxu0
      %v4613 = vadd.f32 0.0, %v4612
      %v4614 = vpop.f32.mrf.mxu0
      %4615 = vmatprep.mubr.f32.mxu0 0.0
      %4616 = vmatmul.mubr.f32.gmra.mxu0 %v2508
      %v4617 = vpop.f32.mrf.mxu0
      %v4618 = vadd.f32 0.0, %v4617
      %v4619 = vpop.f32.mrf.mxu0
      %4620 = vmatprep.mubr.f32.mxu0 0.0
      %4621 = vmatmul.mubr.f32.gmra.mxu0 %v2511
      %v4622 = vpop.f32.mrf.mxu0
      %v4623 = vadd.f32 0.0, %v4622
      %v4624 = vpop.f32.mrf.mxu0
      %4625 = vmatprep.mubr.f32.mxu0 0.0
      %4626 = vmatmul.mubr.f32.gmra.mxu0 %v2514
      %v4627 = vpop.f32.mrf.mxu0
      %v4628 = vadd.f32 0.0, %v4627
      %v4629 = vpop.f32.mrf.mxu0
      %4630 = vmatprep.mubr.f32.mxu0 0.0
      %4631 = vmatmul.mubr.f32.gmra.mxu0 %v2517
      %v4632 = vpop.f32.mrf.mxu0
      %v4633 = vadd.f32 0.0, %v4632
      %v4634 = vpop.f32.mrf.mxu0
      %4635 = vmatprep.mubr.f32.mxu0 0.0
      %4636 = vmatmul.mubr.f32.gmra.mxu0 %v2520
      %v4637 = vpop.f32.mrf.mxu0
      %v4638 = vadd.f32 0.0, %v4637
      %v4639 = vpop.f32.mrf.mxu0
      %4640 = vmatprep.mubr.f32.mxu0 0.0
      %4641 = vmatmul.mubr.f32.gmra.mxu0 %v2523
      %v4642 = vpop.f32.mrf.mxu0
      %v4643 = vadd.f32 0.0, %v4642
      %v4644 = vpop.f32.mrf.mxu0
      %4645 = vmatprep.mubr.f32.mxu0 0.0
      %4646 = vmatmul.mubr.f32.gmra.mxu0 %v2526
      %v4647 = vpop.f32.mrf.mxu0
      %v4648 = vadd.f32 0.0, %v4647
      %v4649 = vpop.f32.mrf.mxu0
      %4650 = vmatprep.mubr.f32.mxu0 0.0
      %4651 = vmatmul.mubr.f32.gmra.mxu0 %v2529
      %v4652 = vpop.f32.mrf.mxu0
      %v4653 = vadd.f32 0.0, %v4652
      %v4654 = vpop.f32.mrf.mxu0
      %4655 = vmatprep.mubr.f32.mxu0 0.0
      %4656 = vmatmul.mubr.f32.gmra.mxu0 %v2532
      %v4657 = vpop.f32.mrf.mxu0
      %v4658 = vadd.f32 0.0, %v4657
      %v4659 = vpop.f32.mrf.mxu0
      %4660 = vmatprep.mubr.f32.mxu0 0.0
      %4661 = vmatmul.mubr.f32.gmra.mxu0 %v2535
      %v4662 = vpop.f32.mrf.mxu0
      %v4663 = vadd.f32 0.0, %v4662
      %v4664 = vpop.f32.mrf.mxu0
      %4665 = vmatprep.mubr.f32.mxu0 0.0
      %4666 = vmatmul.mubr.f32.gmra.mxu0 %v2538
      %v4667 = vpop.f32.mrf.mxu0
      %v4668 = vadd.f32 0.0, %v4667
      %v4669 = vpop.f32.mrf.mxu0
      %4670 = vmatprep.mubr.f32.mxu0 0.0
      %4671 = vmatmul.mubr.f32.gmra.mxu0 %v2541
      %v4672 = vpop.f32.mrf.mxu0
      %v4673 = vadd.f32 0.0, %v4672
      %v4674 = vpop.f32.mrf.mxu0
      %4675 = vmatprep.mubr.f32.mxu0 0.0
      %4676 = vmatmul.mubr.f32.gmra.mxu0 %v2544
      %v4677 = vpop.f32.mrf.mxu0
      %v4678 = vadd.f32 0.0, %v4677
      %v4679 = vpop.f32.mrf.mxu0
      %4680 = vmatprep.mubr.f32.mxu0 0.0
      %4681 = vmatmul.mubr.f32.gmra.mxu0 %v2547
      %v4682 = vpop.f32.mrf.mxu0
      %v4683 = vadd.f32 0.0, %v4682
      %v4684 = vpop.f32.mrf.mxu0
      %4685 = vmatprep.mubr.f32.mxu0 0.0
      %4686 = vmatmul.mubr.f32.gmra.mxu0 %v2550
      %v4687 = vpop.f32.mrf.mxu0
      %v4688 = vadd.f32 0.0, %v4687
      %v4689 = vpop.f32.mrf.mxu0
      %4690 = vmatprep.mubr.f32.mxu0 0.0
      %4691 = vmatmul.mubr.f32.gmra.mxu0 %v2553
      %v4692 = vpop.f32.mrf.mxu0
      %v4693 = vadd.f32 0.0, %v4692
      %v4694 = vpop.f32.mrf.mxu0
      %4695 = vmatprep.mubr.f32.mxu0 0.0
      %4696 = vmatmul.mubr.f32.gmra.mxu0 %v2556
      %v4697 = vpop.f32.mrf.mxu0
      %v4698 = vadd.f32 0.0, %v4697
      %v4699 = vpop.f32.mrf.mxu0
      %4700 = vmatprep.mubr.f32.mxu0 0.0
      %4701 = vmatmul.mubr.f32.gmra.mxu0 %v2559
      %v4702 = vpop.f32.mrf.mxu0
      %v4703 = vadd.f32 0.0, %v4702
      %v4704 = vpop.f32.mrf.mxu0
      %4705 = vmatprep.mubr.f32.mxu0 0.0
      %4706 = vmatmul.mubr.f32.gmra.mxu0 %v2562
      %v4707 = vpop.f32.mrf.mxu0
      %v4708 = vadd.f32 0.0, %v4707
      %v4709 = vpop.f32.mrf.mxu0
      %4710 = vmatprep.mubr.f32.mxu0 0.0
      %4711 = vmatmul.mubr.f32.gmra.mxu0 %v2565
      %v4712 = vpop.f32.mrf.mxu0
      %v4713 = vadd.f32 0.0, %v4712
      %v4714 = vpop.f32.mrf.mxu0
      %4715 = vmatprep.mubr.f32.mxu0 0.0
      %4716 = vmatmul.mubr.f32.gmra.mxu0 %v2568
      %v4717 = vpop.f32.mrf.mxu0
      %v4718 = vadd.f32 0.0, %v4717
      %v4719 = vpop.f32.mrf.mxu0
      %4720 = vmatprep.mubr.f32.mxu0 0.0
      %4721 = vmatmul.mubr.f32.gmra.mxu0 %v2571
      %v4722 = vpop.f32.mrf.mxu0
      %v4723 = vadd.f32 0.0, %v4722
      %v4724 = vpop.f32.mrf.mxu0
      %4725 = vmatprep.mubr.f32.mxu0 0.0
      %4726 = vmatmul.mubr.f32.gmra.mxu0 %v2574
      %v4727 = vpop.f32.mrf.mxu0
      %v4728 = vadd.f32 0.0, %v4727
      %v4729 = vpop.f32.mrf.mxu0
      %4730 = vmatprep.mubr.f32.mxu0 0.0
      %4731 = vmatmul.mubr.f32.gmra.mxu0 %v2577
      %v4732 = vpop.f32.mrf.mxu0
      %v4733 = vadd.f32 0.0, %v4732
      %v4734 = vpop.f32.mrf.mxu0
      %4735 = vmatprep.mubr.f32.mxu0 0.0
      %4736 = vmatmul.mubr.f32.gmra.mxu0 %v2580
      %v4737 = vpop.f32.mrf.mxu0
      %v4738 = vadd.f32 0.0, %v4737
      %v4739 = vpop.f32.mrf.mxu0
      %4740 = vmatprep.mubr.f32.mxu0 0.0
      %4741 = vmatmul.mubr.f32.gmra.mxu0 %v2583
      %v4742 = vpop.f32.mrf.mxu0
      %v4743 = vadd.f32 0.0, %v4742
      %v4744 = vpop.f32.mrf.mxu0
      %4745 = vmatprep.mubr.f32.mxu0 0.0
      %4746 = vmatmul.mubr.f32.gmra.mxu0 %v4375
      %v4747 = vpop.f32.mrf.mxu0
      %v4748 = vadd.f32 0.0, %v4747
      %v4749 = vpop.f32.mrf.mxu0
      %4750 = vmatprep.mubr.f32.mxu0 0.0
      %4751 = vmatmul.mubr.f32.gmra.mxu0 %v4378
      %v4752 = vpop.f32.mrf.mxu0
      %v4753 = vadd.f32 0.0, %v4752
      %v4754 = vpop.f32.mrf.mxu0
      %4755 = vmatprep.mubr.f32.mxu0 0.0
      %4756 = vmatmul.mubr.f32.gmra.mxu0 %v4381
      %v4757 = vpop.f32.mrf.mxu0
      %v4758 = vadd.f32 0.0, %v4757
      %v4759 = vpop.f32.mrf.mxu0
      %4760 = vmatprep.mubr.f32.mxu0 0.0
      %4761 = vmatmul.mubr.f32.gmra.mxu0 %v4384
      %v4762 = vpop.f32.mrf.mxu0
      %v4763 = vadd.f32 0.0, %v4762
      %v4764 = vpop.f32.mrf.mxu0
      %4765 = vmatprep.mubr.f32.mxu0 0.0
      %4766 = vmatmul.mubr.f32.gmra.mxu0 %v4387
      %v4767 = vpop.f32.mrf.mxu0
      %v4768 = vadd.f32 0.0, %v4767
      %v4769 = vpop.f32.mrf.mxu0
      %4770 = vmatprep.mubr.f32.mxu0 0.0
      %4771 = vmatmul.mubr.f32.gmra.mxu0 %v4390
      %v4772 = vpop.f32.mrf.mxu0
      %v4773 = vadd.f32 0.0, %v4772
      %v4774 = vpop.f32.mrf.mxu0
      %4775 = vmatprep.mubr.f32.mxu0 0.0
      %4776 = vmatmul.mubr.f32.gmra.mxu0 %v4393
      %v4777 = vpop.f32.mrf.mxu0
      %v4778 = vadd.f32 0.0, %v4777
      %v4779 = vpop.f32.mrf.mxu0
      %4780 = vmatprep.mubr.f32.mxu0 0.0
      %4781 = vmatmul.mubr.f32.gmra.mxu0 %v4396
      %v4782 = vpop.f32.mrf.mxu0
      %v4783 = vadd.f32 0.0, %v4782
      %v4784 = vpop.f32.mrf.mxu0
      %4785 = vdwg.mxu0
      %v4786 = vadd.f32 %v4310, %v4468
      %v4787 = vadd.f32 %v4311, %v4473
      %v4788 = vadd.f32 %v4312, %v4478
      %v4789 = vadd.f32 %v4313, %v4483
      %v4790 = vadd.f32 %v4314, %v4488
      %v4791 = vadd.f32 %v4315, %v4493
      %v4792 = vadd.f32 %v4316, %v4498
      %v4793 = vadd.f32 %v4317, %v4503
      %v4794 = vadd.f32 %v4318, %v4508
      %v4795 = vadd.f32 %v4319, %v4513
      %v4796 = vadd.f32 %v4320, %v4518
      %v4797 = vadd.f32 %v4321, %v4523
      %v4798 = vadd.f32 %v4322, %v4528
      %v4799 = vadd.f32 %v4323, %v4533
      %v4800 = vadd.f32 %v4324, %v4538
      %v4801 = vadd.f32 %v4325, %v4543
      %v4802 = vadd.f32 %v4326, %v4548
      %v4803 = vadd.f32 %v4327, %v4553
      %v4804 = vadd.f32 %v4328, %v4558
      %v4805 = vadd.f32 %v4329, %v4563
      %v4806 = vadd.f32 %v4330, %v4568
      %v4807 = vadd.f32 %v4331, %v4573
      %v4808 = vadd.f32 %v4332, %v4578
      %v4809 = vadd.f32 %v4333, %v4583
      %v4810 = vadd.f32 %v4334, %v4588
      %v4811 = vadd.f32 %v4335, %v4593
      %v4812 = vadd.f32 %v4336, %v4598
      %v4813 = vadd.f32 %v4337, %v4603
      %v4814 = vadd.f32 %v4338, %v4608
      %v4815 = vadd.f32 %v4339, %v4613
      %v4816 = vadd.f32 %v4340, %v4618
      %v4817 = vadd.f32 %v4341, %v4623
      %v4818 = vadd.f32 %v4342, %v4628
      %v4819 = vadd.f32 %v4343, %v4633
      %v4820 = vadd.f32 %v4344, %v4638
      %v4821 = vadd.f32 %v4345, %v4643
      %v4822 = vadd.f32 %v4346, %v4648
      %v4823 = vadd.f32 %v4347, %v4653
      %v4824 = vadd.f32 %v4348, %v4658
      %v4825 = vadd.f32 %v4349, %v4663
      %v4826 = vadd.f32 %v4350, %v4668
      %v4827 = vadd.f32 %v4351, %v4673
      %v4828 = vadd.f32 %v4352, %v4678
      %v4829 = vadd.f32 %v4353, %v4683
      %v4830 = vadd.f32 %v4354, %v4688
      %v4831 = vadd.f32 %v4355, %v4693
      %v4832 = vadd.f32 %v4356, %v4698
      %v4833 = vadd.f32 %v4357, %v4703
      %v4834 = vadd.f32 %v4358, %v4708
      %v4835 = vadd.f32 %v4359, %v4713
      %v4836 = vadd.f32 %v4360, %v4718
      %v4837 = vadd.f32 %v4361, %v4723
      %v4838 = vadd.f32 %v4362, %v4728
      %v4839 = vadd.f32 %v4363, %v4733
      %v4840 = vadd.f32 %v4364, %v4738
      %v4841 = vadd.f32 %v4365, %v4743
      %v4842 = vadd.f32 %v4366, %v4748
      %v4843 = vadd.f32 %v4367, %v4753
      %v4844 = vadd.f32 %v4368, %v4758
      %v4845 = vadd.f32 %v4369, %v4763
      %v4846 = vadd.f32 %v4370, %v4768
      %v4847 = vadd.f32 %v4371, %v4773
      %v4848 = vadd.f32 %v4372, %v4778
      %v4849 = vadd.f32 %v4373, %v4783
      %4850 = vst.msk [vmem:[#allocation2] sm:$0xff] %vm2127, %v4786
      %4851 = vst.msk [vmem:[#allocation2 + $0x8] sm:$0xff] %vm2127, %v4787
      %4852 = vst.msk [vmem:[#allocation2 + $0x10] sm:$0xff] %vm2127, %v4788
      %4853 = vst.msk [vmem:[#allocation2 + $0x18] sm:$0xff] %vm2127, %v4789
      %4854 = vst.msk [vmem:[#allocation2 + $0x20] sm:$0xff] %vm2127, %v4790
      %4855 = vst.msk [vmem:[#allocation2 + $0x28] sm:$0xff] %vm2127, %v4791
      %4856 = vst.msk [vmem:[#allocation2 + $0x30] sm:$0xff] %vm2127, %v4792
      %4857 = vst.msk [vmem:[#allocation2 + $0x38] sm:$0xff] %vm2127, %v4793
      %4858 = vst.msk [vmem:[#allocation2 + $0x40] sm:$0xff] %vm2127, %v4794
      %4859 = vst.msk [vmem:[#allocation2 + $0x48] sm:$0xff] %vm2127, %v4795
      %4860 = vst.msk [vmem:[#allocation2 + $0x50] sm:$0xff] %vm2127, %v4796
      %4861 = vst.msk [vmem:[#allocation2 + $0x58] sm:$0xff] %vm2127, %v4797
      %4862 = vst.msk [vmem:[#allocation2 + $0x60] sm:$0xff] %vm2127, %v4798
      %4863 = vst.msk [vmem:[#allocation2 + $0x68] sm:$0xff] %vm2127, %v4799
      %4864 = vst.msk [vmem:[#allocation2 + $0x70] sm:$0xff] %vm2127, %v4800
      %4865 = vst.msk [vmem:[#allocation2 + $0x78] sm:$0xff] %vm2127, %v4801
      %4866 = vst.msk [vmem:[#allocation2 + $0x80] sm:$0xff] %vm2127, %v4802
      %4867 = vst.msk [vmem:[#allocation2 + $0x88] sm:$0xff] %vm2127, %v4803
      %4868 = vst.msk [vmem:[#allocation2 + $0x90] sm:$0xff] %vm2127, %v4804
      %4869 = vst.msk [vmem:[#allocation2 + $0x98] sm:$0xff] %vm2127, %v4805
      %4870 = vst.msk [vmem:[#allocation2 + $0xa0] sm:$0xff] %vm2127, %v4806
      %4871 = vst.msk [vmem:[#allocation2 + $0xa8] sm:$0xff] %vm2127, %v4807
      %4872 = vst.msk [vmem:[#allocation2 + $0xb0] sm:$0xff] %vm2127, %v4808
      %4873 = vst.msk [vmem:[#allocation2 + $0xb8] sm:$0xff] %vm2127, %v4809
      %4874 = vst.msk [vmem:[#allocation2 + $0xc0] sm:$0xff] %vm2127, %v4810
      %4875 = vst.msk [vmem:[#allocation2 + $0xc8] sm:$0xff] %vm2127, %v4811
      %4876 = vst.msk [vmem:[#allocation2 + $0xd0] sm:$0xff] %vm2127, %v4812
      %4877 = vst.msk [vmem:[#allocation2 + $0xd8] sm:$0xff] %vm2127, %v4813
      %4878 = vst.msk [vmem:[#allocation2 + $0xe0] sm:$0xff] %vm2127, %v4814
      %4879 = vst.msk [vmem:[#allocation2 + $0xe8] sm:$0xff] %vm2127, %v4815
      %4880 = vst.msk [vmem:[#allocation2 + $0xf0] sm:$0xff] %vm2127, %v4816
      %4881 = vst.msk [vmem:[#allocation2 + $0xf8] sm:$0xff] %vm2127, %v4817
      %4882 = vst.msk [vmem:[#allocation2 + $0x100] sm:$0xff] %vm2127, %v4818
      %4883 = vst.msk [vmem:[#allocation2 + $0x108] sm:$0xff] %vm2127, %v4819
      %4884 = vst.msk [vmem:[#allocation2 + $0x110] sm:$0xff] %vm2127, %v4820
      %4885 = vst.msk [vmem:[#allocation2 + $0x118] sm:$0xff] %vm2127, %v4821
      %4886 = vst.msk [vmem:[#allocation2 + $0x120] sm:$0xff] %vm2127, %v4822
      %4887 = vst.msk [vmem:[#allocation2 + $0x128] sm:$0xff] %vm2127, %v4823
      %4888 = vst.msk [vmem:[#allocation2 + $0x130] sm:$0xff] %vm2127, %v4824
      %4889 = vst.msk [vmem:[#allocation2 + $0x138] sm:$0xff] %vm2127, %v4825
      %4890 = vst.msk [vmem:[#allocation2 + $0x140] sm:$0xff] %vm2127, %v4826
      %4891 = vst.msk [vmem:[#allocation2 + $0x148] sm:$0xff] %vm2127, %v4827
      %4892 = vst.msk [vmem:[#allocation2 + $0x150] sm:$0xff] %vm2127, %v4828
      %4893 = vst.msk [vmem:[#allocation2 + $0x158] sm:$0xff] %vm2127, %v4829
      %4894 = vst.msk [vmem:[#allocation2 + $0x160] sm:$0xff] %vm2127, %v4830
      %4895 = vst.msk [vmem:[#allocation2 + $0x168] sm:$0xff] %vm2127, %v4831
      %4896 = vst.msk [vmem:[#allocation2 + $0x170] sm:$0xff] %vm2127, %v4832
      %4897 = vst.msk [vmem:[#allocation2 + $0x178] sm:$0xff] %vm2127, %v4833
      %4898 = vst.msk [vmem:[#allocation2 + $0x180] sm:$0xff] %vm2127, %v4834
      %4899 = vst.msk [vmem:[#allocation2 + $0x188] sm:$0xff] %vm2127, %v4835
      %4900 = vst.msk [vmem:[#allocation2 + $0x190] sm:$0xff] %vm2127, %v4836
      %4901 = vst.msk [vmem:[#allocation2 + $0x198] sm:$0xff] %vm2127, %v4837
      %4902 = vst.msk [vmem:[#allocation2 + $0x1a0] sm:$0xff] %vm2127, %v4838
      %4903 = vst.msk [vmem:[#allocation2 + $0x1a8] sm:$0xff] %vm2127, %v4839
      %4904 = vst.msk [vmem:[#allocation2 + $0x1b0] sm:$0xff] %vm2127, %v4840
      %4905 = vst.msk [vmem:[#allocation2 + $0x1b8] sm:$0xff] %vm2127, %v4841
      %4906 = vst.msk [vmem:[#allocation2 + $0x1c0] sm:$0xff] %vm2127, %v4842
      %4907 = vst.msk [vmem:[#allocation2 + $0x1c8] sm:$0xff] %vm2127, %v4843
      %4908 = vst.msk [vmem:[#allocation2 + $0x1d0] sm:$0xff] %vm2127, %v4844
      %4909 = vst.msk [vmem:[#allocation2 + $0x1d8] sm:$0xff] %vm2127, %v4845
      %4910 = vst.msk [vmem:[#allocation2 + $0x1e0] sm:$0xff] %vm2127, %v4846
      %4911 = vst.msk [vmem:[#allocation2 + $0x1e8] sm:$0xff] %vm2127, %v4847
      %4912 = vst.msk [vmem:[#allocation2 + $0x1f0] sm:$0xff] %vm2127, %v4848
      %4913 = vst.msk [vmem:[#allocation2 + $0x1f8] sm:$0xff] %vm2127, %v4849
      %v4914 = vld [vmem:[#allocation2] sm:$0xff]
      %v4915 = vld [vmem:[#allocation2 + $0x8] sm:$0xff]
      %v4916 = vld [vmem:[#allocation2 + $0x10] sm:$0xff]
      %v4917 = vld [vmem:[#allocation2 + $0x18] sm:$0xff]
      %v4918 = vld [vmem:[#allocation2 + $0x20] sm:$0xff]
      %v4919 = vld [vmem:[#allocation2 + $0x28] sm:$0xff]
      %v4920 = vld [vmem:[#allocation2 + $0x30] sm:$0xff]
      %v4921 = vld [vmem:[#allocation2 + $0x38] sm:$0xff]
      %v4922 = vld [vmem:[#allocation2 + $0x40] sm:$0xff]
      %v4923 = vld [vmem:[#allocation2 + $0x48] sm:$0xff]
      %v4924 = vld [vmem:[#allocation2 + $0x50] sm:$0xff]
      %v4925 = vld [vmem:[#allocation2 + $0x58] sm:$0xff]
      %v4926 = vld [vmem:[#allocation2 + $0x60] sm:$0xff]
      %v4927 = vld [vmem:[#allocation2 + $0x68] sm:$0xff]
      %v4928 = vld [vmem:[#allocation2 + $0x70] sm:$0xff]
      %v4929 = vld [vmem:[#allocation2 + $0x78] sm:$0xff]
      %v4930 = vld [vmem:[#allocation2 + $0x80] sm:$0xff]
      %v4931 = vld [vmem:[#allocation2 + $0x88] sm:$0xff]
      %v4932 = vld [vmem:[#allocation2 + $0x90] sm:$0xff]
      %v4933 = vld [vmem:[#allocation2 + $0x98] sm:$0xff]
      %v4934 = vld [vmem:[#allocation2 + $0xa0] sm:$0xff]
      %v4935 = vld [vmem:[#allocation2 + $0xa8] sm:$0xff]
      %v4936 = vld [vmem:[#allocation2 + $0xb0] sm:$0xff]
      %v4937 = vld [vmem:[#allocation2 + $0xb8] sm:$0xff]
      %v4938 = vld [vmem:[#allocation2 + $0xc0] sm:$0xff]
      %v4939 = vld [vmem:[#allocation2 + $0xc8] sm:$0xff]
      %v4940 = vld [vmem:[#allocation2 + $0xd0] sm:$0xff]
      %v4941 = vld [vmem:[#allocation2 + $0xd8] sm:$0xff]
      %v4942 = vld [vmem:[#allocation2 + $0xe0] sm:$0xff]
      %v4943 = vld [vmem:[#allocation2 + $0xe8] sm:$0xff]
      %v4944 = vld [vmem:[#allocation2 + $0xf0] sm:$0xff]
      %v4945 = vld [vmem:[#allocation2 + $0xf8] sm:$0xff]
      %v4946 = vld [vmem:[#allocation2 + $0x100] sm:$0xff]
      %v4947 = vld [vmem:[#allocation2 + $0x108] sm:$0xff]
      %v4948 = vld [vmem:[#allocation2 + $0x110] sm:$0xff]
      %v4949 = vld [vmem:[#allocation2 + $0x118] sm:$0xff]
      %v4950 = vld [vmem:[#allocation2 + $0x120] sm:$0xff]
      %v4951 = vld [vmem:[#allocation2 + $0x128] sm:$0xff]
      %v4952 = vld [vmem:[#allocation2 + $0x130] sm:$0xff]
      %v4953 = vld [vmem:[#allocation2 + $0x138] sm:$0xff]
      %v4954 = vld [vmem:[#allocation2 + $0x140] sm:$0xff]
      %v4955 = vld [vmem:[#allocation2 + $0x148] sm:$0xff]
      %v4956 = vld [vmem:[#allocation2 + $0x150] sm:$0xff]
      %v4957 = vld [vmem:[#allocation2 + $0x158] sm:$0xff]
      %v4958 = vld [vmem:[#allocation2 + $0x160] sm:$0xff]
      %v4959 = vld [vmem:[#allocation2 + $0x168] sm:$0xff]
      %v4960 = vld [vmem:[#allocation2 + $0x170] sm:$0xff]
      %v4961 = vld [vmem:[#allocation2 + $0x178] sm:$0xff]
      %v4962 = vld [vmem:[#allocation2 + $0x180] sm:$0xff]
      %v4963 = vld [vmem:[#allocation2 + $0x188] sm:$0xff]
      %v4964 = vld [vmem:[#allocation2 + $0x190] sm:$0xff]
      %v4965 = vld [vmem:[#allocation2 + $0x198] sm:$0xff]
      %v4966 = vld [vmem:[#allocation2 + $0x1a0] sm:$0xff]
      %v4967 = vld [vmem:[#allocation2 + $0x1a8] sm:$0xff]
      %v4968 = vld [vmem:[#allocation2 + $0x1b0] sm:$0xff]
      %v4969 = vld [vmem:[#allocation2 + $0x1b8] sm:$0xff]
      %v4970 = vld [vmem:[#allocation2 + $0x1c0] sm:$0xff]
      %v4971 = vld [vmem:[#allocation2 + $0x1c8] sm:$0xff]
      %v4972 = vld [vmem:[#allocation2 + $0x1d0] sm:$0xff]
      %v4973 = vld [vmem:[#allocation2 + $0x1d8] sm:$0xff]
      %v4974 = vld [vmem:[#allocation2 + $0x1e0] sm:$0xff]
      %v4975 = vld [vmem:[#allocation2 + $0x1e8] sm:$0xff]
      %v4976 = vld [vmem:[#allocation2 + $0x1f0] sm:$0xff]
      %v4977 = vld [vmem:[#allocation2 + $0x1f8] sm:$0xff]
      %v4979 = vsel %vm2392, %v2216, 0
      %v4982 = vsel %vm2585, %v2255, 0
      %4984 = vmatprep.subr.mxu0 0.0
      %4985 = vmatpush1.msra.mxu0 0.0
      %4986 = vmatprep.subr.mxu0 0.0
      %4987 = vmatpush1.msra.mxu0 0.0
      %4988 = vmatprep.subr.mxu0 0.0
      %4989 = vmatpush1.msra.mxu0 0.0
      %4990 = vmatprep.subr.mxu0 0.0
      %4991 = vmatpush1.msra.mxu0 0.0
      %4992 = vmatprep.subr.mxu0 0.0
      %4993 = vmatpush1.msra.mxu0 0.0
      %4994 = vmatprep.subr.mxu0 0.0
      %4995 = vmatpush1.msra.mxu0 0.0
      %4996 = vmatprep.subr.mxu0 0.0
      %4997 = vmatpush1.msra.mxu0 0.0
      %4998 = vmatprep.subr.mxu0 0.0
      %4999 = vmatpush1.msra.mxu0 0.0
      %5000 = vmatprep.subr.mxu0 0.0
      %5001 = vmatpush1.msra.mxu0 0.0
      %5002 = vmatprep.subr.mxu0 0.0
      %5003 = vmatpush1.msra.mxu0 0.0
      %5004 = vmatprep.subr.mxu0 0.0
      %5005 = vmatpush1.msra.mxu0 0.0
      %5006 = vmatprep.subr.mxu0 0.0
      %5007 = vmatpush1.msra.mxu0 0.0
      %5008 = vmatprep.subr.mxu0 0.0
      %5009 = vmatpush1.msra.mxu0 0.0
      %5010 = vmatprep.subr.mxu0 0.0
      %5011 = vmatpush1.msra.mxu0 0.0
      %5012 = vmatprep.subr.mxu0 0.0
      %5013 = vmatpush1.msra.mxu0 %v4982
      %5014 = vmatprep.subr.mxu0 0.0
      %5015 = vmatpush1.msra.mxu0 %v2254
      %5016 = vmatprep.subr.mxu0 0.0
      %5017 = vmatpush2.msra.mxu0 0.0
      %5018 = vmatprep.subr.mxu0 0.0
      %5019 = vmatpush2.msra.mxu0 0.0
      %5020 = vmatprep.subr.mxu0 0.0
      %5021 = vmatpush2.msra.mxu0 0.0
      %5022 = vmatprep.subr.mxu0 0.0
      %5023 = vmatpush2.msra.mxu0 0.0
      %5024 = vmatprep.subr.mxu0 0.0
      %5025 = vmatpush2.msra.mxu0 0.0
      %5026 = vmatprep.subr.mxu0 0.0
      %5027 = vmatpush2.msra.mxu0 0.0
      %5028 = vmatprep.subr.mxu0 0.0
      %5029 = vmatpush2.msra.mxu0 0.0
      %5030 = vmatprep.subr.mxu0 0.0
      %5031 = vmatpush2.msra.mxu0 0.0
      %5032 = vmatprep.subr.mxu0 0.0
      %5033 = vmatpush2.msra.mxu0 0.0
      %5034 = vmatprep.subr.mxu0 0.0
      %5035 = vmatpush2.msra.mxu0 0.0
      %5036 = vmatprep.subr.mxu0 0.0
      %5037 = vmatpush2.msra.mxu0 0.0
      %5038 = vmatprep.subr.mxu0 0.0
      %5039 = vmatpush2.msra.mxu0 0.0
      %5040 = vmatprep.subr.mxu0 0.0
      %5041 = vmatpush2.msra.mxu0 0.0
      %5042 = vmatprep.subr.mxu0 0.0
      %5043 = vmatpush2.msra.mxu0 0.0
      %5044 = vmatprep.subr.mxu0 0.0
      %5045 = vmatpush2.msra.mxu0 0.0
      %5046 = vmatprep.subr.mxu0 0.0
      %5047 = vmatpush2.msra.mxu0 0.0
      %5048 = vmatprep.mubr.f32.mxu0 0.0
      %5049 = vmatmul.mubr.f32.gmra.mxu0 %v2421
      %v5050 = vpop.f32.mrf.mxu0
      %v5051 = vadd.f32 0.0, %v5050
      %v5052 = vpop.f32.mrf.mxu0
      %5053 = vmatprep.mubr.f32.mxu0 0.0
      %5054 = vmatmul.mubr.f32.gmra.mxu0 %v2424
      %v5055 = vpop.f32.mrf.mxu0
      %v5056 = vadd.f32 0.0, %v5055
      %v5057 = vpop.f32.mrf.mxu0
      %5058 = vmatprep.mubr.f32.mxu0 0.0
      %5059 = vmatmul.mubr.f32.gmra.mxu0 %v2427
      %v5060 = vpop.f32.mrf.mxu0
      %v5061 = vadd.f32 0.0, %v5060
      %v5062 = vpop.f32.mrf.mxu0
      %5063 = vmatprep.mubr.f32.mxu0 0.0
      %5064 = vmatmul.mubr.f32.gmra.mxu0 %v2430
      %v5065 = vpop.f32.mrf.mxu0
      %v5066 = vadd.f32 0.0, %v5065
      %v5067 = vpop.f32.mrf.mxu0
      %5068 = vmatprep.mubr.f32.mxu0 0.0
      %5069 = vmatmul.mubr.f32.gmra.mxu0 %v2433
      %v5070 = vpop.f32.mrf.mxu0
      %v5071 = vadd.f32 0.0, %v5070
      %v5072 = vpop.f32.mrf.mxu0
      %5073 = vmatprep.mubr.f32.mxu0 0.0
      %5074 = vmatmul.mubr.f32.gmra.mxu0 %v2436
      %v5075 = vpop.f32.mrf.mxu0
      %v5076 = vadd.f32 0.0, %v5075
      %v5077 = vpop.f32.mrf.mxu0
      %5078 = vmatprep.mubr.f32.mxu0 0.0
      %5079 = vmatmul.mubr.f32.gmra.mxu0 %v2439
      %v5080 = vpop.f32.mrf.mxu0
      %v5081 = vadd.f32 0.0, %v5080
      %v5082 = vpop.f32.mrf.mxu0
      %5083 = vmatprep.mubr.f32.mxu0 0.0
      %5084 = vmatmul.mubr.f32.gmra.mxu0 %v3170
      %v5085 = vpop.f32.mrf.mxu0
      %v5086 = vadd.f32 0.0, %v5085
      %v5087 = vpop.f32.mrf.mxu0
      %5088 = vmatprep.mubr.f32.mxu0 0.0
      %5089 = vmatmul.mubr.f32.gmra.mxu0 %v2445
      %v5090 = vpop.f32.mrf.mxu0
      %v5091 = vadd.f32 0.0, %v5090
      %v5092 = vpop.f32.mrf.mxu0
      %5093 = vmatprep.mubr.f32.mxu0 0.0
      %5094 = vmatmul.mubr.f32.gmra.mxu0 %v2448
      %v5095 = vpop.f32.mrf.mxu0
      %v5096 = vadd.f32 0.0, %v5095
      %v5097 = vpop.f32.mrf.mxu0
      %5098 = vmatprep.mubr.f32.mxu0 0.0
      %5099 = vmatmul.mubr.f32.gmra.mxu0 %v2451
      %v5100 = vpop.f32.mrf.mxu0
      %v5101 = vadd.f32 0.0, %v5100
      %v5102 = vpop.f32.mrf.mxu0
      %5103 = vmatprep.mubr.f32.mxu0 0.0
      %5104 = vmatmul.mubr.f32.gmra.mxu0 %v2454
      %v5105 = vpop.f32.mrf.mxu0
      %v5106 = vadd.f32 0.0, %v5105
      %v5107 = vpop.f32.mrf.mxu0
      %5108 = vmatprep.mubr.f32.mxu0 0.0
      %5109 = vmatmul.mubr.f32.gmra.mxu0 %v2457
      %v5110 = vpop.f32.mrf.mxu0
      %v5111 = vadd.f32 0.0, %v5110
      %v5112 = vpop.f32.mrf.mxu0
      %5113 = vmatprep.mubr.f32.mxu0 0.0
      %5114 = vmatmul.mubr.f32.gmra.mxu0 %v2460
      %v5115 = vpop.f32.mrf.mxu0
      %v5116 = vadd.f32 0.0, %v5115
      %v5117 = vpop.f32.mrf.mxu0
      %5118 = vmatprep.mubr.f32.mxu0 0.0
      %5119 = vmatmul.mubr.f32.gmra.mxu0 %v2463
      %v5120 = vpop.f32.mrf.mxu0
      %v5121 = vadd.f32 0.0, %v5120
      %v5122 = vpop.f32.mrf.mxu0
      %5123 = vmatprep.mubr.f32.mxu0 0.0
      %5124 = vmatmul.mubr.f32.gmra.mxu0 %v3173
      %v5125 = vpop.f32.mrf.mxu0
      %v5126 = vadd.f32 0.0, %v5125
      %v5127 = vpop.f32.mrf.mxu0
      %5128 = vmatprep.mubr.f32.mxu0 0.0
      %5129 = vmatmul.mubr.f32.gmra.mxu0 %v2469
      %v5130 = vpop.f32.mrf.mxu0
      %v5131 = vadd.f32 0.0, %v5130
      %v5132 = vpop.f32.mrf.mxu0
      %5133 = vmatprep.mubr.f32.mxu0 0.0
      %5134 = vmatmul.mubr.f32.gmra.mxu0 %v2472
      %v5135 = vpop.f32.mrf.mxu0
      %v5136 = vadd.f32 0.0, %v5135
      %v5137 = vpop.f32.mrf.mxu0
      %5138 = vmatprep.mubr.f32.mxu0 0.0
      %5139 = vmatmul.mubr.f32.gmra.mxu0 %v2475
      %v5140 = vpop.f32.mrf.mxu0
      %v5141 = vadd.f32 0.0, %v5140
      %v5142 = vpop.f32.mrf.mxu0
      %5143 = vmatprep.mubr.f32.mxu0 0.0
      %5144 = vmatmul.mubr.f32.gmra.mxu0 %v2478
      %v5145 = vpop.f32.mrf.mxu0
      %v5146 = vadd.f32 0.0, %v5145
      %v5147 = vpop.f32.mrf.mxu0
      %5148 = vmatprep.mubr.f32.mxu0 0.0
      %5149 = vmatmul.mubr.f32.gmra.mxu0 %v2481
      %v5150 = vpop.f32.mrf.mxu0
      %v5151 = vadd.f32 0.0, %v5150
      %v5152 = vpop.f32.mrf.mxu0
      %5153 = vmatprep.mubr.f32.mxu0 0.0
      %5154 = vmatmul.mubr.f32.gmra.mxu0 %v2484
      %v5155 = vpop.f32.mrf.mxu0
      %v5156 = vadd.f32 0.0, %v5155
      %v5157 = vpop.f32.mrf.mxu0
      %5158 = vmatprep.mubr.f32.mxu0 0.0
      %5159 = vmatmul.mubr.f32.gmra.mxu0 %v2487
      %v5160 = vpop.f32.mrf.mxu0
      %v5161 = vadd.f32 0.0, %v5160
      %v5162 = vpop.f32.mrf.mxu0
      %5163 = vmatprep.mubr.f32.mxu0 0.0
      %5164 = vmatmul.mubr.f32.gmra.mxu0 %v3176
      %v5165 = vpop.f32.mrf.mxu0
      %v5166 = vadd.f32 0.0, %v5165
      %v5167 = vpop.f32.mrf.mxu0
      %5168 = vmatprep.mubr.f32.mxu0 0.0
      %5169 = vmatmul.mubr.f32.gmra.mxu0 %v2493
      %v5170 = vpop.f32.mrf.mxu0
      %v5171 = vadd.f32 0.0, %v5170
      %v5172 = vpop.f32.mrf.mxu0
      %5173 = vmatprep.mubr.f32.mxu0 0.0
      %5174 = vmatmul.mubr.f32.gmra.mxu0 %v2496
      %v5175 = vpop.f32.mrf.mxu0
      %v5176 = vadd.f32 0.0, %v5175
      %v5177 = vpop.f32.mrf.mxu0
      %5178 = vmatprep.mubr.f32.mxu0 0.0
      %5179 = vmatmul.mubr.f32.gmra.mxu0 %v2499
      %v5180 = vpop.f32.mrf.mxu0
      %v5181 = vadd.f32 0.0, %v5180
      %v5182 = vpop.f32.mrf.mxu0
      %5183 = vmatprep.mubr.f32.mxu0 0.0
      %5184 = vmatmul.mubr.f32.gmra.mxu0 %v2502
      %v5185 = vpop.f32.mrf.mxu0
      %v5186 = vadd.f32 0.0, %v5185
      %v5187 = vpop.f32.mrf.mxu0
      %5188 = vmatprep.mubr.f32.mxu0 0.0
      %5189 = vmatmul.mubr.f32.gmra.mxu0 %v2505
      %v5190 = vpop.f32.mrf.mxu0
      %v5191 = vadd.f32 0.0, %v5190
      %v5192 = vpop.f32.mrf.mxu0
      %5193 = vmatprep.mubr.f32.mxu0 0.0
      %5194 = vmatmul.mubr.f32.gmra.mxu0 %v2508
      %v5195 = vpop.f32.mrf.mxu0
      %v5196 = vadd.f32 0.0, %v5195
      %v5197 = vpop.f32.mrf.mxu0
      %5198 = vmatprep.mubr.f32.mxu0 0.0
      %5199 = vmatmul.mubr.f32.gmra.mxu0 %v2511
      %v5200 = vpop.f32.mrf.mxu0
      %v5201 = vadd.f32 0.0, %v5200
      %v5202 = vpop.f32.mrf.mxu0
      %5203 = vmatprep.mubr.f32.mxu0 0.0
      %5204 = vmatmul.mubr.f32.gmra.mxu0 %v3179
      %v5205 = vpop.f32.mrf.mxu0
      %v5206 = vadd.f32 0.0, %v5205
      %v5207 = vpop.f32.mrf.mxu0
      %5208 = vmatprep.mubr.f32.mxu0 0.0
      %5209 = vmatmul.mubr.f32.gmra.mxu0 %v2517
      %v5210 = vpop.f32.mrf.mxu0
      %v5211 = vadd.f32 0.0, %v5210
      %v5212 = vpop.f32.mrf.mxu0
      %5213 = vmatprep.mubr.f32.mxu0 0.0
      %5214 = vmatmul.mubr.f32.gmra.mxu0 %v2520
      %v5215 = vpop.f32.mrf.mxu0
      %v5216 = vadd.f32 0.0, %v5215
      %v5217 = vpop.f32.mrf.mxu0
      %5218 = vmatprep.mubr.f32.mxu0 0.0
      %5219 = vmatmul.mubr.f32.gmra.mxu0 %v2523
      %v5220 = vpop.f32.mrf.mxu0
      %v5221 = vadd.f32 0.0, %v5220
      %v5222 = vpop.f32.mrf.mxu0
      %5223 = vmatprep.mubr.f32.mxu0 0.0
      %5224 = vmatmul.mubr.f32.gmra.mxu0 %v2526
      %v5225 = vpop.f32.mrf.mxu0
      %v5226 = vadd.f32 0.0, %v5225
      %v5227 = vpop.f32.mrf.mxu0
      %5228 = vmatprep.mubr.f32.mxu0 0.0
      %5229 = vmatmul.mubr.f32.gmra.mxu0 %v2529
      %v5230 = vpop.f32.mrf.mxu0
      %v5231 = vadd.f32 0.0, %v5230
      %v5232 = vpop.f32.mrf.mxu0
      %5233 = vmatprep.mubr.f32.mxu0 0.0
      %5234 = vmatmul.mubr.f32.gmra.mxu0 %v2532
      %v5235 = vpop.f32.mrf.mxu0
      %v5236 = vadd.f32 0.0, %v5235
      %v5237 = vpop.f32.mrf.mxu0
      %5238 = vmatprep.mubr.f32.mxu0 0.0
      %5239 = vmatmul.mubr.f32.gmra.mxu0 %v2535
      %v5240 = vpop.f32.mrf.mxu0
      %v5241 = vadd.f32 0.0, %v5240
      %v5242 = vpop.f32.mrf.mxu0
      %5243 = vmatprep.mubr.f32.mxu0 0.0
      %5244 = vmatmul.mubr.f32.gmra.mxu0 %v3182
      %v5245 = vpop.f32.mrf.mxu0
      %v5246 = vadd.f32 0.0, %v5245
      %v5247 = vpop.f32.mrf.mxu0
      %5248 = vmatprep.mubr.f32.mxu0 0.0
      %5249 = vmatmul.mubr.f32.gmra.mxu0 %v2541
      %v5250 = vpop.f32.mrf.mxu0
      %v5251 = vadd.f32 0.0, %v5250
      %v5252 = vpop.f32.mrf.mxu0
      %5253 = vmatprep.mubr.f32.mxu0 0.0
      %5254 = vmatmul.mubr.f32.gmra.mxu0 %v2544
      %v5255 = vpop.f32.mrf.mxu0
      %v5256 = vadd.f32 0.0, %v5255
      %v5257 = vpop.f32.mrf.mxu0
      %5258 = vmatprep.mubr.f32.mxu0 0.0
      %5259 = vmatmul.mubr.f32.gmra.mxu0 %v2547
      %v5260 = vpop.f32.mrf.mxu0
      %v5261 = vadd.f32 0.0, %v5260
      %v5262 = vpop.f32.mrf.mxu0
      %5263 = vmatprep.mubr.f32.mxu0 0.0
      %5264 = vmatmul.mubr.f32.gmra.mxu0 %v2550
      %v5265 = vpop.f32.mrf.mxu0
      %v5266 = vadd.f32 0.0, %v5265
      %v5267 = vpop.f32.mrf.mxu0
      %5268 = vmatprep.mubr.f32.mxu0 0.0
      %5269 = vmatmul.mubr.f32.gmra.mxu0 %v2553
      %v5270 = vpop.f32.mrf.mxu0
      %v5271 = vadd.f32 0.0, %v5270
      %v5272 = vpop.f32.mrf.mxu0
      %5273 = vmatprep.mubr.f32.mxu0 0.0
      %5274 = vmatmul.mubr.f32.gmra.mxu0 %v2556
      %v5275 = vpop.f32.mrf.mxu0
      %v5276 = vadd.f32 0.0, %v5275
      %v5277 = vpop.f32.mrf.mxu0
      %5278 = vmatprep.mubr.f32.mxu0 0.0
      %5279 = vmatmul.mubr.f32.gmra.mxu0 %v2559
      %v5280 = vpop.f32.mrf.mxu0
      %v5281 = vadd.f32 0.0, %v5280
      %v5282 = vpop.f32.mrf.mxu0
      %5283 = vmatprep.mubr.f32.mxu0 0.0
      %5284 = vmatmul.mubr.f32.gmra.mxu0 %v3185
      %v5285 = vpop.f32.mrf.mxu0
      %v5286 = vadd.f32 0.0, %v5285
      %v5287 = vpop.f32.mrf.mxu0
      %5288 = vmatprep.mubr.f32.mxu0 0.0
      %5289 = vmatmul.mubr.f32.gmra.mxu0 %v2565
      %v5290 = vpop.f32.mrf.mxu0
      %v5291 = vadd.f32 0.0, %v5290
      %v5292 = vpop.f32.mrf.mxu0
      %5293 = vmatprep.mubr.f32.mxu0 0.0
      %5294 = vmatmul.mubr.f32.gmra.mxu0 %v2568
      %v5295 = vpop.f32.mrf.mxu0
      %v5296 = vadd.f32 0.0, %v5295
      %v5297 = vpop.f32.mrf.mxu0
      %5298 = vmatprep.mubr.f32.mxu0 0.0
      %5299 = vmatmul.mubr.f32.gmra.mxu0 %v2571
      %v5300 = vpop.f32.mrf.mxu0
      %v5301 = vadd.f32 0.0, %v5300
      %v5302 = vpop.f32.mrf.mxu0
      %5303 = vmatprep.mubr.f32.mxu0 0.0
      %5304 = vmatmul.mubr.f32.gmra.mxu0 %v2574
      %v5305 = vpop.f32.mrf.mxu0
      %v5306 = vadd.f32 0.0, %v5305
      %v5307 = vpop.f32.mrf.mxu0
      %5308 = vmatprep.mubr.f32.mxu0 0.0
      %5309 = vmatmul.mubr.f32.gmra.mxu0 %v2577
      %v5310 = vpop.f32.mrf.mxu0
      %v5311 = vadd.f32 0.0, %v5310
      %v5312 = vpop.f32.mrf.mxu0
      %5313 = vmatprep.mubr.f32.mxu0 0.0
      %5314 = vmatmul.mubr.f32.gmra.mxu0 %v2580
      %v5315 = vpop.f32.mrf.mxu0
      %v5316 = vadd.f32 0.0, %v5315
      %v5317 = vpop.f32.mrf.mxu0
      %5318 = vmatprep.mubr.f32.mxu0 0.0
      %5319 = vmatmul.mubr.f32.gmra.mxu0 %v2583
      %v5320 = vpop.f32.mrf.mxu0
      %v5321 = vadd.f32 0.0, %v5320
      %v5322 = vpop.f32.mrf.mxu0
      %5323 = vmatprep.mubr.f32.mxu0 0.0
      %5324 = vmatmul.mubr.f32.gmra.mxu0 %v3188
      %v5325 = vpop.f32.mrf.mxu0
      %v5326 = vadd.f32 0.0, %v5325
      %v5327 = vpop.f32.mrf.mxu0
      %5328 = vmatprep.mubr.f32.mxu0 0.0
      %5329 = vmatmul.mubr.f32.gmra.mxu0 %v4378
      %v5330 = vpop.f32.mrf.mxu0
      %v5331 = vadd.f32 0.0, %v5330
      %v5332 = vpop.f32.mrf.mxu0
      %5333 = vmatprep.mubr.f32.mxu0 0.0
      %5334 = vmatmul.mubr.f32.gmra.mxu0 %v4381
      %v5335 = vpop.f32.mrf.mxu0
      %v5336 = vadd.f32 0.0, %v5335
      %v5337 = vpop.f32.mrf.mxu0
      %5338 = vmatprep.mubr.f32.mxu0 0.0
      %5339 = vmatmul.mubr.f32.gmra.mxu0 %v4384
      %v5340 = vpop.f32.mrf.mxu0
      %v5341 = vadd.f32 0.0, %v5340
      %v5342 = vpop.f32.mrf.mxu0
      %5343 = vmatprep.mubr.f32.mxu0 0.0
      %5344 = vmatmul.mubr.f32.gmra.mxu0 %v4387
      %v5345 = vpop.f32.mrf.mxu0
      %v5346 = vadd.f32 0.0, %v5345
      %v5347 = vpop.f32.mrf.mxu0
      %5348 = vmatprep.mubr.f32.mxu0 0.0
      %5349 = vmatmul.mubr.f32.gmra.mxu0 %v4390
      %v5350 = vpop.f32.mrf.mxu0
      %v5351 = vadd.f32 0.0, %v5350
      %v5352 = vpop.f32.mrf.mxu0
      %5353 = vmatprep.mubr.f32.mxu0 0.0
      %5354 = vmatmul.mubr.f32.gmra.mxu0 %v4393
      %v5355 = vpop.f32.mrf.mxu0
      %v5356 = vadd.f32 0.0, %v5355
      %v5357 = vpop.f32.mrf.mxu0
      %5358 = vmatprep.mubr.f32.mxu0 0.0
      %5359 = vmatmul.mubr.f32.gmra.mxu0 %v4396
      %v5360 = vpop.f32.mrf.mxu0
      %v5361 = vadd.f32 0.0, %v5360
      %v5362 = vpop.f32.mrf.mxu0
      %5363 = vmatprep.mubr.f32.mxu0 0.0
      %5364 = vmatmul.mubr.f32.gmra.mxu0 %v4979
      %v5365 = vpop.f32.mrf.mxu0
      %v5366 = vadd.f32 0.0, %v5365
      %v5367 = vpop.f32.mrf.mxu0
      %5368 = vdwg.mxu0
      %v5369 = vadd.f32 %v4914, %v5051
      %v5370 = vadd.f32 %v4915, %v5056
      %v5371 = vadd.f32 %v4916, %v5061
      %v5372 = vadd.f32 %v4917, %v5066
      %v5373 = vadd.f32 %v4918, %v5071
      %v5374 = vadd.f32 %v4919, %v5076
      %v5375 = vadd.f32 %v4920, %v5081
      %v5376 = vadd.f32 %v4921, %v5086
      %v5377 = vadd.f32 %v4922, %v5091
      %v5378 = vadd.f32 %v4923, %v5096
      %v5379 = vadd.f32 %v4924, %v5101
      %v5380 = vadd.f32 %v4925, %v5106
      %v5381 = vadd.f32 %v4926, %v5111
      %v5382 = vadd.f32 %v4927, %v5116
      %v5383 = vadd.f32 %v4928, %v5121
      %v5384 = vadd.f32 %v4929, %v5126
      %v5385 = vadd.f32 %v4930, %v5131
      %v5386 = vadd.f32 %v4931, %v5136
      %v5387 = vadd.f32 %v4932, %v5141
      %v5388 = vadd.f32 %v4933, %v5146
      %v5389 = vadd.f32 %v4934, %v5151
      %v5390 = vadd.f32 %v4935, %v5156
      %v5391 = vadd.f32 %v4936, %v5161
      %v5392 = vadd.f32 %v4937, %v5166
      %v5393 = vadd.f32 %v4938, %v5171
      %v5394 = vadd.f32 %v4939, %v5176
      %v5395 = vadd.f32 %v4940, %v5181
      %v5396 = vadd.f32 %v4941, %v5186
      %v5397 = vadd.f32 %v4942, %v5191
      %v5398 = vadd.f32 %v4943, %v5196
      %v5399 = vadd.f32 %v4944, %v5201
      %v5400 = vadd.f32 %v4945, %v5206
      %v5401 = vadd.f32 %v4946, %v5211
      %v5402 = vadd.f32 %v4947, %v5216
      %v5403 = vadd.f32 %v4948, %v5221
      %v5404 = vadd.f32 %v4949, %v5226
      %v5405 = vadd.f32 %v4950, %v5231
      %v5406 = vadd.f32 %v4951, %v5236
      %v5407 = vadd.f32 %v4952, %v5241
      %v5408 = vadd.f32 %v4953, %v5246
      %v5409 = vadd.f32 %v4954, %v5251
      %v5410 = vadd.f32 %v4955, %v5256
      %v5411 = vadd.f32 %v4956, %v5261
      %v5412 = vadd.f32 %v4957, %v5266
      %v5413 = vadd.f32 %v4958, %v5271
      %v5414 = vadd.f32 %v4959, %v5276
      %v5415 = vadd.f32 %v4960, %v5281
      %v5416 = vadd.f32 %v4961, %v5286
      %v5417 = vadd.f32 %v4962, %v5291
      %v5418 = vadd.f32 %v4963, %v5296
      %v5419 = vadd.f32 %v4964, %v5301
      %v5420 = vadd.f32 %v4965, %v5306
      %v5421 = vadd.f32 %v4966, %v5311
      %v5422 = vadd.f32 %v4967, %v5316
      %v5423 = vadd.f32 %v4968, %v5321
      %v5424 = vadd.f32 %v4969, %v5326
      %v5425 = vadd.f32 %v4970, %v5331
      %v5426 = vadd.f32 %v4971, %v5336
      %v5427 = vadd.f32 %v4972, %v5341
      %v5428 = vadd.f32 %v4973, %v5346
      %v5429 = vadd.f32 %v4974, %v5351
      %v5430 = vadd.f32 %v4975, %v5356
      %v5431 = vadd.f32 %v4976, %v5361
      %v5432 = vadd.f32 %v4977, %v5366
      %5433 = vst.msk [vmem:[#allocation2] sm:$0xff] %vm2127, %v5369
      %5434 = vst.msk [vmem:[#allocation2 + $0x8] sm:$0xff] %vm2127, %v5370
      %5435 = vst.msk [vmem:[#allocation2 + $0x10] sm:$0xff] %vm2127, %v5371
      %5436 = vst.msk [vmem:[#allocation2 + $0x18] sm:$0xff] %vm2127, %v5372
      %5437 = vst.msk [vmem:[#allocation2 + $0x20] sm:$0xff] %vm2127, %v5373
      %5438 = vst.msk [vmem:[#allocation2 + $0x28] sm:$0xff] %vm2127, %v5374
      %5439 = vst.msk [vmem:[#allocation2 + $0x30] sm:$0xff] %vm2127, %v5375
      %5440 = vst.msk [vmem:[#allocation2 + $0x38] sm:$0xff] %vm2127, %v5376
      %5441 = vst.msk [vmem:[#allocation2 + $0x40] sm:$0xff] %vm2127, %v5377
      %5442 = vst.msk [vmem:[#allocation2 + $0x48] sm:$0xff] %vm2127, %v5378
      %5443 = vst.msk [vmem:[#allocation2 + $0x50] sm:$0xff] %vm2127, %v5379
      %5444 = vst.msk [vmem:[#allocation2 + $0x58] sm:$0xff] %vm2127, %v5380
      %5445 = vst.msk [vmem:[#allocation2 + $0x60] sm:$0xff] %vm2127, %v5381
      %5446 = vst.msk [vmem:[#allocation2 + $0x68] sm:$0xff] %vm2127, %v5382
      %5447 = vst.msk [vmem:[#allocation2 + $0x70] sm:$0xff] %vm2127, %v5383
      %5448 = vst.msk [vmem:[#allocation2 + $0x78] sm:$0xff] %vm2127, %v5384
      %5449 = vst.msk [vmem:[#allocation2 + $0x80] sm:$0xff] %vm2127, %v5385
      %5450 = vst.msk [vmem:[#allocation2 + $0x88] sm:$0xff] %vm2127, %v5386
      %5451 = vst.msk [vmem:[#allocation2 + $0x90] sm:$0xff] %vm2127, %v5387
      %5452 = vst.msk [vmem:[#allocation2 + $0x98] sm:$0xff] %vm2127, %v5388
      %5453 = vst.msk [vmem:[#allocation2 + $0xa0] sm:$0xff] %vm2127, %v5389
      %5454 = vst.msk [vmem:[#allocation2 + $0xa8] sm:$0xff] %vm2127, %v5390
      %5455 = vst.msk [vmem:[#allocation2 + $0xb0] sm:$0xff] %vm2127, %v5391
      %5456 = vst.msk [vmem:[#allocation2 + $0xb8] sm:$0xff] %vm2127, %v5392
      %5457 = vst.msk [vmem:[#allocation2 + $0xc0] sm:$0xff] %vm2127, %v5393
      %5458 = vst.msk [vmem:[#allocation2 + $0xc8] sm:$0xff] %vm2127, %v5394
      %5459 = vst.msk [vmem:[#allocation2 + $0xd0] sm:$0xff] %vm2127, %v5395
      %5460 = vst.msk [vmem:[#allocation2 + $0xd8] sm:$0xff] %vm2127, %v5396
      %5461 = vst.msk [vmem:[#allocation2 + $0xe0] sm:$0xff] %vm2127, %v5397
      %5462 = vst.msk [vmem:[#allocation2 + $0xe8] sm:$0xff] %vm2127, %v5398
      %5463 = vst.msk [vmem:[#allocation2 + $0xf0] sm:$0xff] %vm2127, %v5399
      %5464 = vst.msk [vmem:[#allocation2 + $0xf8] sm:$0xff] %vm2127, %v5400
      %5465 = vst.msk [vmem:[#allocation2 + $0x100] sm:$0xff] %vm2127, %v5401
      %5466 = vst.msk [vmem:[#allocation2 + $0x108] sm:$0xff] %vm2127, %v5402
      %5467 = vst.msk [vmem:[#allocation2 + $0x110] sm:$0xff] %vm2127, %v5403
      %5468 = vst.msk [vmem:[#allocation2 + $0x118] sm:$0xff] %vm2127, %v5404
      %5469 = vst.msk [vmem:[#allocation2 + $0x120] sm:$0xff] %vm2127, %v5405
      %5470 = vst.msk [vmem:[#allocation2 + $0x128] sm:$0xff] %vm2127, %v5406
      %5471 = vst.msk [vmem:[#allocation2 + $0x130] sm:$0xff] %vm2127, %v5407
      %5472 = vst.msk [vmem:[#allocation2 + $0x138] sm:$0xff] %vm2127, %v5408
      %5473 = vst.msk [vmem:[#allocation2 + $0x140] sm:$0xff] %vm2127, %v5409
      %5474 = vst.msk [vmem:[#allocation2 + $0x148] sm:$0xff] %vm2127, %v5410
      %5475 = vst.msk [vmem:[#allocation2 + $0x150] sm:$0xff] %vm2127, %v5411
      %5476 = vst.msk [vmem:[#allocation2 + $0x158] sm:$0xff] %vm2127, %v5412
      %5477 = vst.msk [vmem:[#allocation2 + $0x160] sm:$0xff] %vm2127, %v5413
      %5478 = vst.msk [vmem:[#allocation2 + $0x168] sm:$0xff] %vm2127, %v5414
      %5479 = vst.msk [vmem:[#allocation2 + $0x170] sm:$0xff] %vm2127, %v5415
      %5480 = vst.msk [vmem:[#allocation2 + $0x178] sm:$0xff] %vm2127, %v5416
      %5481 = vst.msk [vmem:[#allocation2 + $0x180] sm:$0xff] %vm2127, %v5417
      %5482 = vst.msk [vmem:[#allocation2 + $0x188] sm:$0xff] %vm2127, %v5418
      %5483 = vst.msk [vmem:[#allocation2 + $0x190] sm:$0xff] %vm2127, %v5419
      %5484 = vst.msk [vmem:[#allocation2 + $0x198] sm:$0xff] %vm2127, %v5420
      %5485 = vst.msk [vmem:[#allocation2 + $0x1a0] sm:$0xff] %vm2127, %v5421
      %5486 = vst.msk [vmem:[#allocation2 + $0x1a8] sm:$0xff] %vm2127, %v5422
      %5487 = vst.msk [vmem:[#allocation2 + $0x1b0] sm:$0xff] %vm2127, %v5423
      %5488 = vst.msk [vmem:[#allocation2 + $0x1b8] sm:$0xff] %vm2127, %v5424
      %5489 = vst.msk [vmem:[#allocation2 + $0x1c0] sm:$0xff] %vm2127, %v5425
      %5490 = vst.msk [vmem:[#allocation2 + $0x1c8] sm:$0xff] %vm2127, %v5426
      %5491 = vst.msk [vmem:[#allocation2 + $0x1d0] sm:$0xff] %vm2127, %v5427
      %5492 = vst.msk [vmem:[#allocation2 + $0x1d8] sm:$0xff] %vm2127, %v5428
      %5493 = vst.msk [vmem:[#allocation2 + $0x1e0] sm:$0xff] %vm2127, %v5429
      %5494 = vst.msk [vmem:[#allocation2 + $0x1e8] sm:$0xff] %vm2127, %v5430
      %5495 = vst.msk [vmem:[#allocation2 + $0x1f0] sm:$0xff] %vm2127, %v5431
      %5496 = vst.msk [vmem:[#allocation2 + $0x1f8] sm:$0xff] %vm2127, %v5432
      %v5497 = vld [vmem:[#allocation2] sm:$0xff]
      %v5498 = vld [vmem:[#allocation2 + $0x8] sm:$0xff]
      %v5499 = vld [vmem:[#allocation2 + $0x10] sm:$0xff]
      %v5500 = vld [vmem:[#allocation2 + $0x18] sm:$0xff]
      %v5501 = vld [vmem:[#allocation2 + $0x20] sm:$0xff]
      %v5502 = vld [vmem:[#allocation2 + $0x28] sm:$0xff]
      %v5503 = vld [vmem:[#allocation2 + $0x30] sm:$0xff]
      %v5504 = vld [vmem:[#allocation2 + $0x38] sm:$0xff]
      %v5505 = vld [vmem:[#allocation2 + $0x40] sm:$0xff]
      %v5506 = vld [vmem:[#allocation2 + $0x48] sm:$0xff]
      %v5507 = vld [vmem:[#allocation2 + $0x50] sm:$0xff]
      %v5508 = vld [vmem:[#allocation2 + $0x58] sm:$0xff]
      %v5509 = vld [vmem:[#allocation2 + $0x60] sm:$0xff]
      %v5510 = vld [vmem:[#allocation2 + $0x68] sm:$0xff]
      %v5511 = vld [vmem:[#allocation2 + $0x70] sm:$0xff]
      %v5512 = vld [vmem:[#allocation2 + $0x78] sm:$0xff]
      %v5513 = vld [vmem:[#allocation2 + $0x80] sm:$0xff]
      %v5514 = vld [vmem:[#allocation2 + $0x88] sm:$0xff]
      %v5515 = vld [vmem:[#allocation2 + $0x90] sm:$0xff]
      %v5516 = vld [vmem:[#allocation2 + $0x98] sm:$0xff]
      %v5517 = vld [vmem:[#allocation2 + $0xa0] sm:$0xff]
      %v5518 = vld [vmem:[#allocation2 + $0xa8] sm:$0xff]
      %v5519 = vld [vmem:[#allocation2 + $0xb0] sm:$0xff]
      %v5520 = vld [vmem:[#allocation2 + $0xb8] sm:$0xff]
      %v5521 = vld [vmem:[#allocation2 + $0xc0] sm:$0xff]
      %v5522 = vld [vmem:[#allocation2 + $0xc8] sm:$0xff]
      %v5523 = vld [vmem:[#allocation2 + $0xd0] sm:$0xff]
      %v5524 = vld [vmem:[#allocation2 + $0xd8] sm:$0xff]
      %v5525 = vld [vmem:[#allocation2 + $0xe0] sm:$0xff]
      %v5526 = vld [vmem:[#allocation2 + $0xe8] sm:$0xff]
      %v5527 = vld [vmem:[#allocation2 + $0xf0] sm:$0xff]
      %v5528 = vld [vmem:[#allocation2 + $0xf8] sm:$0xff]
      %v5529 = vld [vmem:[#allocation2 + $0x100] sm:$0xff]
      %v5530 = vld [vmem:[#allocation2 + $0x108] sm:$0xff]
      %v5531 = vld [vmem:[#allocation2 + $0x110] sm:$0xff]
      %v5532 = vld [vmem:[#allocation2 + $0x118] sm:$0xff]
      %v5533 = vld [vmem:[#allocation2 + $0x120] sm:$0xff]
      %v5534 = vld [vmem:[#allocation2 + $0x128] sm:$0xff]
      %v5535 = vld [vmem:[#allocation2 + $0x130] sm:$0xff]
      %v5536 = vld [vmem:[#allocation2 + $0x138] sm:$0xff]
      %v5537 = vld [vmem:[#allocation2 + $0x140] sm:$0xff]
      %v5538 = vld [vmem:[#allocation2 + $0x148] sm:$0xff]
      %v5539 = vld [vmem:[#allocation2 + $0x150] sm:$0xff]
      %v5540 = vld [vmem:[#allocation2 + $0x158] sm:$0xff]
      %v5541 = vld [vmem:[#allocation2 + $0x160] sm:$0xff]
      %v5542 = vld [vmem:[#allocation2 + $0x168] sm:$0xff]
      %v5543 = vld [vmem:[#allocation2 + $0x170] sm:$0xff]
      %v5544 = vld [vmem:[#allocation2 + $0x178] sm:$0xff]
      %v5545 = vld [vmem:[#allocation2 + $0x180] sm:$0xff]
      %v5546 = vld [vmem:[#allocation2 + $0x188] sm:$0xff]
      %v5547 = vld [vmem:[#allocation2 + $0x190] sm:$0xff]
      %v5548 = vld [vmem:[#allocation2 + $0x198] sm:$0xff]
      %v5549 = vld [vmem:[#allocation2 + $0x1a0] sm:$0xff]
      %v5550 = vld [vmem:[#allocation2 + $0x1a8] sm:$0xff]
      %v5551 = vld [vmem:[#allocation2 + $0x1b0] sm:$0xff]
      %v5552 = vld [vmem:[#allocation2 + $0x1b8] sm:$0xff]
      %v5553 = vld [vmem:[#allocation2 + $0x1c0] sm:$0xff]
      %v5554 = vld [vmem:[#allocation2 + $0x1c8] sm:$0xff]
      %v5555 = vld [vmem:[#allocation2 + $0x1d0] sm:$0xff]
      %v5556 = vld [vmem:[#allocation2 + $0x1d8] sm:$0xff]
      %v5557 = vld [vmem:[#allocation2 + $0x1e0] sm:$0xff]
      %v5558 = vld [vmem:[#allocation2 + $0x1e8] sm:$0xff]
      %v5559 = vld [vmem:[#allocation2 + $0x1f0] sm:$0xff]
      %v5560 = vld [vmem:[#allocation2 + $0x1f8] sm:$0xff]
      %v5562 = vsel %vm2392, %v2217, 0
      %v5565 = vsel %vm2585, %v2257, 0
      %5567 = vmatprep.subr.mxu0 0.0
      %5568 = vmatpush1.msra.mxu0 0.0
      %5569 = vmatprep.subr.mxu0 0.0
      %5570 = vmatpush1.msra.mxu0 0.0
      %5571 = vmatprep.subr.mxu0 0.0
      %5572 = vmatpush1.msra.mxu0 0.0
      %5573 = vmatprep.subr.mxu0 0.0
      %5574 = vmatpush1.msra.mxu0 0.0
      %5575 = vmatprep.subr.mxu0 0.0
      %5576 = vmatpush1.msra.mxu0 0.0
      %5577 = vmatprep.subr.mxu0 0.0
      %5578 = vmatpush1.msra.mxu0 0.0
      %5579 = vmatprep.subr.mxu0 0.0
      %5580 = vmatpush1.msra.mxu0 0.0
      %5581 = vmatprep.subr.mxu0 0.0
      %5582 = vmatpush1.msra.mxu0 0.0
      %5583 = vmatprep.subr.mxu0 0.0
      %5584 = vmatpush1.msra.mxu0 0.0
      %5585 = vmatprep.subr.mxu0 0.0
      %5586 = vmatpush1.msra.mxu0 0.0
      %5587 = vmatprep.subr.mxu0 0.0
      %5588 = vmatpush1.msra.mxu0 0.0
      %5589 = vmatprep.subr.mxu0 0.0
      %5590 = vmatpush1.msra.mxu0 0.0
      %5591 = vmatprep.subr.mxu0 0.0
      %5592 = vmatpush1.msra.mxu0 0.0
      %5593 = vmatprep.subr.mxu0 0.0
      %5594 = vmatpush1.msra.mxu0 0.0
      %5595 = vmatprep.subr.mxu0 0.0
      %5596 = vmatpush1.msra.mxu0 %v5565
      %5597 = vmatprep.subr.mxu0 0.0
      %5598 = vmatpush1.msra.mxu0 %v2256
      %5599 = vmatprep.subr.mxu0 0.0
      %5600 = vmatpush2.msra.mxu0 0.0
      %5601 = vmatprep.subr.mxu0 0.0
      %5602 = vmatpush2.msra.mxu0 0.0
      %5603 = vmatprep.subr.mxu0 0.0
      %5604 = vmatpush2.msra.mxu0 0.0
      %5605 = vmatprep.subr.mxu0 0.0
      %5606 = vmatpush2.msra.mxu0 0.0
      %5607 = vmatprep.subr.mxu0 0.0
      %5608 = vmatpush2.msra.mxu0 0.0
      %5609 = vmatprep.subr.mxu0 0.0
      %5610 = vmatpush2.msra.mxu0 0.0
      %5611 = vmatprep.subr.mxu0 0.0
      %5612 = vmatpush2.msra.mxu0 0.0
      %5613 = vmatprep.subr.mxu0 0.0
      %5614 = vmatpush2.msra.mxu0 0.0
      %5615 = vmatprep.subr.mxu0 0.0
      %5616 = vmatpush2.msra.mxu0 0.0
      %5617 = vmatprep.subr.mxu0 0.0
      %5618 = vmatpush2.msra.mxu0 0.0
      %5619 = vmatprep.subr.mxu0 0.0
      %5620 = vmatpush2.msra.mxu0 0.0
      %5621 = vmatprep.subr.mxu0 0.0
      %5622 = vmatpush2.msra.mxu0 0.0
      %5623 = vmatprep.subr.mxu0 0.0
      %5624 = vmatpush2.msra.mxu0 0.0
      %5625 = vmatprep.subr.mxu0 0.0
      %5626 = vmatpush2.msra.mxu0 0.0
      %5627 = vmatprep.subr.mxu0 0.0
      %5628 = vmatpush2.msra.mxu0 0.0
      %5629 = vmatprep.subr.mxu0 0.0
      %5630 = vmatpush2.msra.mxu0 0.0
      %5631 = vmatprep.mubr.f32.mxu0 0.0
      %5632 = vmatmul.mubr.f32.gmra.mxu0 %v2424
      %v5633 = vpop.f32.mrf.mxu0
      %v5634 = vadd.f32 0.0, %v5633
      %v5635 = vpop.f32.mrf.mxu0
      %5636 = vmatprep.mubr.f32.mxu0 0.0
      %5637 = vmatmul.mubr.f32.gmra.mxu0 %v2427
      %v5638 = vpop.f32.mrf.mxu0
      %v5639 = vadd.f32 0.0, %v5638
      %v5640 = vpop.f32.mrf.mxu0
      %5641 = vmatprep.mubr.f32.mxu0 0.0
      %5642 = vmatmul.mubr.f32.gmra.mxu0 %v2430
      %v5643 = vpop.f32.mrf.mxu0
      %v5644 = vadd.f32 0.0, %v5643
      %v5645 = vpop.f32.mrf.mxu0
      %5646 = vmatprep.mubr.f32.mxu0 0.0
      %5647 = vmatmul.mubr.f32.gmra.mxu0 %v2433
      %v5648 = vpop.f32.mrf.mxu0
      %v5649 = vadd.f32 0.0, %v5648
      %v5650 = vpop.f32.mrf.mxu0
      %5651 = vmatprep.mubr.f32.mxu0 0.0
      %5652 = vmatmul.mubr.f32.gmra.mxu0 %v2436
      %v5653 = vpop.f32.mrf.mxu0
      %v5654 = vadd.f32 0.0, %v5653
      %v5655 = vpop.f32.mrf.mxu0
      %5656 = vmatprep.mubr.f32.mxu0 0.0
      %5657 = vmatmul.mubr.f32.gmra.mxu0 %v2439
      %v5658 = vpop.f32.mrf.mxu0
      %v5659 = vadd.f32 0.0, %v5658
      %v5660 = vpop.f32.mrf.mxu0
      %5661 = vmatprep.mubr.f32.mxu0 0.0
      %5662 = vmatmul.mubr.f32.gmra.mxu0 %v3170
      %v5663 = vpop.f32.mrf.mxu0
      %v5664 = vadd.f32 0.0, %v5663
      %v5665 = vpop.f32.mrf.mxu0
      %5666 = vmatprep.mubr.f32.mxu0 0.0
      %5667 = vmatmul.mubr.f32.gmra.mxu0 %v3774
      %v5668 = vpop.f32.mrf.mxu0
      %v5669 = vadd.f32 0.0, %v5668
      %v5670 = vpop.f32.mrf.mxu0
      %5671 = vmatprep.mubr.f32.mxu0 0.0
      %5672 = vmatmul.mubr.f32.gmra.mxu0 %v2448
      %v5673 = vpop.f32.mrf.mxu0
      %v5674 = vadd.f32 0.0, %v5673
      %v5675 = vpop.f32.mrf.mxu0
      %5676 = vmatprep.mubr.f32.mxu0 0.0
      %5677 = vmatmul.mubr.f32.gmra.mxu0 %v2451
      %v5678 = vpop.f32.mrf.mxu0
      %v5679 = vadd.f32 0.0, %v5678
      %v5680 = vpop.f32.mrf.mxu0
      %5681 = vmatprep.mubr.f32.mxu0 0.0
      %5682 = vmatmul.mubr.f32.gmra.mxu0 %v2454
      %v5683 = vpop.f32.mrf.mxu0
      %v5684 = vadd.f32 0.0, %v5683
      %v5685 = vpop.f32.mrf.mxu0
      %5686 = vmatprep.mubr.f32.mxu0 0.0
      %5687 = vmatmul.mubr.f32.gmra.mxu0 %v2457
      %v5688 = vpop.f32.mrf.mxu0
      %v5689 = vadd.f32 0.0, %v5688
      %v5690 = vpop.f32.mrf.mxu0
      %5691 = vmatprep.mubr.f32.mxu0 0.0
      %5692 = vmatmul.mubr.f32.gmra.mxu0 %v2460
      %v5693 = vpop.f32.mrf.mxu0
      %v5694 = vadd.f32 0.0, %v5693
      %v5695 = vpop.f32.mrf.mxu0
      %5696 = vmatprep.mubr.f32.mxu0 0.0
      %5697 = vmatmul.mubr.f32.gmra.mxu0 %v2463
      %v5698 = vpop.f32.mrf.mxu0
      %v5699 = vadd.f32 0.0, %v5698
      %v5700 = vpop.f32.mrf.mxu0
      %5701 = vmatprep.mubr.f32.mxu0 0.0
      %5702 = vmatmul.mubr.f32.gmra.mxu0 %v3173
      %v5703 = vpop.f32.mrf.mxu0
      %v5704 = vadd.f32 0.0, %v5703
      %v5705 = vpop.f32.mrf.mxu0
      %5706 = vmatprep.mubr.f32.mxu0 0.0
      %5707 = vmatmul.mubr.f32.gmra.mxu0 %v3777
      %v5708 = vpop.f32.mrf.mxu0
      %v5709 = vadd.f32 0.0, %v5708
      %v5710 = vpop.f32.mrf.mxu0
      %5711 = vmatprep.mubr.f32.mxu0 0.0
      %5712 = vmatmul.mubr.f32.gmra.mxu0 %v2472
      %v5713 = vpop.f32.mrf.mxu0
      %v5714 = vadd.f32 0.0, %v5713
      %v5715 = vpop.f32.mrf.mxu0
      %5716 = vmatprep.mubr.f32.mxu0 0.0
      %5717 = vmatmul.mubr.f32.gmra.mxu0 %v2475
      %v5718 = vpop.f32.mrf.mxu0
      %v5719 = vadd.f32 0.0, %v5718
      %v5720 = vpop.f32.mrf.mxu0
      %5721 = vmatprep.mubr.f32.mxu0 0.0
      %5722 = vmatmul.mubr.f32.gmra.mxu0 %v2478
      %v5723 = vpop.f32.mrf.mxu0
      %v5724 = vadd.f32 0.0, %v5723
      %v5725 = vpop.f32.mrf.mxu0
      %5726 = vmatprep.mubr.f32.mxu0 0.0
      %5727 = vmatmul.mubr.f32.gmra.mxu0 %v2481
      %v5728 = vpop.f32.mrf.mxu0
      %v5729 = vadd.f32 0.0, %v5728
      %v5730 = vpop.f32.mrf.mxu0
      %5731 = vmatprep.mubr.f32.mxu0 0.0
      %5732 = vmatmul.mubr.f32.gmra.mxu0 %v2484
      %v5733 = vpop.f32.mrf.mxu0
      %v5734 = vadd.f32 0.0, %v5733
      %v5735 = vpop.f32.mrf.mxu0
      %5736 = vmatprep.mubr.f32.mxu0 0.0
      %5737 = vmatmul.mubr.f32.gmra.mxu0 %v2487
      %v5738 = vpop.f32.mrf.mxu0
      %v5739 = vadd.f32 0.0, %v5738
      %v5740 = vpop.f32.mrf.mxu0
      %5741 = vmatprep.mubr.f32.mxu0 0.0
      %5742 = vmatmul.mubr.f32.gmra.mxu0 %v3176
      %v5743 = vpop.f32.mrf.mxu0
      %v5744 = vadd.f32 0.0, %v5743
      %v5745 = vpop.f32.mrf.mxu0
      %5746 = vmatprep.mubr.f32.mxu0 0.0
      %5747 = vmatmul.mubr.f32.gmra.mxu0 %v3780
      %v5748 = vpop.f32.mrf.mxu0
      %v5749 = vadd.f32 0.0, %v5748
      %v5750 = vpop.f32.mrf.mxu0
      %5751 = vmatprep.mubr.f32.mxu0 0.0
      %5752 = vmatmul.mubr.f32.gmra.mxu0 %v2496
      %v5753 = vpop.f32.mrf.mxu0
      %v5754 = vadd.f32 0.0, %v5753
      %v5755 = vpop.f32.mrf.mxu0
      %5756 = vmatprep.mubr.f32.mxu0 0.0
      %5757 = vmatmul.mubr.f32.gmra.mxu0 %v2499
      %v5758 = vpop.f32.mrf.mxu0
      %v5759 = vadd.f32 0.0, %v5758
      %v5760 = vpop.f32.mrf.mxu0
      %5761 = vmatprep.mubr.f32.mxu0 0.0
      %5762 = vmatmul.mubr.f32.gmra.mxu0 %v2502
      %v5763 = vpop.f32.mrf.mxu0
      %v5764 = vadd.f32 0.0, %v5763
      %v5765 = vpop.f32.mrf.mxu0
      %5766 = vmatprep.mubr.f32.mxu0 0.0
      %5767 = vmatmul.mubr.f32.gmra.mxu0 %v2505
      %v5768 = vpop.f32.mrf.mxu0
      %v5769 = vadd.f32 0.0, %v5768
      %v5770 = vpop.f32.mrf.mxu0
      %5771 = vmatprep.mubr.f32.mxu0 0.0
      %5772 = vmatmul.mubr.f32.gmra.mxu0 %v2508
      %v5773 = vpop.f32.mrf.mxu0
      %v5774 = vadd.f32 0.0, %v5773
      %v5775 = vpop.f32.mrf.mxu0
      %5776 = vmatprep.mubr.f32.mxu0 0.0
      %5777 = vmatmul.mubr.f32.gmra.mxu0 %v2511
      %v5778 = vpop.f32.mrf.mxu0
      %v5779 = vadd.f32 0.0, %v5778
      %v5780 = vpop.f32.mrf.mxu0
      %5781 = vmatprep.mubr.f32.mxu0 0.0
      %5782 = vmatmul.mubr.f32.gmra.mxu0 %v3179
      %v5783 = vpop.f32.mrf.mxu0
      %v5784 = vadd.f32 0.0, %v5783
      %v5785 = vpop.f32.mrf.mxu0
      %5786 = vmatprep.mubr.f32.mxu0 0.0
      %5787 = vmatmul.mubr.f32.gmra.mxu0 %v3783
      %v5788 = vpop.f32.mrf.mxu0
      %v5789 = vadd.f32 0.0, %v5788
      %v5790 = vpop.f32.mrf.mxu0
      %5791 = vmatprep.mubr.f32.mxu0 0.0
      %5792 = vmatmul.mubr.f32.gmra.mxu0 %v2520
      %v5793 = vpop.f32.mrf.mxu0
      %v5794 = vadd.f32 0.0, %v5793
      %v5795 = vpop.f32.mrf.mxu0
      %5796 = vmatprep.mubr.f32.mxu0 0.0
      %5797 = vmatmul.mubr.f32.gmra.mxu0 %v2523
      %v5798 = vpop.f32.mrf.mxu0
      %v5799 = vadd.f32 0.0, %v5798
      %v5800 = vpop.f32.mrf.mxu0
      %5801 = vmatprep.mubr.f32.mxu0 0.0
      %5802 = vmatmul.mubr.f32.gmra.mxu0 %v2526
      %v5803 = vpop.f32.mrf.mxu0
      %v5804 = vadd.f32 0.0, %v5803
      %v5805 = vpop.f32.mrf.mxu0
      %5806 = vmatprep.mubr.f32.mxu0 0.0
      %5807 = vmatmul.mubr.f32.gmra.mxu0 %v2529
      %v5808 = vpop.f32.mrf.mxu0
      %v5809 = vadd.f32 0.0, %v5808
      %v5810 = vpop.f32.mrf.mxu0
      %5811 = vmatprep.mubr.f32.mxu0 0.0
      %5812 = vmatmul.mubr.f32.gmra.mxu0 %v2532
      %v5813 = vpop.f32.mrf.mxu0
      %v5814 = vadd.f32 0.0, %v5813
      %v5815 = vpop.f32.mrf.mxu0
      %5816 = vmatprep.mubr.f32.mxu0 0.0
      %5817 = vmatmul.mubr.f32.gmra.mxu0 %v2535
      %v5818 = vpop.f32.mrf.mxu0
      %v5819 = vadd.f32 0.0, %v5818
      %v5820 = vpop.f32.mrf.mxu0
      %5821 = vmatprep.mubr.f32.mxu0 0.0
      %5822 = vmatmul.mubr.f32.gmra.mxu0 %v3182
      %v5823 = vpop.f32.mrf.mxu0
      %v5824 = vadd.f32 0.0, %v5823
      %v5825 = vpop.f32.mrf.mxu0
      %5826 = vmatprep.mubr.f32.mxu0 0.0
      %5827 = vmatmul.mubr.f32.gmra.mxu0 %v3786
      %v5828 = vpop.f32.mrf.mxu0
      %v5829 = vadd.f32 0.0, %v5828
      %v5830 = vpop.f32.mrf.mxu0
      %5831 = vmatprep.mubr.f32.mxu0 0.0
      %5832 = vmatmul.mubr.f32.gmra.mxu0 %v2544
      %v5833 = vpop.f32.mrf.mxu0
      %v5834 = vadd.f32 0.0, %v5833
      %v5835 = vpop.f32.mrf.mxu0
      %5836 = vmatprep.mubr.f32.mxu0 0.0
      %5837 = vmatmul.mubr.f32.gmra.mxu0 %v2547
      %v5838 = vpop.f32.mrf.mxu0
      %v5839 = vadd.f32 0.0, %v5838
      %v5840 = vpop.f32.mrf.mxu0
      %5841 = vmatprep.mubr.f32.mxu0 0.0
      %5842 = vmatmul.mubr.f32.gmra.mxu0 %v2550
      %v5843 = vpop.f32.mrf.mxu0
      %v5844 = vadd.f32 0.0, %v5843
      %v5845 = vpop.f32.mrf.mxu0
      %5846 = vmatprep.mubr.f32.mxu0 0.0
      %5847 = vmatmul.mubr.f32.gmra.mxu0 %v2553
      %v5848 = vpop.f32.mrf.mxu0
      %v5849 = vadd.f32 0.0, %v5848
      %v5850 = vpop.f32.mrf.mxu0
      %5851 = vmatprep.mubr.f32.mxu0 0.0
      %5852 = vmatmul.mubr.f32.gmra.mxu0 %v2556
      %v5853 = vpop.f32.mrf.mxu0
      %v5854 = vadd.f32 0.0, %v5853
      %v5855 = vpop.f32.mrf.mxu0
      %5856 = vmatprep.mubr.f32.mxu0 0.0
      %5857 = vmatmul.mubr.f32.gmra.mxu0 %v2559
      %v5858 = vpop.f32.mrf.mxu0
      %v5859 = vadd.f32 0.0, %v5858
      %v5860 = vpop.f32.mrf.mxu0
      %5861 = vmatprep.mubr.f32.mxu0 0.0
      %5862 = vmatmul.mubr.f32.gmra.mxu0 %v3185
      %v5863 = vpop.f32.mrf.mxu0
      %v5864 = vadd.f32 0.0, %v5863
      %v5865 = vpop.f32.mrf.mxu0
      %5866 = vmatprep.mubr.f32.mxu0 0.0
      %5867 = vmatmul.mubr.f32.gmra.mxu0 %v3789
      %v5868 = vpop.f32.mrf.mxu0
      %v5869 = vadd.f32 0.0, %v5868
      %v5870 = vpop.f32.mrf.mxu0
      %5871 = vmatprep.mubr.f32.mxu0 0.0
      %5872 = vmatmul.mubr.f32.gmra.mxu0 %v2568
      %v5873 = vpop.f32.mrf.mxu0
      %v5874 = vadd.f32 0.0, %v5873
      %v5875 = vpop.f32.mrf.mxu0
      %5876 = vmatprep.mubr.f32.mxu0 0.0
      %5877 = vmatmul.mubr.f32.gmra.mxu0 %v2571
      %v5878 = vpop.f32.mrf.mxu0
      %v5879 = vadd.f32 0.0, %v5878
      %v5880 = vpop.f32.mrf.mxu0
      %5881 = vmatprep.mubr.f32.mxu0 0.0
      %5882 = vmatmul.mubr.f32.gmra.mxu0 %v2574
      %v5883 = vpop.f32.mrf.mxu0
      %v5884 = vadd.f32 0.0, %v5883
      %v5885 = vpop.f32.mrf.mxu0
      %5886 = vmatprep.mubr.f32.mxu0 0.0
      %5887 = vmatmul.mubr.f32.gmra.mxu0 %v2577
      %v5888 = vpop.f32.mrf.mxu0
      %v5889 = vadd.f32 0.0, %v5888
      %v5890 = vpop.f32.mrf.mxu0
      %5891 = vmatprep.mubr.f32.mxu0 0.0
      %5892 = vmatmul.mubr.f32.gmra.mxu0 %v2580
      %v5893 = vpop.f32.mrf.mxu0
      %v5894 = vadd.f32 0.0, %v5893
      %v5895 = vpop.f32.mrf.mxu0
      %5896 = vmatprep.mubr.f32.mxu0 0.0
      %5897 = vmatmul.mubr.f32.gmra.mxu0 %v2583
      %v5898 = vpop.f32.mrf.mxu0
      %v5899 = vadd.f32 0.0, %v5898
      %v5900 = vpop.f32.mrf.mxu0
      %5901 = vmatprep.mubr.f32.mxu0 0.0
      %5902 = vmatmul.mubr.f32.gmra.mxu0 %v3188
      %v5903 = vpop.f32.mrf.mxu0
      %v5904 = vadd.f32 0.0, %v5903
      %v5905 = vpop.f32.mrf.mxu0
      %5906 = vmatprep.mubr.f32.mxu0 0.0
      %5907 = vmatmul.mubr.f32.gmra.mxu0 %v3792
      %v5908 = vpop.f32.mrf.mxu0
      %v5909 = vadd.f32 0.0, %v5908
      %v5910 = vpop.f32.mrf.mxu0
      %5911 = vmatprep.mubr.f32.mxu0 0.0
      %5912 = vmatmul.mubr.f32.gmra.mxu0 %v4381
      %v5913 = vpop.f32.mrf.mxu0
      %v5914 = vadd.f32 0.0, %v5913
      %v5915 = vpop.f32.mrf.mxu0
      %5916 = vmatprep.mubr.f32.mxu0 0.0
      %5917 = vmatmul.mubr.f32.gmra.mxu0 %v4384
      %v5918 = vpop.f32.mrf.mxu0
      %v5919 = vadd.f32 0.0, %v5918
      %v5920 = vpop.f32.mrf.mxu0
      %5921 = vmatprep.mubr.f32.mxu0 0.0
      %5922 = vmatmul.mubr.f32.gmra.mxu0 %v4387
      %v5923 = vpop.f32.mrf.mxu0
      %v5924 = vadd.f32 0.0, %v5923
      %v5925 = vpop.f32.mrf.mxu0
      %5926 = vmatprep.mubr.f32.mxu0 0.0
      %5927 = vmatmul.mubr.f32.gmra.mxu0 %v4390
      %v5928 = vpop.f32.mrf.mxu0
      %v5929 = vadd.f32 0.0, %v5928
      %v5930 = vpop.f32.mrf.mxu0
      %5931 = vmatprep.mubr.f32.mxu0 0.0
      %5932 = vmatmul.mubr.f32.gmra.mxu0 %v4393
      %v5933 = vpop.f32.mrf.mxu0
      %v5934 = vadd.f32 0.0, %v5933
      %v5935 = vpop.f32.mrf.mxu0
      %5936 = vmatprep.mubr.f32.mxu0 0.0
      %5937 = vmatmul.mubr.f32.gmra.mxu0 %v4396
      %v5938 = vpop.f32.mrf.mxu0
      %v5939 = vadd.f32 0.0, %v5938
      %v5940 = vpop.f32.mrf.mxu0
      %5941 = vmatprep.mubr.f32.mxu0 0.0
      %5942 = vmatmul.mubr.f32.gmra.mxu0 %v4979
      %v5943 = vpop.f32.mrf.mxu0
      %v5944 = vadd.f32 0.0, %v5943
      %v5945 = vpop.f32.mrf.mxu0
      %5946 = vmatprep.mubr.f32.mxu0 0.0
      %5947 = vmatmul.mubr.f32.gmra.mxu0 %v5562
      %v5948 = vpop.f32.mrf.mxu0
      %v5949 = vadd.f32 0.0, %v5948
      %v5950 = vpop.f32.mrf.mxu0
      %5951 = vdwg.mxu0
      %v5952 = vadd.f32 %v5497, %v5634
      %v5953 = vadd.f32 %v5498, %v5639
      %v5954 = vadd.f32 %v5499, %v5644
      %v5955 = vadd.f32 %v5500, %v5649
      %v5956 = vadd.f32 %v5501, %v5654
      %v5957 = vadd.f32 %v5502, %v5659
      %v5958 = vadd.f32 %v5503, %v5664
      %v5959 = vadd.f32 %v5504, %v5669
      %v5960 = vadd.f32 %v5505, %v5674
      %v5961 = vadd.f32 %v5506, %v5679
      %v5962 = vadd.f32 %v5507, %v5684
      %v5963 = vadd.f32 %v5508, %v5689
      %v5964 = vadd.f32 %v5509, %v5694
      %v5965 = vadd.f32 %v5510, %v5699
      %v5966 = vadd.f32 %v5511, %v5704
      %v5967 = vadd.f32 %v5512, %v5709
      %v5968 = vadd.f32 %v5513, %v5714
      %v5969 = vadd.f32 %v5514, %v5719
      %v5970 = vadd.f32 %v5515, %v5724
      %v5971 = vadd.f32 %v5516, %v5729
      %v5972 = vadd.f32 %v5517, %v5734
      %v5973 = vadd.f32 %v5518, %v5739
      %v5974 = vadd.f32 %v5519, %v5744
      %v5975 = vadd.f32 %v5520, %v5749
      %v5976 = vadd.f32 %v5521, %v5754
      %v5977 = vadd.f32 %v5522, %v5759
      %v5978 = vadd.f32 %v5523, %v5764
      %v5979 = vadd.f32 %v5524, %v5769
      %v5980 = vadd.f32 %v5525, %v5774
      %v5981 = vadd.f32 %v5526, %v5779
      %v5982 = vadd.f32 %v5527, %v5784
      %v5983 = vadd.f32 %v5528, %v5789
      %v5984 = vadd.f32 %v5529, %v5794
      %v5985 = vadd.f32 %v5530, %v5799
      %v5986 = vadd.f32 %v5531, %v5804
      %v5987 = vadd.f32 %v5532, %v5809
      %v5988 = vadd.f32 %v5533, %v5814
      %v5989 = vadd.f32 %v5534, %v5819
      %v5990 = vadd.f32 %v5535, %v5824
      %v5991 = vadd.f32 %v5536, %v5829
      %v5992 = vadd.f32 %v5537, %v5834
      %v5993 = vadd.f32 %v5538, %v5839
      %v5994 = vadd.f32 %v5539, %v5844
      %v5995 = vadd.f32 %v5540, %v5849
      %v5996 = vadd.f32 %v5541, %v5854
      %v5997 = vadd.f32 %v5542, %v5859
      %v5998 = vadd.f32 %v5543, %v5864
      %v5999 = vadd.f32 %v5544, %v5869
      %v6000 = vadd.f32 %v5545, %v5874
      %v6001 = vadd.f32 %v5546, %v5879
      %v6002 = vadd.f32 %v5547, %v5884
      %v6003 = vadd.f32 %v5548, %v5889
      %v6004 = vadd.f32 %v5549, %v5894
      %v6005 = vadd.f32 %v5550, %v5899
      %v6006 = vadd.f32 %v5551, %v5904
      %v6007 = vadd.f32 %v5552, %v5909
      %v6008 = vadd.f32 %v5553, %v5914
      %v6009 = vadd.f32 %v5554, %v5919
      %v6010 = vadd.f32 %v5555, %v5924
      %v6011 = vadd.f32 %v5556, %v5929
      %v6012 = vadd.f32 %v5557, %v5934
      %v6013 = vadd.f32 %v5558, %v5939
      %v6014 = vadd.f32 %v5559, %v5944
      %v6015 = vadd.f32 %v5560, %v5949
      %6016 = vst.msk [vmem:[#allocation2] sm:$0xff] %vm2127, %v5952
      %6017 = vst.msk [vmem:[#allocation2 + $0x8] sm:$0xff] %vm2127, %v5953
      %6018 = vst.msk [vmem:[#allocation2 + $0x10] sm:$0xff] %vm2127, %v5954
      %6019 = vst.msk [vmem:[#allocation2 + $0x18] sm:$0xff] %vm2127, %v5955
      %6020 = vst.msk [vmem:[#allocation2 + $0x20] sm:$0xff] %vm2127, %v5956
      %6021 = vst.msk [vmem:[#allocation2 + $0x28] sm:$0xff] %vm2127, %v5957
      %6022 = vst.msk [vmem:[#allocation2 + $0x30] sm:$0xff] %vm2127, %v5958
      %6023 = vst.msk [vmem:[#allocation2 + $0x38] sm:$0xff] %vm2127, %v5959
      %6024 = vst.msk [vmem:[#allocation2 + $0x40] sm:$0xff] %vm2127, %v5960
      %6025 = vst.msk [vmem:[#allocation2 + $0x48] sm:$0xff] %vm2127, %v5961
      %6026 = vst.msk [vmem:[#allocation2 + $0x50] sm:$0xff] %vm2127, %v5962
      %6027 = vst.msk [vmem:[#allocation2 + $0x58] sm:$0xff] %vm2127, %v5963
      %6028 = vst.msk [vmem:[#allocation2 + $0x60] sm:$0xff] %vm2127, %v5964
      %6029 = vst.msk [vmem:[#allocation2 + $0x68] sm:$0xff] %vm2127, %v5965
      %6030 = vst.msk [vmem:[#allocation2 + $0x70] sm:$0xff] %vm2127, %v5966
      %6031 = vst.msk [vmem:[#allocation2 + $0x78] sm:$0xff] %vm2127, %v5967
      %6032 = vst.msk [vmem:[#allocation2 + $0x80] sm:$0xff] %vm2127, %v5968
      %6033 = vst.msk [vmem:[#allocation2 + $0x88] sm:$0xff] %vm2127, %v5969
      %6034 = vst.msk [vmem:[#allocation2 + $0x90] sm:$0xff] %vm2127, %v5970
      %6035 = vst.msk [vmem:[#allocation2 + $0x98] sm:$0xff] %vm2127, %v5971
      %6036 = vst.msk [vmem:[#allocation2 + $0xa0] sm:$0xff] %vm2127, %v5972
      %6037 = vst.msk [vmem:[#allocation2 + $0xa8] sm:$0xff] %vm2127, %v5973
      %6038 = vst.msk [vmem:[#allocation2 + $0xb0] sm:$0xff] %vm2127, %v5974
      %6039 = vst.msk [vmem:[#allocation2 + $0xb8] sm:$0xff] %vm2127, %v5975
      %6040 = vst.msk [vmem:[#allocation2 + $0xc0] sm:$0xff] %vm2127, %v5976
      %6041 = vst.msk [vmem:[#allocation2 + $0xc8] sm:$0xff] %vm2127, %v5977
      %6042 = vst.msk [vmem:[#allocation2 + $0xd0] sm:$0xff] %vm2127, %v5978
      %6043 = vst.msk [vmem:[#allocation2 + $0xd8] sm:$0xff] %vm2127, %v5979
      %6044 = vst.msk [vmem:[#allocation2 + $0xe0] sm:$0xff] %vm2127, %v5980
      %6045 = vst.msk [vmem:[#allocation2 + $0xe8] sm:$0xff] %vm2127, %v5981
      %6046 = vst.msk [vmem:[#allocation2 + $0xf0] sm:$0xff] %vm2127, %v5982
      %6047 = vst.msk [vmem:[#allocation2 + $0xf8] sm:$0xff] %vm2127, %v5983
      %6048 = vst.msk [vmem:[#allocation2 + $0x100] sm:$0xff] %vm2127, %v5984
      %6049 = vst.msk [vmem:[#allocation2 + $0x108] sm:$0xff] %vm2127, %v5985
      %6050 = vst.msk [vmem:[#allocation2 + $0x110] sm:$0xff] %vm2127, %v5986
      %6051 = vst.msk [vmem:[#allocation2 + $0x118] sm:$0xff] %vm2127, %v5987
      %6052 = vst.msk [vmem:[#allocation2 + $0x120] sm:$0xff] %vm2127, %v5988
      %6053 = vst.msk [vmem:[#allocation2 + $0x128] sm:$0xff] %vm2127, %v5989
      %6054 = vst.msk [vmem:[#allocation2 + $0x130] sm:$0xff] %vm2127, %v5990
      %6055 = vst.msk [vmem:[#allocation2 + $0x138] sm:$0xff] %vm2127, %v5991
      %6056 = vst.msk [vmem:[#allocation2 + $0x140] sm:$0xff] %vm2127, %v5992
      %6057 = vst.msk [vmem:[#allocation2 + $0x148] sm:$0xff] %vm2127, %v5993
      %6058 = vst.msk [vmem:[#allocation2 + $0x150] sm:$0xff] %vm2127, %v5994
      %6059 = vst.msk [vmem:[#allocation2 + $0x158] sm:$0xff] %vm2127, %v5995
      %6060 = vst.msk [vmem:[#allocation2 + $0x160] sm:$0xff] %vm2127, %v5996
      %6061 = vst.msk [vmem:[#allocation2 + $0x168] sm:$0xff] %vm2127, %v5997
      %6062 = vst.msk [vmem:[#allocation2 + $0x170] sm:$0xff] %vm2127, %v5998
      %6063 = vst.msk [vmem:[#allocation2 + $0x178] sm:$0xff] %vm2127, %v5999
      %6064 = vst.msk [vmem:[#allocation2 + $0x180] sm:$0xff] %vm2127, %v6000
      %6065 = vst.msk [vmem:[#allocation2 + $0x188] sm:$0xff] %vm2127, %v6001
      %6066 = vst.msk [vmem:[#allocation2 + $0x190] sm:$0xff] %vm2127, %v6002
      %6067 = vst.msk [vmem:[#allocation2 + $0x198] sm:$0xff] %vm2127, %v6003
      %6068 = vst.msk [vmem:[#allocation2 + $0x1a0] sm:$0xff] %vm2127, %v6004
      %6069 = vst.msk [vmem:[#allocation2 + $0x1a8] sm:$0xff] %vm2127, %v6005
      %6070 = vst.msk [vmem:[#allocation2 + $0x1b0] sm:$0xff] %vm2127, %v6006
      %6071 = vst.msk [vmem:[#allocation2 + $0x1b8] sm:$0xff] %vm2127, %v6007
      %6072 = vst.msk [vmem:[#allocation2 + $0x1c0] sm:$0xff] %vm2127, %v6008
      %6073 = vst.msk [vmem:[#allocation2 + $0x1c8] sm:$0xff] %vm2127, %v6009
      %6074 = vst.msk [vmem:[#allocation2 + $0x1d0] sm:$0xff] %vm2127, %v6010
      %6075 = vst.msk [vmem:[#allocation2 + $0x1d8] sm:$0xff] %vm2127, %v6011
      %6076 = vst.msk [vmem:[#allocation2 + $0x1e0] sm:$0xff] %vm2127, %v6012
      %6077 = vst.msk [vmem:[#allocation2 + $0x1e8] sm:$0xff] %vm2127, %v6013
      %6078 = vst.msk [vmem:[#allocation2 + $0x1f0] sm:$0xff] %vm2127, %v6014
      %6079 = vst.msk [vmem:[#allocation2 + $0x1f8] sm:$0xff] %vm2127, %v6015
      %v6080 = vld [vmem:[#allocation2] sm:$0xff]
      %v6081 = vld [vmem:[#allocation2 + $0x8] sm:$0xff]
      %v6082 = vld [vmem:[#allocation2 + $0x10] sm:$0xff]
      %v6083 = vld [vmem:[#allocation2 + $0x18] sm:$0xff]
      %v6084 = vld [vmem:[#allocation2 + $0x20] sm:$0xff]
      %v6085 = vld [vmem:[#allocation2 + $0x28] sm:$0xff]
      %v6086 = vld [vmem:[#allocation2 + $0x30] sm:$0xff]
      %v6087 = vld [vmem:[#allocation2 + $0x38] sm:$0xff]
      %v6088 = vld [vmem:[#allocation2 + $0x40] sm:$0xff]
      %v6089 = vld [vmem:[#allocation2 + $0x48] sm:$0xff]
      %v6090 = vld [vmem:[#allocation2 + $0x50] sm:$0xff]
      %v6091 = vld [vmem:[#allocation2 + $0x58] sm:$0xff]
      %v6092 = vld [vmem:[#allocation2 + $0x60] sm:$0xff]
      %v6093 = vld [vmem:[#allocation2 + $0x68] sm:$0xff]
      %v6094 = vld [vmem:[#allocation2 + $0x70] sm:$0xff]
      %v6095 = vld [vmem:[#allocation2 + $0x78] sm:$0xff]
      %v6096 = vld [vmem:[#allocation2 + $0x80] sm:$0xff]
      %v6097 = vld [vmem:[#allocation2 + $0x88] sm:$0xff]
      %v6098 = vld [vmem:[#allocation2 + $0x90] sm:$0xff]
      %v6099 = vld [vmem:[#allocation2 + $0x98] sm:$0xff]
      %v6100 = vld [vmem:[#allocation2 + $0xa0] sm:$0xff]
      %v6101 = vld [vmem:[#allocation2 + $0xa8] sm:$0xff]
      %v6102 = vld [vmem:[#allocation2 + $0xb0] sm:$0xff]
      %v6103 = vld [vmem:[#allocation2 + $0xb8] sm:$0xff]
      %v6104 = vld [vmem:[#allocation2 + $0xc0] sm:$0xff]
      %v6105 = vld [vmem:[#allocation2 + $0xc8] sm:$0xff]
      %v6106 = vld [vmem:[#allocation2 + $0xd0] sm:$0xff]
      %v6107 = vld [vmem:[#allocation2 + $0xd8] sm:$0xff]
      %v6108 = vld [vmem:[#allocation2 + $0xe0] sm:$0xff]
      %v6109 = vld [vmem:[#allocation2 + $0xe8] sm:$0xff]
      %v6110 = vld [vmem:[#allocation2 + $0xf0] sm:$0xff]
      %v6111 = vld [vmem:[#allocation2 + $0xf8] sm:$0xff]
      %v6112 = vld [vmem:[#allocation2 + $0x100] sm:$0xff]
      %v6113 = vld [vmem:[#allocation2 + $0x108] sm:$0xff]
      %v6114 = vld [vmem:[#allocation2 + $0x110] sm:$0xff]
      %v6115 = vld [vmem:[#allocation2 + $0x118] sm:$0xff]
      %v6116 = vld [vmem:[#allocation2 + $0x120] sm:$0xff]
      %v6117 = vld [vmem:[#allocation2 + $0x128] sm:$0xff]
      %v6118 = vld [vmem:[#allocation2 + $0x130] sm:$0xff]
      %v6119 = vld [vmem:[#allocation2 + $0x138] sm:$0xff]
      %v6120 = vld [vmem:[#allocation2 + $0x140] sm:$0xff]
      %v6121 = vld [vmem:[#allocation2 + $0x148] sm:$0xff]
      %v6122 = vld [vmem:[#allocation2 + $0x150] sm:$0xff]
      %v6123 = vld [vmem:[#allocation2 + $0x158] sm:$0xff]
      %v6124 = vld [vmem:[#allocation2 + $0x160] sm:$0xff]
      %v6125 = vld [vmem:[#allocation2 + $0x168] sm:$0xff]
      %v6126 = vld [vmem:[#allocation2 + $0x170] sm:$0xff]
      %v6127 = vld [vmem:[#allocation2 + $0x178] sm:$0xff]
      %v6128 = vld [vmem:[#allocation2 + $0x180] sm:$0xff]
      %v6129 = vld [vmem:[#allocation2 + $0x188] sm:$0xff]
      %v6130 = vld [vmem:[#allocation2 + $0x190] sm:$0xff]
      %v6131 = vld [vmem:[#allocation2 + $0x198] sm:$0xff]
      %v6132 = vld [vmem:[#allocation2 + $0x1a0] sm:$0xff]
      %v6133 = vld [vmem:[#allocation2 + $0x1a8] sm:$0xff]
      %v6134 = vld [vmem:[#allocation2 + $0x1b0] sm:$0xff]
      %v6135 = vld [vmem:[#allocation2 + $0x1b8] sm:$0xff]
      %v6136 = vld [vmem:[#allocation2 + $0x1c0] sm:$0xff]
      %v6137 = vld [vmem:[#allocation2 + $0x1c8] sm:$0xff]
      %v6138 = vld [vmem:[#allocation2 + $0x1d0] sm:$0xff]
      %v6139 = vld [vmem:[#allocation2 + $0x1d8] sm:$0xff]
      %v6140 = vld [vmem:[#allocation2 + $0x1e0] sm:$0xff]
      %v6141 = vld [vmem:[#allocation2 + $0x1e8] sm:$0xff]
      %v6142 = vld [vmem:[#allocation2 + $0x1f0] sm:$0xff]
      %v6143 = vld [vmem:[#allocation2 + $0x1f8] sm:$0xff]
      %v6145 = vsel %vm2392, %v2218, 0
      %v6148 = vsel %vm2392, %v2219, 0
      %v6151 = vsel %vm2392, %v2220, 0
      %v6154 = vsel %vm2392, %v2221, 0
      %v6157 = vsel %vm2392, %v2222, 0
      %v6160 = vsel %vm2392, %v2223, 0
      %v6163 = vsel %vm2392, %v2224, 0
      %v6166 = vsel %vm2392, %v2225, 0
      %v6169 = vsel %vm2585, %v2259, 0
      %6171 = vmatprep.subr.mxu0 0.0
      %6172 = vmatpush1.msra.mxu0 0.0
      %6173 = vmatprep.subr.mxu0 0.0
      %6174 = vmatpush1.msra.mxu0 0.0
      %6175 = vmatprep.subr.mxu0 0.0
      %6176 = vmatpush1.msra.mxu0 0.0
      %6177 = vmatprep.subr.mxu0 0.0
      %6178 = vmatpush1.msra.mxu0 0.0
      %6179 = vmatprep.subr.mxu0 0.0
      %6180 = vmatpush1.msra.mxu0 0.0
      %6181 = vmatprep.subr.mxu0 0.0
      %6182 = vmatpush1.msra.mxu0 0.0
      %6183 = vmatprep.subr.mxu0 0.0
      %6184 = vmatpush1.msra.mxu0 0.0
      %6185 = vmatprep.subr.mxu0 0.0
      %6186 = vmatpush1.msra.mxu0 0.0
      %6187 = vmatprep.subr.mxu0 0.0
      %6188 = vmatpush1.msra.mxu0 0.0
      %6189 = vmatprep.subr.mxu0 0.0
      %6190 = vmatpush1.msra.mxu0 0.0
      %6191 = vmatprep.subr.mxu0 0.0
      %6192 = vmatpush1.msra.mxu0 0.0
      %6193 = vmatprep.subr.mxu0 0.0
      %6194 = vmatpush1.msra.mxu0 0.0
      %6195 = vmatprep.subr.mxu0 0.0
      %6196 = vmatpush1.msra.mxu0 0.0
      %6197 = vmatprep.subr.mxu0 0.0
      %6198 = vmatpush1.msra.mxu0 0.0
      %6199 = vmatprep.subr.mxu0 0.0
      %6200 = vmatpush1.msra.mxu0 %v6169
      %6201 = vmatprep.subr.mxu0 0.0
      %6202 = vmatpush1.msra.mxu0 %v2258
      %6203 = vmatprep.subr.mxu0 0.0
      %6204 = vmatpush2.msra.mxu0 0.0
      %6205 = vmatprep.subr.mxu0 0.0
      %6206 = vmatpush2.msra.mxu0 0.0
      %6207 = vmatprep.subr.mxu0 0.0
      %6208 = vmatpush2.msra.mxu0 0.0
      %6209 = vmatprep.subr.mxu0 0.0
      %6210 = vmatpush2.msra.mxu0 0.0
      %6211 = vmatprep.subr.mxu0 0.0
      %6212 = vmatpush2.msra.mxu0 0.0
      %6213 = vmatprep.subr.mxu0 0.0
      %6214 = vmatpush2.msra.mxu0 0.0
      %6215 = vmatprep.subr.mxu0 0.0
      %6216 = vmatpush2.msra.mxu0 0.0
      %6217 = vmatprep.subr.mxu0 0.0
      %6218 = vmatpush2.msra.mxu0 0.0
      %6219 = vmatprep.subr.mxu0 0.0
      %6220 = vmatpush2.msra.mxu0 0.0
      %6221 = vmatprep.subr.mxu0 0.0
      %6222 = vmatpush2.msra.mxu0 0.0
      %6223 = vmatprep.subr.mxu0 0.0
      %6224 = vmatpush2.msra.mxu0 0.0
      %6225 = vmatprep.subr.mxu0 0.0
      %6226 = vmatpush2.msra.mxu0 0.0
      %6227 = vmatprep.subr.mxu0 0.0
      %6228 = vmatpush2.msra.mxu0 0.0
      %6229 = vmatprep.subr.mxu0 0.0
      %6230 = vmatpush2.msra.mxu0 0.0
      %6231 = vmatprep.subr.mxu0 0.0
      %6232 = vmatpush2.msra.mxu0 0.0
      %6233 = vmatprep.subr.mxu0 0.0
      %6234 = vmatpush2.msra.mxu0 0.0
      %6235 = vmatprep.mubr.f32.mxu0 0.0
      %6236 = vmatmul.mubr.f32.gmra.mxu0 %v2442
      %v6237 = vpop.f32.mrf.mxu0
      %v6238 = vadd.f32 0.0, %v6237
      %v6239 = vpop.f32.mrf.mxu0
      %6240 = vmatprep.mubr.f32.mxu0 0.0
      %6241 = vmatmul.mubr.f32.gmra.mxu0 %v2445
      %v6242 = vpop.f32.mrf.mxu0
      %v6243 = vadd.f32 0.0, %v6242
      %v6244 = vpop.f32.mrf.mxu0
      %6245 = vmatprep.mubr.f32.mxu0 0.0
      %6246 = vmatmul.mubr.f32.gmra.mxu0 %v2448
      %v6247 = vpop.f32.mrf.mxu0
      %v6248 = vadd.f32 0.0, %v6247
      %v6249 = vpop.f32.mrf.mxu0
      %6250 = vmatprep.mubr.f32.mxu0 0.0
      %6251 = vmatmul.mubr.f32.gmra.mxu0 %v2451
      %v6252 = vpop.f32.mrf.mxu0
      %v6253 = vadd.f32 0.0, %v6252
      %v6254 = vpop.f32.mrf.mxu0
      %6255 = vmatprep.mubr.f32.mxu0 0.0
      %6256 = vmatmul.mubr.f32.gmra.mxu0 %v2454
      %v6257 = vpop.f32.mrf.mxu0
      %v6258 = vadd.f32 0.0, %v6257
      %v6259 = vpop.f32.mrf.mxu0
      %6260 = vmatprep.mubr.f32.mxu0 0.0
      %6261 = vmatmul.mubr.f32.gmra.mxu0 %v2457
      %v6262 = vpop.f32.mrf.mxu0
      %v6263 = vadd.f32 0.0, %v6262
      %v6264 = vpop.f32.mrf.mxu0
      %6265 = vmatprep.mubr.f32.mxu0 0.0
      %6266 = vmatmul.mubr.f32.gmra.mxu0 %v2460
      %v6267 = vpop.f32.mrf.mxu0
      %v6268 = vadd.f32 0.0, %v6267
      %v6269 = vpop.f32.mrf.mxu0
      %6270 = vmatprep.mubr.f32.mxu0 0.0
      %6271 = vmatmul.mubr.f32.gmra.mxu0 %v2463
      %v6272 = vpop.f32.mrf.mxu0
      %v6273 = vadd.f32 0.0, %v6272
      %v6274 = vpop.f32.mrf.mxu0
      %6275 = vmatprep.mubr.f32.mxu0 0.0
      %6276 = vmatmul.mubr.f32.gmra.mxu0 %v2466
      %v6277 = vpop.f32.mrf.mxu0
      %v6278 = vadd.f32 0.0, %v6277
      %v6279 = vpop.f32.mrf.mxu0
      %6280 = vmatprep.mubr.f32.mxu0 0.0
      %6281 = vmatmul.mubr.f32.gmra.mxu0 %v2469
      %v6282 = vpop.f32.mrf.mxu0
      %v6283 = vadd.f32 0.0, %v6282
      %v6284 = vpop.f32.mrf.mxu0
      %6285 = vmatprep.mubr.f32.mxu0 0.0
      %6286 = vmatmul.mubr.f32.gmra.mxu0 %v2472
      %v6287 = vpop.f32.mrf.mxu0
      %v6288 = vadd.f32 0.0, %v6287
      %v6289 = vpop.f32.mrf.mxu0
      %6290 = vmatprep.mubr.f32.mxu0 0.0
      %6291 = vmatmul.mubr.f32.gmra.mxu0 %v2475
      %v6292 = vpop.f32.mrf.mxu0
      %v6293 = vadd.f32 0.0, %v6292
      %v6294 = vpop.f32.mrf.mxu0
      %6295 = vmatprep.mubr.f32.mxu0 0.0
      %6296 = vmatmul.mubr.f32.gmra.mxu0 %v2478
      %v6297 = vpop.f32.mrf.mxu0
      %v6298 = vadd.f32 0.0, %v6297
      %v6299 = vpop.f32.mrf.mxu0
      %6300 = vmatprep.mubr.f32.mxu0 0.0
      %6301 = vmatmul.mubr.f32.gmra.mxu0 %v2481
      %v6302 = vpop.f32.mrf.mxu0
      %v6303 = vadd.f32 0.0, %v6302
      %v6304 = vpop.f32.mrf.mxu0
      %6305 = vmatprep.mubr.f32.mxu0 0.0
      %6306 = vmatmul.mubr.f32.gmra.mxu0 %v2484
      %v6307 = vpop.f32.mrf.mxu0
      %v6308 = vadd.f32 0.0, %v6307
      %v6309 = vpop.f32.mrf.mxu0
      %6310 = vmatprep.mubr.f32.mxu0 0.0
      %6311 = vmatmul.mubr.f32.gmra.mxu0 %v2487
      %v6312 = vpop.f32.mrf.mxu0
      %v6313 = vadd.f32 0.0, %v6312
      %v6314 = vpop.f32.mrf.mxu0
      %6315 = vmatprep.mubr.f32.mxu0 0.0
      %6316 = vmatmul.mubr.f32.gmra.mxu0 %v2490
      %v6317 = vpop.f32.mrf.mxu0
      %v6318 = vadd.f32 0.0, %v6317
      %v6319 = vpop.f32.mrf.mxu0
      %6320 = vmatprep.mubr.f32.mxu0 0.0
      %6321 = vmatmul.mubr.f32.gmra.mxu0 %v2493
      %v6322 = vpop.f32.mrf.mxu0
      %v6323 = vadd.f32 0.0, %v6322
      %v6324 = vpop.f32.mrf.mxu0
      %6325 = vmatprep.mubr.f32.mxu0 0.0
      %6326 = vmatmul.mubr.f32.gmra.mxu0 %v2496
      %v6327 = vpop.f32.mrf.mxu0
      %v6328 = vadd.f32 0.0, %v6327
      %v6329 = vpop.f32.mrf.mxu0
      %6330 = vmatprep.mubr.f32.mxu0 0.0
      %6331 = vmatmul.mubr.f32.gmra.mxu0 %v2499
      %v6332 = vpop.f32.mrf.mxu0
      %v6333 = vadd.f32 0.0, %v6332
      %v6334 = vpop.f32.mrf.mxu0
      %6335 = vmatprep.mubr.f32.mxu0 0.0
      %6336 = vmatmul.mubr.f32.gmra.mxu0 %v2502
      %v6337 = vpop.f32.mrf.mxu0
      %v6338 = vadd.f32 0.0, %v6337
      %v6339 = vpop.f32.mrf.mxu0
      %6340 = vmatprep.mubr.f32.mxu0 0.0
      %6341 = vmatmul.mubr.f32.gmra.mxu0 %v2505
      %v6342 = vpop.f32.mrf.mxu0
      %v6343 = vadd.f32 0.0, %v6342
      %v6344 = vpop.f32.mrf.mxu0
      %6345 = vmatprep.mubr.f32.mxu0 0.0
      %6346 = vmatmul.mubr.f32.gmra.mxu0 %v2508
      %v6347 = vpop.f32.mrf.mxu0
      %v6348 = vadd.f32 0.0, %v6347
      %v6349 = vpop.f32.mrf.mxu0
      %6350 = vmatprep.mubr.f32.mxu0 0.0
      %6351 = vmatmul.mubr.f32.gmra.mxu0 %v2511
      %v6352 = vpop.f32.mrf.mxu0
      %v6353 = vadd.f32 0.0, %v6352
      %v6354 = vpop.f32.mrf.mxu0
      %6355 = vmatprep.mubr.f32.mxu0 0.0
      %6356 = vmatmul.mubr.f32.gmra.mxu0 %v2514
      %v6357 = vpop.f32.mrf.mxu0
      %v6358 = vadd.f32 0.0, %v6357
      %v6359 = vpop.f32.mrf.mxu0
      %6360 = vmatprep.mubr.f32.mxu0 0.0
      %6361 = vmatmul.mubr.f32.gmra.mxu0 %v2517
      %v6362 = vpop.f32.mrf.mxu0
      %v6363 = vadd.f32 0.0, %v6362
      %v6364 = vpop.f32.mrf.mxu0
      %6365 = vmatprep.mubr.f32.mxu0 0.0
      %6366 = vmatmul.mubr.f32.gmra.mxu0 %v2520
      %v6367 = vpop.f32.mrf.mxu0
      %v6368 = vadd.f32 0.0, %v6367
      %v6369 = vpop.f32.mrf.mxu0
      %6370 = vmatprep.mubr.f32.mxu0 0.0
      %6371 = vmatmul.mubr.f32.gmra.mxu0 %v2523
      %v6372 = vpop.f32.mrf.mxu0
      %v6373 = vadd.f32 0.0, %v6372
      %v6374 = vpop.f32.mrf.mxu0
      %6375 = vmatprep.mubr.f32.mxu0 0.0
      %6376 = vmatmul.mubr.f32.gmra.mxu0 %v2526
      %v6377 = vpop.f32.mrf.mxu0
      %v6378 = vadd.f32 0.0, %v6377
      %v6379 = vpop.f32.mrf.mxu0
      %6380 = vmatprep.mubr.f32.mxu0 0.0
      %6381 = vmatmul.mubr.f32.gmra.mxu0 %v2529
      %v6382 = vpop.f32.mrf.mxu0
      %v6383 = vadd.f32 0.0, %v6382
      %v6384 = vpop.f32.mrf.mxu0
      %6385 = vmatprep.mubr.f32.mxu0 0.0
      %6386 = vmatmul.mubr.f32.gmra.mxu0 %v2532
      %v6387 = vpop.f32.mrf.mxu0
      %v6388 = vadd.f32 0.0, %v6387
      %v6389 = vpop.f32.mrf.mxu0
      %6390 = vmatprep.mubr.f32.mxu0 0.0
      %6391 = vmatmul.mubr.f32.gmra.mxu0 %v2535
      %v6392 = vpop.f32.mrf.mxu0
      %v6393 = vadd.f32 0.0, %v6392
      %v6394 = vpop.f32.mrf.mxu0
      %6395 = vmatprep.mubr.f32.mxu0 0.0
      %6396 = vmatmul.mubr.f32.gmra.mxu0 %v2538
      %v6397 = vpop.f32.mrf.mxu0
      %v6398 = vadd.f32 0.0, %v6397
      %v6399 = vpop.f32.mrf.mxu0
      %6400 = vmatprep.mubr.f32.mxu0 0.0
      %6401 = vmatmul.mubr.f32.gmra.mxu0 %v2541
      %v6402 = vpop.f32.mrf.mxu0
      %v6403 = vadd.f32 0.0, %v6402
      %v6404 = vpop.f32.mrf.mxu0
      %6405 = vmatprep.mubr.f32.mxu0 0.0
      %6406 = vmatmul.mubr.f32.gmra.mxu0 %v2544
      %v6407 = vpop.f32.mrf.mxu0
      %v6408 = vadd.f32 0.0, %v6407
      %v6409 = vpop.f32.mrf.mxu0
      %6410 = vmatprep.mubr.f32.mxu0 0.0
      %6411 = vmatmul.mubr.f32.gmra.mxu0 %v2547
      %v6412 = vpop.f32.mrf.mxu0
      %v6413 = vadd.f32 0.0, %v6412
      %v6414 = vpop.f32.mrf.mxu0
      %6415 = vmatprep.mubr.f32.mxu0 0.0
      %6416 = vmatmul.mubr.f32.gmra.mxu0 %v2550
      %v6417 = vpop.f32.mrf.mxu0
      %v6418 = vadd.f32 0.0, %v6417
      %v6419 = vpop.f32.mrf.mxu0
      %6420 = vmatprep.mubr.f32.mxu0 0.0
      %6421 = vmatmul.mubr.f32.gmra.mxu0 %v2553
      %v6422 = vpop.f32.mrf.mxu0
      %v6423 = vadd.f32 0.0, %v6422
      %v6424 = vpop.f32.mrf.mxu0
      %6425 = vmatprep.mubr.f32.mxu0 0.0
      %6426 = vmatmul.mubr.f32.gmra.mxu0 %v2556
      %v6427 = vpop.f32.mrf.mxu0
      %v6428 = vadd.f32 0.0, %v6427
      %v6429 = vpop.f32.mrf.mxu0
      %6430 = vmatprep.mubr.f32.mxu0 0.0
      %6431 = vmatmul.mubr.f32.gmra.mxu0 %v2559
      %v6432 = vpop.f32.mrf.mxu0
      %v6433 = vadd.f32 0.0, %v6432
      %v6434 = vpop.f32.mrf.mxu0
      %6435 = vmatprep.mubr.f32.mxu0 0.0
      %6436 = vmatmul.mubr.f32.gmra.mxu0 %v2562
      %v6437 = vpop.f32.mrf.mxu0
      %v6438 = vadd.f32 0.0, %v6437
      %v6439 = vpop.f32.mrf.mxu0
      %6440 = vmatprep.mubr.f32.mxu0 0.0
      %6441 = vmatmul.mubr.f32.gmra.mxu0 %v2565
      %v6442 = vpop.f32.mrf.mxu0
      %v6443 = vadd.f32 0.0, %v6442
      %v6444 = vpop.f32.mrf.mxu0
      %6445 = vmatprep.mubr.f32.mxu0 0.0
      %6446 = vmatmul.mubr.f32.gmra.mxu0 %v2568
      %v6447 = vpop.f32.mrf.mxu0
      %v6448 = vadd.f32 0.0, %v6447
      %v6449 = vpop.f32.mrf.mxu0
      %6450 = vmatprep.mubr.f32.mxu0 0.0
      %6451 = vmatmul.mubr.f32.gmra.mxu0 %v2571
      %v6452 = vpop.f32.mrf.mxu0
      %v6453 = vadd.f32 0.0, %v6452
      %v6454 = vpop.f32.mrf.mxu0
      %6455 = vmatprep.mubr.f32.mxu0 0.0
      %6456 = vmatmul.mubr.f32.gmra.mxu0 %v2574
      %v6457 = vpop.f32.mrf.mxu0
      %v6458 = vadd.f32 0.0, %v6457
      %v6459 = vpop.f32.mrf.mxu0
      %6460 = vmatprep.mubr.f32.mxu0 0.0
      %6461 = vmatmul.mubr.f32.gmra.mxu0 %v2577
      %v6462 = vpop.f32.mrf.mxu0
      %v6463 = vadd.f32 0.0, %v6462
      %v6464 = vpop.f32.mrf.mxu0
      %6465 = vmatprep.mubr.f32.mxu0 0.0
      %6466 = vmatmul.mubr.f32.gmra.mxu0 %v2580
      %v6467 = vpop.f32.mrf.mxu0
      %v6468 = vadd.f32 0.0, %v6467
      %v6469 = vpop.f32.mrf.mxu0
      %6470 = vmatprep.mubr.f32.mxu0 0.0
      %6471 = vmatmul.mubr.f32.gmra.mxu0 %v2583
      %v6472 = vpop.f32.mrf.mxu0
      %v6473 = vadd.f32 0.0, %v6472
      %v6474 = vpop.f32.mrf.mxu0
      %6475 = vmatprep.mubr.f32.mxu0 0.0
      %6476 = vmatmul.mubr.f32.gmra.mxu0 %v4375
      %v6477 = vpop.f32.mrf.mxu0
      %v6478 = vadd.f32 0.0, %v6477
      %v6479 = vpop.f32.mrf.mxu0
      %6480 = vmatprep.mubr.f32.mxu0 0.0
      %6481 = vmatmul.mubr.f32.gmra.mxu0 %v4378
      %v6482 = vpop.f32.mrf.mxu0
      %v6483 = vadd.f32 0.0, %v6482
      %v6484 = vpop.f32.mrf.mxu0
      %6485 = vmatprep.mubr.f32.mxu0 0.0
      %6486 = vmatmul.mubr.f32.gmra.mxu0 %v4381
      %v6487 = vpop.f32.mrf.mxu0
      %v6488 = vadd.f32 0.0, %v6487
      %v6489 = vpop.f32.mrf.mxu0
      %6490 = vmatprep.mubr.f32.mxu0 0.0
      %6491 = vmatmul.mubr.f32.gmra.mxu0 %v4384
      %v6492 = vpop.f32.mrf.mxu0
      %v6493 = vadd.f32 0.0, %v6492
      %v6494 = vpop.f32.mrf.mxu0
      %6495 = vmatprep.mubr.f32.mxu0 0.0
      %6496 = vmatmul.mubr.f32.gmra.mxu0 %v4387
      %v6497 = vpop.f32.mrf.mxu0
      %v6498 = vadd.f32 0.0, %v6497
      %v6499 = vpop.f32.mrf.mxu0
      %6500 = vmatprep.mubr.f32.mxu0 0.0
      %6501 = vmatmul.mubr.f32.gmra.mxu0 %v4390
      %v6502 = vpop.f32.mrf.mxu0
      %v6503 = vadd.f32 0.0, %v6502
      %v6504 = vpop.f32.mrf.mxu0
      %6505 = vmatprep.mubr.f32.mxu0 0.0
      %6506 = vmatmul.mubr.f32.gmra.mxu0 %v4393
      %v6507 = vpop.f32.mrf.mxu0
      %v6508 = vadd.f32 0.0, %v6507
      %v6509 = vpop.f32.mrf.mxu0
      %6510 = vmatprep.mubr.f32.mxu0 0.0
      %6511 = vmatmul.mubr.f32.gmra.mxu0 %v4396
      %v6512 = vpop.f32.mrf.mxu0
      %v6513 = vadd.f32 0.0, %v6512
      %v6514 = vpop.f32.mrf.mxu0
      %6515 = vmatprep.mubr.f32.mxu0 0.0
      %6516 = vmatmul.mubr.f32.gmra.mxu0 %v6145
      %v6517 = vpop.f32.mrf.mxu0
      %v6518 = vadd.f32 0.0, %v6517
      %v6519 = vpop.f32.mrf.mxu0
      %6520 = vmatprep.mubr.f32.mxu0 0.0
      %6521 = vmatmul.mubr.f32.gmra.mxu0 %v6148
      %v6522 = vpop.f32.mrf.mxu0
      %v6523 = vadd.f32 0.0, %v6522
      %v6524 = vpop.f32.mrf.mxu0
      %6525 = vmatprep.mubr.f32.mxu0 0.0
      %6526 = vmatmul.mubr.f32.gmra.mxu0 %v6151
      %v6527 = vpop.f32.mrf.mxu0
      %v6528 = vadd.f32 0.0, %v6527
      %v6529 = vpop.f32.mrf.mxu0
      %6530 = vmatprep.mubr.f32.mxu0 0.0
      %6531 = vmatmul.mubr.f32.gmra.mxu0 %v6154
      %v6532 = vpop.f32.mrf.mxu0
      %v6533 = vadd.f32 0.0, %v6532
      %v6534 = vpop.f32.mrf.mxu0
      %6535 = vmatprep.mubr.f32.mxu0 0.0
      %6536 = vmatmul.mubr.f32.gmra.mxu0 %v6157
      %v6537 = vpop.f32.mrf.mxu0
      %v6538 = vadd.f32 0.0, %v6537
      %v6539 = vpop.f32.mrf.mxu0
      %6540 = vmatprep.mubr.f32.mxu0 0.0
      %6541 = vmatmul.mubr.f32.gmra.mxu0 %v6160
      %v6542 = vpop.f32.mrf.mxu0
      %v6543 = vadd.f32 0.0, %v6542
      %v6544 = vpop.f32.mrf.mxu0
      %6545 = vmatprep.mubr.f32.mxu0 0.0
      %6546 = vmatmul.mubr.f32.gmra.mxu0 %v6163
      %v6547 = vpop.f32.mrf.mxu0
      %v6548 = vadd.f32 0.0, %v6547
      %v6549 = vpop.f32.mrf.mxu0
      %6550 = vmatprep.mubr.f32.mxu0 0.0
      %6551 = vmatmul.mubr.f32.gmra.mxu0 %v6166
      %v6552 = vpop.f32.mrf.mxu0
      %v6553 = vadd.f32 0.0, %v6552
      %v6554 = vpop.f32.mrf.mxu0
      %6555 = vdwg.mxu0
      %v6556 = vadd.f32 %v6080, %v6238
      %v6557 = vadd.f32 %v6081, %v6243
      %v6558 = vadd.f32 %v6082, %v6248
      %v6559 = vadd.f32 %v6083, %v6253
      %v6560 = vadd.f32 %v6084, %v6258
      %v6561 = vadd.f32 %v6085, %v6263
      %v6562 = vadd.f32 %v6086, %v6268
      %v6563 = vadd.f32 %v6087, %v6273
      %v6564 = vadd.f32 %v6088, %v6278
      %v6565 = vadd.f32 %v6089, %v6283
      %v6566 = vadd.f32 %v6090, %v6288
      %v6567 = vadd.f32 %v6091, %v6293
      %v6568 = vadd.f32 %v6092, %v6298
      %v6569 = vadd.f32 %v6093, %v6303
      %v6570 = vadd.f32 %v6094, %v6308
      %v6571 = vadd.f32 %v6095, %v6313
      %v6572 = vadd.f32 %v6096, %v6318
      %v6573 = vadd.f32 %v6097, %v6323
      %v6574 = vadd.f32 %v6098, %v6328
      %v6575 = vadd.f32 %v6099, %v6333
      %v6576 = vadd.f32 %v6100, %v6338
      %v6577 = vadd.f32 %v6101, %v6343
      %v6578 = vadd.f32 %v6102, %v6348
      %v6579 = vadd.f32 %v6103, %v6353
      %v6580 = vadd.f32 %v6104, %v6358
      %v6581 = vadd.f32 %v6105, %v6363
      %v6582 = vadd.f32 %v6106, %v6368
      %v6583 = vadd.f32 %v6107, %v6373
      %v6584 = vadd.f32 %v6108, %v6378
      %v6585 = vadd.f32 %v6109, %v6383
      %v6586 = vadd.f32 %v6110, %v6388
      %v6587 = vadd.f32 %v6111, %v6393
      %v6588 = vadd.f32 %v6112, %v6398
      %v6589 = vadd.f32 %v6113, %v6403
      %v6590 = vadd.f32 %v6114, %v6408
      %v6591 = vadd.f32 %v6115, %v6413
      %v6592 = vadd.f32 %v6116, %v6418
      %v6593 = vadd.f32 %v6117, %v6423
      %v6594 = vadd.f32 %v6118, %v6428
      %v6595 = vadd.f32 %v6119, %v6433
      %v6596 = vadd.f32 %v6120, %v6438
      %v6597 = vadd.f32 %v6121, %v6443
      %v6598 = vadd.f32 %v6122, %v6448
      %v6599 = vadd.f32 %v6123, %v6453
      %v6600 = vadd.f32 %v6124, %v6458
      %v6601 = vadd.f32 %v6125, %v6463
      %v6602 = vadd.f32 %v6126, %v6468
      %v6603 = vadd.f32 %v6127, %v6473
      %v6604 = vadd.f32 %v6128, %v6478
      %v6605 = vadd.f32 %v6129, %v6483
      %v6606 = vadd.f32 %v6130, %v6488
      %v6607 = vadd.f32 %v6131, %v6493
      %v6608 = vadd.f32 %v6132, %v6498
      %v6609 = vadd.f32 %v6133, %v6503
      %v6610 = vadd.f32 %v6134, %v6508
      %v6611 = vadd.f32 %v6135, %v6513
      %v6612 = vadd.f32 %v6136, %v6518
      %v6613 = vadd.f32 %v6137, %v6523
      %v6614 = vadd.f32 %v6138, %v6528
      %v6615 = vadd.f32 %v6139, %v6533
      %v6616 = vadd.f32 %v6140, %v6538
      %v6617 = vadd.f32 %v6141, %v6543
      %v6618 = vadd.f32 %v6142, %v6548
      %v6619 = vadd.f32 %v6143, %v6553
      %6620 = vst.msk [vmem:[#allocation2] sm:$0xff] %vm2127, %v6556
      %6621 = vst.msk [vmem:[#allocation2 + $0x8] sm:$0xff] %vm2127, %v6557
      %6622 = vst.msk [vmem:[#allocation2 + $0x10] sm:$0xff] %vm2127, %v6558
      %6623 = vst.msk [vmem:[#allocation2 + $0x18] sm:$0xff] %vm2127, %v6559
      %6624 = vst.msk [vmem:[#allocation2 + $0x20] sm:$0xff] %vm2127, %v6560
      %6625 = vst.msk [vmem:[#allocation2 + $0x28] sm:$0xff] %vm2127, %v6561
      %6626 = vst.msk [vmem:[#allocation2 + $0x30] sm:$0xff] %vm2127, %v6562
      %6627 = vst.msk [vmem:[#allocation2 + $0x38] sm:$0xff] %vm2127, %v6563
      %6628 = vst.msk [vmem:[#allocation2 + $0x40] sm:$0xff] %vm2127, %v6564
      %6629 = vst.msk [vmem:[#allocation2 + $0x48] sm:$0xff] %vm2127, %v6565
      %6630 = vst.msk [vmem:[#allocation2 + $0x50] sm:$0xff] %vm2127, %v6566
      %6631 = vst.msk [vmem:[#allocation2 + $0x58] sm:$0xff] %vm2127, %v6567
      %6632 = vst.msk [vmem:[#allocation2 + $0x60] sm:$0xff] %vm2127, %v6568
      %6633 = vst.msk [vmem:[#allocation2 + $0x68] sm:$0xff] %vm2127, %v6569
      %6634 = vst.msk [vmem:[#allocation2 + $0x70] sm:$0xff] %vm2127, %v6570
      %6635 = vst.msk [vmem:[#allocation2 + $0x78] sm:$0xff] %vm2127, %v6571
      %6636 = vst.msk [vmem:[#allocation2 + $0x80] sm:$0xff] %vm2127, %v6572
      %6637 = vst.msk [vmem:[#allocation2 + $0x88] sm:$0xff] %vm2127, %v6573
      %6638 = vst.msk [vmem:[#allocation2 + $0x90] sm:$0xff] %vm2127, %v6574
      %6639 = vst.msk [vmem:[#allocation2 + $0x98] sm:$0xff] %vm2127, %v6575
      %6640 = vst.msk [vmem:[#allocation2 + $0xa0] sm:$0xff] %vm2127, %v6576
      %6641 = vst.msk [vmem:[#allocation2 + $0xa8] sm:$0xff] %vm2127, %v6577
      %6642 = vst.msk [vmem:[#allocation2 + $0xb0] sm:$0xff] %vm2127, %v6578
      %6643 = vst.msk [vmem:[#allocation2 + $0xb8] sm:$0xff] %vm2127, %v6579
      %6644 = vst.msk [vmem:[#allocation2 + $0xc0] sm:$0xff] %vm2127, %v6580
      %6645 = vst.msk [vmem:[#allocation2 + $0xc8] sm:$0xff] %vm2127, %v6581
      %6646 = vst.msk [vmem:[#allocation2 + $0xd0] sm:$0xff] %vm2127, %v6582
      %6647 = vst.msk [vmem:[#allocation2 + $0xd8] sm:$0xff] %vm2127, %v6583
      %6648 = vst.msk [vmem:[#allocation2 + $0xe0] sm:$0xff] %vm2127, %v6584
      %6649 = vst.msk [vmem:[#allocation2 + $0xe8] sm:$0xff] %vm2127, %v6585
      %6650 = vst.msk [vmem:[#allocation2 + $0xf0] sm:$0xff] %vm2127, %v6586
      %6651 = vst.msk [vmem:[#allocation2 + $0xf8] sm:$0xff] %vm2127, %v6587
      %6652 = vst.msk [vmem:[#allocation2 + $0x100] sm:$0xff] %vm2127, %v6588
      %6653 = vst.msk [vmem:[#allocation2 + $0x108] sm:$0xff] %vm2127, %v6589
      %6654 = vst.msk [vmem:[#allocation2 + $0x110] sm:$0xff] %vm2127, %v6590
      %6655 = vst.msk [vmem:[#allocation2 + $0x118] sm:$0xff] %vm2127, %v6591
      %6656 = vst.msk [vmem:[#allocation2 + $0x120] sm:$0xff] %vm2127, %v6592
      %6657 = vst.msk [vmem:[#allocation2 + $0x128] sm:$0xff] %vm2127, %v6593
      %6658 = vst.msk [vmem:[#allocation2 + $0x130] sm:$0xff] %vm2127, %v6594
      %6659 = vst.msk [vmem:[#allocation2 + $0x138] sm:$0xff] %vm2127, %v6595
      %6660 = vst.msk [vmem:[#allocation2 + $0x140] sm:$0xff] %vm2127, %v6596
      %6661 = vst.msk [vmem:[#allocation2 + $0x148] sm:$0xff] %vm2127, %v6597
      %6662 = vst.msk [vmem:[#allocation2 + $0x150] sm:$0xff] %vm2127, %v6598
      %6663 = vst.msk [vmem:[#allocation2 + $0x158] sm:$0xff] %vm2127, %v6599
      %6664 = vst.msk [vmem:[#allocation2 + $0x160] sm:$0xff] %vm2127, %v6600
      %6665 = vst.msk [vmem:[#allocation2 + $0x168] sm:$0xff] %vm2127, %v6601
      %6666 = vst.msk [vmem:[#allocation2 + $0x170] sm:$0xff] %vm2127, %v6602
      %6667 = vst.msk [vmem:[#allocation2 + $0x178] sm:$0xff] %vm2127, %v6603
      %6668 = vst.msk [vmem:[#allocation2 + $0x180] sm:$0xff] %vm2127, %v6604
      %6669 = vst.msk [vmem:[#allocation2 + $0x188] sm:$0xff] %vm2127, %v6605
      %6670 = vst.msk [vmem:[#allocation2 + $0x190] sm:$0xff] %vm2127, %v6606
      %6671 = vst.msk [vmem:[#allocation2 + $0x198] sm:$0xff] %vm2127, %v6607
      %6672 = vst.msk [vmem:[#allocation2 + $0x1a0] sm:$0xff] %vm2127, %v6608
      %6673 = vst.msk [vmem:[#allocation2 + $0x1a8] sm:$0xff] %vm2127, %v6609
      %6674 = vst.msk [vmem:[#allocation2 + $0x1b0] sm:$0xff] %vm2127, %v6610
      %6675 = vst.msk [vmem:[#allocation2 + $0x1b8] sm:$0xff] %vm2127, %v6611
      %6676 = vst.msk [vmem:[#allocation2 + $0x1c0] sm:$0xff] %vm2127, %v6612
      %6677 = vst.msk [vmem:[#allocation2 + $0x1c8] sm:$0xff] %vm2127, %v6613
      %6678 = vst.msk [vmem:[#allocation2 + $0x1d0] sm:$0xff] %vm2127, %v6614
      %6679 = vst.msk [vmem:[#allocation2 + $0x1d8] sm:$0xff] %vm2127, %v6615
      %6680 = vst.msk [vmem:[#allocation2 + $0x1e0] sm:$0xff] %vm2127, %v6616
      %6681 = vst.msk [vmem:[#allocation2 + $0x1e8] sm:$0xff] %vm2127, %v6617
      %6682 = vst.msk [vmem:[#allocation2 + $0x1f0] sm:$0xff] %vm2127, %v6618
      %6683 = vst.msk [vmem:[#allocation2 + $0x1f8] sm:$0xff] %vm2127, %v6619
      %v6684 = vld [vmem:[#allocation2] sm:$0xff]
      %v6685 = vld [vmem:[#allocation2 + $0x8] sm:$0xff]
      %v6686 = vld [vmem:[#allocation2 + $0x10] sm:$0xff]
      %v6687 = vld [vmem:[#allocation2 + $0x18] sm:$0xff]
      %v6688 = vld [vmem:[#allocation2 + $0x20] sm:$0xff]
      %v6689 = vld [vmem:[#allocation2 + $0x28] sm:$0xff]
      %v6690 = vld [vmem:[#allocation2 + $0x30] sm:$0xff]
      %v6691 = vld [vmem:[#allocation2 + $0x38] sm:$0xff]
      %v6692 = vld [vmem:[#allocation2 + $0x40] sm:$0xff]
      %v6693 = vld [vmem:[#allocation2 + $0x48] sm:$0xff]
      %v6694 = vld [vmem:[#allocation2 + $0x50] sm:$0xff]
      %v6695 = vld [vmem:[#allocation2 + $0x58] sm:$0xff]
      %v6696 = vld [vmem:[#allocation2 + $0x60] sm:$0xff]
      %v6697 = vld [vmem:[#allocation2 + $0x68] sm:$0xff]
      %v6698 = vld [vmem:[#allocation2 + $0x70] sm:$0xff]
      %v6699 = vld [vmem:[#allocation2 + $0x78] sm:$0xff]
      %v6700 = vld [vmem:[#allocation2 + $0x80] sm:$0xff]
      %v6701 = vld [vmem:[#allocation2 + $0x88] sm:$0xff]
      %v6702 = vld [vmem:[#allocation2 + $0x90] sm:$0xff]
      %v6703 = vld [vmem:[#allocation2 + $0x98] sm:$0xff]
      %v6704 = vld [vmem:[#allocation2 + $0xa0] sm:$0xff]
      %v6705 = vld [vmem:[#allocation2 + $0xa8] sm:$0xff]
      %v6706 = vld [vmem:[#allocation2 + $0xb0] sm:$0xff]
      %v6707 = vld [vmem:[#allocation2 + $0xb8] sm:$0xff]
      %v6708 = vld [vmem:[#allocation2 + $0xc0] sm:$0xff]
      %v6709 = vld [vmem:[#allocation2 + $0xc8] sm:$0xff]
      %v6710 = vld [vmem:[#allocation2 + $0xd0] sm:$0xff]
      %v6711 = vld [vmem:[#allocation2 + $0xd8] sm:$0xff]
      %v6712 = vld [vmem:[#allocation2 + $0xe0] sm:$0xff]
      %v6713 = vld [vmem:[#allocation2 + $0xe8] sm:$0xff]
      %v6714 = vld [vmem:[#allocation2 + $0xf0] sm:$0xff]
      %v6715 = vld [vmem:[#allocation2 + $0xf8] sm:$0xff]
      %v6716 = vld [vmem:[#allocation2 + $0x100] sm:$0xff]
      %v6717 = vld [vmem:[#allocation2 + $0x108] sm:$0xff]
      %v6718 = vld [vmem:[#allocation2 + $0x110] sm:$0xff]
      %v6719 = vld [vmem:[#allocation2 + $0x118] sm:$0xff]
      %v6720 = vld [vmem:[#allocation2 + $0x120] sm:$0xff]
      %v6721 = vld [vmem:[#allocation2 + $0x128] sm:$0xff]
      %v6722 = vld [vmem:[#allocation2 + $0x130] sm:$0xff]
      %v6723 = vld [vmem:[#allocation2 + $0x138] sm:$0xff]
      %v6724 = vld [vmem:[#allocation2 + $0x140] sm:$0xff]
      %v6725 = vld [vmem:[#allocation2 + $0x148] sm:$0xff]
      %v6726 = vld [vmem:[#allocation2 + $0x150] sm:$0xff]
      %v6727 = vld [vmem:[#allocation2 + $0x158] sm:$0xff]
      %v6728 = vld [vmem:[#allocation2 + $0x160] sm:$0xff]
      %v6729 = vld [vmem:[#allocation2 + $0x168] sm:$0xff]
      %v6730 = vld [vmem:[#allocation2 + $0x170] sm:$0xff]
      %v6731 = vld [vmem:[#allocation2 + $0x178] sm:$0xff]
      %v6732 = vld [vmem:[#allocation2 + $0x180] sm:$0xff]
      %v6733 = vld [vmem:[#allocation2 + $0x188] sm:$0xff]
      %v6734 = vld [vmem:[#allocation2 + $0x190] sm:$0xff]
      %v6735 = vld [vmem:[#allocation2 + $0x198] sm:$0xff]
      %v6736 = vld [vmem:[#allocation2 + $0x1a0] sm:$0xff]
      %v6737 = vld [vmem:[#allocation2 + $0x1a8] sm:$0xff]
      %v6738 = vld [vmem:[#allocation2 + $0x1b0] sm:$0xff]
      %v6739 = vld [vmem:[#allocation2 + $0x1b8] sm:$0xff]
      %v6740 = vld [vmem:[#allocation2 + $0x1c0] sm:$0xff]
      %v6741 = vld [vmem:[#allocation2 + $0x1c8] sm:$0xff]
      %v6742 = vld [vmem:[#allocation2 + $0x1d0] sm:$0xff]
      %v6743 = vld [vmem:[#allocation2 + $0x1d8] sm:$0xff]
      %v6744 = vld [vmem:[#allocation2 + $0x1e0] sm:$0xff]
      %v6745 = vld [vmem:[#allocation2 + $0x1e8] sm:$0xff]
      %v6746 = vld [vmem:[#allocation2 + $0x1f0] sm:$0xff]
      %v6747 = vld [vmem:[#allocation2 + $0x1f8] sm:$0xff]
      %v6749 = vsel %vm2392, %v2226, 0
      %v6752 = vsel %vm2585, %v2261, 0
      %6754 = vmatprep.subr.mxu0 0.0
      %6755 = vmatpush1.msra.mxu0 0.0
      %6756 = vmatprep.subr.mxu0 0.0
      %6757 = vmatpush1.msra.mxu0 0.0
      %6758 = vmatprep.subr.mxu0 0.0
      %6759 = vmatpush1.msra.mxu0 0.0
      %6760 = vmatprep.subr.mxu0 0.0
      %6761 = vmatpush1.msra.mxu0 0.0
      %6762 = vmatprep.subr.mxu0 0.0
      %6763 = vmatpush1.msra.mxu0 0.0
      %6764 = vmatprep.subr.mxu0 0.0
      %6765 = vmatpush1.msra.mxu0 0.0
      %6766 = vmatprep.subr.mxu0 0.0
      %6767 = vmatpush1.msra.mxu0 0.0
      %6768 = vmatprep.subr.mxu0 0.0
      %6769 = vmatpush1.msra.mxu0 0.0
      %6770 = vmatprep.subr.mxu0 0.0
      %6771 = vmatpush1.msra.mxu0 0.0
      %6772 = vmatprep.subr.mxu0 0.0
      %6773 = vmatpush1.msra.mxu0 0.0
      %6774 = vmatprep.subr.mxu0 0.0
      %6775 = vmatpush1.msra.mxu0 0.0
      %6776 = vmatprep.subr.mxu0 0.0
      %6777 = vmatpush1.msra.mxu0 0.0
      %6778 = vmatprep.subr.mxu0 0.0
      %6779 = vmatpush1.msra.mxu0 0.0
      %6780 = vmatprep.subr.mxu0 0.0
      %6781 = vmatpush1.msra.mxu0 0.0
      %6782 = vmatprep.subr.mxu0 0.0
      %6783 = vmatpush1.msra.mxu0 %v6752
      %6784 = vmatprep.subr.mxu0 0.0
      %6785 = vmatpush1.msra.mxu0 %v2260
      %6786 = vmatprep.subr.mxu0 0.0
      %6787 = vmatpush2.msra.mxu0 0.0
      %6788 = vmatprep.subr.mxu0 0.0
      %6789 = vmatpush2.msra.mxu0 0.0
      %6790 = vmatprep.subr.mxu0 0.0
      %6791 = vmatpush2.msra.mxu0 0.0
      %6792 = vmatprep.subr.mxu0 0.0
      %6793 = vmatpush2.msra.mxu0 0.0
      %6794 = vmatprep.subr.mxu0 0.0
      %6795 = vmatpush2.msra.mxu0 0.0
      %6796 = vmatprep.subr.mxu0 0.0
      %6797 = vmatpush2.msra.mxu0 0.0
      %6798 = vmatprep.subr.mxu0 0.0
      %6799 = vmatpush2.msra.mxu0 0.0
      %6800 = vmatprep.subr.mxu0 0.0
      %6801 = vmatpush2.msra.mxu0 0.0
      %6802 = vmatprep.subr.mxu0 0.0
      %6803 = vmatpush2.msra.mxu0 0.0
      %6804 = vmatprep.subr.mxu0 0.0
      %6805 = vmatpush2.msra.mxu0 0.0
      %6806 = vmatprep.subr.mxu0 0.0
      %6807 = vmatpush2.msra.mxu0 0.0
      %6808 = vmatprep.subr.mxu0 0.0
      %6809 = vmatpush2.msra.mxu0 0.0
      %6810 = vmatprep.subr.mxu0 0.0
      %6811 = vmatpush2.msra.mxu0 0.0
      %6812 = vmatprep.subr.mxu0 0.0
      %6813 = vmatpush2.msra.mxu0 0.0
      %6814 = vmatprep.subr.mxu0 0.0
      %6815 = vmatpush2.msra.mxu0 0.0
      %6816 = vmatprep.subr.mxu0 0.0
      %6817 = vmatpush2.msra.mxu0 0.0
      %6818 = vmatprep.mubr.f32.mxu0 0.0
      %6819 = vmatmul.mubr.f32.gmra.mxu0 %v2445
      %v6820 = vpop.f32.mrf.mxu0
      %v6821 = vadd.f32 0.0, %v6820
      %v6822 = vpop.f32.mrf.mxu0
      %6823 = vmatprep.mubr.f32.mxu0 0.0
      %6824 = vmatmul.mubr.f32.gmra.mxu0 %v2448
      %v6825 = vpop.f32.mrf.mxu0
      %v6826 = vadd.f32 0.0, %v6825
      %v6827 = vpop.f32.mrf.mxu0
      %6828 = vmatprep.mubr.f32.mxu0 0.0
      %6829 = vmatmul.mubr.f32.gmra.mxu0 %v2451
      %v6830 = vpop.f32.mrf.mxu0
      %v6831 = vadd.f32 0.0, %v6830
      %v6832 = vpop.f32.mrf.mxu0
      %6833 = vmatprep.mubr.f32.mxu0 0.0
      %6834 = vmatmul.mubr.f32.gmra.mxu0 %v2454
      %v6835 = vpop.f32.mrf.mxu0
      %v6836 = vadd.f32 0.0, %v6835
      %v6837 = vpop.f32.mrf.mxu0
      %6838 = vmatprep.mubr.f32.mxu0 0.0
      %6839 = vmatmul.mubr.f32.gmra.mxu0 %v2457
      %v6840 = vpop.f32.mrf.mxu0
      %v6841 = vadd.f32 0.0, %v6840
      %v6842 = vpop.f32.mrf.mxu0
      %6843 = vmatprep.mubr.f32.mxu0 0.0
      %6844 = vmatmul.mubr.f32.gmra.mxu0 %v2460
      %v6845 = vpop.f32.mrf.mxu0
      %v6846 = vadd.f32 0.0, %v6845
      %v6847 = vpop.f32.mrf.mxu0
      %6848 = vmatprep.mubr.f32.mxu0 0.0
      %6849 = vmatmul.mubr.f32.gmra.mxu0 %v2463
      %v6850 = vpop.f32.mrf.mxu0
      %v6851 = vadd.f32 0.0, %v6850
      %v6852 = vpop.f32.mrf.mxu0
      %6853 = vmatprep.mubr.f32.mxu0 0.0
      %6854 = vmatmul.mubr.f32.gmra.mxu0 %v3173
      %v6855 = vpop.f32.mrf.mxu0
      %v6856 = vadd.f32 0.0, %v6855
      %v6857 = vpop.f32.mrf.mxu0
      %6858 = vmatprep.mubr.f32.mxu0 0.0
      %6859 = vmatmul.mubr.f32.gmra.mxu0 %v2469
      %v6860 = vpop.f32.mrf.mxu0
      %v6861 = vadd.f32 0.0, %v6860
      %v6862 = vpop.f32.mrf.mxu0
      %6863 = vmatprep.mubr.f32.mxu0 0.0
      %6864 = vmatmul.mubr.f32.gmra.mxu0 %v2472
      %v6865 = vpop.f32.mrf.mxu0
      %v6866 = vadd.f32 0.0, %v6865
      %v6867 = vpop.f32.mrf.mxu0
      %6868 = vmatprep.mubr.f32.mxu0 0.0
      %6869 = vmatmul.mubr.f32.gmra.mxu0 %v2475
      %v6870 = vpop.f32.mrf.mxu0
      %v6871 = vadd.f32 0.0, %v6870
      %v6872 = vpop.f32.mrf.mxu0
      %6873 = vmatprep.mubr.f32.mxu0 0.0
      %6874 = vmatmul.mubr.f32.gmra.mxu0 %v2478
      %v6875 = vpop.f32.mrf.mxu0
      %v6876 = vadd.f32 0.0, %v6875
      %v6877 = vpop.f32.mrf.mxu0
      %6878 = vmatprep.mubr.f32.mxu0 0.0
      %6879 = vmatmul.mubr.f32.gmra.mxu0 %v2481
      %v6880 = vpop.f32.mrf.mxu0
      %v6881 = vadd.f32 0.0, %v6880
      %v6882 = vpop.f32.mrf.mxu0
      %6883 = vmatprep.mubr.f32.mxu0 0.0
      %6884 = vmatmul.mubr.f32.gmra.mxu0 %v2484
      %v6885 = vpop.f32.mrf.mxu0
      %v6886 = vadd.f32 0.0, %v6885
      %v6887 = vpop.f32.mrf.mxu0
      %6888 = vmatprep.mubr.f32.mxu0 0.0
      %6889 = vmatmul.mubr.f32.gmra.mxu0 %v2487
      %v6890 = vpop.f32.mrf.mxu0
      %v6891 = vadd.f32 0.0, %v6890
      %v6892 = vpop.f32.mrf.mxu0
      %6893 = vmatprep.mubr.f32.mxu0 0.0
      %6894 = vmatmul.mubr.f32.gmra.mxu0 %v3176
      %v6895 = vpop.f32.mrf.mxu0
      %v6896 = vadd.f32 0.0, %v6895
      %v6897 = vpop.f32.mrf.mxu0
      %6898 = vmatprep.mubr.f32.mxu0 0.0
      %6899 = vmatmul.mubr.f32.gmra.mxu0 %v2493
      %v6900 = vpop.f32.mrf.mxu0
      %v6901 = vadd.f32 0.0, %v6900
      %v6902 = vpop.f32.mrf.mxu0
      %6903 = vmatprep.mubr.f32.mxu0 0.0
      %6904 = vmatmul.mubr.f32.gmra.mxu0 %v2496
      %v6905 = vpop.f32.mrf.mxu0
      %v6906 = vadd.f32 0.0, %v6905
      %v6907 = vpop.f32.mrf.mxu0
      %6908 = vmatprep.mubr.f32.mxu0 0.0
      %6909 = vmatmul.mubr.f32.gmra.mxu0 %v2499
      %v6910 = vpop.f32.mrf.mxu0
      %v6911 = vadd.f32 0.0, %v6910
      %v6912 = vpop.f32.mrf.mxu0
      %6913 = vmatprep.mubr.f32.mxu0 0.0
      %6914 = vmatmul.mubr.f32.gmra.mxu0 %v2502
      %v6915 = vpop.f32.mrf.mxu0
      %v6916 = vadd.f32 0.0, %v6915
      %v6917 = vpop.f32.mrf.mxu0
      %6918 = vmatprep.mubr.f32.mxu0 0.0
      %6919 = vmatmul.mubr.f32.gmra.mxu0 %v2505
      %v6920 = vpop.f32.mrf.mxu0
      %v6921 = vadd.f32 0.0, %v6920
      %v6922 = vpop.f32.mrf.mxu0
      %6923 = vmatprep.mubr.f32.mxu0 0.0
      %6924 = vmatmul.mubr.f32.gmra.mxu0 %v2508
      %v6925 = vpop.f32.mrf.mxu0
      %v6926 = vadd.f32 0.0, %v6925
      %v6927 = vpop.f32.mrf.mxu0
      %6928 = vmatprep.mubr.f32.mxu0 0.0
      %6929 = vmatmul.mubr.f32.gmra.mxu0 %v2511
      %v6930 = vpop.f32.mrf.mxu0
      %v6931 = vadd.f32 0.0, %v6930
      %v6932 = vpop.f32.mrf.mxu0
      %6933 = vmatprep.mubr.f32.mxu0 0.0
      %6934 = vmatmul.mubr.f32.gmra.mxu0 %v3179
      %v6935 = vpop.f32.mrf.mxu0
      %v6936 = vadd.f32 0.0, %v6935
      %v6937 = vpop.f32.mrf.mxu0
      %6938 = vmatprep.mubr.f32.mxu0 0.0
      %6939 = vmatmul.mubr.f32.gmra.mxu0 %v2517
      %v6940 = vpop.f32.mrf.mxu0
      %v6941 = vadd.f32 0.0, %v6940
      %v6942 = vpop.f32.mrf.mxu0
      %6943 = vmatprep.mubr.f32.mxu0 0.0
      %6944 = vmatmul.mubr.f32.gmra.mxu0 %v2520
      %v6945 = vpop.f32.mrf.mxu0
      %v6946 = vadd.f32 0.0, %v6945
      %v6947 = vpop.f32.mrf.mxu0
      %6948 = vmatprep.mubr.f32.mxu0 0.0
      %6949 = vmatmul.mubr.f32.gmra.mxu0 %v2523
      %v6950 = vpop.f32.mrf.mxu0
      %v6951 = vadd.f32 0.0, %v6950
      %v6952 = vpop.f32.mrf.mxu0
      %6953 = vmatprep.mubr.f32.mxu0 0.0
      %6954 = vmatmul.mubr.f32.gmra.mxu0 %v2526
      %v6955 = vpop.f32.mrf.mxu0
      %v6956 = vadd.f32 0.0, %v6955
      %v6957 = vpop.f32.mrf.mxu0
      %6958 = vmatprep.mubr.f32.mxu0 0.0
      %6959 = vmatmul.mubr.f32.gmra.mxu0 %v2529
      %v6960 = vpop.f32.mrf.mxu0
      %v6961 = vadd.f32 0.0, %v6960
      %v6962 = vpop.f32.mrf.mxu0
      %6963 = vmatprep.mubr.f32.mxu0 0.0
      %6964 = vmatmul.mubr.f32.gmra.mxu0 %v2532
      %v6965 = vpop.f32.mrf.mxu0
      %v6966 = vadd.f32 0.0, %v6965
      %v6967 = vpop.f32.mrf.mxu0
      %6968 = vmatprep.mubr.f32.mxu0 0.0
      %6969 = vmatmul.mubr.f32.gmra.mxu0 %v2535
      %v6970 = vpop.f32.mrf.mxu0
      %v6971 = vadd.f32 0.0, %v6970
      %v6972 = vpop.f32.mrf.mxu0
      %6973 = vmatprep.mubr.f32.mxu0 0.0
      %6974 = vmatmul.mubr.f32.gmra.mxu0 %v3182
      %v6975 = vpop.f32.mrf.mxu0
      %v6976 = vadd.f32 0.0, %v6975
      %v6977 = vpop.f32.mrf.mxu0
      %6978 = vmatprep.mubr.f32.mxu0 0.0
      %6979 = vmatmul.mubr.f32.gmra.mxu0 %v2541
      %v6980 = vpop.f32.mrf.mxu0
      %v6981 = vadd.f32 0.0, %v6980
      %v6982 = vpop.f32.mrf.mxu0
      %6983 = vmatprep.mubr.f32.mxu0 0.0
      %6984 = vmatmul.mubr.f32.gmra.mxu0 %v2544
      %v6985 = vpop.f32.mrf.mxu0
      %v6986 = vadd.f32 0.0, %v6985
      %v6987 = vpop.f32.mrf.mxu0
      %6988 = vmatprep.mubr.f32.mxu0 0.0
      %6989 = vmatmul.mubr.f32.gmra.mxu0 %v2547
      %v6990 = vpop.f32.mrf.mxu0
      %v6991 = vadd.f32 0.0, %v6990
      %v6992 = vpop.f32.mrf.mxu0
      %6993 = vmatprep.mubr.f32.mxu0 0.0
      %6994 = vmatmul.mubr.f32.gmra.mxu0 %v2550
      %v6995 = vpop.f32.mrf.mxu0
      %v6996 = vadd.f32 0.0, %v6995
      %v6997 = vpop.f32.mrf.mxu0
      %6998 = vmatprep.mubr.f32.mxu0 0.0
      %6999 = vmatmul.mubr.f32.gmra.mxu0 %v2553
      %v7000 = vpop.f32.mrf.mxu0
      %v7001 = vadd.f32 0.0, %v7000
      %v7002 = vpop.f32.mrf.mxu0
      %7003 = vmatprep.mubr.f32.mxu0 0.0
      %7004 = vmatmul.mubr.f32.gmra.mxu0 %v2556
      %v7005 = vpop.f32.mrf.mxu0
      %v7006 = vadd.f32 0.0, %v7005
      %v7007 = vpop.f32.mrf.mxu0
      %7008 = vmatprep.mubr.f32.mxu0 0.0
      %7009 = vmatmul.mubr.f32.gmra.mxu0 %v2559
      %v7010 = vpop.f32.mrf.mxu0
      %v7011 = vadd.f32 0.0, %v7010
      %v7012 = vpop.f32.mrf.mxu0
      %7013 = vmatprep.mubr.f32.mxu0 0.0
      %7014 = vmatmul.mubr.f32.gmra.mxu0 %v3185
      %v7015 = vpop.f32.mrf.mxu0
      %v7016 = vadd.f32 0.0, %v7015
      %v7017 = vpop.f32.mrf.mxu0
      %7018 = vmatprep.mubr.f32.mxu0 0.0
      %7019 = vmatmul.mubr.f32.gmra.mxu0 %v2565
      %v7020 = vpop.f32.mrf.mxu0
      %v7021 = vadd.f32 0.0, %v7020
      %v7022 = vpop.f32.mrf.mxu0
      %7023 = vmatprep.mubr.f32.mxu0 0.0
      %7024 = vmatmul.mubr.f32.gmra.mxu0 %v2568
      %v7025 = vpop.f32.mrf.mxu0
      %v7026 = vadd.f32 0.0, %v7025
      %v7027 = vpop.f32.mrf.mxu0
      %7028 = vmatprep.mubr.f32.mxu0 0.0
      %7029 = vmatmul.mubr.f32.gmra.mxu0 %v2571
      %v7030 = vpop.f32.mrf.mxu0
      %v7031 = vadd.f32 0.0, %v7030
      %v7032 = vpop.f32.mrf.mxu0
      %7033 = vmatprep.mubr.f32.mxu0 0.0
      %7034 = vmatmul.mubr.f32.gmra.mxu0 %v2574
      %v7035 = vpop.f32.mrf.mxu0
      %v7036 = vadd.f32 0.0, %v7035
      %v7037 = vpop.f32.mrf.mxu0
      %7038 = vmatprep.mubr.f32.mxu0 0.0
      %7039 = vmatmul.mubr.f32.gmra.mxu0 %v2577
      %v7040 = vpop.f32.mrf.mxu0
      %v7041 = vadd.f32 0.0, %v7040
      %v7042 = vpop.f32.mrf.mxu0
      %7043 = vmatprep.mubr.f32.mxu0 0.0
      %7044 = vmatmul.mubr.f32.gmra.mxu0 %v2580
      %v7045 = vpop.f32.mrf.mxu0
      %v7046 = vadd.f32 0.0, %v7045
      %v7047 = vpop.f32.mrf.mxu0
      %7048 = vmatprep.mubr.f32.mxu0 0.0
      %7049 = vmatmul.mubr.f32.gmra.mxu0 %v2583
      %v7050 = vpop.f32.mrf.mxu0
      %v7051 = vadd.f32 0.0, %v7050
      %v7052 = vpop.f32.mrf.mxu0
      %7053 = vmatprep.mubr.f32.mxu0 0.0
      %7054 = vmatmul.mubr.f32.gmra.mxu0 %v3188
      %v7055 = vpop.f32.mrf.mxu0
      %v7056 = vadd.f32 0.0, %v7055
      %v7057 = vpop.f32.mrf.mxu0
      %7058 = vmatprep.mubr.f32.mxu0 0.0
      %7059 = vmatmul.mubr.f32.gmra.mxu0 %v4378
      %v7060 = vpop.f32.mrf.mxu0
      %v7061 = vadd.f32 0.0, %v7060
      %v7062 = vpop.f32.mrf.mxu0
      %7063 = vmatprep.mubr.f32.mxu0 0.0
      %7064 = vmatmul.mubr.f32.gmra.mxu0 %v4381
      %v7065 = vpop.f32.mrf.mxu0
      %v7066 = vadd.f32 0.0, %v7065
      %v7067 = vpop.f32.mrf.mxu0
      %7068 = vmatprep.mubr.f32.mxu0 0.0
      %7069 = vmatmul.mubr.f32.gmra.mxu0 %v4384
      %v7070 = vpop.f32.mrf.mxu0
      %v7071 = vadd.f32 0.0, %v7070
      %v7072 = vpop.f32.mrf.mxu0
      %7073 = vmatprep.mubr.f32.mxu0 0.0
      %7074 = vmatmul.mubr.f32.gmra.mxu0 %v4387
      %v7075 = vpop.f32.mrf.mxu0
      %v7076 = vadd.f32 0.0, %v7075
      %v7077 = vpop.f32.mrf.mxu0
      %7078 = vmatprep.mubr.f32.mxu0 0.0
      %7079 = vmatmul.mubr.f32.gmra.mxu0 %v4390
      %v7080 = vpop.f32.mrf.mxu0
      %v7081 = vadd.f32 0.0, %v7080
      %v7082 = vpop.f32.mrf.mxu0
      %7083 = vmatprep.mubr.f32.mxu0 0.0
      %7084 = vmatmul.mubr.f32.gmra.mxu0 %v4393
      %v7085 = vpop.f32.mrf.mxu0
      %v7086 = vadd.f32 0.0, %v7085
      %v7087 = vpop.f32.mrf.mxu0
      %7088 = vmatprep.mubr.f32.mxu0 0.0
      %7089 = vmatmul.mubr.f32.gmra.mxu0 %v4396
      %v7090 = vpop.f32.mrf.mxu0
      %v7091 = vadd.f32 0.0, %v7090
      %v7092 = vpop.f32.mrf.mxu0
      %7093 = vmatprep.mubr.f32.mxu0 0.0
      %7094 = vmatmul.mubr.f32.gmra.mxu0 %v4979
      %v7095 = vpop.f32.mrf.mxu0
      %v7096 = vadd.f32 0.0, %v7095
      %v7097 = vpop.f32.mrf.mxu0
      %7098 = vmatprep.mubr.f32.mxu0 0.0
      %7099 = vmatmul.mubr.f32.gmra.mxu0 %v6148
      %v7100 = vpop.f32.mrf.mxu0
      %v7101 = vadd.f32 0.0, %v7100
      %v7102 = vpop.f32.mrf.mxu0
      %7103 = vmatprep.mubr.f32.mxu0 0.0
      %7104 = vmatmul.mubr.f32.gmra.mxu0 %v6151
      %v7105 = vpop.f32.mrf.mxu0
      %v7106 = vadd.f32 0.0, %v7105
      %v7107 = vpop.f32.mrf.mxu0
      %7108 = vmatprep.mubr.f32.mxu0 0.0
      %7109 = vmatmul.mubr.f32.gmra.mxu0 %v6154
      %v7110 = vpop.f32.mrf.mxu0
      %v7111 = vadd.f32 0.0, %v7110
      %v7112 = vpop.f32.mrf.mxu0
      %7113 = vmatprep.mubr.f32.mxu0 0.0
      %7114 = vmatmul.mubr.f32.gmra.mxu0 %v6157
      %v7115 = vpop.f32.mrf.mxu0
      %v7116 = vadd.f32 0.0, %v7115
      %v7117 = vpop.f32.mrf.mxu0
      %7118 = vmatprep.mubr.f32.mxu0 0.0
      %7119 = vmatmul.mubr.f32.gmra.mxu0 %v6160
      %v7120 = vpop.f32.mrf.mxu0
      %v7121 = vadd.f32 0.0, %v7120
      %v7122 = vpop.f32.mrf.mxu0
      %7123 = vmatprep.mubr.f32.mxu0 0.0
      %7124 = vmatmul.mubr.f32.gmra.mxu0 %v6163
      %v7125 = vpop.f32.mrf.mxu0
      %v7126 = vadd.f32 0.0, %v7125
      %v7127 = vpop.f32.mrf.mxu0
      %7128 = vmatprep.mubr.f32.mxu0 0.0
      %7129 = vmatmul.mubr.f32.gmra.mxu0 %v6166
      %v7130 = vpop.f32.mrf.mxu0
      %v7131 = vadd.f32 0.0, %v7130
      %v7132 = vpop.f32.mrf.mxu0
      %7133 = vmatprep.mubr.f32.mxu0 0.0
      %7134 = vmatmul.mubr.f32.gmra.mxu0 %v6749
      %v7135 = vpop.f32.mrf.mxu0
      %v7136 = vadd.f32 0.0, %v7135
      %v7137 = vpop.f32.mrf.mxu0
      %7138 = vdwg.mxu0
      %v7139 = vadd.f32 %v6684, %v6821
      %v7140 = vadd.f32 %v6685, %v6826
      %v7141 = vadd.f32 %v6686, %v6831
      %v7142 = vadd.f32 %v6687, %v6836
      %v7143 = vadd.f32 %v6688, %v6841
      %v7144 = vadd.f32 %v6689, %v6846
      %v7145 = vadd.f32 %v6690, %v6851
      %v7146 = vadd.f32 %v6691, %v6856
      %v7147 = vadd.f32 %v6692, %v6861
      %v7148 = vadd.f32 %v6693, %v6866
      %v7149 = vadd.f32 %v6694, %v6871
      %v7150 = vadd.f32 %v6695, %v6876
      %v7151 = vadd.f32 %v6696, %v6881
      %v7152 = vadd.f32 %v6697, %v6886
      %v7153 = vadd.f32 %v6698, %v6891
      %v7154 = vadd.f32 %v6699, %v6896
      %v7155 = vadd.f32 %v6700, %v6901
      %v7156 = vadd.f32 %v6701, %v6906
      %v7157 = vadd.f32 %v6702, %v6911
      %v7158 = vadd.f32 %v6703, %v6916
      %v7159 = vadd.f32 %v6704, %v6921
      %v7160 = vadd.f32 %v6705, %v6926
      %v7161 = vadd.f32 %v6706, %v6931
      %v7162 = vadd.f32 %v6707, %v6936
      %v7163 = vadd.f32 %v6708, %v6941
      %v7164 = vadd.f32 %v6709, %v6946
      %v7165 = vadd.f32 %v6710, %v6951
      %v7166 = vadd.f32 %v6711, %v6956
      %v7167 = vadd.f32 %v6712, %v6961
      %v7168 = vadd.f32 %v6713, %v6966
      %v7169 = vadd.f32 %v6714, %v6971
      %v7170 = vadd.f32 %v6715, %v6976
      %v7171 = vadd.f32 %v6716, %v6981
      %v7172 = vadd.f32 %v6717, %v6986
      %v7173 = vadd.f32 %v6718, %v6991
      %v7174 = vadd.f32 %v6719, %v6996
      %v7175 = vadd.f32 %v6720, %v7001
      %v7176 = vadd.f32 %v6721, %v7006
      %v7177 = vadd.f32 %v6722, %v7011
      %v7178 = vadd.f32 %v6723, %v7016
      %v7179 = vadd.f32 %v6724, %v7021
      %v7180 = vadd.f32 %v6725, %v7026
      %v7181 = vadd.f32 %v6726, %v7031
      %v7182 = vadd.f32 %v6727, %v7036
      %v7183 = vadd.f32 %v6728, %v7041
      %v7184 = vadd.f32 %v6729, %v7046
      %v7185 = vadd.f32 %v6730, %v7051
      %v7186 = vadd.f32 %v6731, %v7056
      %v7187 = vadd.f32 %v6732, %v7061
      %v7188 = vadd.f32 %v6733, %v7066
      %v7189 = vadd.f32 %v6734, %v7071
      %v7190 = vadd.f32 %v6735, %v7076
      %v7191 = vadd.f32 %v6736, %v7081
      %v7192 = vadd.f32 %v6737, %v7086
      %v7193 = vadd.f32 %v6738, %v7091
      %v7194 = vadd.f32 %v6739, %v7096
      %v7195 = vadd.f32 %v6740, %v7101
      %v7196 = vadd.f32 %v6741, %v7106
      %v7197 = vadd.f32 %v6742, %v7111
      %v7198 = vadd.f32 %v6743, %v7116
      %v7199 = vadd.f32 %v6744, %v7121
      %v7200 = vadd.f32 %v6745, %v7126
      %v7201 = vadd.f32 %v6746, %v7131
      %v7202 = vadd.f32 %v6747, %v7136
      %7203 = vst.msk [vmem:[#allocation2] sm:$0xff] %vm2127, %v7139
      %7204 = vst.msk [vmem:[#allocation2 + $0x8] sm:$0xff] %vm2127, %v7140
      %7205 = vst.msk [vmem:[#allocation2 + $0x10] sm:$0xff] %vm2127, %v7141
      %7206 = vst.msk [vmem:[#allocation2 + $0x18] sm:$0xff] %vm2127, %v7142
      %7207 = vst.msk [vmem:[#allocation2 + $0x20] sm:$0xff] %vm2127, %v7143
      %7208 = vst.msk [vmem:[#allocation2 + $0x28] sm:$0xff] %vm2127, %v7144
      %7209 = vst.msk [vmem:[#allocation2 + $0x30] sm:$0xff] %vm2127, %v7145
      %7210 = vst.msk [vmem:[#allocation2 + $0x38] sm:$0xff] %vm2127, %v7146
      %7211 = vst.msk [vmem:[#allocation2 + $0x40] sm:$0xff] %vm2127, %v7147
      %7212 = vst.msk [vmem:[#allocation2 + $0x48] sm:$0xff] %vm2127, %v7148
      %7213 = vst.msk [vmem:[#allocation2 + $0x50] sm:$0xff] %vm2127, %v7149
      %7214 = vst.msk [vmem:[#allocation2 + $0x58] sm:$0xff] %vm2127, %v7150
      %7215 = vst.msk [vmem:[#allocation2 + $0x60] sm:$0xff] %vm2127, %v7151
      %7216 = vst.msk [vmem:[#allocation2 + $0x68] sm:$0xff] %vm2127, %v7152
      %7217 = vst.msk [vmem:[#allocation2 + $0x70] sm:$0xff] %vm2127, %v7153
      %7218 = vst.msk [vmem:[#allocation2 + $0x78] sm:$0xff] %vm2127, %v7154
      %7219 = vst.msk [vmem:[#allocation2 + $0x80] sm:$0xff] %vm2127, %v7155
      %7220 = vst.msk [vmem:[#allocation2 + $0x88] sm:$0xff] %vm2127, %v7156
      %7221 = vst.msk [vmem:[#allocation2 + $0x90] sm:$0xff] %vm2127, %v7157
      %7222 = vst.msk [vmem:[#allocation2 + $0x98] sm:$0xff] %vm2127, %v7158
      %7223 = vst.msk [vmem:[#allocation2 + $0xa0] sm:$0xff] %vm2127, %v7159
      %7224 = vst.msk [vmem:[#allocation2 + $0xa8] sm:$0xff] %vm2127, %v7160
      %7225 = vst.msk [vmem:[#allocation2 + $0xb0] sm:$0xff] %vm2127, %v7161
      %7226 = vst.msk [vmem:[#allocation2 + $0xb8] sm:$0xff] %vm2127, %v7162
      %7227 = vst.msk [vmem:[#allocation2 + $0xc0] sm:$0xff] %vm2127, %v7163
      %7228 = vst.msk [vmem:[#allocation2 + $0xc8] sm:$0xff] %vm2127, %v7164
      %7229 = vst.msk [vmem:[#allocation2 + $0xd0] sm:$0xff] %vm2127, %v7165
      %7230 = vst.msk [vmem:[#allocation2 + $0xd8] sm:$0xff] %vm2127, %v7166
      %7231 = vst.msk [vmem:[#allocation2 + $0xe0] sm:$0xff] %vm2127, %v7167
      %7232 = vst.msk [vmem:[#allocation2 + $0xe8] sm:$0xff] %vm2127, %v7168
      %7233 = vst.msk [vmem:[#allocation2 + $0xf0] sm:$0xff] %vm2127, %v7169
      %7234 = vst.msk [vmem:[#allocation2 + $0xf8] sm:$0xff] %vm2127, %v7170
      %7235 = vst.msk [vmem:[#allocation2 + $0x100] sm:$0xff] %vm2127, %v7171
      %7236 = vst.msk [vmem:[#allocation2 + $0x108] sm:$0xff] %vm2127, %v7172
      %7237 = vst.msk [vmem:[#allocation2 + $0x110] sm:$0xff] %vm2127, %v7173
      %7238 = vst.msk [vmem:[#allocation2 + $0x118] sm:$0xff] %vm2127, %v7174
      %7239 = vst.msk [vmem:[#allocation2 + $0x120] sm:$0xff] %vm2127, %v7175
      %7240 = vst.msk [vmem:[#allocation2 + $0x128] sm:$0xff] %vm2127, %v7176
      %7241 = vst.msk [vmem:[#allocation2 + $0x130] sm:$0xff] %vm2127, %v7177
      %7242 = vst.msk [vmem:[#allocation2 + $0x138] sm:$0xff] %vm2127, %v7178
      %7243 = vst.msk [vmem:[#allocation2 + $0x140] sm:$0xff] %vm2127, %v7179
      %7244 = vst.msk [vmem:[#allocation2 + $0x148] sm:$0xff] %vm2127, %v7180
      %7245 = vst.msk [vmem:[#allocation2 + $0x150] sm:$0xff] %vm2127, %v7181
      %7246 = vst.msk [vmem:[#allocation2 + $0x158] sm:$0xff] %vm2127, %v7182
      %7247 = vst.msk [vmem:[#allocation2 + $0x160] sm:$0xff] %vm2127, %v7183
      %7248 = vst.msk [vmem:[#allocation2 + $0x168] sm:$0xff] %vm2127, %v7184
      %7249 = vst.msk [vmem:[#allocation2 + $0x170] sm:$0xff] %vm2127, %v7185
      %7250 = vst.msk [vmem:[#allocation2 + $0x178] sm:$0xff] %vm2127, %v7186
      %7251 = vst.msk [vmem:[#allocation2 + $0x180] sm:$0xff] %vm2127, %v7187
      %7252 = vst.msk [vmem:[#allocation2 + $0x188] sm:$0xff] %vm2127, %v7188
      %7253 = vst.msk [vmem:[#allocation2 + $0x190] sm:$0xff] %vm2127, %v7189
      %7254 = vst.msk [vmem:[#allocation2 + $0x198] sm:$0xff] %vm2127, %v7190
      %7255 = vst.msk [vmem:[#allocation2 + $0x1a0] sm:$0xff] %vm2127, %v7191
      %7256 = vst.msk [vmem:[#allocation2 + $0x1a8] sm:$0xff] %vm2127, %v7192
      %7257 = vst.msk [vmem:[#allocation2 + $0x1b0] sm:$0xff] %vm2127, %v7193
      %7258 = vst.msk [vmem:[#allocation2 + $0x1b8] sm:$0xff] %vm2127, %v7194
      %7259 = vst.msk [vmem:[#allocation2 + $0x1c0] sm:$0xff] %vm2127, %v7195
      %7260 = vst.msk [vmem:[#allocation2 + $0x1c8] sm:$0xff] %vm2127, %v7196
      %7261 = vst.msk [vmem:[#allocation2 + $0x1d0] sm:$0xff] %vm2127, %v7197
      %7262 = vst.msk [vmem:[#allocation2 + $0x1d8] sm:$0xff] %vm2127, %v7198
      %7263 = vst.msk [vmem:[#allocation2 + $0x1e0] sm:$0xff] %vm2127, %v7199
      %7264 = vst.msk [vmem:[#allocation2 + $0x1e8] sm:$0xff] %vm2127, %v7200
      %7265 = vst.msk [vmem:[#allocation2 + $0x1f0] sm:$0xff] %vm2127, %v7201
      %7266 = vst.msk [vmem:[#allocation2 + $0x1f8] sm:$0xff] %vm2127, %v7202
      %v7267 = vld [vmem:[#allocation2] sm:$0xff]
      %v7268 = vld [vmem:[#allocation2 + $0x8] sm:$0xff]
      %v7269 = vld [vmem:[#allocation2 + $0x10] sm:$0xff]
      %v7270 = vld [vmem:[#allocation2 + $0x18] sm:$0xff]
      %v7271 = vld [vmem:[#allocation2 + $0x20] sm:$0xff]
      %v7272 = vld [vmem:[#allocation2 + $0x28] sm:$0xff]
      %v7273 = vld [vmem:[#allocation2 + $0x30] sm:$0xff]
      %v7274 = vld [vmem:[#allocation2 + $0x38] sm:$0xff]
      %v7275 = vld [vmem:[#allocation2 + $0x40] sm:$0xff]
      %v7276 = vld [vmem:[#allocation2 + $0x48] sm:$0xff]
      %v7277 = vld [vmem:[#allocation2 + $0x50] sm:$0xff]
      %v7278 = vld [vmem:[#allocation2 + $0x58] sm:$0xff]
      %v7279 = vld [vmem:[#allocation2 + $0x60] sm:$0xff]
      %v7280 = vld [vmem:[#allocation2 + $0x68] sm:$0xff]
      %v7281 = vld [vmem:[#allocation2 + $0x70] sm:$0xff]
      %v7282 = vld [vmem:[#allocation2 + $0x78] sm:$0xff]
      %v7283 = vld [vmem:[#allocation2 + $0x80] sm:$0xff]
      %v7284 = vld [vmem:[#allocation2 + $0x88] sm:$0xff]
      %v7285 = vld [vmem:[#allocation2 + $0x90] sm:$0xff]
      %v7286 = vld [vmem:[#allocation2 + $0x98] sm:$0xff]
      %v7287 = vld [vmem:[#allocation2 + $0xa0] sm:$0xff]
      %v7288 = vld [vmem:[#allocation2 + $0xa8] sm:$0xff]
      %v7289 = vld [vmem:[#allocation2 + $0xb0] sm:$0xff]
      %v7290 = vld [vmem:[#allocation2 + $0xb8] sm:$0xff]
      %v7291 = vld [vmem:[#allocation2 + $0xc0] sm:$0xff]
      %v7292 = vld [vmem:[#allocation2 + $0xc8] sm:$0xff]
      %v7293 = vld [vmem:[#allocation2 + $0xd0] sm:$0xff]
      %v7294 = vld [vmem:[#allocation2 + $0xd8] sm:$0xff]
      %v7295 = vld [vmem:[#allocation2 + $0xe0] sm:$0xff]
      %v7296 = vld [vmem:[#allocation2 + $0xe8] sm:$0xff]
      %v7297 = vld [vmem:[#allocation2 + $0xf0] sm:$0xff]
      %v7298 = vld [vmem:[#allocation2 + $0xf8] sm:$0xff]
      %v7299 = vld [vmem:[#allocation2 + $0x100] sm:$0xff]
      %v7300 = vld [vmem:[#allocation2 + $0x108] sm:$0xff]
      %v7301 = vld [vmem:[#allocation2 + $0x110] sm:$0xff]
      %v7302 = vld [vmem:[#allocation2 + $0x118] sm:$0xff]
      %v7303 = vld [vmem:[#allocation2 + $0x120] sm:$0xff]
      %v7304 = vld [vmem:[#allocation2 + $0x128] sm:$0xff]
      %v7305 = vld [vmem:[#allocation2 + $0x130] sm:$0xff]
      %v7306 = vld [vmem:[#allocation2 + $0x138] sm:$0xff]
      %v7307 = vld [vmem:[#allocation2 + $0x140] sm:$0xff]
      %v7308 = vld [vmem:[#allocation2 + $0x148] sm:$0xff]
      %v7309 = vld [vmem:[#allocation2 + $0x150] sm:$0xff]
      %v7310 = vld [vmem:[#allocation2 + $0x158] sm:$0xff]
      %v7311 = vld [vmem:[#allocation2 + $0x160] sm:$0xff]
      %v7312 = vld [vmem:[#allocation2 + $0x168] sm:$0xff]
      %v7313 = vld [vmem:[#allocation2 + $0x170] sm:$0xff]
      %v7314 = vld [vmem:[#allocation2 + $0x178] sm:$0xff]
      %v7315 = vld [vmem:[#allocation2 + $0x180] sm:$0xff]
      %v7316 = vld [vmem:[#allocation2 + $0x188] sm:$0xff]
      %v7317 = vld [vmem:[#allocation2 + $0x190] sm:$0xff]
      %v7318 = vld [vmem:[#allocation2 + $0x198] sm:$0xff]
      %v7319 = vld [vmem:[#allocation2 + $0x1a0] sm:$0xff]
      %v7320 = vld [vmem:[#allocation2 + $0x1a8] sm:$0xff]
      %v7321 = vld [vmem:[#allocation2 + $0x1b0] sm:$0xff]
      %v7322 = vld [vmem:[#allocation2 + $0x1b8] sm:$0xff]
      %v7323 = vld [vmem:[#allocation2 + $0x1c0] sm:$0xff]
      %v7324 = vld [vmem:[#allocation2 + $0x1c8] sm:$0xff]
      %v7325 = vld [vmem:[#allocation2 + $0x1d0] sm:$0xff]
      %v7326 = vld [vmem:[#allocation2 + $0x1d8] sm:$0xff]
      %v7327 = vld [vmem:[#allocation2 + $0x1e0] sm:$0xff]
      %v7328 = vld [vmem:[#allocation2 + $0x1e8] sm:$0xff]
      %v7329 = vld [vmem:[#allocation2 + $0x1f0] sm:$0xff]
      %v7330 = vld [vmem:[#allocation2 + $0x1f8] sm:$0xff]
      %v7332 = vsel %vm2392, %v2227, 0
      %v7335 = vsel %vm2585, %v2263, 0
      %7337 = vmatprep.subr.mxu0 0.0
      %7338 = vmatpush1.msra.mxu0 0.0
      %7339 = vmatprep.subr.mxu0 0.0
      %7340 = vmatpush1.msra.mxu0 0.0
      %7341 = vmatprep.subr.mxu0 0.0
      %7342 = vmatpush1.msra.mxu0 0.0
      %7343 = vmatprep.subr.mxu0 0.0
      %7344 = vmatpush1.msra.mxu0 0.0
      %7345 = vmatprep.subr.mxu0 0.0
      %7346 = vmatpush1.msra.mxu0 0.0
      %7347 = vmatprep.subr.mxu0 0.0
      %7348 = vmatpush1.msra.mxu0 0.0
      %7349 = vmatprep.subr.mxu0 0.0
      %7350 = vmatpush1.msra.mxu0 0.0
      %7351 = vmatprep.subr.mxu0 0.0
      %7352 = vmatpush1.msra.mxu0 0.0
      %7353 = vmatprep.subr.mxu0 0.0
      %7354 = vmatpush1.msra.mxu0 0.0
      %7355 = vmatprep.subr.mxu0 0.0
      %7356 = vmatpush1.msra.mxu0 0.0
      %7357 = vmatprep.subr.mxu0 0.0
      %7358 = vmatpush1.msra.mxu0 0.0
      %7359 = vmatprep.subr.mxu0 0.0
      %7360 = vmatpush1.msra.mxu0 0.0
      %7361 = vmatprep.subr.mxu0 0.0
      %7362 = vmatpush1.msra.mxu0 0.0
      %7363 = vmatprep.subr.mxu0 0.0
      %7364 = vmatpush1.msra.mxu0 0.0
      %7365 = vmatprep.subr.mxu0 0.0
      %7366 = vmatpush1.msra.mxu0 %v7335
      %7367 = vmatprep.subr.mxu0 0.0
      %7368 = vmatpush1.msra.mxu0 %v2262
      %7369 = vmatprep.subr.mxu0 0.0
      %7370 = vmatpush2.msra.mxu0 0.0
      %7371 = vmatprep.subr.mxu0 0.0
      %7372 = vmatpush2.msra.mxu0 0.0
      %7373 = vmatprep.subr.mxu0 0.0
      %7374 = vmatpush2.msra.mxu0 0.0
      %7375 = vmatprep.subr.mxu0 0.0
      %7376 = vmatpush2.msra.mxu0 0.0
      %7377 = vmatprep.subr.mxu0 0.0
      %7378 = vmatpush2.msra.mxu0 0.0
      %7379 = vmatprep.subr.mxu0 0.0
      %7380 = vmatpush2.msra.mxu0 0.0
      %7381 = vmatprep.subr.mxu0 0.0
      %7382 = vmatpush2.msra.mxu0 0.0
      %7383 = vmatprep.subr.mxu0 0.0
      %7384 = vmatpush2.msra.mxu0 0.0
      %7385 = vmatprep.subr.mxu0 0.0
      %7386 = vmatpush2.msra.mxu0 0.0
      %7387 = vmatprep.subr.mxu0 0.0
      %7388 = vmatpush2.msra.mxu0 0.0
      %7389 = vmatprep.subr.mxu0 0.0
      %7390 = vmatpush2.msra.mxu0 0.0
      %7391 = vmatprep.subr.mxu0 0.0
      %7392 = vmatpush2.msra.mxu0 0.0
      %7393 = vmatprep.subr.mxu0 0.0
      %7394 = vmatpush2.msra.mxu0 0.0
      %7395 = vmatprep.subr.mxu0 0.0
      %7396 = vmatpush2.msra.mxu0 0.0
      %7397 = vmatprep.subr.mxu0 0.0
      %7398 = vmatpush2.msra.mxu0 0.0
      %7399 = vmatprep.subr.mxu0 0.0
      %7400 = vmatpush2.msra.mxu0 0.0
      %7401 = vmatprep.mubr.f32.mxu0 0.0
      %7402 = vmatmul.mubr.f32.gmra.mxu0 %v2448
      %v7403 = vpop.f32.mrf.mxu0
      %v7404 = vadd.f32 0.0, %v7403
      %v7405 = vpop.f32.mrf.mxu0
      %7406 = vmatprep.mubr.f32.mxu0 0.0
      %7407 = vmatmul.mubr.f32.gmra.mxu0 %v2451
      %v7408 = vpop.f32.mrf.mxu0
      %v7409 = vadd.f32 0.0, %v7408
      %v7410 = vpop.f32.mrf.mxu0
      %7411 = vmatprep.mubr.f32.mxu0 0.0
      %7412 = vmatmul.mubr.f32.gmra.mxu0 %v2454
      %v7413 = vpop.f32.mrf.mxu0
      %v7414 = vadd.f32 0.0, %v7413
      %v7415 = vpop.f32.mrf.mxu0
      %7416 = vmatprep.mubr.f32.mxu0 0.0
      %7417 = vmatmul.mubr.f32.gmra.mxu0 %v2457
      %v7418 = vpop.f32.mrf.mxu0
      %v7419 = vadd.f32 0.0, %v7418
      %v7420 = vpop.f32.mrf.mxu0
      %7421 = vmatprep.mubr.f32.mxu0 0.0
      %7422 = vmatmul.mubr.f32.gmra.mxu0 %v2460
      %v7423 = vpop.f32.mrf.mxu0
      %v7424 = vadd.f32 0.0, %v7423
      %v7425 = vpop.f32.mrf.mxu0
      %7426 = vmatprep.mubr.f32.mxu0 0.0
      %7427 = vmatmul.mubr.f32.gmra.mxu0 %v2463
      %v7428 = vpop.f32.mrf.mxu0
      %v7429 = vadd.f32 0.0, %v7428
      %v7430 = vpop.f32.mrf.mxu0
      %7431 = vmatprep.mubr.f32.mxu0 0.0
      %7432 = vmatmul.mubr.f32.gmra.mxu0 %v3173
      %v7433 = vpop.f32.mrf.mxu0
      %v7434 = vadd.f32 0.0, %v7433
      %v7435 = vpop.f32.mrf.mxu0
      %7436 = vmatprep.mubr.f32.mxu0 0.0
      %7437 = vmatmul.mubr.f32.gmra.mxu0 %v3777
      %v7438 = vpop.f32.mrf.mxu0
      %v7439 = vadd.f32 0.0, %v7438
      %v7440 = vpop.f32.mrf.mxu0
      %7441 = vmatprep.mubr.f32.mxu0 0.0
      %7442 = vmatmul.mubr.f32.gmra.mxu0 %v2472
      %v7443 = vpop.f32.mrf.mxu0
      %v7444 = vadd.f32 0.0, %v7443
      %v7445 = vpop.f32.mrf.mxu0
      %7446 = vmatprep.mubr.f32.mxu0 0.0
      %7447 = vmatmul.mubr.f32.gmra.mxu0 %v2475
      %v7448 = vpop.f32.mrf.mxu0
      %v7449 = vadd.f32 0.0, %v7448
      %v7450 = vpop.f32.mrf.mxu0
      %7451 = vmatprep.mubr.f32.mxu0 0.0
      %7452 = vmatmul.mubr.f32.gmra.mxu0 %v2478
      %v7453 = vpop.f32.mrf.mxu0
      %v7454 = vadd.f32 0.0, %v7453
      %v7455 = vpop.f32.mrf.mxu0
      %7456 = vmatprep.mubr.f32.mxu0 0.0
      %7457 = vmatmul.mubr.f32.gmra.mxu0 %v2481
      %v7458 = vpop.f32.mrf.mxu0
      %v7459 = vadd.f32 0.0, %v7458
      %v7460 = vpop.f32.mrf.mxu0
      %7461 = vmatprep.mubr.f32.mxu0 0.0
      %7462 = vmatmul.mubr.f32.gmra.mxu0 %v2484
      %v7463 = vpop.f32.mrf.mxu0
      %v7464 = vadd.f32 0.0, %v7463
      %v7465 = vpop.f32.mrf.mxu0
      %7466 = vmatprep.mubr.f32.mxu0 0.0
      %7467 = vmatmul.mubr.f32.gmra.mxu0 %v2487
      %v7468 = vpop.f32.mrf.mxu0
      %v7469 = vadd.f32 0.0, %v7468
      %v7470 = vpop.f32.mrf.mxu0
      %7471 = vmatprep.mubr.f32.mxu0 0.0
      %7472 = vmatmul.mubr.f32.gmra.mxu0 %v3176
      %v7473 = vpop.f32.mrf.mxu0
      %v7474 = vadd.f32 0.0, %v7473
      %v7475 = vpop.f32.mrf.mxu0
      %7476 = vmatprep.mubr.f32.mxu0 0.0
      %7477 = vmatmul.mubr.f32.gmra.mxu0 %v3780
      %v7478 = vpop.f32.mrf.mxu0
      %v7479 = vadd.f32 0.0, %v7478
      %v7480 = vpop.f32.mrf.mxu0
      %7481 = vmatprep.mubr.f32.mxu0 0.0
      %7482 = vmatmul.mubr.f32.gmra.mxu0 %v2496
      %v7483 = vpop.f32.mrf.mxu0
      %v7484 = vadd.f32 0.0, %v7483
      %v7485 = vpop.f32.mrf.mxu0
      %7486 = vmatprep.mubr.f32.mxu0 0.0
      %7487 = vmatmul.mubr.f32.gmra.mxu0 %v2499
      %v7488 = vpop.f32.mrf.mxu0
      %v7489 = vadd.f32 0.0, %v7488
      %v7490 = vpop.f32.mrf.mxu0
      %7491 = vmatprep.mubr.f32.mxu0 0.0
      %7492 = vmatmul.mubr.f32.gmra.mxu0 %v2502
      %v7493 = vpop.f32.mrf.mxu0
      %v7494 = vadd.f32 0.0, %v7493
      %v7495 = vpop.f32.mrf.mxu0
      %7496 = vmatprep.mubr.f32.mxu0 0.0
      %7497 = vmatmul.mubr.f32.gmra.mxu0 %v2505
      %v7498 = vpop.f32.mrf.mxu0
      %v7499 = vadd.f32 0.0, %v7498
      %v7500 = vpop.f32.mrf.mxu0
      %7501 = vmatprep.mubr.f32.mxu0 0.0
      %7502 = vmatmul.mubr.f32.gmra.mxu0 %v2508
      %v7503 = vpop.f32.mrf.mxu0
      %v7504 = vadd.f32 0.0, %v7503
      %v7505 = vpop.f32.mrf.mxu0
      %7506 = vmatprep.mubr.f32.mxu0 0.0
      %7507 = vmatmul.mubr.f32.gmra.mxu0 %v2511
      %v7508 = vpop.f32.mrf.mxu0
      %v7509 = vadd.f32 0.0, %v7508
      %v7510 = vpop.f32.mrf.mxu0
      %7511 = vmatprep.mubr.f32.mxu0 0.0
      %7512 = vmatmul.mubr.f32.gmra.mxu0 %v3179
      %v7513 = vpop.f32.mrf.mxu0
      %v7514 = vadd.f32 0.0, %v7513
      %v7515 = vpop.f32.mrf.mxu0
      %7516 = vmatprep.mubr.f32.mxu0 0.0
      %7517 = vmatmul.mubr.f32.gmra.mxu0 %v3783
      %v7518 = vpop.f32.mrf.mxu0
      %v7519 = vadd.f32 0.0, %v7518
      %v7520 = vpop.f32.mrf.mxu0
      %7521 = vmatprep.mubr.f32.mxu0 0.0
      %7522 = vmatmul.mubr.f32.gmra.mxu0 %v2520
      %v7523 = vpop.f32.mrf.mxu0
      %v7524 = vadd.f32 0.0, %v7523
      %v7525 = vpop.f32.mrf.mxu0
      %7526 = vmatprep.mubr.f32.mxu0 0.0
      %7527 = vmatmul.mubr.f32.gmra.mxu0 %v2523
      %v7528 = vpop.f32.mrf.mxu0
      %v7529 = vadd.f32 0.0, %v7528
      %v7530 = vpop.f32.mrf.mxu0
      %7531 = vmatprep.mubr.f32.mxu0 0.0
      %7532 = vmatmul.mubr.f32.gmra.mxu0 %v2526
      %v7533 = vpop.f32.mrf.mxu0
      %v7534 = vadd.f32 0.0, %v7533
      %v7535 = vpop.f32.mrf.mxu0
      %7536 = vmatprep.mubr.f32.mxu0 0.0
      %7537 = vmatmul.mubr.f32.gmra.mxu0 %v2529
      %v7538 = vpop.f32.mrf.mxu0
      %v7539 = vadd.f32 0.0, %v7538
      %v7540 = vpop.f32.mrf.mxu0
      %7541 = vmatprep.mubr.f32.mxu0 0.0
      %7542 = vmatmul.mubr.f32.gmra.mxu0 %v2532
      %v7543 = vpop.f32.mrf.mxu0
      %v7544 = vadd.f32 0.0, %v7543
      %v7545 = vpop.f32.mrf.mxu0
      %7546 = vmatprep.mubr.f32.mxu0 0.0
      %7547 = vmatmul.mubr.f32.gmra.mxu0 %v2535
      %v7548 = vpop.f32.mrf.mxu0
      %v7549 = vadd.f32 0.0, %v7548
      %v7550 = vpop.f32.mrf.mxu0
      %7551 = vmatprep.mubr.f32.mxu0 0.0
      %7552 = vmatmul.mubr.f32.gmra.mxu0 %v3182
      %v7553 = vpop.f32.mrf.mxu0
      %v7554 = vadd.f32 0.0, %v7553
      %v7555 = vpop.f32.mrf.mxu0
      %7556 = vmatprep.mubr.f32.mxu0 0.0
      %7557 = vmatmul.mubr.f32.gmra.mxu0 %v3786
      %v7558 = vpop.f32.mrf.mxu0
      %v7559 = vadd.f32 0.0, %v7558
      %v7560 = vpop.f32.mrf.mxu0
      %7561 = vmatprep.mubr.f32.mxu0 0.0
      %7562 = vmatmul.mubr.f32.gmra.mxu0 %v2544
      %v7563 = vpop.f32.mrf.mxu0
      %v7564 = vadd.f32 0.0, %v7563
      %v7565 = vpop.f32.mrf.mxu0
      %7566 = vmatprep.mubr.f32.mxu0 0.0
      %7567 = vmatmul.mubr.f32.gmra.mxu0 %v2547
      %v7568 = vpop.f32.mrf.mxu0
      %v7569 = vadd.f32 0.0, %v7568
      %v7570 = vpop.f32.mrf.mxu0
      %7571 = vmatprep.mubr.f32.mxu0 0.0
      %7572 = vmatmul.mubr.f32.gmra.mxu0 %v2550
      %v7573 = vpop.f32.mrf.mxu0
      %v7574 = vadd.f32 0.0, %v7573
      %v7575 = vpop.f32.mrf.mxu0
      %7576 = vmatprep.mubr.f32.mxu0 0.0
      %7577 = vmatmul.mubr.f32.gmra.mxu0 %v2553
      %v7578 = vpop.f32.mrf.mxu0
      %v7579 = vadd.f32 0.0, %v7578
      %v7580 = vpop.f32.mrf.mxu0
      %7581 = vmatprep.mubr.f32.mxu0 0.0
      %7582 = vmatmul.mubr.f32.gmra.mxu0 %v2556
      %v7583 = vpop.f32.mrf.mxu0
      %v7584 = vadd.f32 0.0, %v7583
      %v7585 = vpop.f32.mrf.mxu0
      %7586 = vmatprep.mubr.f32.mxu0 0.0
      %7587 = vmatmul.mubr.f32.gmra.mxu0 %v2559
      %v7588 = vpop.f32.mrf.mxu0
      %v7589 = vadd.f32 0.0, %v7588
      %v7590 = vpop.f32.mrf.mxu0
      %7591 = vmatprep.mubr.f32.mxu0 0.0
      %7592 = vmatmul.mubr.f32.gmra.mxu0 %v3185
      %v7593 = vpop.f32.mrf.mxu0
      %v7594 = vadd.f32 0.0, %v7593
      %v7595 = vpop.f32.mrf.mxu0
      %7596 = vmatprep.mubr.f32.mxu0 0.0
      %7597 = vmatmul.mubr.f32.gmra.mxu0 %v3789
      %v7598 = vpop.f32.mrf.mxu0
      %v7599 = vadd.f32 0.0, %v7598
      %v7600 = vpop.f32.mrf.mxu0
      %7601 = vmatprep.mubr.f32.mxu0 0.0
      %7602 = vmatmul.mubr.f32.gmra.mxu0 %v2568
      %v7603 = vpop.f32.mrf.mxu0
      %v7604 = vadd.f32 0.0, %v7603
      %v7605 = vpop.f32.mrf.mxu0
      %7606 = vmatprep.mubr.f32.mxu0 0.0
      %7607 = vmatmul.mubr.f32.gmra.mxu0 %v2571
      %v7608 = vpop.f32.mrf.mxu0
      %v7609 = vadd.f32 0.0, %v7608
      %v7610 = vpop.f32.mrf.mxu0
      %7611 = vmatprep.mubr.f32.mxu0 0.0
      %7612 = vmatmul.mubr.f32.gmra.mxu0 %v2574
      %v7613 = vpop.f32.mrf.mxu0
      %v7614 = vadd.f32 0.0, %v7613
      %v7615 = vpop.f32.mrf.mxu0
      %7616 = vmatprep.mubr.f32.mxu0 0.0
      %7617 = vmatmul.mubr.f32.gmra.mxu0 %v2577
      %v7618 = vpop.f32.mrf.mxu0
      %v7619 = vadd.f32 0.0, %v7618
      %v7620 = vpop.f32.mrf.mxu0
      %7621 = vmatprep.mubr.f32.mxu0 0.0
      %7622 = vmatmul.mubr.f32.gmra.mxu0 %v2580
      %v7623 = vpop.f32.mrf.mxu0
      %v7624 = vadd.f32 0.0, %v7623
      %v7625 = vpop.f32.mrf.mxu0
      %7626 = vmatprep.mubr.f32.mxu0 0.0
      %7627 = vmatmul.mubr.f32.gmra.mxu0 %v2583
      %v7628 = vpop.f32.mrf.mxu0
      %v7629 = vadd.f32 0.0, %v7628
      %v7630 = vpop.f32.mrf.mxu0
      %7631 = vmatprep.mubr.f32.mxu0 0.0
      %7632 = vmatmul.mubr.f32.gmra.mxu0 %v3188
      %v7633 = vpop.f32.mrf.mxu0
      %v7634 = vadd.f32 0.0, %v7633
      %v7635 = vpop.f32.mrf.mxu0
      %7636 = vmatprep.mubr.f32.mxu0 0.0
      %7637 = vmatmul.mubr.f32.gmra.mxu0 %v3792
      %v7638 = vpop.f32.mrf.mxu0
      %v7639 = vadd.f32 0.0, %v7638
      %v7640 = vpop.f32.mrf.mxu0
      %7641 = vmatprep.mubr.f32.mxu0 0.0
      %7642 = vmatmul.mubr.f32.gmra.mxu0 %v4381
      %v7643 = vpop.f32.mrf.mxu0
      %v7644 = vadd.f32 0.0, %v7643
      %v7645 = vpop.f32.mrf.mxu0
      %7646 = vmatprep.mubr.f32.mxu0 0.0
      %7647 = vmatmul.mubr.f32.gmra.mxu0 %v4384
      %v7648 = vpop.f32.mrf.mxu0
      %v7649 = vadd.f32 0.0, %v7648
      %v7650 = vpop.f32.mrf.mxu0
      %7651 = vmatprep.mubr.f32.mxu0 0.0
      %7652 = vmatmul.mubr.f32.gmra.mxu0 %v4387
      %v7653 = vpop.f32.mrf.mxu0
      %v7654 = vadd.f32 0.0, %v7653
      %v7655 = vpop.f32.mrf.mxu0
      %7656 = vmatprep.mubr.f32.mxu0 0.0
      %7657 = vmatmul.mubr.f32.gmra.mxu0 %v4390
      %v7658 = vpop.f32.mrf.mxu0
      %v7659 = vadd.f32 0.0, %v7658
      %v7660 = vpop.f32.mrf.mxu0
      %7661 = vmatprep.mubr.f32.mxu0 0.0
      %7662 = vmatmul.mubr.f32.gmra.mxu0 %v4393
      %v7663 = vpop.f32.mrf.mxu0
      %v7664 = vadd.f32 0.0, %v7663
      %v7665 = vpop.f32.mrf.mxu0
      %7666 = vmatprep.mubr.f32.mxu0 0.0
      %7667 = vmatmul.mubr.f32.gmra.mxu0 %v4396
      %v7668 = vpop.f32.mrf.mxu0
      %v7669 = vadd.f32 0.0, %v7668
      %v7670 = vpop.f32.mrf.mxu0
      %7671 = vmatprep.mubr.f32.mxu0 0.0
      %7672 = vmatmul.mubr.f32.gmra.mxu0 %v4979
      %v7673 = vpop.f32.mrf.mxu0
      %v7674 = vadd.f32 0.0, %v7673
      %v7675 = vpop.f32.mrf.mxu0
      %7676 = vmatprep.mubr.f32.mxu0 0.0
      %7677 = vmatmul.mubr.f32.gmra.mxu0 %v5562
      %v7678 = vpop.f32.mrf.mxu0
      %v7679 = vadd.f32 0.0, %v7678
      %v7680 = vpop.f32.mrf.mxu0
      %7681 = vmatprep.mubr.f32.mxu0 0.0
      %7682 = vmatmul.mubr.f32.gmra.mxu0 %v6151
      %v7683 = vpop.f32.mrf.mxu0
      %v7684 = vadd.f32 0.0, %v7683
      %v7685 = vpop.f32.mrf.mxu0
      %7686 = vmatprep.mubr.f32.mxu0 0.0
      %7687 = vmatmul.mubr.f32.gmra.mxu0 %v6154
      %v7688 = vpop.f32.mrf.mxu0
      %v7689 = vadd.f32 0.0, %v7688
      %v7690 = vpop.f32.mrf.mxu0
      %7691 = vmatprep.mubr.f32.mxu0 0.0
      %7692 = vmatmul.mubr.f32.gmra.mxu0 %v6157
      %v7693 = vpop.f32.mrf.mxu0
      %v7694 = vadd.f32 0.0, %v7693
      %v7695 = vpop.f32.mrf.mxu0
      %7696 = vmatprep.mubr.f32.mxu0 0.0
      %7697 = vmatmul.mubr.f32.gmra.mxu0 %v6160
      %v7698 = vpop.f32.mrf.mxu0
      %v7699 = vadd.f32 0.0, %v7698
      %v7700 = vpop.f32.mrf.mxu0
      %7701 = vmatprep.mubr.f32.mxu0 0.0
      %7702 = vmatmul.mubr.f32.gmra.mxu0 %v6163
      %v7703 = vpop.f32.mrf.mxu0
      %v7704 = vadd.f32 0.0, %v7703
      %v7705 = vpop.f32.mrf.mxu0
      %7706 = vmatprep.mubr.f32.mxu0 0.0
      %7707 = vmatmul.mubr.f32.gmra.mxu0 %v6166
      %v7708 = vpop.f32.mrf.mxu0
      %v7709 = vadd.f32 0.0, %v7708
      %v7710 = vpop.f32.mrf.mxu0
      %7711 = vmatprep.mubr.f32.mxu0 0.0
      %7712 = vmatmul.mubr.f32.gmra.mxu0 %v6749
      %v7713 = vpop.f32.mrf.mxu0
      %v7714 = vadd.f32 0.0, %v7713
      %v7715 = vpop.f32.mrf.mxu0
      %7716 = vmatprep.mubr.f32.mxu0 0.0
      %7717 = vmatmul.mubr.f32.gmra.mxu0 %v7332
      %v7718 = vpop.f32.mrf.mxu0
      %v7719 = vadd.f32 0.0, %v7718
      %v7720 = vpop.f32.mrf.mxu0
      %7721 = vdwg.mxu0
      %v7722 = vadd.f32 %v7267, %v7404
      %v7723 = vadd.f32 %v7268, %v7409
      %v7724 = vadd.f32 %v7269, %v7414
      %v7725 = vadd.f32 %v7270, %v7419
      %v7726 = vadd.f32 %v7271, %v7424
      %v7727 = vadd.f32 %v7272, %v7429
      %v7728 = vadd.f32 %v7273, %v7434
      %v7729 = vadd.f32 %v7274, %v7439
      %v7730 = vadd.f32 %v7275, %v7444
      %v7731 = vadd.f32 %v7276, %v7449
      %v7732 = vadd.f32 %v7277, %v7454
      %v7733 = vadd.f32 %v7278, %v7459
      %v7734 = vadd.f32 %v7279, %v7464
      %v7735 = vadd.f32 %v7280, %v7469
      %v7736 = vadd.f32 %v7281, %v7474
      %v7737 = vadd.f32 %v7282, %v7479
      %v7738 = vadd.f32 %v7283, %v7484
      %v7739 = vadd.f32 %v7284, %v7489
      %v7740 = vadd.f32 %v7285, %v7494
      %v7741 = vadd.f32 %v7286, %v7499
      %v7742 = vadd.f32 %v7287, %v7504
      %v7743 = vadd.f32 %v7288, %v7509
      %v7744 = vadd.f32 %v7289, %v7514
      %v7745 = vadd.f32 %v7290, %v7519
      %v7746 = vadd.f32 %v7291, %v7524
      %v7747 = vadd.f32 %v7292, %v7529
      %v7748 = vadd.f32 %v7293, %v7534
      %v7749 = vadd.f32 %v7294, %v7539
      %v7750 = vadd.f32 %v7295, %v7544
      %v7751 = vadd.f32 %v7296, %v7549
      %v7752 = vadd.f32 %v7297, %v7554
      %v7753 = vadd.f32 %v7298, %v7559
      %v7754 = vadd.f32 %v7299, %v7564
      %v7755 = vadd.f32 %v7300, %v7569
      %v7756 = vadd.f32 %v7301, %v7574
      %v7757 = vadd.f32 %v7302, %v7579
      %v7758 = vadd.f32 %v7303, %v7584
      %v7759 = vadd.f32 %v7304, %v7589
      %v7760 = vadd.f32 %v7305, %v7594
      %v7761 = vadd.f32 %v7306, %v7599
      %v7762 = vadd.f32 %v7307, %v7604
      %v7763 = vadd.f32 %v7308, %v7609
      %v7764 = vadd.f32 %v7309, %v7614
      %v7765 = vadd.f32 %v7310, %v7619
      %v7766 = vadd.f32 %v7311, %v7624
      %v7767 = vadd.f32 %v7312, %v7629
      %v7768 = vadd.f32 %v7313, %v7634
      %v7769 = vadd.f32 %v7314, %v7639
      %v7770 = vadd.f32 %v7315, %v7644
      %v7771 = vadd.f32 %v7316, %v7649
      %v7772 = vadd.f32 %v7317, %v7654
      %v7773 = vadd.f32 %v7318, %v7659
      %v7774 = vadd.f32 %v7319, %v7664
      %v7775 = vadd.f32 %v7320, %v7669
      %v7776 = vadd.f32 %v7321, %v7674
      %v7777 = vadd.f32 %v7322, %v7679
      %v7778 = vadd.f32 %v7323, %v7684
      %v7779 = vadd.f32 %v7324, %v7689
      %v7780 = vadd.f32 %v7325, %v7694
      %v7781 = vadd.f32 %v7326, %v7699
      %v7782 = vadd.f32 %v7327, %v7704
      %v7783 = vadd.f32 %v7328, %v7709
      %v7784 = vadd.f32 %v7329, %v7714
      %v7785 = vadd.f32 %v7330, %v7719
      %7786 = vst.msk [vmem:[#allocation2] sm:$0xff] %vm2127, %v7722
      %7787 = vst.msk [vmem:[#allocation2 + $0x8] sm:$0xff] %vm2127, %v7723
      %7788 = vst.msk [vmem:[#allocation2 + $0x10] sm:$0xff] %vm2127, %v7724
      %7789 = vst.msk [vmem:[#allocation2 + $0x18] sm:$0xff] %vm2127, %v7725
      %7790 = vst.msk [vmem:[#allocation2 + $0x20] sm:$0xff] %vm2127, %v7726
      %7791 = vst.msk [vmem:[#allocation2 + $0x28] sm:$0xff] %vm2127, %v7727
      %7792 = vst.msk [vmem:[#allocation2 + $0x30] sm:$0xff] %vm2127, %v7728
      %7793 = vst.msk [vmem:[#allocation2 + $0x38] sm:$0xff] %vm2127, %v7729
      %7794 = vst.msk [vmem:[#allocation2 + $0x40] sm:$0xff] %vm2127, %v7730
      %7795 = vst.msk [vmem:[#allocation2 + $0x48] sm:$0xff] %vm2127, %v7731
      %7796 = vst.msk [vmem:[#allocation2 + $0x50] sm:$0xff] %vm2127, %v7732
      %7797 = vst.msk [vmem:[#allocation2 + $0x58] sm:$0xff] %vm2127, %v7733
      %7798 = vst.msk [vmem:[#allocation2 + $0x60] sm:$0xff] %vm2127, %v7734
      %7799 = vst.msk [vmem:[#allocation2 + $0x68] sm:$0xff] %vm2127, %v7735
      %7800 = vst.msk [vmem:[#allocation2 + $0x70] sm:$0xff] %vm2127, %v7736
      %7801 = vst.msk [vmem:[#allocation2 + $0x78] sm:$0xff] %vm2127, %v7737
      %7802 = vst.msk [vmem:[#allocation2 + $0x80] sm:$0xff] %vm2127, %v7738
      %7803 = vst.msk [vmem:[#allocation2 + $0x88] sm:$0xff] %vm2127, %v7739
      %7804 = vst.msk [vmem:[#allocation2 + $0x90] sm:$0xff] %vm2127, %v7740
      %7805 = vst.msk [vmem:[#allocation2 + $0x98] sm:$0xff] %vm2127, %v7741
      %7806 = vst.msk [vmem:[#allocation2 + $0xa0] sm:$0xff] %vm2127, %v7742
      %7807 = vst.msk [vmem:[#allocation2 + $0xa8] sm:$0xff] %vm2127, %v7743
      %7808 = vst.msk [vmem:[#allocation2 + $0xb0] sm:$0xff] %vm2127, %v7744
      %7809 = vst.msk [vmem:[#allocation2 + $0xb8] sm:$0xff] %vm2127, %v7745
      %7810 = vst.msk [vmem:[#allocation2 + $0xc0] sm:$0xff] %vm2127, %v7746
      %7811 = vst.msk [vmem:[#allocation2 + $0xc8] sm:$0xff] %vm2127, %v7747
      %7812 = vst.msk [vmem:[#allocation2 + $0xd0] sm:$0xff] %vm2127, %v7748
      %7813 = vst.msk [vmem:[#allocation2 + $0xd8] sm:$0xff] %vm2127, %v7749
      %7814 = vst.msk [vmem:[#allocation2 + $0xe0] sm:$0xff] %vm2127, %v7750
      %7815 = vst.msk [vmem:[#allocation2 + $0xe8] sm:$0xff] %vm2127, %v7751
      %7816 = vst.msk [vmem:[#allocation2 + $0xf0] sm:$0xff] %vm2127, %v7752
      %7817 = vst.msk [vmem:[#allocation2 + $0xf8] sm:$0xff] %vm2127, %v7753
      %7818 = vst.msk [vmem:[#allocation2 + $0x100] sm:$0xff] %vm2127, %v7754
      %7819 = vst.msk [vmem:[#allocation2 + $0x108] sm:$0xff] %vm2127, %v7755
      %7820 = vst.msk [vmem:[#allocation2 + $0x110] sm:$0xff] %vm2127, %v7756
      %7821 = vst.msk [vmem:[#allocation2 + $0x118] sm:$0xff] %vm2127, %v7757
      %7822 = vst.msk [vmem:[#allocation2 + $0x120] sm:$0xff] %vm2127, %v7758
      %7823 = vst.msk [vmem:[#allocation2 + $0x128] sm:$0xff] %vm2127, %v7759
      %7824 = vst.msk [vmem:[#allocation2 + $0x130] sm:$0xff] %vm2127, %v7760
      %7825 = vst.msk [vmem:[#allocation2 + $0x138] sm:$0xff] %vm2127, %v7761
      %7826 = vst.msk [vmem:[#allocation2 + $0x140] sm:$0xff] %vm2127, %v7762
      %7827 = vst.msk [vmem:[#allocation2 + $0x148] sm:$0xff] %vm2127, %v7763
      %7828 = vst.msk [vmem:[#allocation2 + $0x150] sm:$0xff] %vm2127, %v7764
      %7829 = vst.msk [vmem:[#allocation2 + $0x158] sm:$0xff] %vm2127, %v7765
      %7830 = vst.msk [vmem:[#allocation2 + $0x160] sm:$0xff] %vm2127, %v7766
      %7831 = vst.msk [vmem:[#allocation2 + $0x168] sm:$0xff] %vm2127, %v7767
      %7832 = vst.msk [vmem:[#allocation2 + $0x170] sm:$0xff] %vm2127, %v7768
      %7833 = vst.msk [vmem:[#allocation2 + $0x178] sm:$0xff] %vm2127, %v7769
      %7834 = vst.msk [vmem:[#allocation2 + $0x180] sm:$0xff] %vm2127, %v7770
      %7835 = vst.msk [vmem:[#allocation2 + $0x188] sm:$0xff] %vm2127, %v7771
      %7836 = vst.msk [vmem:[#allocation2 + $0x190] sm:$0xff] %vm2127, %v7772
      %7837 = vst.msk [vmem:[#allocation2 + $0x198] sm:$0xff] %vm2127, %v7773
      %7838 = vst.msk [vmem:[#allocation2 + $0x1a0] sm:$0xff] %vm2127, %v7774
      %7839 = vst.msk [vmem:[#allocation2 + $0x1a8] sm:$0xff] %vm2127, %v7775
      %7840 = vst.msk [vmem:[#allocation2 + $0x1b0] sm:$0xff] %vm2127, %v7776
      %7841 = vst.msk [vmem:[#allocation2 + $0x1b8] sm:$0xff] %vm2127, %v7777
      %7842 = vst.msk [vmem:[#allocation2 + $0x1c0] sm:$0xff] %vm2127, %v7778
      %7843 = vst.msk [vmem:[#allocation2 + $0x1c8] sm:$0xff] %vm2127, %v7779
      %7844 = vst.msk [vmem:[#allocation2 + $0x1d0] sm:$0xff] %vm2127, %v7780
      %7845 = vst.msk [vmem:[#allocation2 + $0x1d8] sm:$0xff] %vm2127, %v7781
      %7846 = vst.msk [vmem:[#allocation2 + $0x1e0] sm:$0xff] %vm2127, %v7782
      %7847 = vst.msk [vmem:[#allocation2 + $0x1e8] sm:$0xff] %vm2127, %v7783
      %7848 = vst.msk [vmem:[#allocation2 + $0x1f0] sm:$0xff] %vm2127, %v7784
      %7849 = vst.msk [vmem:[#allocation2 + $0x1f8] sm:$0xff] %vm2127, %v7785
      %v7850 = vld [vmem:[#allocation2] sm:$0xff]
      %v7851 = vld [vmem:[#allocation2 + $0x8] sm:$0xff]
      %v7852 = vld [vmem:[#allocation2 + $0x10] sm:$0xff]
      %v7853 = vld [vmem:[#allocation2 + $0x18] sm:$0xff]
      %v7854 = vld [vmem:[#allocation2 + $0x20] sm:$0xff]
      %v7855 = vld [vmem:[#allocation2 + $0x28] sm:$0xff]
      %v7856 = vld [vmem:[#allocation2 + $0x30] sm:$0xff]
      %v7857 = vld [vmem:[#allocation2 + $0x38] sm:$0xff]
      %v7858 = vld [vmem:[#allocation2 + $0x40] sm:$0xff]
      %v7859 = vld [vmem:[#allocation2 + $0x48] sm:$0xff]
      %v7860 = vld [vmem:[#allocation2 + $0x50] sm:$0xff]
      %v7861 = vld [vmem:[#allocation2 + $0x58] sm:$0xff]
      %v7862 = vld [vmem:[#allocation2 + $0x60] sm:$0xff]
      %v7863 = vld [vmem:[#allocation2 + $0x68] sm:$0xff]
      %v7864 = vld [vmem:[#allocation2 + $0x70] sm:$0xff]
      %v7865 = vld [vmem:[#allocation2 + $0x78] sm:$0xff]
      %v7866 = vld [vmem:[#allocation2 + $0x80] sm:$0xff]
      %v7867 = vld [vmem:[#allocation2 + $0x88] sm:$0xff]
      %v7868 = vld [vmem:[#allocation2 + $0x90] sm:$0xff]
      %v7869 = vld [vmem:[#allocation2 + $0x98] sm:$0xff]
      %v7870 = vld [vmem:[#allocation2 + $0xa0] sm:$0xff]
      %v7871 = vld [vmem:[#allocation2 + $0xa8] sm:$0xff]
      %v7872 = vld [vmem:[#allocation2 + $0xb0] sm:$0xff]
      %v7873 = vld [vmem:[#allocation2 + $0xb8] sm:$0xff]
      %v7874 = vld [vmem:[#allocation2 + $0xc0] sm:$0xff]
      %v7875 = vld [vmem:[#allocation2 + $0xc8] sm:$0xff]
      %v7876 = vld [vmem:[#allocation2 + $0xd0] sm:$0xff]
      %v7877 = vld [vmem:[#allocation2 + $0xd8] sm:$0xff]
      %v7878 = vld [vmem:[#allocation2 + $0xe0] sm:$0xff]
      %v7879 = vld [vmem:[#allocation2 + $0xe8] sm:$0xff]
      %v7880 = vld [vmem:[#allocation2 + $0xf0] sm:$0xff]
      %v7881 = vld [vmem:[#allocation2 + $0xf8] sm:$0xff]
      %v7882 = vld [vmem:[#allocation2 + $0x100] sm:$0xff]
      %v7883 = vld [vmem:[#allocation2 + $0x108] sm:$0xff]
      %v7884 = vld [vmem:[#allocation2 + $0x110] sm:$0xff]
      %v7885 = vld [vmem:[#allocation2 + $0x118] sm:$0xff]
      %v7886 = vld [vmem:[#allocation2 + $0x120] sm:$0xff]
      %v7887 = vld [vmem:[#allocation2 + $0x128] sm:$0xff]
      %v7888 = vld [vmem:[#allocation2 + $0x130] sm:$0xff]
      %v7889 = vld [vmem:[#allocation2 + $0x138] sm:$0xff]
      %v7890 = vld [vmem:[#allocation2 + $0x140] sm:$0xff]
      %v7891 = vld [vmem:[#allocation2 + $0x148] sm:$0xff]
      %v7892 = vld [vmem:[#allocation2 + $0x150] sm:$0xff]
      %v7893 = vld [vmem:[#allocation2 + $0x158] sm:$0xff]
      %v7894 = vld [vmem:[#allocation2 + $0x160] sm:$0xff]
      %v7895 = vld [vmem:[#allocation2 + $0x168] sm:$0xff]
      %v7896 = vld [vmem:[#allocation2 + $0x170] sm:$0xff]
      %v7897 = vld [vmem:[#allocation2 + $0x178] sm:$0xff]
      %v7898 = vld [vmem:[#allocation2 + $0x180] sm:$0xff]
      %v7899 = vld [vmem:[#allocation2 + $0x188] sm:$0xff]
      %v7900 = vld [vmem:[#allocation2 + $0x190] sm:$0xff]
      %v7901 = vld [vmem:[#allocation2 + $0x198] sm:$0xff]
      %v7902 = vld [vmem:[#allocation2 + $0x1a0] sm:$0xff]
      %v7903 = vld [vmem:[#allocation2 + $0x1a8] sm:$0xff]
      %v7904 = vld [vmem:[#allocation2 + $0x1b0] sm:$0xff]
      %v7905 = vld [vmem:[#allocation2 + $0x1b8] sm:$0xff]
      %v7906 = vld [vmem:[#allocation2 + $0x1c0] sm:$0xff]
      %v7907 = vld [vmem:[#allocation2 + $0x1c8] sm:$0xff]
      %v7908 = vld [vmem:[#allocation2 + $0x1d0] sm:$0xff]
      %v7909 = vld [vmem:[#allocation2 + $0x1d8] sm:$0xff]
      %v7910 = vld [vmem:[#allocation2 + $0x1e0] sm:$0xff]
      %v7911 = vld [vmem:[#allocation2 + $0x1e8] sm:$0xff]
      %v7912 = vld [vmem:[#allocation2 + $0x1f0] sm:$0xff]
      %v7913 = vld [vmem:[#allocation2 + $0x1f8] sm:$0xff]
      %v7914 = vld [vmem:[%s2] sm:$0x1]
      %v7916 = vlaneseq
      %v7917 = vshrl.u32 %v7916, 7
      %v7918 = vsub.s32 0, %v7917
      %v7919 = vrot.slane %v7914, %v7918
      %v7921 = vmul.f32 %v7850, %v7919
      %v7922 = vmul.f32 %v7851, %v7919
      %v7923 = vmul.f32 %v7852, %v7919
      %v7924 = vmul.f32 %v7853, %v7919
      %v7925 = vmul.f32 %v7854, %v7919
      %v7926 = vmul.f32 %v7855, %v7919
      %v7927 = vmul.f32 %v7856, %v7919
      %v7928 = vmul.f32 %v7857, %v7919
      %v7929 = vmul.f32 %v7858, %v7919
      %v7930 = vmul.f32 %v7859, %v7919
      %v7931 = vmul.f32 %v7860, %v7919
      %v7932 = vmul.f32 %v7861, %v7919
      %v7933 = vmul.f32 %v7862, %v7919
      %v7934 = vmul.f32 %v7863, %v7919
      %v7935 = vmul.f32 %v7864, %v7919
      %v7936 = vmul.f32 %v7865, %v7919
      %v7937 = vmul.f32 %v7866, %v7919
      %v7938 = vmul.f32 %v7867, %v7919
      %v7939 = vmul.f32 %v7868, %v7919
      %v7940 = vmul.f32 %v7869, %v7919
      %v7941 = vmul.f32 %v7870, %v7919
      %v7942 = vmul.f32 %v7871, %v7919
      %v7943 = vmul.f32 %v7872, %v7919
      %v7944 = vmul.f32 %v7873, %v7919
      %v7945 = vmul.f32 %v7874, %v7919
      %v7946 = vmul.f32 %v7875, %v7919
      %v7947 = vmul.f32 %v7876, %v7919
      %v7948 = vmul.f32 %v7877, %v7919
      %v7949 = vmul.f32 %v7878, %v7919
      %v7950 = vmul.f32 %v7879, %v7919
      %v7951 = vmul.f32 %v7880, %v7919
      %v7952 = vmul.f32 %v7881, %v7919
      %v7953 = vmul.f32 %v7882, %v7919
      %v7954 = vmul.f32 %v7883, %v7919
      %v7955 = vmul.f32 %v7884, %v7919
      %v7956 = vmul.f32 %v7885, %v7919
      %v7957 = vmul.f32 %v7886, %v7919
      %v7958 = vmul.f32 %v7887, %v7919
      %v7959 = vmul.f32 %v7888, %v7919
      %v7960 = vmul.f32 %v7889, %v7919
      %v7961 = vmul.f32 %v7890, %v7919
      %v7962 = vmul.f32 %v7891, %v7919
      %v7963 = vmul.f32 %v7892, %v7919
      %v7964 = vmul.f32 %v7893, %v7919
      %v7965 = vmul.f32 %v7894, %v7919
      %v7966 = vmul.f32 %v7895, %v7919
      %v7967 = vmul.f32 %v7896, %v7919
      %v7968 = vmul.f32 %v7897, %v7919
      %v7969 = vmul.f32 %v7898, %v7919
      %v7970 = vmul.f32 %v7899, %v7919
      %v7971 = vmul.f32 %v7900, %v7919
      %v7972 = vmul.f32 %v7901, %v7919
      %v7973 = vmul.f32 %v7902, %v7919
      %v7974 = vmul.f32 %v7903, %v7919
      %v7975 = vmul.f32 %v7904, %v7919
      %v7976 = vmul.f32 %v7905, %v7919
      %v7977 = vmul.f32 %v7906, %v7919
      %v7978 = vmul.f32 %v7907, %v7919
      %v7979 = vmul.f32 %v7908, %v7919
      %v7980 = vmul.f32 %v7909, %v7919
      %v7981 = vmul.f32 %v7910, %v7919
      %v7982 = vmul.f32 %v7911, %v7919
      %v7983 = vmul.f32 %v7912, %v7919
      %v7984 = vmul.f32 %v7913, %v7919
      %v7985 = vld [vmem:[%s3] sm:$0x1]
      %v7987 = vlaneseq
      %v7988 = vshrl.u32 %v7987, 7
      %v7989 = vsub.s32 0, %v7988
      %v7990 = vrot.slane %v7985, %v7989
      %v7992 = vadd.f32 %v7921, %v7990
      %v7993 = vadd.f32 %v7922, %v7990
      %v7994 = vadd.f32 %v7923, %v7990
      %v7995 = vadd.f32 %v7924, %v7990
      %v7996 = vadd.f32 %v7925, %v7990
      %v7997 = vadd.f32 %v7926, %v7990
      %v7998 = vadd.f32 %v7927, %v7990
      %v7999 = vadd.f32 %v7928, %v7990
      %v8000 = vadd.f32 %v7929, %v7990
      %v8001 = vadd.f32 %v7930, %v7990
      %v8002 = vadd.f32 %v7931, %v7990
      %v8003 = vadd.f32 %v7932, %v7990
      %v8004 = vadd.f32 %v7933, %v7990
      %v8005 = vadd.f32 %v7934, %v7990
      %v8006 = vadd.f32 %v7935, %v7990
      %v8007 = vadd.f32 %v7936, %v7990
      %v8008 = vadd.f32 %v7937, %v7990
      %v8009 = vadd.f32 %v7938, %v7990
      %v8010 = vadd.f32 %v7939, %v7990
      %v8011 = vadd.f32 %v7940, %v7990
      %v8012 = vadd.f32 %v7941, %v7990
      %v8013 = vadd.f32 %v7942, %v7990
      %v8014 = vadd.f32 %v7943, %v7990
      %v8015 = vadd.f32 %v7944, %v7990
      %v8016 = vadd.f32 %v7945, %v7990
      %v8017 = vadd.f32 %v7946, %v7990
      %v8018 = vadd.f32 %v7947, %v7990
      %v8019 = vadd.f32 %v7948, %v7990
      %v8020 = vadd.f32 %v7949, %v7990
      %v8021 = vadd.f32 %v7950, %v7990
      %v8022 = vadd.f32 %v7951, %v7990
      %v8023 = vadd.f32 %v7952, %v7990
      %v8024 = vadd.f32 %v7953, %v7990
      %v8025 = vadd.f32 %v7954, %v7990
      %v8026 = vadd.f32 %v7955, %v7990
      %v8027 = vadd.f32 %v7956, %v7990
      %v8028 = vadd.f32 %v7957, %v7990
      %v8029 = vadd.f32 %v7958, %v7990
      %v8030 = vadd.f32 %v7959, %v7990
      %v8031 = vadd.f32 %v7960, %v7990
      %v8032 = vadd.f32 %v7961, %v7990
      %v8033 = vadd.f32 %v7962, %v7990
      %v8034 = vadd.f32 %v7963, %v7990
      %v8035 = vadd.f32 %v7964, %v7990
      %v8036 = vadd.f32 %v7965, %v7990
      %v8037 = vadd.f32 %v7966, %v7990
      %v8038 = vadd.f32 %v7967, %v7990
      %v8039 = vadd.f32 %v7968, %v7990
      %v8040 = vadd.f32 %v7969, %v7990
      %v8041 = vadd.f32 %v7970, %v7990
      %v8042 = vadd.f32 %v7971, %v7990
      %v8043 = vadd.f32 %v7972, %v7990
      %v8044 = vadd.f32 %v7973, %v7990
      %v8045 = vadd.f32 %v7974, %v7990
      %v8046 = vadd.f32 %v7975, %v7990
      %v8047 = vadd.f32 %v7976, %v7990
      %v8048 = vadd.f32 %v7977, %v7990
      %v8049 = vadd.f32 %v7978, %v7990
      %v8050 = vadd.f32 %v7979, %v7990
      %v8051 = vadd.f32 %v7980, %v7990
      %v8052 = vadd.f32 %v7981, %v7990
      %v8053 = vadd.f32 %v7982, %v7990
      %v8054 = vadd.f32 %v7983, %v7990
      %v8055 = vadd.f32 %v7984, %v7990
      %v8056 = vmax.f32 %v7992, 0.0
      %v8057 = vmax.f32 %v7993, 0.0
      %v8058 = vmax.f32 %v7994, 0.0
      %v8059 = vmax.f32 %v7995, 0.0
      %v8060 = vmax.f32 %v7996, 0.0
      %v8061 = vmax.f32 %v7997, 0.0
      %v8062 = vmax.f32 %v7998, 0.0
      %v8063 = vmax.f32 %v7999, 0.0
      %v8064 = vmax.f32 %v8000, 0.0
      %v8065 = vmax.f32 %v8001, 0.0
      %v8066 = vmax.f32 %v8002, 0.0
      %v8067 = vmax.f32 %v8003, 0.0
      %v8068 = vmax.f32 %v8004, 0.0
      %v8069 = vmax.f32 %v8005, 0.0
      %v8070 = vmax.f32 %v8006, 0.0
      %v8071 = vmax.f32 %v8007, 0.0
      %v8072 = vmax.f32 %v8008, 0.0
      %v8073 = vmax.f32 %v8009, 0.0
      %v8074 = vmax.f32 %v8010, 0.0
      %v8075 = vmax.f32 %v8011, 0.0
      %v8076 = vmax.f32 %v8012, 0.0
      %v8077 = vmax.f32 %v8013, 0.0
      %v8078 = vmax.f32 %v8014, 0.0
      %v8079 = vmax.f32 %v8015, 0.0
      %v8080 = vmax.f32 %v8016, 0.0
      %v8081 = vmax.f32 %v8017, 0.0
      %v8082 = vmax.f32 %v8018, 0.0
      %v8083 = vmax.f32 %v8019, 0.0
      %v8084 = vmax.f32 %v8020, 0.0
      %v8085 = vmax.f32 %v8021, 0.0
      %v8086 = vmax.f32 %v8022, 0.0
      %v8087 = vmax.f32 %v8023, 0.0
      %v8088 = vmax.f32 %v8024, 0.0
      %v8089 = vmax.f32 %v8025, 0.0
      %v8090 = vmax.f32 %v8026, 0.0
      %v8091 = vmax.f32 %v8027, 0.0
      %v8092 = vmax.f32 %v8028, 0.0
      %v8093 = vmax.f32 %v8029, 0.0
      %v8094 = vmax.f32 %v8030, 0.0
      %v8095 = vmax.f32 %v8031, 0.0
      %v8096 = vmax.f32 %v8032, 0.0
      %v8097 = vmax.f32 %v8033, 0.0
      %v8098 = vmax.f32 %v8034, 0.0
      %v8099 = vmax.f32 %v8035, 0.0
      %v8100 = vmax.f32 %v8036, 0.0
      %v8101 = vmax.f32 %v8037, 0.0
      %v8102 = vmax.f32 %v8038, 0.0
      %v8103 = vmax.f32 %v8039, 0.0
      %v8104 = vmax.f32 %v8040, 0.0
      %v8105 = vmax.f32 %v8041, 0.0
      %v8106 = vmax.f32 %v8042, 0.0
      %v8107 = vmax.f32 %v8043, 0.0
      %v8108 = vmax.f32 %v8044, 0.0
      %v8109 = vmax.f32 %v8045, 0.0
      %v8110 = vmax.f32 %v8046, 0.0
      %v8111 = vmax.f32 %v8047, 0.0
      %v8112 = vmax.f32 %v8048, 0.0
      %v8113 = vmax.f32 %v8049, 0.0
      %v8114 = vmax.f32 %v8050, 0.0
      %v8115 = vmax.f32 %v8051, 0.0
      %v8116 = vmax.f32 %v8052, 0.0
      %v8117 = vmax.f32 %v8053, 0.0
      %v8118 = vmax.f32 %v8054, 0.0
      %v8119 = vmax.f32 %v8055, 0.0
      %v8120 = vpack.c.bf16 %v8057, %v8056
      %v8121 = vpack.c.bf16 %v8059, %v8058
      %v8122 = vpack.c.bf16 %v8061, %v8060
      %v8123 = vpack.c.bf16 %v8063, %v8062
      %v8124 = vpack.c.bf16 %v8065, %v8064
      %v8125 = vpack.c.bf16 %v8067, %v8066
      %v8126 = vpack.c.bf16 %v8069, %v8068
      %v8127 = vpack.c.bf16 %v8071, %v8070
      %v8128 = vpack.c.bf16 %v8073, %v8072
      %v8129 = vpack.c.bf16 %v8075, %v8074
      %v8130 = vpack.c.bf16 %v8077, %v8076
      %v8131 = vpack.c.bf16 %v8079, %v8078
      %v8132 = vpack.c.bf16 %v8081, %v8080
      %v8133 = vpack.c.bf16 %v8083, %v8082
      %v8134 = vpack.c.bf16 %v8085, %v8084
      %v8135 = vpack.c.bf16 %v8087, %v8086
      %v8136 = vpack.c.bf16 %v8089, %v8088
      %v8137 = vpack.c.bf16 %v8091, %v8090
      %v8138 = vpack.c.bf16 %v8093, %v8092
      %v8139 = vpack.c.bf16 %v8095, %v8094
      %v8140 = vpack.c.bf16 %v8097, %v8096
      %v8141 = vpack.c.bf16 %v8099, %v8098
      %v8142 = vpack.c.bf16 %v8101, %v8100
      %v8143 = vpack.c.bf16 %v8103, %v8102
      %v8144 = vpack.c.bf16 %v8105, %v8104
      %v8145 = vpack.c.bf16 %v8107, %v8106
      %v8146 = vpack.c.bf16 %v8109, %v8108
      %v8147 = vpack.c.bf16 %v8111, %v8110
      %v8148 = vpack.c.bf16 %v8113, %v8112
      %v8149 = vpack.c.bf16 %v8115, %v8114
      %v8150 = vpack.c.bf16 %v8117, %v8116
      %v8151 = vpack.c.bf16 %v8119, %v8118
      %v8184 = vunpack.c.l.b16 %v8120
      %v8185 = vunpack.c.h.b16 %v8120
      %v8186 = vunpack.c.l.b16 %v8121
      %v8187 = vunpack.c.h.b16 %v8121
      %v8188 = vunpack.c.l.b16 %v8122
      %v8189 = vunpack.c.h.b16 %v8122
      %v8190 = vunpack.c.l.b16 %v8123
      %v8191 = vunpack.c.h.b16 %v8123
      %v8192 = vunpack.c.l.b16 %v8124
      %v8193 = vunpack.c.h.b16 %v8124
      %v8194 = vunpack.c.l.b16 %v8125
      %v8195 = vunpack.c.h.b16 %v8125
      %v8196 = vunpack.c.l.b16 %v8126
      %v8197 = vunpack.c.h.b16 %v8126
      %v8198 = vunpack.c.l.b16 %v8127
      %v8199 = vunpack.c.h.b16 %v8127
      %v8200 = vunpack.c.l.b16 %v8128
      %v8201 = vunpack.c.h.b16 %v8128
      %v8202 = vunpack.c.l.b16 %v8129
      %v8203 = vunpack.c.h.b16 %v8129
      %v8204 = vunpack.c.l.b16 %v8130
      %v8205 = vunpack.c.h.b16 %v8130
      %v8206 = vunpack.c.l.b16 %v8131
      %v8207 = vunpack.c.h.b16 %v8131
      %v8208 = vunpack.c.l.b16 %v8132
      %v8209 = vunpack.c.h.b16 %v8132
      %v8210 = vunpack.c.l.b16 %v8133
      %v8211 = vunpack.c.h.b16 %v8133
      %v8212 = vunpack.c.l.b16 %v8134
      %v8213 = vunpack.c.h.b16 %v8134
      %v8214 = vunpack.c.l.b16 %v8135
      %v8215 = vunpack.c.h.b16 %v8135
      %v8216 = vunpack.c.l.b16 %v8136
      %v8217 = vunpack.c.h.b16 %v8136
      %v8218 = vunpack.c.l.b16 %v8137
      %v8219 = vunpack.c.h.b16 %v8137
      %v8220 = vunpack.c.l.b16 %v8138
      %v8221 = vunpack.c.h.b16 %v8138
      %v8222 = vunpack.c.l.b16 %v8139
      %v8223 = vunpack.c.h.b16 %v8139
      %v8224 = vunpack.c.l.b16 %v8140
      %v8225 = vunpack.c.h.b16 %v8140
      %v8226 = vunpack.c.l.b16 %v8141
      %v8227 = vunpack.c.h.b16 %v8141
      %v8228 = vunpack.c.l.b16 %v8142
      %v8229 = vunpack.c.h.b16 %v8142
      %v8230 = vunpack.c.l.b16 %v8143
      %v8231 = vunpack.c.h.b16 %v8143
      %v8232 = vunpack.c.l.b16 %v8144
      %v8233 = vunpack.c.h.b16 %v8144
      %v8234 = vunpack.c.l.b16 %v8145
      %v8235 = vunpack.c.h.b16 %v8145
      %v8236 = vunpack.c.l.b16 %v8146
      %v8237 = vunpack.c.h.b16 %v8146
      %v8238 = vunpack.c.l.b16 %v8147
      %v8239 = vunpack.c.h.b16 %v8147
      %v8240 = vunpack.c.l.b16 %v8148
      %v8241 = vunpack.c.h.b16 %v8148
      %v8242 = vunpack.c.l.b16 %v8149
      %v8243 = vunpack.c.h.b16 %v8149
      %v8244 = vunpack.c.l.b16 %v8150
      %v8245 = vunpack.c.h.b16 %v8150
      %v8246 = vunpack.c.l.b16 %v8151
      %v8247 = vunpack.c.h.b16 %v8151
      %v8248 = vpack.c.b16 %v8184, %v8184
      %v8249 = vpack.c.b16 %v8185, %v8185
      %v8250 = vpack.c.b16 %v8186, %v8186
      %v8251 = vpack.c.b16 %v8187, %v8187
      %v8252 = vpack.c.b16 %v8188, %v8188
      %v8253 = vpack.c.b16 %v8189, %v8189
      %v8254 = vpack.c.b16 %v8190, %v8190
      %v8255 = vpack.c.b16 %v8191, %v8191
      %v8256 = vpack.c.b16 %v8192, %v8192
      %v8257 = vpack.c.b16 %v8193, %v8193
      %v8258 = vpack.c.b16 %v8194, %v8194
      %v8259 = vpack.c.b16 %v8195, %v8195
      %v8260 = vpack.c.b16 %v8196, %v8196
      %v8261 = vpack.c.b16 %v8197, %v8197
      %v8262 = vpack.c.b16 %v8198, %v8198
      %v8263 = vpack.c.b16 %v8199, %v8199
      %v8264 = vpack.c.b16 %v8200, %v8200
      %v8265 = vpack.c.b16 %v8201, %v8201
      %v8266 = vpack.c.b16 %v8202, %v8202
      %v8267 = vpack.c.b16 %v8203, %v8203
      %v8268 = vpack.c.b16 %v8204, %v8204
      %v8269 = vpack.c.b16 %v8205, %v8205
      %v8270 = vpack.c.b16 %v8206, %v8206
      %v8271 = vpack.c.b16 %v8207, %v8207
      %v8272 = vpack.c.b16 %v8208, %v8208
      %v8273 = vpack.c.b16 %v8209, %v8209
      %v8274 = vpack.c.b16 %v8210, %v8210
      %v8275 = vpack.c.b16 %v8211, %v8211
      %v8276 = vpack.c.b16 %v8212, %v8212
      %v8277 = vpack.c.b16 %v8213, %v8213
      %v8278 = vpack.c.b16 %v8214, %v8214
      %v8279 = vpack.c.b16 %v8215, %v8215
      %v8280 = vpack.c.b16 %v8216, %v8216
      %v8281 = vpack.c.b16 %v8217, %v8217
      %v8282 = vpack.c.b16 %v8218, %v8218
      %v8283 = vpack.c.b16 %v8219, %v8219
      %v8284 = vpack.c.b16 %v8220, %v8220
      %v8285 = vpack.c.b16 %v8221, %v8221
      %v8286 = vpack.c.b16 %v8222, %v8222
      %v8287 = vpack.c.b16 %v8223, %v8223
      %v8288 = vpack.c.b16 %v8224, %v8224
      %v8289 = vpack.c.b16 %v8225, %v8225
      %v8290 = vpack.c.b16 %v8226, %v8226
      %v8291 = vpack.c.b16 %v8227, %v8227
      %v8292 = vpack.c.b16 %v8228, %v8228
      %v8293 = vpack.c.b16 %v8229, %v8229
      %v8294 = vpack.c.b16 %v8230, %v8230
      %v8295 = vpack.c.b16 %v8231, %v8231
      %v8296 = vpack.c.b16 %v8232, %v8232
      %v8297 = vpack.c.b16 %v8233, %v8233
      %v8298 = vpack.c.b16 %v8234, %v8234
      %v8299 = vpack.c.b16 %v8235, %v8235
      %v8300 = vpack.c.b16 %v8236, %v8236
      %v8301 = vpack.c.b16 %v8237, %v8237
      %v8302 = vpack.c.b16 %v8238, %v8238
      %v8303 = vpack.c.b16 %v8239, %v8239
      %v8304 = vpack.c.b16 %v8240, %v8240
      %v8305 = vpack.c.b16 %v8241, %v8241
      %v8306 = vpack.c.b16 %v8242, %v8242
      %v8307 = vpack.c.b16 %v8243, %v8243
      %v8308 = vpack.c.b16 %v8244, %v8244
      %v8309 = vpack.c.b16 %v8245, %v8245
      %v8310 = vpack.c.b16 %v8246, %v8246
      %v8311 = vpack.c.b16 %v8247, %v8247
      %vm8376 = vcmask 60416
      %8377 = vst.msk [vmem:[%s219] sm:$0xf] %vm8376, %v8248
      %8378 = vst.msk [vmem:[%s219 + $0x4] sm:$0xf] %vm8376, %v8249
      %8379 = vst.msk [vmem:[%s219 + $0x8] sm:$0xf] %vm8376, %v8250
      %8380 = vst.msk [vmem:[%s219 + $0xc] sm:$0xf] %vm8376, %v8251
      %8381 = vst.msk [vmem:[%s219 + $0x10] sm:$0xf] %vm8376, %v8252
      %8382 = vst.msk [vmem:[%s219 + $0x14] sm:$0xf] %vm8376, %v8253
      %8383 = vst.msk [vmem:[%s219 + $0x18] sm:$0xf] %vm8376, %v8254
      %8384 = vst.msk [vmem:[%s219 + $0x1c] sm:$0xf] %vm8376, %v8255
      %8385 = vst.msk [vmem:[%s219 + $0x20] sm:$0xf] %vm8376, %v8256
      %8386 = vst.msk [vmem:[%s219 + $0x24] sm:$0xf] %vm8376, %v8257
      %8387 = vst.msk [vmem:[%s219 + $0x28] sm:$0xf] %vm8376, %v8258
      %8388 = vst.msk [vmem:[%s219 + $0x2c] sm:$0xf] %vm8376, %v8259
      %8389 = vst.msk [vmem:[%s219 + $0x30] sm:$0xf] %vm8376, %v8260
      %8390 = vst.msk [vmem:[%s219 + $0x34] sm:$0xf] %vm8376, %v8261
      %8391 = vst.msk [vmem:[%s219 + $0x38] sm:$0xf] %vm8376, %v8262
      %8392 = vst.msk [vmem:[%s219 + $0x3c] sm:$0xf] %vm8376, %v8263
      %8393 = vst.msk [vmem:[%s219 + $0x40] sm:$0xf] %vm8376, %v8264
      %8394 = vst.msk [vmem:[%s219 + $0x44] sm:$0xf] %vm8376, %v8265
      %8395 = vst.msk [vmem:[%s219 + $0x48] sm:$0xf] %vm8376, %v8266
      %8396 = vst.msk [vmem:[%s219 + $0x4c] sm:$0xf] %vm8376, %v8267
      %8397 = vst.msk [vmem:[%s219 + $0x50] sm:$0xf] %vm8376, %v8268
      %8398 = vst.msk [vmem:[%s219 + $0x54] sm:$0xf] %vm8376, %v8269
      %8399 = vst.msk [vmem:[%s219 + $0x58] sm:$0xf] %vm8376, %v8270
      %8400 = vst.msk [vmem:[%s219 + $0x5c] sm:$0xf] %vm8376, %v8271
      %8401 = vst.msk [vmem:[%s219 + $0x60] sm:$0xf] %vm8376, %v8272
      %8402 = vst.msk [vmem:[%s219 + $0x64] sm:$0xf] %vm8376, %v8273
      %8403 = vst.msk [vmem:[%s219 + $0x68] sm:$0xf] %vm8376, %v8274
      %8404 = vst.msk [vmem:[%s219 + $0x6c] sm:$0xf] %vm8376, %v8275
      %8405 = vst.msk [vmem:[%s219 + $0x70] sm:$0xf] %vm8376, %v8276
      %8406 = vst.msk [vmem:[%s219 + $0x74] sm:$0xf] %vm8376, %v8277
      %8407 = vst.msk [vmem:[%s219 + $0x78] sm:$0xf] %vm8376, %v8278
      %8408 = vst.msk [vmem:[%s219 + $0x7c] sm:$0xf] %vm8376, %v8279
      %8409 = vst.msk [vmem:[%s219 + $0x80] sm:$0xf] %vm8376, %v8280
      %8410 = vst.msk [vmem:[%s219 + $0x84] sm:$0xf] %vm8376, %v8281
      %8411 = vst.msk [vmem:[%s219 + $0x88] sm:$0xf] %vm8376, %v8282
      %8412 = vst.msk [vmem:[%s219 + $0x8c] sm:$0xf] %vm8376, %v8283
      %8413 = vst.msk [vmem:[%s219 + $0x90] sm:$0xf] %vm8376, %v8284
      %8414 = vst.msk [vmem:[%s219 + $0x94] sm:$0xf] %vm8376, %v8285
      %8415 = vst.msk [vmem:[%s219 + $0x98] sm:$0xf] %vm8376, %v8286
      %8416 = vst.msk [vmem:[%s219 + $0x9c] sm:$0xf] %vm8376, %v8287
      %8417 = vst.msk [vmem:[%s219 + $0xa0] sm:$0xf] %vm8376, %v8288
      %8418 = vst.msk [vmem:[%s219 + $0xa4] sm:$0xf] %vm8376, %v8289
      %8419 = vst.msk [vmem:[%s219 + $0xa8] sm:$0xf] %vm8376, %v8290
      %8420 = vst.msk [vmem:[%s219 + $0xac] sm:$0xf] %vm8376, %v8291
      %8421 = vst.msk [vmem:[%s219 + $0xb0] sm:$0xf] %vm8376, %v8292
      %8422 = vst.msk [vmem:[%s219 + $0xb4] sm:$0xf] %vm8376, %v8293
      %8423 = vst.msk [vmem:[%s219 + $0xb8] sm:$0xf] %vm8376, %v8294
      %8424 = vst.msk [vmem:[%s219 + $0xbc] sm:$0xf] %vm8376, %v8295
      %8425 = vst.msk [vmem:[%s219 + $0xc0] sm:$0xf] %vm8376, %v8296
      %8426 = vst.msk [vmem:[%s219 + $0xc4] sm:$0xf] %vm8376, %v8297
      %8427 = vst.msk [vmem:[%s219 + $0xc8] sm:$0xf] %vm8376, %v8298
      %8428 = vst.msk [vmem:[%s219 + $0xcc] sm:$0xf] %vm8376, %v8299
      %8429 = vst.msk [vmem:[%s219 + $0xd0] sm:$0xf] %vm8376, %v8300
      %8430 = vst.msk [vmem:[%s219 + $0xd4] sm:$0xf] %vm8376, %v8301
      %8431 = vst.msk [vmem:[%s219 + $0xd8] sm:$0xf] %vm8376, %v8302
      %8432 = vst.msk [vmem:[%s219 + $0xdc] sm:$0xf] %vm8376, %v8303
      %8433 = vst.msk [vmem:[%s219 + $0xe0] sm:$0xf] %vm8376, %v8304
      %8434 = vst.msk [vmem:[%s219 + $0xe4] sm:$0xf] %vm8376, %v8305
      %8435 = vst.msk [vmem:[%s219 + $0xe8] sm:$0xf] %vm8376, %v8306
      %8436 = vst.msk [vmem:[%s219 + $0xec] sm:$0xf] %vm8376, %v8307
      %8437 = vst.msk [vmem:[%s219 + $0xf0] sm:$0xf] %vm8376, %v8308
      %8438 = vst.msk [vmem:[%s219 + $0xf4] sm:$0xf] %vm8376, %v8309
      %8439 = vst.msk [vmem:[%s219 + $0xf8] sm:$0xf] %vm8376, %v8310
      %8440 = vst.msk [vmem:[%s219 + $0xfc] sm:$0xf] %vm8376, %v8311
      %p8441 = scmp.lt.s32.totalorder %s19, 1
      %s8442 = scalar_select %p8441, %s19, 1
      %p8443 = scmp.lt.s32.totalorder %s20, 0
      %s8444 = scalar_select %p8443, %s20, 0
      %s8445 = smul.addr %s8444, 64
      %s8446 = smul.addr %s8442, 64
      %s8447 = sadd.s32 %s8445, %s8446
      %s8448 = smul.addr %s8447, 4
      %s8449 = scalar_lea.vmem %s4, %s8448
      // Predicated region
      $region37: #{tpu_custom_call.1} parent=35 // pred_check
        %p8450 = pneg %p136
      $region38: #{tpu_custom_call.1} parent=35 // pred_check_branch
        %8452 = sbr.rel (%p8450) target = $region40
      $region39: #{tpu_custom_call.1} parent=35 // pred_region
        _
      $region40: #{tpu_custom_call.1} parent=35 // pred_fallthru
        _
    $region36: #{tpu_custom_call.1} parent=5 // pred_fallthru
      _
    %p8453 = scmp.le.s32.totalorder 2, %s10
    // Predicated region
    $region41: #{tpu_custom_call.1} parent=5 // pred_check
      %p8454 = pneg %p8453
    $region42: #{tpu_custom_call.1} parent=5 // pred_check_branch
      %8456 = sbr.rel (%p8454) target = $region44
    $region43: #{tpu_custom_call.1} parent=5 // pred_region
      %s8457 = ssub.s32 %s10, 2
      // Predicated region
      $region45: #{tpu_custom_call.1} parent=43 // pred_check
        %p8458 = pneg %p142
      $region46: #{tpu_custom_call.1} parent=43 // pred_check_branch
        %8460 = sbr.rel (%p8458) target = $region48
      $region47: #{tpu_custom_call.1} parent=43 // pred_region
        %p8461 = scmp.lt.s32.totalorder %s21, 1
        %s8462 = scalar_select %p8461, %s21, 1
        %p8463 = scmp.lt.s32.totalorder %s22, 0
        %s8464 = scalar_select %p8463, %s22, 0
        %s8465 = smul.addr %s8464, 64
        %s8466 = smul.addr %s8462, 64
        %s8467 = sadd.s32 %s8465, %s8466
        %s8468 = smul.addr %s8467, 4
        %s8469 = scalar_lea.vmem %s4, %s8468
      $region48: #{tpu_custom_call.1} parent=43 // pred_fallthru
        _
    $region44: #{tpu_custom_call.1} parent=5 // pred_fallthru
      _
  $region6: #{tpu_custom_call.1} parent=0 // loop_footer
    %s14 = sadd.s32 1, %s10
  $region7: #{tpu_custom_call.1} parent=0 // loop_footer_branch
    %9 = sbr.rel target = $region3
  $region8: #{tpu_custom_call.1} parent=0 // loop_exit
    _

</llo_original>
